<compile_context>
chip_gen: v6e
topology: v6e:2x2x1
jax: 0.10.0
libtpu: 0.0.40
codegen_flags: <defaults>
</compile_context>

<pallas_src>
import functools
import math

import numpy as np
import jax
import jax.numpy as jnp
from jax import lax
from jax.experimental import pallas as pl
from jax.experimental.pallas import tpu as pltpu


_VMEM = pl.BlockSpec(memory_space=pltpu.MemorySpace.VMEM)
_SMEM = pl.BlockSpec(memory_space=pltpu.MemorySpace.SMEM)

_SCORE_LANES = 128  # pad the width-1 SAG score to a lane-dense output slab


# ----------------------------------------------------------------------------
# In-kernel helpers
# ----------------------------------------------------------------------------

def _dot(a, b):
    """MXU matmul: bf16 operands, f32 accumulation."""
    return jnp.dot(a.astype(jnp.bfloat16), b.astype(jnp.bfloat16),
                   preferred_element_type=jnp.float32)


def _dot_nt(a, b):
    """a @ b.T without materializing the transpose (contract last dims)."""
    return lax.dot_general(a.astype(jnp.bfloat16), b.astype(jnp.bfloat16),
                           (((1,), (1,)), ((), ())),
                           preferred_element_type=jnp.float32)


def _batchnorm(h, gamma, beta):
    """BatchNorm1d, training-mode batch statistics (biased var), eps=1e-5, f32."""
    mean = jnp.mean(h, axis=0, keepdims=True)
    var = jnp.mean((h - mean) * (h - mean), axis=0, keepdims=True)
    return (h - mean) * lax.rsqrt(var + 1e-5) * gamma + beta


def _gcn_propagate(adj, xw):
    """GCNConv propagation D^{-1/2}(A+I)D^{-1/2} @ XW, without materializing
    the normalized adjacency or any transpose:
        D^{-1/2}(A+I)D^{-1/2} Y == d ⊙ ((A+I) @ (d ⊙ Y)),  d = deg^{-1/2} (n,1)
    """
    n = adj.shape[0]
    eye = (lax.broadcasted_iota(jnp.int32, (n, n), 0)
           == lax.broadcasted_iota(jnp.int32, (n, n), 1)).astype(jnp.float32)
    a_hat = adj + eye
    deg = jnp.sum(a_hat, axis=1, keepdims=True)          # in-degree + 1
    d_is = lax.rsqrt(jnp.maximum(deg, 1e-12))
    return d_is * _dot(a_hat, d_is * xw)


# ----------------------------------------------------------------------------
# Fused BGNN layer: GCNConv -> Linear -> ReLU -> BN -> SAG scorer -> tanh gate
# ----------------------------------------------------------------------------

def _bgnn_layer_kernel(adj_ref, x_ref, convw_ref, convb_ref, fcw_ref, fcb_ref,
                       bng_ref, bnb_ref, wroot_ref, wrel_ref, sagb_ref,
                       xg_ref, score_ref):
    adj = adj_ref[...]
    # GCNConv: (XW) propagated with self-loops + symmetric norm, plus bias.
    h = _gcn_propagate(adj, _dot(x_ref[...], convw_ref[...])) + convb_ref[...]
    # Linear + ReLU
    h = jnp.maximum(_dot(h, fcw_ref[...]) + fcb_ref[...], 0.0)
    # BatchNorm1d (training statistics)
    h = _batchnorm(h, bng_ref[...], bnb_ref[...])
    # SAGPooling scorer (GraphConv, width 1), reassociated: A @ (X w_rel)
    s = (_dot(h, wroot_ref[...]) + _dot(adj, _dot(h, wrel_ref[...]))
         + sagb_ref[...])                                     # (n, 1)
    # tanh gate fused here (elementwise per row => commutes with the top-k gather)
    xg_ref[...] = h * jnp.tanh(s)
    score_ref[...] = jnp.broadcast_to(s, score_ref.shape)     # lane-dense store


def bgnn_layer(adj, x, conv_w, conv_b, fc_w, fc_b, bn_g, bn_b,
               sag_wroot, sag_wrel, sag_b):
    n, hidden = x.shape[0], fc_w.shape[1]
    return pl.pallas_call(
        _bgnn_layer_kernel,
        out_shape=(jax.ShapeDtypeStruct((n, hidden), jnp.float32),
                   jax.ShapeDtypeStruct((n, _SCORE_LANES), jnp.float32)),
        in_specs=[_VMEM] * 11,
        out_specs=(_VMEM, _VMEM),
    )(adj, x, conv_w, conv_b, fc_w, fc_b, bn_g, bn_b, sag_wroot, sag_wrel, sag_b)


# ----------------------------------------------------------------------------
# Fused labelG: GCNConv(200,64) -> ReLU -> BN(64)
# ----------------------------------------------------------------------------

def _labg_kernel(adj_ref, x_ref, w_ref, b_ref, g_ref, beta_ref, o_ref):
    h = _gcn_propagate(adj_ref[...], _dot(x_ref[...], w_ref[...])) + b_ref[...]
    h = jnp.maximum(h, 0.0)
    o_ref[...] = _batchnorm(h, g_ref[...], beta_ref[...])


def labg_forward(adj, x, w, b, g, beta):
    return pl.pallas_call(
        _labg_kernel,
        out_shape=jax.ShapeDtypeStruct((x.shape[0], w.shape[1]), jnp.float32),
        in_specs=[_VMEM] * 6,
        out_specs=_VMEM,
    )(adj, x, w, b, g, beta)


# ----------------------------------------------------------------------------
# Fused TGNN head: mean-pool + GIN1(MLP) + GIN2(MLP) + lin1 + edge head + @C.T
# ----------------------------------------------------------------------------

def _tgnn_head_kernel(eps1_ref, eps2_ref,                     # SMEM scalars
                      pool_ref, x4_ref, adj_ref,
                      c1w1_ref, c1b1_ref, c1w2_ref, c1b2_ref, c1g_ref, c1b_ref,
                      c2w1_ref, c2b1_ref, c2g_ref, c2b_ref,
                      lin1w_ref, lin1b_ref, fc1w_ref, fc1b_ref,
                      s1_ref, s2_ref, cmat_ref, o_ref):
    # global_mean_pool: pooling matrix (1/count folded) @ gathered node features
    embs = _dot(pool_ref[...], x4_ref[...])                   # (G, 128)
    adj = adj_ref[...]
    eps1 = eps1_ref[0, 0]
    eps2 = eps2_ref[0, 0]
    # GINConv 1: MLP = Linear(128,H), ReLU, Linear(H,H), ReLU, BN(H)
    agg = (1.0 + eps1) * embs + _dot(adj, embs)
    h = jnp.maximum(_dot(agg, c1w1_ref[...]) + c1b1_ref[...], 0.0)
    h = jnp.maximum(_dot(h, c1w2_ref[...]) + c1b2_ref[...], 0.0)
    h = _batchnorm(h, c1g_ref[...], c1b_ref[...])
    # GINConv 2: MLP = Linear(H,H), ReLU, BN(H)
    agg = (1.0 + eps2) * h + _dot(adj, h)
    h = jnp.maximum(_dot(agg, c2w1_ref[...]) + c2b1_ref[...], 0.0)
    h = _batchnorm(h, c2g_ref[...], c2b_ref[...])
    # lin1 + ReLU (dropout p=0.0 is identity)
    h = jnp.maximum(_dot(h, lin1w_ref[...]) + lin1b_ref[...], 0.0)
    # edge head: one-hot endpoint selection, Hadamard product, fc1
    x1 = _dot(s1_ref[...], h)
    x2 = _dot(s2_ref[...], h)
    e = _dot(x1 * x2, fc1w_ref[...]) + fc1b_ref[...]          # (E, 64)
    # final = e @ C.T  (contract last dims; no transpose materialized)
    o_ref[...] = _dot_nt(e, cmat_ref[...])                    # (E, num_classes)


def tgnn_head(p, pool, x4, adj, s1, s2, cmat):
    E, num_classes = s1.shape[0], cmat.shape[0]
    return pl.pallas_call(
        _tgnn_head_kernel,
        out_shape=jax.ShapeDtypeStruct((E, num_classes), jnp.float32),
        in_specs=[_SMEM, _SMEM] + [_VMEM] * 20,
        out_specs=_VMEM,
    )(p["c1_eps"], p["c2_eps"], pool, x4, adj,
      p["c1_w1"], p["c1_b1"], p["c1_w2"], p["c1_b2"], p["c1_bng"], p["c1_bnb"],
      p["c2_w1"], p["c2_b1"], p["c2_bng"], p["c2_bnb"],
      p["lin1_w"], p["lin1_b"], p["fc1_w"], p["fc1_b"],
      s1, s2, cmat)


# ----------------------------------------------------------------------------
# Device-side SAG top-k / gather glue (static per-graph sizes, no host syncs)
# ----------------------------------------------------------------------------

# TODO(synk): per-graph top-k and the data-dependent row/column gathers use
# lax.top_k / XLA gather between the fused Pallas kernels; a scalar-prefetch
# Pallas gather kernel would be the next step for large graphs.
def _topk_perm_device(score, counts, ks):
    parts, start = [], 0
    for cnt, k in zip(counts, ks):
        _, idx = lax.top_k(score[start:start + cnt], k)
        parts.append(idx + start)
        start += cnt
    return jnp.concatenate(parts)


def bgnn_forward(p, x, adj, counts):
    """GCN(): 4 x [fused layer kernel -> device top-k pooling]. Returns pooled x."""
    for l in range(1, 5):
        xg, score = bgnn_layer(
            adj, x,
            p[f"conv{l}_w"], p[f"conv{l}_b"],
            p[f"fc{l}_w"], p[f"fc{l}_b"],
            p[f"bn{l}_g"], p[f"bn{l}_b"],
            p[f"sag{l}_wroot"], p[f"sag{l}_wrel"], p[f"sag{l}_b"])
        ks = [int(math.ceil(0.5 * c)) for c in counts]
        perm = _topk_perm_device(score[:, 0], counts, ks)
        x = jnp.take(xg, perm, axis=0)                        # tanh-gated rows
        adj = jnp.take(jnp.take(adj, perm, axis=0), perm, axis=1)
        counts = ks
    return x


# ----------------------------------------------------------------------------
# Host-side static structure helpers (no per-layer host<->device traffic)
# ----------------------------------------------------------------------------

def dense_adj(edge_index, num_nodes):
    A = np.zeros((num_nodes, num_nodes), np.float32)
    if edge_index.size:
        A[edge_index[1], edge_index[0]] = 1.0   # row = dst, col = src
    return A


# ----------------------------------------------------------------------------
# Parameter initialization (deterministic, synthetic)
# ----------------------------------------------------------------------------

def _glorot(key, shape):
    lim = math.sqrt(6.0 / (shape[0] + shape[1]))
    return jax.random.uniform(key, shape, jnp.float32, -lim, lim)


def init_bgnn_params(key):  # GCN()
    hidden = 128
    p = {}
    dims = [(7, hidden)] + [(hidden, hidden)] * 3
    ki = iter(jax.random.split(key, 16))
    for l, (din, dout) in enumerate(dims, 1):
        p[f"conv{l}_w"] = _glorot(next(ki), (din, dout))
        p[f"conv{l}_b"] = jnp.zeros((1, dout), jnp.float32)
        p[f"fc{l}_w"] = _glorot(next(ki), (hidden, hidden))
        p[f"fc{l}_b"] = jnp.zeros((1, hidden), jnp.float32)
        p[f"bn{l}_g"] = jnp.ones((1, hidden), jnp.float32)
        p[f"bn{l}_b"] = jnp.zeros((1, hidden), jnp.float32)
        p[f"sag{l}_wroot"] = _glorot(next(ki), (hidden, 1))
        p[f"sag{l}_wrel"] = _glorot(next(ki), (hidden, 1))
        p[f"sag{l}_b"] = jnp.zeros((1, 1), jnp.float32)
    return p


def init_tgnn_params(key, hidden=512):  # GIN()
    ki = iter(jax.random.split(key, 8))
    return {
        "c1_w1": _glorot(next(ki), (128, hidden)), "c1_b1": jnp.zeros((1, hidden), jnp.float32),
        "c1_w2": _glorot(next(ki), (hidden, hidden)), "c1_b2": jnp.zeros((1, hidden), jnp.float32),
        "c1_bng": jnp.ones((1, hidden), jnp.float32), "c1_bnb": jnp.zeros((1, hidden), jnp.float32),
        "c1_eps": jnp.zeros((1, 1), jnp.float32),
        "c2_w1": _glorot(next(ki), (hidden, hidden)), "c2_b1": jnp.zeros((1, hidden), jnp.float32),
        "c2_bng": jnp.ones((1, hidden), jnp.float32), "c2_bnb": jnp.zeros((1, hidden), jnp.float32),
        "c2_eps": jnp.zeros((1, 1), jnp.float32),
        "lin1_w": _glorot(next(ki), (hidden, hidden)), "lin1_b": jnp.zeros((1, hidden), jnp.float32),
        "fc1_w": _glorot(next(ki), (hidden, 64)), "fc1_b": jnp.zeros((1, 64), jnp.float32),
    }


def init_labg_params(key):  # labelG()
    k1, = jax.random.split(key, 1)
    return {
        "conv_w": _glorot(k1, (200, 64)), "conv_b": jnp.zeros((1, 64), jnp.float32),
        "bn_g": jnp.ones((1, 64), jnp.float32), "bn_b": jnp.zeros((1, 64), jnp.float32),
    }


# ----------------------------------------------------------------------------
# Full forward
# ----------------------------------------------------------------------------

def lambiomhG_forward(params, batch, p_x_all, p_edge_all, adj_subgraph,
                      train_edge_index, labGx, labe):
    batch = np.asarray(batch)
    assert np.all(np.diff(batch) >= 0), "batch must be sorted / contiguous"
    num_graphs = int(batch.max()) + 1
    counts0 = tuple(int((batch == g).sum()) for g in range(num_graphs))

    n0 = p_x_all.shape[0]
    adj0 = dense_adj(np.asarray(p_edge_all), n0)
    adj_sub = dense_adj(np.asarray(adj_subgraph), num_graphs)
    adj_lab = dense_adj(np.asarray(labe), labGx.shape[0])

    # Per-graph counts after 4x ceil(0.5*) pooling are static -> static
    # mean-pool matrix (with 1/count folded in).
    counts = list(counts0)
    for _ in range(4):
        counts = [int(math.ceil(0.5 * c)) for c in counts]
    n4 = sum(counts)
    pool = np.zeros((num_graphs, n4), np.float32)
    off = 0
    for g, c in enumerate(counts):
        pool[g, off:off + c] = 1.0 / c
        off += c

    # One-hot endpoint selectors for the GIN edge head (static).
    tei = np.asarray(train_edge_index)
    E = tei.shape[1]
    s1 = np.zeros((E, num_graphs), np.float32)
    s2 = np.zeros((E, num_graphs), np.float32)
    s1[np.arange(E), tei[0]] = 1.0
    s2[np.arange(E), tei[1]] = 1.0

    @jax.jit
    def _fwd(params, x, adj0, adj_sub, adj_lab, pool, s1, s2, labGx):
        x4 = bgnn_forward(params["bgnn"], x, adj0, list(counts0))
        pg = params["labg"]
        cmat = labg_forward(adj_lab, labGx, pg["conv_w"], pg["conv_b"],
                            pg["bn_g"], pg["bn_b"])
        return tgnn_head(params["tgnn"], pool, x4, adj_sub, s1, s2, cmat)

    return _fwd(params, jnp.asarray(p_x_all), jnp.asarray(adj0),
                jnp.asarray(adj_sub), jnp.asarray(adj_lab), jnp.asarray(pool),
                jnp.asarray(s1), jnp.asarray(s2), jnp.asarray(labGx))


# ----------------------------------------------------------------------------
# Demo
# ----------------------------------------------------------------------------

if __name__ == "__main__":
    key = jax.random.PRNGKey(0)
    k_bgnn, k_tgnn, k_labg, k_x, k_lab = jax.random.split(key, 5)

    params = {
        "bgnn": init_bgnn_params(k_bgnn),
        "tgnn": init_tgnn_params(k_tgnn),
        "labg": init_labg_params(k_labg),
    }

    # Two graphs of 8 nodes each; symmetric ring edges within each graph.
    nodes_per_graph, num_graphs = 8, 2
    n_nodes = nodes_per_graph * num_graphs
    batch = np.repeat(np.arange(num_graphs), nodes_per_graph).astype(np.int32)
    src, dst = [], []
    for g in range(num_graphs):
        off = g * nodes_per_graph
        for i in range(nodes_per_graph):
            j = (i + 1) % nodes_per_graph
            src += [off + i, off + j]
            dst += [off + j, off + i]
    p_edge_all = np.stack([np.array(src), np.array(dst)]).astype(np.int32)   # (2, 32)
    p_x_all = jax.random.normal(k_x, (n_nodes, 7), jnp.float32)              # (16, 7)

    # Graph-level (subgraph) adjacency for the GIN and train edges.
    adj_subgraph = np.array([[0, 1], [1, 0]], np.int32)                      # (2, 2)
    train_edge_index = np.array([[0, 1, 0, 1], [1, 0, 0, 1]], np.int32)      # (2, 4)

    # Label graph: 7 label nodes, 200-dim features, symmetric ring edges.
    num_classes = 7
    labGx = jax.random.normal(k_lab, (num_classes, 200), jnp.float32)        # (7, 200)
    ring = np.stack([np.arange(num_classes), (np.arange(num_classes) + 1) % num_classes])
    labe = np.concatenate([ring, ring[::-1]], axis=1).astype(np.int32)       # (2, 14)

    out = lambiomhG_forward(params, batch, p_x_all, p_edge_all, adj_subgraph,
                            train_edge_index, labGx, labe)
    out = jax.block_until_ready(out)
    assert out.shape == (train_edge_index.shape[1], num_classes), out.shape
    assert bool(jnp.all(jnp.isfinite(out)))
    print("KERNEL_OK")
</pallas_src>

<mosaic_0001>
module attributes {stable_mosaic.version = 11 : i64} {
  func.func @_bgnn_layer_kernel(%arg0: memref<16x16xf32, #tpu.memory_space<vmem>>, %arg1: memref<16x7xf32, #tpu.memory_space<vmem>>, %arg2: memref<7x128xf32, #tpu.memory_space<vmem>>, %arg3: memref<1x128xf32, #tpu.memory_space<vmem>>, %arg4: memref<128x128xf32, #tpu.memory_space<vmem>>, %arg5: memref<1x128xf32, #tpu.memory_space<vmem>>, %arg6: memref<1x128xf32, #tpu.memory_space<vmem>>, %arg7: memref<1x128xf32, #tpu.memory_space<vmem>>, %arg8: memref<128x1xf32, #tpu.memory_space<vmem>>, %arg9: memref<128x1xf32, #tpu.memory_space<vmem>>, %arg10: memref<1x1xf32, #tpu.memory_space<vmem>>, %arg11: memref<16x128xf32, #tpu.memory_space<vmem>>, %arg12: memref<16x128xf32, #tpu.memory_space<vmem>>) attributes {dimension_semantics = [], scalar_prefetch = 0 : i64, scratch_operands = 0 : i64, tpu.core_type = #tpu.core_type<tc>} {
    %c0 = arith.constant 0 : index
    %c0_0 = arith.constant 0 : index
    %0 = vector.load %arg0[%c0, %c0_0] : memref<16x16xf32, #tpu.memory_space<vmem>>, vector<16x16xf32>
    %c0_1 = arith.constant 0 : index
    %c0_2 = arith.constant 0 : index
    %1 = vector.load %arg1[%c0_1, %c0_2] : memref<16x7xf32, #tpu.memory_space<vmem>>, vector<16x7xf32>
    %c0_3 = arith.constant 0 : index
    %c0_4 = arith.constant 0 : index
    %2 = vector.load %arg2[%c0_3, %c0_4] : memref<7x128xf32, #tpu.memory_space<vmem>>, vector<7x128xf32>
    %3 = arith.truncf %1 : vector<16x7xf32> to vector<16x7xbf16>
    %4 = arith.truncf %2 : vector<7x128xf32> to vector<7x128xbf16>
    %cst = arith.constant dense<0.000000e+00> : vector<16x128xf32>
    %5 = tpu.matmul %3, %4, %cst {dimension_numbers = #tpu.dot_dimension_numbers<[1], [0], [0], [1], [0, 0, 1, 1], [], []>} : vector<16x7xbf16>, vector<7x128xbf16>, vector<16x128xf32> -> vector<16x128xf32>
    %6 = tpu.iota {dimensions = array<i32: 0>} : vector<16x16xi32>
    %7 = tpu.iota {dimensions = array<i32: 1>} : vector<16x16xi32>
    %8 = arith.cmpi eq, %6, %7 : vector<16x16xi32>
    %9 = arith.extui %8 : vector<16x16xi1> to vector<16x16xi32>
    %10 = arith.sitofp %9 : vector<16x16xi32> to vector<16x16xf32>
    %11 = arith.addf %0, %10 : vector<16x16xf32>
    %cst_5 = arith.constant dense<0.000000e+00> : vector<16xf32>
    %12 = vector.multi_reduction <add>, %11, %cst_5 [1] : vector<16x16xf32> to vector<16xf32>
    %13 = vector.shape_cast %12 : vector<16xf32> to vector<16x1xf32>
    %cst_6 = arith.constant 9.99999996E-13 : f32
    %14 = vector.broadcast %cst_6 : f32 to vector<16x1xf32>
    %15 = arith.maximumf %13, %14 : vector<16x1xf32>
    %16 = math.rsqrt %15 : vector<16x1xf32>
    %17 = vector.broadcast %16 : vector<16x1xf32> to vector<16x128xf32>
    %18 = arith.mulf %17, %5 : vector<16x128xf32>
    %19 = arith.truncf %11 : vector<16x16xf32> to vector<16x16xbf16>
    %20 = arith.truncf %18 : vector<16x128xf32> to vector<16x128xbf16>
    %cst_7 = arith.constant dense<0.000000e+00> : vector<16x128xf32>
    %21 = tpu.matmul %19, %20, %cst_7 {dimension_numbers = #tpu.dot_dimension_numbers<[1], [0], [0], [1], [0, 0, 1, 1], [], []>} : vector<16x16xbf16>, vector<16x128xbf16>, vector<16x128xf32> -> vector<16x128xf32>
    %22 = vector.broadcast %16 : vector<16x1xf32> to vector<16x128xf32>
    %23 = arith.mulf %22, %21 : vector<16x128xf32>
    %c0_8 = arith.constant 0 : index
    %c0_9 = arith.constant 0 : index
    %24 = vector.load %arg3[%c0_8, %c0_9] : memref<1x128xf32, #tpu.memory_space<vmem>>, vector<1x128xf32>
    %25 = vector.broadcast %24 : vector<1x128xf32> to vector<16x128xf32>
    %26 = arith.addf %23, %25 : vector<16x128xf32>
    %c0_10 = arith.constant 0 : index
    %c0_11 = arith.constant 0 : index
    %27 = vector.load %arg4[%c0_10, %c0_11] : memref<128x128xf32, #tpu.memory_space<vmem>>, vector<128x128xf32>
    %28 = arith.truncf %26 : vector<16x128xf32> to vector<16x128xbf16>
    %29 = arith.truncf %27 : vector<128x128xf32> to vector<128x128xbf16>
    %cst_12 = arith.constant dense<0.000000e+00> : vector<16x128xf32>
    %30 = tpu.matmul %28, %29, %cst_12 {dimension_numbers = #tpu.dot_dimension_numbers<[1], [0], [0], [1], [0, 0, 1, 1], [], []>} : vector<16x128xbf16>, vector<128x128xbf16>, vector<16x128xf32> -> vector<16x128xf32>
    %c0_13 = arith.constant 0 : index
    %c0_14 = arith.constant 0 : index
    %31 = vector.load %arg5[%c0_13, %c0_14] : memref<1x128xf32, #tpu.memory_space<vmem>>, vector<1x128xf32>
    %32 = vector.broadcast %31 : vector<1x128xf32> to vector<16x128xf32>
    %33 = arith.addf %30, %32 : vector<16x128xf32>
    %cst_15 = arith.constant 0.000000e+00 : f32
    %34 = vector.broadcast %cst_15 : f32 to vector<16x128xf32>
    %35 = arith.maximumf %33, %34 : vector<16x128xf32>
    %c0_16 = arith.constant 0 : index
    %c0_17 = arith.constant 0 : index
    %36 = vector.load %arg6[%c0_16, %c0_17] : memref<1x128xf32, #tpu.memory_space<vmem>>, vector<1x128xf32>
    %c0_18 = arith.constant 0 : index
    %c0_19 = arith.constant 0 : index
    %37 = vector.load %arg7[%c0_18, %c0_19] : memref<1x128xf32, #tpu.memory_space<vmem>>, vector<1x128xf32>
    %cst_20 = arith.constant dense<0.000000e+00> : vector<128xf32>
    %38 = vector.multi_reduction <add>, %35, %cst_20 [0] : vector<16x128xf32> to vector<128xf32>
    %39 = vector.shape_cast %38 : vector<128xf32> to vector<1x128xf32>
    %cst_21 = arith.constant 1.600000e+01 : f32
    %40 = vector.broadcast %cst_21 : f32 to vector<1x128xf32>
    %41 = arith.divf %39, %40 : vector<1x128xf32>
    %42 = vector.broadcast %41 : vector<1x128xf32> to vector<16x128xf32>
    %43 = arith.subf %35, %42 : vector<16x128xf32>
    %44 = vector.broadcast %41 : vector<1x128xf32> to vector<16x128xf32>
    %45 = arith.subf %35, %44 : vector<16x128xf32>
    %46 = arith.mulf %43, %45 : vector<16x128xf32>
    %cst_22 = arith.constant dense<0.000000e+00> : vector<128xf32>
    %47 = vector.multi_reduction <add>, %46, %cst_22 [0] : vector<16x128xf32> to vector<128xf32>
    %48 = vector.shape_cast %47 : vector<128xf32> to vector<1x128xf32>
    %cst_23 = arith.constant 1.600000e+01 : f32
    %49 = vector.broadcast %cst_23 : f32 to vector<1x128xf32>
    %50 = arith.divf %48, %49 : vector<1x128xf32>
    %51 = vector.broadcast %41 : vector<1x128xf32> to vector<16x128xf32>
    %52 = arith.subf %35, %51 : vector<16x128xf32>
    %cst_24 = arith.constant 9.99999974E-6 : f32
    %53 = vector.broadcast %cst_24 : f32 to vector<1x128xf32>
    %54 = arith.addf %50, %53 : vector<1x128xf32>
    %55 = math.rsqrt %54 : vector<1x128xf32>
    %56 = vector.broadcast %55 : vector<1x128xf32> to vector<16x128xf32>
    %57 = arith.mulf %52, %56 : vector<16x128xf32>
    %58 = vector.broadcast %36 : vector<1x128xf32> to vector<16x128xf32>
    %59 = arith.mulf %57, %58 : vector<16x128xf32>
    %60 = vector.broadcast %37 : vector<1x128xf32> to vector<16x128xf32>
    %61 = arith.addf %59, %60 : vector<16x128xf32>
    %c0_25 = arith.constant 0 : index
    %c0_26 = arith.constant 0 : index
    %62 = vector.load %arg8[%c0_25, %c0_26] : memref<128x1xf32, #tpu.memory_space<vmem>>, vector<128x1xf32>
    %63 = arith.truncf %61 : vector<16x128xf32> to vector<16x128xbf16>
    %64 = arith.truncf %62 : vector<128x1xf32> to vector<128x1xbf16>
    %cst_27 = arith.constant dense<0.000000e+00> : vector<16x1xf32>
    %65 = tpu.matmul %63, %64, %cst_27 {dimension_numbers = #tpu.dot_dimension_numbers<[1], [0], [0], [1], [0, 0, 1, 1], [], []>} : vector<16x128xbf16>, vector<128x1xbf16>, vector<16x1xf32> -> vector<16x1xf32>
    %c0_28 = arith.constant 0 : index
    %c0_29 = arith.constant 0 : index
    %66 = vector.load %arg9[%c0_28, %c0_29] : memref<128x1xf32, #tpu.memory_space<vmem>>, vector<128x1xf32>
    %67 = arith.truncf %61 : vector<16x128xf32> to vector<16x128xbf16>
    %68 = arith.truncf %66 : vector<128x1xf32> to vector<128x1xbf16>
    %cst_30 = arith.constant dense<0.000000e+00> : vector<16x1xf32>
    %69 = tpu.matmul %67, %68, %cst_30 {dimension_numbers = #tpu.dot_dimension_numbers<[1], [0], [0], [1], [0, 0, 1, 1], [], []>} : vector<16x128xbf16>, vector<128x1xbf16>, vector<16x1xf32> -> vector<16x1xf32>
    %70 = arith.truncf %0 : vector<16x16xf32> to vector<16x16xbf16>
    %71 = arith.truncf %69 : vector<16x1xf32> to vector<16x1xbf16>
    %cst_31 = arith.constant dense<0.000000e+00> : vector<16x1xf32>
    %72 = tpu.matmul %70, %71, %cst_31 {dimension_numbers = #tpu.dot_dimension_numbers<[1], [0], [0], [1], [0, 0, 1, 1], [], []>} : vector<16x16xbf16>, vector<16x1xbf16>, vector<16x1xf32> -> vector<16x1xf32>
    %73 = arith.addf %65, %72 : vector<16x1xf32>
    %c0_32 = arith.constant 0 : index
    %c0_33 = arith.constant 0 : index
    %74 = vector.load %arg10[%c0_32, %c0_33] : memref<1x1xf32, #tpu.memory_space<vmem>>, vector<1x1xf32>
    %75 = vector.broadcast %74 : vector<1x1xf32> to vector<16x1xf32>
    %76 = arith.addf %73, %75 : vector<16x1xf32>
    %77 = math.tanh %76 : vector<16x1xf32>
    %78 = vector.broadcast %77 : vector<16x1xf32> to vector<16x128xf32>
    %79 = arith.mulf %61, %78 : vector<16x128xf32>
    %c0_34 = arith.constant 0 : index
    %c0_35 = arith.constant 0 : index
    %80 = vector.load %arg11[%c0_34, %c0_35] : memref<16x128xf32, #tpu.memory_space<vmem>>, vector<16x128xf32>
    tpu.vector_store %arg11[%c0_34, %c0_35], %79 {strides = array<i32>} : memref<16x128xf32, #tpu.memory_space<vmem>>, vector<16x128xf32>,
    %81 = vector.shape_cast %76 : vector<16x1xf32> to vector<16x1xf32>
    %82 = vector.broadcast %81 : vector<16x1xf32> to vector<16x128xf32>
    %c0_36 = arith.constant 0 : index
    %c0_37 = arith.constant 0 : index
    %83 = vector.load %arg12[%c0_36, %c0_37] : memref<16x128xf32, #tpu.memory_space<vmem>>, vector<16x128xf32>
    tpu.vector_store %arg12[%c0_36, %c0_37], %82 {strides = array<i32>} : memref<16x128xf32, #tpu.memory_space<vmem>>, vector<16x128xf32>,
    return
  }
}

module attributes {stable_mosaic.version = 11 : i64} {
  func.func @_bgnn_layer_kernel(%arg0: memref<8x8xf32, #tpu.memory_space<vmem>>, %arg1: memref<8x128xf32, #tpu.memory_space<vmem>>, %arg2: memref<128x128xf32, #tpu.memory_space<vmem>>, %arg3: memref<1x128xf32, #tpu.memory_space<vmem>>, %arg4: memref<128x128xf32, #tpu.memory_space<vmem>>, %arg5: memref<1x128xf32, #tpu.memory_space<vmem>>, %arg6: memref<1x128xf32, #tpu.memory_space<vmem>>, %arg7: memref<1x128xf32, #tpu.memory_space<vmem>>, %arg8: memref<128x1xf32, #tpu.memory_space<vmem>>, %arg9: memref<128x1xf32, #tpu.memory_space<vmem>>, %arg10: memref<1x1xf32, #tpu.memory_space<vmem>>, %arg11: memref<8x128xf32, #tpu.memory_space<vmem>>, %arg12: memref<8x128xf32, #tpu.memory_space<vmem>>) attributes {dimension_semantics = [], scalar_prefetch = 0 : i64, scratch_operands = 0 : i64, tpu.core_type = #tpu.core_type<tc>} {
    %c0 = arith.constant 0 : index
    %c0_0 = arith.constant 0 : index
    %0 = vector.load %arg0[%c0, %c0_0] : memref<8x8xf32, #tpu.memory_space<vmem>>, vector<8x8xf32>
    %c0_1 = arith.constant 0 : index
    %c0_2 = arith.constant 0 : index
    %1 = vector.load %arg1[%c0_1, %c0_2] : memref<8x128xf32, #tpu.memory_space<vmem>>, vector<8x128xf32>
    %c0_3 = arith.constant 0 : index
    %c0_4 = arith.constant 0 : index
    %2 = vector.load %arg2[%c0_3, %c0_4] : memref<128x128xf32, #tpu.memory_space<vmem>>, vector<128x128xf32>
    %3 = arith.truncf %1 : vector<8x128xf32> to vector<8x128xbf16>
    %4 = arith.truncf %2 : vector<128x128xf32> to vector<128x128xbf16>
    %cst = arith.constant dense<0.000000e+00> : vector<8x128xf32>
    %5 = tpu.matmul %3, %4, %cst {dimension_numbers = #tpu.dot_dimension_numbers<[1], [0], [0], [1], [0, 0, 1, 1], [], []>} : vector<8x128xbf16>, vector<128x128xbf16>, vector<8x128xf32> -> vector<8x128xf32>
    %6 = tpu.iota {dimensions = array<i32: 0>} : vector<8x8xi32>
    %7 = tpu.iota {dimensions = array<i32: 1>} : vector<8x8xi32>
    %8 = arith.cmpi eq, %6, %7 : vector<8x8xi32>
    %9 = arith.extui %8 : vector<8x8xi1> to vector<8x8xi32>
    %10 = arith.sitofp %9 : vector<8x8xi32> to vector<8x8xf32>
    %11 = arith.addf %0, %10 : vector<8x8xf32>
    %cst_5 = arith.constant dense<0.000000e+00> : vector<8xf32>
    %12 = vector.multi_reduction <add>, %11, %cst_5 [1] : vector<8x8xf32> to vector<8xf32>
    %13 = vector.shape_cast %12 : vector<8xf32> to vector<8x1xf32>
    %cst_6 = arith.constant 9.99999996E-13 : f32
    %14 = vector.broadcast %cst_6 : f32 to vector<8x1xf32>
    %15 = arith.maximumf %13, %14 : vector<8x1xf32>
    %16 = math.rsqrt %15 : vector<8x1xf32>
    %17 = vector.broadcast %16 : vector<8x1xf32> to vector<8x128xf32>
    %18 = arith.mulf %17, %5 : vector<8x128xf32>
    %19 = arith.truncf %11 : vector<8x8xf32> to vector<8x8xbf16>
    %20 = arith.truncf %18 : vector<8x128xf32> to vector<8x128xbf16>
    %cst_7 = arith.constant dense<0.000000e+00> : vector<8x128xf32>
    %21 = tpu.matmul %19, %20, %cst_7 {dimension_numbers = #tpu.dot_dimension_numbers<[1], [0], [0], [1], [0, 0, 1, 1], [], []>} : vector<8x8xbf16>, vector<8x128xbf16>, vector<8x128xf32> -> vector<8x128xf32>
    %22 = vector.broadcast %16 : vector<8x1xf32> to vector<8x128xf32>
    %23 = arith.mulf %22, %21 : vector<8x128xf32>
    %c0_8 = arith.constant 0 : index
    %c0_9 = arith.constant 0 : index
    %24 = vector.load %arg3[%c0_8, %c0_9] : memref<1x128xf32, #tpu.memory_space<vmem>>, vector<1x128xf32>
    %25 = vector.broadcast %24 : vector<1x128xf32> to vector<8x128xf32>
    %26 = arith.addf %23, %25 : vector<8x128xf32>
    %c0_10 = arith.constant 0 : index
    %c0_11 = arith.constant 0 : index
    %27 = vector.load %arg4[%c0_10, %c0_11] : memref<128x128xf32, #tpu.memory_space<vmem>>, vector<128x128xf32>
    %28 = arith.truncf %26 : vector<8x128xf32> to vector<8x128xbf16>
    %29 = arith.truncf %27 : vector<128x128xf32> to vector<128x128xbf16>
    %cst_12 = arith.constant dense<0.000000e+00> : vector<8x128xf32>
    %30 = tpu.matmul %28, %29, %cst_12 {dimension_numbers = #tpu.dot_dimension_numbers<[1], [0], [0], [1], [0, 0, 1, 1], [], []>} : vector<8x128xbf16>, vector<128x128xbf16>, vector<8x128xf32> -> vector<8x128xf32>
    %c0_13 = arith.constant 0 : index
    %c0_14 = arith.constant 0 : index
    %31 = vector.load %arg5[%c0_13, %c0_14] : memref<1x128xf32, #tpu.memory_space<vmem>>, vector<1x128xf32>
    %32 = vector.broadcast %31 : vector<1x128xf32> to vector<8x128xf32>
    %33 = arith.addf %30, %32 : vector<8x128xf32>
    %cst_15 = arith.constant 0.000000e+00 : f32
    %34 = vector.broadcast %cst_15 : f32 to vector<8x128xf32>
    %35 = arith.maximumf %33, %34 : vector<8x128xf32>
    %c0_16 = arith.constant 0 : index
    %c0_17 = arith.constant 0 : index
    %36 = vector.load %arg6[%c0_16, %c0_17] : memref<1x128xf32, #tpu.memory_space<vmem>>, vector<1x128xf32>
    %c0_18 = arith.constant 0 : index
    %c0_19 = arith.constant 0 : index
    %37 = vector.load %arg7[%c0_18, %c0_19] : memref<1x128xf32, #tpu.memory_space<vmem>>, vector<1x128xf32>
    %cst_20 = arith.constant dense<0.000000e+00> : vector<128xf32>
    %38 = vector.multi_reduction <add>, %35, %cst_20 [0] : vector<8x128xf32> to vector<128xf32>
    %39 = vector.shape_cast %38 : vector<128xf32> to vector<1x128xf32>
    %cst_21 = arith.constant 8.000000e+00 : f32
    %40 = vector.broadcast %cst_21 : f32 to vector<1x128xf32>
    %41 = arith.divf %39, %40 : vector<1x128xf32>
    %42 = vector.broadcast %41 : vector<1x128xf32> to vector<8x128xf32>
    %43 = arith.subf %35, %42 : vector<8x128xf32>
    %44 = vector.broadcast %41 : vector<1x128xf32> to vector<8x128xf32>
    %45 = arith.subf %35, %44 : vector<8x128xf32>
    %46 = arith.mulf %43, %45 : vector<8x128xf32>
    %cst_22 = arith.constant dense<0.000000e+00> : vector<128xf32>
    %47 = vector.multi_reduction <add>, %46, %cst_22 [0] : vector<8x128xf32> to vector<128xf32>
    %48 = vector.shape_cast %47 : vector<128xf32> to vector<1x128xf32>
    %cst_23 = arith.constant 8.000000e+00 : f32
    %49 = vector.broadcast %cst_23 : f32 to vector<1x128xf32>
    %50 = arith.divf %48, %49 : vector<1x128xf32>
    %51 = vector.broadcast %41 : vector<1x128xf32> to vector<8x128xf32>
    %52 = arith.subf %35, %51 : vector<8x128xf32>
    %cst_24 = arith.constant 9.99999974E-6 : f32
    %53 = vector.broadcast %cst_24 : f32 to vector<1x128xf32>
    %54 = arith.addf %50, %53 : vector<1x128xf32>
    %55 = math.rsqrt %54 : vector<1x128xf32>
    %56 = vector.broadcast %55 : vector<1x128xf32> to vector<8x128xf32>
    %57 = arith.mulf %52, %56 : vector<8x128xf32>
    %58 = vector.broadcast %36 : vector<1x128xf32> to vector<8x128xf32>
    %59 = arith.mulf %57, %58 : vector<8x128xf32>
    %60 = vector.broadcast %37 : vector<1x128xf32> to vector<8x128xf32>
    %61 = arith.addf %59, %60 : vector<8x128xf32>
    %c0_25 = arith.constant 0 : index
    %c0_26 = arith.constant 0 : index
    %62 = vector.load %arg8[%c0_25, %c0_26] : memref<128x1xf32, #tpu.memory_space<vmem>>, vector<128x1xf32>
    %63 = arith.truncf %61 : vector<8x128xf32> to vector<8x128xbf16>
    %64 = arith.truncf %62 : vector<128x1xf32> to vector<128x1xbf16>
    %cst_27 = arith.constant dense<0.000000e+00> : vector<8x1xf32>
    %65 = tpu.matmul %63, %64, %cst_27 {dimension_numbers = #tpu.dot_dimension_numbers<[1], [0], [0], [1], [0, 0, 1, 1], [], []>} : vector<8x128xbf16>, vector<128x1xbf16>, vector<8x1xf32> -> vector<8x1xf32>
    %c0_28 = arith.constant 0 : index
    %c0_29 = arith.constant 0 : index
    %66 = vector.load %arg9[%c0_28, %c0_29] : memref<128x1xf32, #tpu.memory_space<vmem>>, vector<128x1xf32>
    %67 = arith.truncf %61 : vector<8x128xf32> to vector<8x128xbf16>
    %68 = arith.truncf %66 : vector<128x1xf32> to vector<128x1xbf16>
    %cst_30 = arith.constant dense<0.000000e+00> : vector<8x1xf32>
    %69 = tpu.matmul %67, %68, %cst_30 {dimension_numbers = #tpu.dot_dimension_numbers<[1], [0], [0], [1], [0, 0, 1, 1], [], []>} : vector<8x128xbf16>, vector<128x1xbf16>, vector<8x1xf32> -> vector<8x1xf32>
    %70 = arith.truncf %0 : vector<8x8xf32> to vector<8x8xbf16>
    %71 = arith.truncf %69 : vector<8x1xf32> to vector<8x1xbf16>
    %cst_31 = arith.constant dense<0.000000e+00> : vector<8x1xf32>
    %72 = tpu.matmul %70, %71, %cst_31 {dimension_numbers = #tpu.dot_dimension_numbers<[1], [0], [0], [1], [0, 0, 1, 1], [], []>} : vector<8x8xbf16>, vector<8x1xbf16>, vector<8x1xf32> -> vector<8x1xf32>
    %73 = arith.addf %65, %72 : vector<8x1xf32>
    %c0_32 = arith.constant 0 : index
    %c0_33 = arith.constant 0 : index
    %74 = vector.load %arg10[%c0_32, %c0_33] : memref<1x1xf32, #tpu.memory_space<vmem>>, vector<1x1xf32>
    %75 = vector.broadcast %74 : vector<1x1xf32> to vector<8x1xf32>
    %76 = arith.addf %73, %75 : vector<8x1xf32>
    %77 = math.tanh %76 : vector<8x1xf32>
    %78 = vector.broadcast %77 : vector<8x1xf32> to vector<8x128xf32>
    %79 = arith.mulf %61, %78 : vector<8x128xf32>
    %c0_34 = arith.constant 0 : index
    %c0_35 = arith.constant 0 : index
    %80 = vector.load %arg11[%c0_34, %c0_35] : memref<8x128xf32, #tpu.memory_space<vmem>>, vector<8x128xf32>
    tpu.vector_store %arg11[%c0_34, %c0_35], %79 {strides = array<i32>} : memref<8x128xf32, #tpu.memory_space<vmem>>, vector<8x128xf32>,
    %81 = vector.shape_cast %76 : vector<8x1xf32> to vector<8x1xf32>
    %82 = vector.broadcast %81 : vector<8x1xf32> to vector<8x128xf32>
    %c0_36 = arith.constant 0 : index
    %c0_37 = arith.constant 0 : index
    %83 = vector.load %arg12[%c0_36, %c0_37] : memref<8x128xf32, #tpu.memory_space<vmem>>, vector<8x128xf32>
    tpu.vector_store %arg12[%c0_36, %c0_37], %82 {strides = array<i32>} : memref<8x128xf32, #tpu.memory_space<vmem>>, vector<8x128xf32>,
    return
  }
}

module attributes {stable_mosaic.version = 11 : i64} {
  func.func @_bgnn_layer_kernel(%arg0: memref<4x4xf32, #tpu.memory_space<vmem>>, %arg1: memref<4x128xf32, #tpu.memory_space<vmem>>, %arg2: memref<128x128xf32, #tpu.memory_space<vmem>>, %arg3: memref<1x128xf32, #tpu.memory_space<vmem>>, %arg4: memref<128x128xf32, #tpu.memory_space<vmem>>, %arg5: memref<1x128xf32, #tpu.memory_space<vmem>>, %arg6: memref<1x128xf32, #tpu.memory_space<vmem>>, %arg7: memref<1x128xf32, #tpu.memory_space<vmem>>, %arg8: memref<128x1xf32, #tpu.memory_space<vmem>>, %arg9: memref<128x1xf32, #tpu.memory_space<vmem>>, %arg10: memref<1x1xf32, #tpu.memory_space<vmem>>, %arg11: memref<4x128xf32, #tpu.memory_space<vmem>>, %arg12: memref<4x128xf32, #tpu.memory_space<vmem>>) attributes {dimension_semantics = [], scalar_prefetch = 0 : i64, scratch_operands = 0 : i64, tpu.core_type = #tpu.core_type<tc>} {
    %c0 = arith.constant 0 : index
    %c0_0 = arith.constant 0 : index
    %0 = vector.load %arg0[%c0, %c0_0] : memref<4x4xf32, #tpu.memory_space<vmem>>, vector<4x4xf32>
    %c0_1 = arith.constant 0 : index
    %c0_2 = arith.constant 0 : index
    %1 = vector.load %arg1[%c0_1, %c0_2] : memref<4x128xf32, #tpu.memory_space<vmem>>, vector<4x128xf32>
    %c0_3 = arith.constant 0 : index
    %c0_4 = arith.constant 0 : index
    %2 = vector.load %arg2[%c0_3, %c0_4] : memref<128x128xf32, #tpu.memory_space<vmem>>, vector<128x128xf32>
    %3 = arith.truncf %1 : vector<4x128xf32> to vector<4x128xbf16>
    %4 = arith.truncf %2 : vector<128x128xf32> to vector<128x128xbf16>
    %cst = arith.constant dense<0.000000e+00> : vector<4x128xf32>
    %5 = tpu.matmul %3, %4, %cst {dimension_numbers = #tpu.dot_dimension_numbers<[1], [0], [0], [1], [0, 0, 1, 1], [], []>} : vector<4x128xbf16>, vector<128x128xbf16>, vector<4x128xf32> -> vector<4x128xf32>
    %6 = tpu.iota {dimensions = array<i32: 0>} : vector<4x4xi32>
    %7 = tpu.iota {dimensions = array<i32: 1>} : vector<4x4xi32>
    %8 = arith.cmpi eq, %6, %7 : vector<4x4xi32>
    %9 = arith.extui %8 : vector<4x4xi1> to vector<4x4xi32>
    %10 = arith.sitofp %9 : vector<4x4xi32> to vector<4x4xf32>
    %11 = arith.addf %0, %10 : vector<4x4xf32>
    %cst_5 = arith.constant dense<0.000000e+00> : vector<4xf32>
    %12 = vector.multi_reduction <add>, %11, %cst_5 [1] : vector<4x4xf32> to vector<4xf32>
    %13 = vector.shape_cast %12 : vector<4xf32> to vector<4x1xf32>
    %cst_6 = arith.constant 9.99999996E-13 : f32
    %14 = vector.broadcast %cst_6 : f32 to vector<4x1xf32>
    %15 = arith.maximumf %13, %14 : vector<4x1xf32>
    %16 = math.rsqrt %15 : vector<4x1xf32>
    %17 = vector.broadcast %16 : vector<4x1xf32> to vector<4x128xf32>
    %18 = arith.mulf %17, %5 : vector<4x128xf32>
    %19 = arith.truncf %11 : vector<4x4xf32> to vector<4x4xbf16>
    %20 = arith.truncf %18 : vector<4x128xf32> to vector<4x128xbf16>
    %cst_7 = arith.constant dense<0.000000e+00> : vector<4x128xf32>
    %21 = tpu.matmul %19, %20, %cst_7 {dimension_numbers = #tpu.dot_dimension_numbers<[1], [0], [0], [1], [0, 0, 1, 1], [], []>} : vector<4x4xbf16>, vector<4x128xbf16>, vector<4x128xf32> -> vector<4x128xf32>
    %22 = vector.broadcast %16 : vector<4x1xf32> to vector<4x128xf32>
    %23 = arith.mulf %22, %21 : vector<4x128xf32>
    %c0_8 = arith.constant 0 : index
    %c0_9 = arith.constant 0 : index
    %24 = vector.load %arg3[%c0_8, %c0_9] : memref<1x128xf32, #tpu.memory_space<vmem>>, vector<1x128xf32>
    %25 = vector.broadcast %24 : vector<1x128xf32> to vector<4x128xf32>
    %26 = arith.addf %23, %25 : vector<4x128xf32>
    %c0_10 = arith.constant 0 : index
    %c0_11 = arith.constant 0 : index
    %27 = vector.load %arg4[%c0_10, %c0_11] : memref<128x128xf32, #tpu.memory_space<vmem>>, vector<128x128xf32>
    %28 = arith.truncf %26 : vector<4x128xf32> to vector<4x128xbf16>
    %29 = arith.truncf %27 : vector<128x128xf32> to vector<128x128xbf16>
    %cst_12 = arith.constant dense<0.000000e+00> : vector<4x128xf32>
    %30 = tpu.matmul %28, %29, %cst_12 {dimension_numbers = #tpu.dot_dimension_numbers<[1], [0], [0], [1], [0, 0, 1, 1], [], []>} : vector<4x128xbf16>, vector<128x128xbf16>, vector<4x128xf32> -> vector<4x128xf32>
    %c0_13 = arith.constant 0 : index
    %c0_14 = arith.constant 0 : index
    %31 = vector.load %arg5[%c0_13, %c0_14] : memref<1x128xf32, #tpu.memory_space<vmem>>, vector<1x128xf32>
    %32 = vector.broadcast %31 : vector<1x128xf32> to vector<4x128xf32>
    %33 = arith.addf %30, %32 : vector<4x128xf32>
    %cst_15 = arith.constant 0.000000e+00 : f32
    %34 = vector.broadcast %cst_15 : f32 to vector<4x128xf32>
    %35 = arith.maximumf %33, %34 : vector<4x128xf32>
    %c0_16 = arith.constant 0 : index
    %c0_17 = arith.constant 0 : index
    %36 = vector.load %arg6[%c0_16, %c0_17] : memref<1x128xf32, #tpu.memory_space<vmem>>, vector<1x128xf32>
    %c0_18 = arith.constant 0 : index
    %c0_19 = arith.constant 0 : index
    %37 = vector.load %arg7[%c0_18, %c0_19] : memref<1x128xf32, #tpu.memory_space<vmem>>, vector<1x128xf32>
    %cst_20 = arith.constant dense<0.000000e+00> : vector<128xf32>
    %38 = vector.multi_reduction <add>, %35, %cst_20 [0] : vector<4x128xf32> to vector<128xf32>
    %39 = vector.shape_cast %38 : vector<128xf32> to vector<1x128xf32>
    %cst_21 = arith.constant 4.000000e+00 : f32
    %40 = vector.broadcast %cst_21 : f32 to vector<1x128xf32>
    %41 = arith.divf %39, %40 : vector<1x128xf32>
    %42 = vector.broadcast %41 : vector<1x128xf32> to vector<4x128xf32>
    %43 = arith.subf %35, %42 : vector<4x128xf32>
    %44 = vector.broadcast %41 : vector<1x128xf32> to vector<4x128xf32>
    %45 = arith.subf %35, %44 : vector<4x128xf32>
    %46 = arith.mulf %43, %45 : vector<4x128xf32>
    %cst_22 = arith.constant dense<0.000000e+00> : vector<128xf32>
    %47 = vector.multi_reduction <add>, %46, %cst_22 [0] : vector<4x128xf32> to vector<128xf32>
    %48 = vector.shape_cast %47 : vector<128xf32> to vector<1x128xf32>
    %cst_23 = arith.constant 4.000000e+00 : f32
    %49 = vector.broadcast %cst_23 : f32 to vector<1x128xf32>
    %50 = arith.divf %48, %49 : vector<1x128xf32>
    %51 = vector.broadcast %41 : vector<1x128xf32> to vector<4x128xf32>
    %52 = arith.subf %35, %51 : vector<4x128xf32>
    %cst_24 = arith.constant 9.99999974E-6 : f32
    %53 = vector.broadcast %cst_24 : f32 to vector<1x128xf32>
    %54 = arith.addf %50, %53 : vector<1x128xf32>
    %55 = math.rsqrt %54 : vector<1x128xf32>
    %56 = vector.broadcast %55 : vector<1x128xf32> to vector<4x128xf32>
    %57 = arith.mulf %52, %56 : vector<4x128xf32>
    %58 = vector.broadcast %36 : vector<1x128xf32> to vector<4x128xf32>
    %59 = arith.mulf %57, %58 : vector<4x128xf32>
    %60 = vector.broadcast %37 : vector<1x128xf32> to vector<4x128xf32>
    %61 = arith.addf %59, %60 : vector<4x128xf32>
    %c0_25 = arith.constant 0 : index
    %c0_26 = arith.constant 0 : index
    %62 = vector.load %arg8[%c0_25, %c0_26] : memref<128x1xf32, #tpu.memory_space<vmem>>, vector<128x1xf32>
    %63 = arith.truncf %61 : vector<4x128xf32> to vector<4x128xbf16>
    %64 = arith.truncf %62 : vector<128x1xf32> to vector<128x1xbf16>
    %cst_27 = arith.constant dense<0.000000e+00> : vector<4x1xf32>
    %65 = tpu.matmul %63, %64, %cst_27 {dimension_numbers = #tpu.dot_dimension_numbers<[1], [0], [0], [1], [0, 0, 1, 1], [], []>} : vector<4x128xbf16>, vector<128x1xbf16>, vector<4x1xf32> -> vector<4x1xf32>
    %c0_28 = arith.constant 0 : index
    %c0_29 = arith.constant 0 : index
    %66 = vector.load %arg9[%c0_28, %c0_29] : memref<128x1xf32, #tpu.memory_space<vmem>>, vector<128x1xf32>
    %67 = arith.truncf %61 : vector<4x128xf32> to vector<4x128xbf16>
    %68 = arith.truncf %66 : vector<128x1xf32> to vector<128x1xbf16>
    %cst_30 = arith.constant dense<0.000000e+00> : vector<4x1xf32>
    %69 = tpu.matmul %67, %68, %cst_30 {dimension_numbers = #tpu.dot_dimension_numbers<[1], [0], [0], [1], [0, 0, 1, 1], [], []>} : vector<4x128xbf16>, vector<128x1xbf16>, vector<4x1xf32> -> vector<4x1xf32>
    %70 = arith.truncf %0 : vector<4x4xf32> to vector<4x4xbf16>
    %71 = arith.truncf %69 : vector<4x1xf32> to vector<4x1xbf16>
    %cst_31 = arith.constant dense<0.000000e+00> : vector<4x1xf32>
    %72 = tpu.matmul %70, %71, %cst_31 {dimension_numbers = #tpu.dot_dimension_numbers<[1], [0], [0], [1], [0, 0, 1, 1], [], []>} : vector<4x4xbf16>, vector<4x1xbf16>, vector<4x1xf32> -> vector<4x1xf32>
    %73 = arith.addf %65, %72 : vector<4x1xf32>
    %c0_32 = arith.constant 0 : index
    %c0_33 = arith.constant 0 : index
    %74 = vector.load %arg10[%c0_32, %c0_33] : memref<1x1xf32, #tpu.memory_space<vmem>>, vector<1x1xf32>
    %75 = vector.broadcast %74 : vector<1x1xf32> to vector<4x1xf32>
    %76 = arith.addf %73, %75 : vector<4x1xf32>
    %77 = math.tanh %76 : vector<4x1xf32>
    %78 = vector.broadcast %77 : vector<4x1xf32> to vector<4x128xf32>
    %79 = arith.mulf %61, %78 : vector<4x128xf32>
    %c0_34 = arith.constant 0 : index
    %c0_35 = arith.constant 0 : index
    %80 = vector.load %arg11[%c0_34, %c0_35] : memref<4x128xf32, #tpu.memory_space<vmem>>, vector<4x128xf32>
    tpu.vector_store %arg11[%c0_34, %c0_35], %79 {strides = array<i32>} : memref<4x128xf32, #tpu.memory_space<vmem>>, vector<4x128xf32>,
    %81 = vector.shape_cast %76 : vector<4x1xf32> to vector<4x1xf32>
    %82 = vector.broadcast %81 : vector<4x1xf32> to vector<4x128xf32>
    %c0_36 = arith.constant 0 : index
    %c0_37 = arith.constant 0 : index
    %83 = vector.load %arg12[%c0_36, %c0_37] : memref<4x128xf32, #tpu.memory_space<vmem>>, vector<4x128xf32>
    tpu.vector_store %arg12[%c0_36, %c0_37], %82 {strides = array<i32>} : memref<4x128xf32, #tpu.memory_space<vmem>>, vector<4x128xf32>,
    return
  }
}

module attributes {stable_mosaic.version = 11 : i64} {
  func.func @_bgnn_layer_kernel(%arg0: memref<2x2xf32, #tpu.memory_space<vmem>>, %arg1: memref<2x128xf32, #tpu.memory_space<vmem>>, %arg2: memref<128x128xf32, #tpu.memory_space<vmem>>, %arg3: memref<1x128xf32, #tpu.memory_space<vmem>>, %arg4: memref<128x128xf32, #tpu.memory_space<vmem>>, %arg5: memref<1x128xf32, #tpu.memory_space<vmem>>, %arg6: memref<1x128xf32, #tpu.memory_space<vmem>>, %arg7: memref<1x128xf32, #tpu.memory_space<vmem>>, %arg8: memref<128x1xf32, #tpu.memory_space<vmem>>, %arg9: memref<128x1xf32, #tpu.memory_space<vmem>>, %arg10: memref<1x1xf32, #tpu.memory_space<vmem>>, %arg11: memref<2x128xf32, #tpu.memory_space<vmem>>, %arg12: memref<2x128xf32, #tpu.memory_space<vmem>>) attributes {dimension_semantics = [], scalar_prefetch = 0 : i64, scratch_operands = 0 : i64, tpu.core_type = #tpu.core_type<tc>} {
    %c0 = arith.constant 0 : index
    %c0_0 = arith.constant 0 : index
    %0 = vector.load %arg0[%c0, %c0_0] : memref<2x2xf32, #tpu.memory_space<vmem>>, vector<2x2xf32>
    %c0_1 = arith.constant 0 : index
    %c0_2 = arith.constant 0 : index
    %1 = vector.load %arg1[%c0_1, %c0_2] : memref<2x128xf32, #tpu.memory_space<vmem>>, vector<2x128xf32>
    %c0_3 = arith.constant 0 : index
    %c0_4 = arith.constant 0 : index
    %2 = vector.load %arg2[%c0_3, %c0_4] : memref<128x128xf32, #tpu.memory_space<vmem>>, vector<128x128xf32>
    %3 = arith.truncf %1 : vector<2x128xf32> to vector<2x128xbf16>
    %4 = arith.truncf %2 : vector<128x128xf32> to vector<128x128xbf16>
    %cst = arith.constant dense<0.000000e+00> : vector<2x128xf32>
    %5 = tpu.matmul %3, %4, %cst {dimension_numbers = #tpu.dot_dimension_numbers<[1], [0], [0], [1], [0, 0, 1, 1], [], []>} : vector<2x128xbf16>, vector<128x128xbf16>, vector<2x128xf32> -> vector<2x128xf32>
    %6 = tpu.iota {dimensions = array<i32: 0>} : vector<2x2xi32>
    %7 = tpu.iota {dimensions = array<i32: 1>} : vector<2x2xi32>
    %8 = arith.cmpi eq, %6, %7 : vector<2x2xi32>
    %9 = arith.extui %8 : vector<2x2xi1> to vector<2x2xi32>
    %10 = arith.sitofp %9 : vector<2x2xi32> to vector<2x2xf32>
    %11 = arith.addf %0, %10 : vector<2x2xf32>
    %cst_5 = arith.constant dense<0.000000e+00> : vector<2xf32>
    %12 = vector.multi_reduction <add>, %11, %cst_5 [1] : vector<2x2xf32> to vector<2xf32>
    %13 = vector.shape_cast %12 : vector<2xf32> to vector<2x1xf32>
    %cst_6 = arith.constant 9.99999996E-13 : f32
    %14 = vector.broadcast %cst_6 : f32 to vector<2x1xf32>
    %15 = arith.maximumf %13, %14 : vector<2x1xf32>
    %16 = math.rsqrt %15 : vector<2x1xf32>
    %17 = vector.broadcast %16 : vector<2x1xf32> to vector<2x128xf32>
    %18 = arith.mulf %17, %5 : vector<2x128xf32>
    %19 = arith.truncf %11 : vector<2x2xf32> to vector<2x2xbf16>
    %20 = arith.truncf %18 : vector<2x128xf32> to vector<2x128xbf16>
    %cst_7 = arith.constant dense<0.000000e+00> : vector<2x128xf32>
    %21 = tpu.matmul %19, %20, %cst_7 {dimension_numbers = #tpu.dot_dimension_numbers<[1], [0], [0], [1], [0, 0, 1, 1], [], []>} : vector<2x2xbf16>, vector<2x128xbf16>, vector<2x128xf32> -> vector<2x128xf32>
    %22 = vector.broadcast %16 : vector<2x1xf32> to vector<2x128xf32>
    %23 = arith.mulf %22, %21 : vector<2x128xf32>
    %c0_8 = arith.constant 0 : index
    %c0_9 = arith.constant 0 : index
    %24 = vector.load %arg3[%c0_8, %c0_9] : memref<1x128xf32, #tpu.memory_space<vmem>>, vector<1x128xf32>
    %25 = vector.broadcast %24 : vector<1x128xf32> to vector<2x128xf32>
    %26 = arith.addf %23, %25 : vector<2x128xf32>
    %c0_10 = arith.constant 0 : index
    %c0_11 = arith.constant 0 : index
    %27 = vector.load %arg4[%c0_10, %c0_11] : memref<128x128xf32, #tpu.memory_space<vmem>>, vector<128x128xf32>
    %28 = arith.truncf %26 : vector<2x128xf32> to vector<2x128xbf16>
    %29 = arith.truncf %27 : vector<128x128xf32> to vector<128x128xbf16>
    %cst_12 = arith.constant dense<0.000000e+00> : vector<2x128xf32>
    %30 = tpu.matmul %28, %29, %cst_12 {dimension_numbers = #tpu.dot_dimension_numbers<[1], [0], [0], [1], [0, 0, 1, 1], [], []>} : vector<2x128xbf16>, vector<128x128xbf16>, vector<2x128xf32> -> vector<2x128xf32>
    %c0_13 = arith.constant 0 : index
    %c0_14 = arith.constant 0 : index
    %31 = vector.load %arg5[%c0_13, %c0_14] : memref<1x128xf32, #tpu.memory_space<vmem>>, vector<1x128xf32>
    %32 = vector.broadcast %31 : vector<1x128xf32> to vector<2x128xf32>
    %33 = arith.addf %30, %32 : vector<2x128xf32>
    %cst_15 = arith.constant 0.000000e+00 : f32
    %34 = vector.broadcast %cst_15 : f32 to vector<2x128xf32>
    %35 = arith.maximumf %33, %34 : vector<2x128xf32>
    %c0_16 = arith.constant 0 : index
    %c0_17 = arith.constant 0 : index
    %36 = vector.load %arg6[%c0_16, %c0_17] : memref<1x128xf32, #tpu.memory_space<vmem>>, vector<1x128xf32>
    %c0_18 = arith.constant 0 : index
    %c0_19 = arith.constant 0 : index
    %37 = vector.load %arg7[%c0_18, %c0_19] : memref<1x128xf32, #tpu.memory_space<vmem>>, vector<1x128xf32>
    %cst_20 = arith.constant dense<0.000000e+00> : vector<128xf32>
    %38 = vector.multi_reduction <add>, %35, %cst_20 [0] : vector<2x128xf32> to vector<128xf32>
    %39 = vector.shape_cast %38 : vector<128xf32> to vector<1x128xf32>
    %cst_21 = arith.constant 2.000000e+00 : f32
    %40 = vector.broadcast %cst_21 : f32 to vector<1x128xf32>
    %41 = arith.divf %39, %40 : vector<1x128xf32>
    %42 = vector.broadcast %41 : vector<1x128xf32> to vector<2x128xf32>
    %43 = arith.subf %35, %42 : vector<2x128xf32>
    %44 = vector.broadcast %41 : vector<1x128xf32> to vector<2x128xf32>
    %45 = arith.subf %35, %44 : vector<2x128xf32>
    %46 = arith.mulf %43, %45 : vector<2x128xf32>
    %cst_22 = arith.constant dense<0.000000e+00> : vector<128xf32>
    %47 = vector.multi_reduction <add>, %46, %cst_22 [0] : vector<2x128xf32> to vector<128xf32>
    %48 = vector.shape_cast %47 : vector<128xf32> to vector<1x128xf32>
    %cst_23 = arith.constant 2.000000e+00 : f32
    %49 = vector.broadcast %cst_23 : f32 to vector<1x128xf32>
    %50 = arith.divf %48, %49 : vector<1x128xf32>
    %51 = vector.broadcast %41 : vector<1x128xf32> to vector<2x128xf32>
    %52 = arith.subf %35, %51 : vector<2x128xf32>
    %cst_24 = arith.constant 9.99999974E-6 : f32
    %53 = vector.broadcast %cst_24 : f32 to vector<1x128xf32>
    %54 = arith.addf %50, %53 : vector<1x128xf32>
    %55 = math.rsqrt %54 : vector<1x128xf32>
    %56 = vector.broadcast %55 : vector<1x128xf32> to vector<2x128xf32>
    %57 = arith.mulf %52, %56 : vector<2x128xf32>
    %58 = vector.broadcast %36 : vector<1x128xf32> to vector<2x128xf32>
    %59 = arith.mulf %57, %58 : vector<2x128xf32>
    %60 = vector.broadcast %37 : vector<1x128xf32> to vector<2x128xf32>
    %61 = arith.addf %59, %60 : vector<2x128xf32>
    %c0_25 = arith.constant 0 : index
    %c0_26 = arith.constant 0 : index
    %62 = vector.load %arg8[%c0_25, %c0_26] : memref<128x1xf32, #tpu.memory_space<vmem>>, vector<128x1xf32>
    %63 = arith.truncf %61 : vector<2x128xf32> to vector<2x128xbf16>
    %64 = arith.truncf %62 : vector<128x1xf32> to vector<128x1xbf16>
    %cst_27 = arith.constant dense<0.000000e+00> : vector<2x1xf32>
    %65 = tpu.matmul %63, %64, %cst_27 {dimension_numbers = #tpu.dot_dimension_numbers<[1], [0], [0], [1], [0, 0, 1, 1], [], []>} : vector<2x128xbf16>, vector<128x1xbf16>, vector<2x1xf32> -> vector<2x1xf32>
    %c0_28 = arith.constant 0 : index
    %c0_29 = arith.constant 0 : index
    %66 = vector.load %arg9[%c0_28, %c0_29] : memref<128x1xf32, #tpu.memory_space<vmem>>, vector<128x1xf32>
    %67 = arith.truncf %61 : vector<2x128xf32> to vector<2x128xbf16>
    %68 = arith.truncf %66 : vector<128x1xf32> to vector<128x1xbf16>
    %cst_30 = arith.constant dense<0.000000e+00> : vector<2x1xf32>
    %69 = tpu.matmul %67, %68, %cst_30 {dimension_numbers = #tpu.dot_dimension_numbers<[1], [0], [0], [1], [0, 0, 1, 1], [], []>} : vector<2x128xbf16>, vector<128x1xbf16>, vector<2x1xf32> -> vector<2x1xf32>
    %70 = arith.truncf %0 : vector<2x2xf32> to vector<2x2xbf16>
    %71 = arith.truncf %69 : vector<2x1xf32> to vector<2x1xbf16>
    %cst_31 = arith.constant dense<0.000000e+00> : vector<2x1xf32>
    %72 = tpu.matmul %70, %71, %cst_31 {dimension_numbers = #tpu.dot_dimension_numbers<[1], [0], [0], [1], [0, 0, 1, 1], [], []>} : vector<2x2xbf16>, vector<2x1xbf16>, vector<2x1xf32> -> vector<2x1xf32>
    %73 = arith.addf %65, %72 : vector<2x1xf32>
    %c0_32 = arith.constant 0 : index
    %c0_33 = arith.constant 0 : index
    %74 = vector.load %arg10[%c0_32, %c0_33] : memref<1x1xf32, #tpu.memory_space<vmem>>, vector<1x1xf32>
    %75 = vector.broadcast %74 : vector<1x1xf32> to vector<2x1xf32>
    %76 = arith.addf %73, %75 : vector<2x1xf32>
    %77 = math.tanh %76 : vector<2x1xf32>
    %78 = vector.broadcast %77 : vector<2x1xf32> to vector<2x128xf32>
    %79 = arith.mulf %61, %78 : vector<2x128xf32>
    %c0_34 = arith.constant 0 : index
    %c0_35 = arith.constant 0 : index
    %80 = vector.load %arg11[%c0_34, %c0_35] : memref<2x128xf32, #tpu.memory_space<vmem>>, vector<2x128xf32>
    tpu.vector_store %arg11[%c0_34, %c0_35], %79 {strides = array<i32>} : memref<2x128xf32, #tpu.memory_space<vmem>>, vector<2x128xf32>,
    %81 = vector.shape_cast %76 : vector<2x1xf32> to vector<2x1xf32>
    %82 = vector.broadcast %81 : vector<2x1xf32> to vector<2x128xf32>
    %c0_36 = arith.constant 0 : index
    %c0_37 = arith.constant 0 : index
    %83 = vector.load %arg12[%c0_36, %c0_37] : memref<2x128xf32, #tpu.memory_space<vmem>>, vector<2x128xf32>
    tpu.vector_store %arg12[%c0_36, %c0_37], %82 {strides = array<i32>} : memref<2x128xf32, #tpu.memory_space<vmem>>, vector<2x128xf32>,
    return
  }
}

module attributes {stable_mosaic.version = 11 : i64} {
  func.func @_labg_kernel(%arg0: memref<7x7xf32, #tpu.memory_space<vmem>>, %arg1: memref<7x200xf32, #tpu.memory_space<vmem>>, %arg2: memref<200x64xf32, #tpu.memory_space<vmem>>, %arg3: memref<1x64xf32, #tpu.memory_space<vmem>>, %arg4: memref<1x64xf32, #tpu.memory_space<vmem>>, %arg5: memref<1x64xf32, #tpu.memory_space<vmem>>, %arg6: memref<7x64xf32, #tpu.memory_space<vmem>>) attributes {dimension_semantics = [], scalar_prefetch = 0 : i64, scratch_operands = 0 : i64, tpu.core_type = #tpu.core_type<tc>} {
    %c0 = arith.constant 0 : index
    %c0_0 = arith.constant 0 : index
    %0 = vector.load %arg0[%c0, %c0_0] : memref<7x7xf32, #tpu.memory_space<vmem>>, vector<7x7xf32>
    %c0_1 = arith.constant 0 : index
    %c0_2 = arith.constant 0 : index
    %1 = vector.load %arg1[%c0_1, %c0_2] : memref<7x200xf32, #tpu.memory_space<vmem>>, vector<7x200xf32>
    %c0_3 = arith.constant 0 : index
    %c0_4 = arith.constant 0 : index
    %2 = vector.load %arg2[%c0_3, %c0_4] : memref<200x64xf32, #tpu.memory_space<vmem>>, vector<200x64xf32>
    %3 = arith.truncf %1 : vector<7x200xf32> to vector<7x200xbf16>
    %4 = arith.truncf %2 : vector<200x64xf32> to vector<200x64xbf16>
    %cst = arith.constant dense<0.000000e+00> : vector<7x64xf32>
    %5 = tpu.matmul %3, %4, %cst {dimension_numbers = #tpu.dot_dimension_numbers<[1], [0], [0], [1], [0, 0, 1, 1], [], []>} : vector<7x200xbf16>, vector<200x64xbf16>, vector<7x64xf32> -> vector<7x64xf32>
    %6 = tpu.iota {dimensions = array<i32: 0>} : vector<7x7xi32>
    %7 = tpu.iota {dimensions = array<i32: 1>} : vector<7x7xi32>
    %8 = arith.cmpi eq, %6, %7 : vector<7x7xi32>
    %9 = arith.extui %8 : vector<7x7xi1> to vector<7x7xi32>
    %10 = arith.sitofp %9 : vector<7x7xi32> to vector<7x7xf32>
    %11 = arith.addf %0, %10 : vector<7x7xf32>
    %cst_5 = arith.constant dense<0.000000e+00> : vector<7xf32>
    %12 = vector.multi_reduction <add>, %11, %cst_5 [1] : vector<7x7xf32> to vector<7xf32>
    %13 = vector.shape_cast %12 : vector<7xf32> to vector<7x1xf32>
    %cst_6 = arith.constant 9.99999996E-13 : f32
    %14 = vector.broadcast %cst_6 : f32 to vector<7x1xf32>
    %15 = arith.maximumf %13, %14 : vector<7x1xf32>
    %16 = math.rsqrt %15 : vector<7x1xf32>
    %17 = vector.broadcast %16 : vector<7x1xf32> to vector<7x64xf32>
    %18 = arith.mulf %17, %5 : vector<7x64xf32>
    %19 = arith.truncf %11 : vector<7x7xf32> to vector<7x7xbf16>
    %20 = arith.truncf %18 : vector<7x64xf32> to vector<7x64xbf16>
    %cst_7 = arith.constant dense<0.000000e+00> : vector<7x64xf32>
    %21 = tpu.matmul %19, %20, %cst_7 {dimension_numbers = #tpu.dot_dimension_numbers<[1], [0], [0], [1], [0, 0, 1, 1], [], []>} : vector<7x7xbf16>, vector<7x64xbf16>, vector<7x64xf32> -> vector<7x64xf32>
    %22 = vector.broadcast %16 : vector<7x1xf32> to vector<7x64xf32>
    %23 = arith.mulf %22, %21 : vector<7x64xf32>
    %c0_8 = arith.constant 0 : index
    %c0_9 = arith.constant 0 : index
    %24 = vector.load %arg3[%c0_8, %c0_9] : memref<1x64xf32, #tpu.memory_space<vmem>>, vector<1x64xf32>
    %25 = vector.broadcast %24 : vector<1x64xf32> to vector<7x64xf32>
    %26 = arith.addf %23, %25 : vector<7x64xf32>
    %cst_10 = arith.constant 0.000000e+00 : f32
    %27 = vector.broadcast %cst_10 : f32 to vector<7x64xf32>
    %28 = arith.maximumf %26, %27 : vector<7x64xf32>
    %c0_11 = arith.constant 0 : index
    %c0_12 = arith.constant 0 : index
    %29 = vector.load %arg4[%c0_11, %c0_12] : memref<1x64xf32, #tpu.memory_space<vmem>>, vector<1x64xf32>
    %c0_13 = arith.constant 0 : index
    %c0_14 = arith.constant 0 : index
    %30 = vector.load %arg5[%c0_13, %c0_14] : memref<1x64xf32, #tpu.memory_space<vmem>>, vector<1x64xf32>
    %cst_15 = arith.constant dense<0.000000e+00> : vector<64xf32>
    %31 = vector.multi_reduction <add>, %28, %cst_15 [0] : vector<7x64xf32> to vector<64xf32>
    %32 = vector.shape_cast %31 : vector<64xf32> to vector<1x64xf32>
    %cst_16 = arith.constant 7.000000e+00 : f32
    %33 = vector.broadcast %cst_16 : f32 to vector<1x64xf32>
    %34 = arith.divf %32, %33 : vector<1x64xf32>
    %35 = vector.broadcast %34 : vector<1x64xf32> to vector<7x64xf32>
    %36 = arith.subf %28, %35 : vector<7x64xf32>
    %37 = vector.broadcast %34 : vector<1x64xf32> to vector<7x64xf32>
    %38 = arith.subf %28, %37 : vector<7x64xf32>
    %39 = arith.mulf %36, %38 : vector<7x64xf32>
    %cst_17 = arith.constant dense<0.000000e+00> : vector<64xf32>
    %40 = vector.multi_reduction <add>, %39, %cst_17 [0] : vector<7x64xf32> to vector<64xf32>
    %41 = vector.shape_cast %40 : vector<64xf32> to vector<1x64xf32>
    %cst_18 = arith.constant 7.000000e+00 : f32
    %42 = vector.broadcast %cst_18 : f32 to vector<1x64xf32>
    %43 = arith.divf %41, %42 : vector<1x64xf32>
    %44 = vector.broadcast %34 : vector<1x64xf32> to vector<7x64xf32>
    %45 = arith.subf %28, %44 : vector<7x64xf32>
    %cst_19 = arith.constant 9.99999974E-6 : f32
    %46 = vector.broadcast %cst_19 : f32 to vector<1x64xf32>
    %47 = arith.addf %43, %46 : vector<1x64xf32>
    %48 = math.rsqrt %47 : vector<1x64xf32>
    %49 = vector.broadcast %48 : vector<1x64xf32> to vector<7x64xf32>
    %50 = arith.mulf %45, %49 : vector<7x64xf32>
    %51 = vector.broadcast %29 : vector<1x64xf32> to vector<7x64xf32>
    %52 = arith.mulf %50, %51 : vector<7x64xf32>
    %53 = vector.broadcast %30 : vector<1x64xf32> to vector<7x64xf32>
    %54 = arith.addf %52, %53 : vector<7x64xf32>
    %c0_20 = arith.constant 0 : index
    %c0_21 = arith.constant 0 : index
    %55 = vector.load %arg6[%c0_20, %c0_21] : memref<7x64xf32, #tpu.memory_space<vmem>>, vector<7x64xf32>
    tpu.vector_store %arg6[%c0_20, %c0_21], %54 {strides = array<i32>} : memref<7x64xf32, #tpu.memory_space<vmem>>, vector<7x64xf32>,
    return
  }
}

module attributes {stable_mosaic.version = 11 : i64} {
  func.func @_tgnn_head_kernel(%arg0: memref<1x1xf32, #tpu.memory_space<smem>>, %arg1: memref<1x1xf32, #tpu.memory_space<smem>>, %arg2: memref<2x2xf32, #tpu.memory_space<vmem>>, %arg3: memref<2x128xf32, #tpu.memory_space<vmem>>, %arg4: memref<2x2xf32, #tpu.memory_space<vmem>>, %arg5: memref<128x512xf32, #tpu.memory_space<vmem>>, %arg6: memref<1x512xf32, #tpu.memory_space<vmem>>, %arg7: memref<512x512xf32, #tpu.memory_space<vmem>>, %arg8: memref<1x512xf32, #tpu.memory_space<vmem>>, %arg9: memref<1x512xf32, #tpu.memory_space<vmem>>, %arg10: memref<1x512xf32, #tpu.memory_space<vmem>>, %arg11: memref<512x512xf32, #tpu.memory_space<vmem>>, %arg12: memref<1x512xf32, #tpu.memory_space<vmem>>, %arg13: memref<1x512xf32, #tpu.memory_space<vmem>>, %arg14: memref<1x512xf32, #tpu.memory_space<vmem>>, %arg15: memref<512x512xf32, #tpu.memory_space<vmem>>, %arg16: memref<1x512xf32, #tpu.memory_space<vmem>>, %arg17: memref<512x64xf32, #tpu.memory_space<vmem>>, %arg18: memref<1x64xf32, #tpu.memory_space<vmem>>, %arg19: memref<4x2xf32, #tpu.memory_space<vmem>>, %arg20: memref<4x2xf32, #tpu.memory_space<vmem>>, %arg21: memref<7x64xf32, #tpu.memory_space<vmem>>, %arg22: memref<4x7xf32, #tpu.memory_space<vmem>>) attributes {dimension_semantics = [], scalar_prefetch = 0 : i64, scratch_operands = 0 : i64, tpu.core_type = #tpu.core_type<tc>} {
    %c0 = arith.constant 0 : index
    %c0_0 = arith.constant 0 : index
    %0 = vector.load %arg2[%c0, %c0_0] : memref<2x2xf32, #tpu.memory_space<vmem>>, vector<2x2xf32>
    %c0_1 = arith.constant 0 : index
    %c0_2 = arith.constant 0 : index
    %1 = vector.load %arg3[%c0_1, %c0_2] : memref<2x128xf32, #tpu.memory_space<vmem>>, vector<2x128xf32>
    %2 = arith.truncf %0 : vector<2x2xf32> to vector<2x2xbf16>
    %3 = arith.truncf %1 : vector<2x128xf32> to vector<2x128xbf16>
    %cst = arith.constant dense<0.000000e+00> : vector<2x128xf32>
    %4 = tpu.matmul %2, %3, %cst {dimension_numbers = #tpu.dot_dimension_numbers<[1], [0], [0], [1], [0, 0, 1, 1], [], []>} : vector<2x2xbf16>, vector<2x128xbf16>, vector<2x128xf32> -> vector<2x128xf32>
    %c0_3 = arith.constant 0 : index
    %c0_4 = arith.constant 0 : index
    %5 = vector.load %arg4[%c0_3, %c0_4] : memref<2x2xf32, #tpu.memory_space<vmem>>, vector<2x2xf32>
    %c0_5 = arith.constant 0 : index
    %c0_6 = arith.constant 0 : index
    %6 = memref.load %arg0[%c0_5, %c0_6] : memref<1x1xf32, #tpu.memory_space<smem>>
    %c0_7 = arith.constant 0 : index
    %c0_8 = arith.constant 0 : index
    %7 = memref.load %arg1[%c0_7, %c0_8] : memref<1x1xf32, #tpu.memory_space<smem>>
    %cst_9 = arith.constant 1.000000e+00 : f32
    %8 = arith.addf %cst_9, %6 : f32
    %9 = vector.broadcast %8 : f32 to vector<2x128xf32>
    %10 = arith.mulf %9, %4 : vector<2x128xf32>
    %11 = arith.truncf %5 : vector<2x2xf32> to vector<2x2xbf16>
    %12 = arith.truncf %4 : vector<2x128xf32> to vector<2x128xbf16>
    %cst_10 = arith.constant dense<0.000000e+00> : vector<2x128xf32>
    %13 = tpu.matmul %11, %12, %cst_10 {dimension_numbers = #tpu.dot_dimension_numbers<[1], [0], [0], [1], [0, 0, 1, 1], [], []>} : vector<2x2xbf16>, vector<2x128xbf16>, vector<2x128xf32> -> vector<2x128xf32>
    %14 = arith.addf %10, %13 : vector<2x128xf32>
    %c0_11 = arith.constant 0 : index
    %c0_12 = arith.constant 0 : index
    %15 = vector.load %arg5[%c0_11, %c0_12] : memref<128x512xf32, #tpu.memory_space<vmem>>, vector<128x512xf32>
    %16 = arith.truncf %14 : vector<2x128xf32> to vector<2x128xbf16>
    %17 = arith.truncf %15 : vector<128x512xf32> to vector<128x512xbf16>
    %cst_13 = arith.constant dense<0.000000e+00> : vector<2x512xf32>
    %18 = tpu.matmul %16, %17, %cst_13 {dimension_numbers = #tpu.dot_dimension_numbers<[1], [0], [0], [1], [0, 0, 1, 1], [], []>} : vector<2x128xbf16>, vector<128x512xbf16>, vector<2x512xf32> -> vector<2x512xf32>
    %c0_14 = arith.constant 0 : index
    %c0_15 = arith.constant 0 : index
    %19 = vector.load %arg6[%c0_14, %c0_15] : memref<1x512xf32, #tpu.memory_space<vmem>>, vector<1x512xf32>
    %20 = vector.broadcast %19 : vector<1x512xf32> to vector<2x512xf32>
    %21 = arith.addf %18, %20 : vector<2x512xf32>
    %cst_16 = arith.constant 0.000000e+00 : f32
    %22 = vector.broadcast %cst_16 : f32 to vector<2x512xf32>
    %23 = arith.maximumf %21, %22 : vector<2x512xf32>
    %c0_17 = arith.constant 0 : index
    %c0_18 = arith.constant 0 : index
    %24 = vector.load %arg7[%c0_17, %c0_18] : memref<512x512xf32, #tpu.memory_space<vmem>>, vector<512x512xf32>
    %25 = arith.truncf %23 : vector<2x512xf32> to vector<2x512xbf16>
    %26 = arith.truncf %24 : vector<512x512xf32> to vector<512x512xbf16>
    %cst_19 = arith.constant dense<0.000000e+00> : vector<2x512xf32>
    %27 = tpu.matmul %25, %26, %cst_19 {dimension_numbers = #tpu.dot_dimension_numbers<[1], [0], [0], [1], [0, 0, 1, 1], [], []>} : vector<2x512xbf16>, vector<512x512xbf16>, vector<2x512xf32> -> vector<2x512xf32>
    %c0_20 = arith.constant 0 : index
    %c0_21 = arith.constant 0 : index
    %28 = vector.load %arg8[%c0_20, %c0_21] : memref<1x512xf32, #tpu.memory_space<vmem>>, vector<1x512xf32>
    %29 = vector.broadcast %28 : vector<1x512xf32> to vector<2x512xf32>
    %30 = arith.addf %27, %29 : vector<2x512xf32>
    %cst_22 = arith.constant 0.000000e+00 : f32
    %31 = vector.broadcast %cst_22 : f32 to vector<2x512xf32>
    %32 = arith.maximumf %30, %31 : vector<2x512xf32>
    %c0_23 = arith.constant 0 : index
    %c0_24 = arith.constant 0 : index
    %33 = vector.load %arg9[%c0_23, %c0_24] : memref<1x512xf32, #tpu.memory_space<vmem>>, vector<1x512xf32>
    %c0_25 = arith.constant 0 : index
    %c0_26 = arith.constant 0 : index
    %34 = vector.load %arg10[%c0_25, %c0_26] : memref<1x512xf32, #tpu.memory_space<vmem>>, vector<1x512xf32>
    %cst_27 = arith.constant dense<0.000000e+00> : vector<512xf32>
    %35 = vector.multi_reduction <add>, %32, %cst_27 [0] : vector<2x512xf32> to vector<512xf32>
    %36 = vector.shape_cast %35 : vector<512xf32> to vector<1x512xf32>
    %cst_28 = arith.constant 2.000000e+00 : f32
    %37 = vector.broadcast %cst_28 : f32 to vector<1x512xf32>
    %38 = arith.divf %36, %37 : vector<1x512xf32>
    %39 = vector.broadcast %38 : vector<1x512xf32> to vector<2x512xf32>
    %40 = arith.subf %32, %39 : vector<2x512xf32>
    %41 = vector.broadcast %38 : vector<1x512xf32> to vector<2x512xf32>
    %42 = arith.subf %32, %41 : vector<2x512xf32>
    %43 = arith.mulf %40, %42 : vector<2x512xf32>
    %cst_29 = arith.constant dense<0.000000e+00> : vector<512xf32>
    %44 = vector.multi_reduction <add>, %43, %cst_29 [0] : vector<2x512xf32> to vector<512xf32>
    %45 = vector.shape_cast %44 : vector<512xf32> to vector<1x512xf32>
    %cst_30 = arith.constant 2.000000e+00 : f32
    %46 = vector.broadcast %cst_30 : f32 to vector<1x512xf32>
    %47 = arith.divf %45, %46 : vector<1x512xf32>
    %48 = vector.broadcast %38 : vector<1x512xf32> to vector<2x512xf32>
    %49 = arith.subf %32, %48 : vector<2x512xf32>
    %cst_31 = arith.constant 9.99999974E-6 : f32
    %50 = vector.broadcast %cst_31 : f32 to vector<1x512xf32>
    %51 = arith.addf %47, %50 : vector<1x512xf32>
    %52 = math.rsqrt %51 : vector<1x512xf32>
    %53 = vector.broadcast %52 : vector<1x512xf32> to vector<2x512xf32>
    %54 = arith.mulf %49, %53 : vector<2x512xf32>
    %55 = vector.broadcast %33 : vector<1x512xf32> to vector<2x512xf32>
    %56 = arith.mulf %54, %55 : vector<2x512xf32>
    %57 = vector.broadcast %34 : vector<1x512xf32> to vector<2x512xf32>
    %58 = arith.addf %56, %57 : vector<2x512xf32>
    %cst_32 = arith.constant 1.000000e+00 : f32
    %59 = arith.addf %cst_32, %7 : f32
    %60 = vector.broadcast %59 : f32 to vector<2x512xf32>
    %61 = arith.mulf %60, %58 : vector<2x512xf32>
    %62 = arith.truncf %5 : vector<2x2xf32> to vector<2x2xbf16>
    %63 = arith.truncf %58 : vector<2x512xf32> to vector<2x512xbf16>
    %cst_33 = arith.constant dense<0.000000e+00> : vector<2x512xf32>
    %64 = tpu.matmul %62, %63, %cst_33 {dimension_numbers = #tpu.dot_dimension_numbers<[1], [0], [0], [1], [0, 0, 1, 1], [], []>} : vector<2x2xbf16>, vector<2x512xbf16>, vector<2x512xf32> -> vector<2x512xf32>
    %65 = arith.addf %61, %64 : vector<2x512xf32>
    %c0_34 = arith.constant 0 : index
    %c0_35 = arith.constant 0 : index
    %66 = vector.load %arg11[%c0_34, %c0_35] : memref<512x512xf32, #tpu.memory_space<vmem>>, vector<512x512xf32>
    %67 = arith.truncf %65 : vector<2x512xf32> to vector<2x512xbf16>
    %68 = arith.truncf %66 : vector<512x512xf32> to vector<512x512xbf16>
    %cst_36 = arith.constant dense<0.000000e+00> : vector<2x512xf32>
    %69 = tpu.matmul %67, %68, %cst_36 {dimension_numbers = #tpu.dot_dimension_numbers<[1], [0], [0], [1], [0, 0, 1, 1], [], []>} : vector<2x512xbf16>, vector<512x512xbf16>, vector<2x512xf32> -> vector<2x512xf32>
    %c0_37 = arith.constant 0 : index
    %c0_38 = arith.constant 0 : index
    %70 = vector.load %arg12[%c0_37, %c0_38] : memref<1x512xf32, #tpu.memory_space<vmem>>, vector<1x512xf32>
    %71 = vector.broadcast %70 : vector<1x512xf32> to vector<2x512xf32>
    %72 = arith.addf %69, %71 : vector<2x512xf32>
    %cst_39 = arith.constant 0.000000e+00 : f32
    %73 = vector.broadcast %cst_39 : f32 to vector<2x512xf32>
    %74 = arith.maximumf %72, %73 : vector<2x512xf32>
    %c0_40 = arith.constant 0 : index
    %c0_41 = arith.constant 0 : index
    %75 = vector.load %arg13[%c0_40, %c0_41] : memref<1x512xf32, #tpu.memory_space<vmem>>, vector<1x512xf32>
    %c0_42 = arith.constant 0 : index
    %c0_43 = arith.constant 0 : index
    %76 = vector.load %arg14[%c0_42, %c0_43] : memref<1x512xf32, #tpu.memory_space<vmem>>, vector<1x512xf32>
    %cst_44 = arith.constant dense<0.000000e+00> : vector<512xf32>
    %77 = vector.multi_reduction <add>, %74, %cst_44 [0] : vector<2x512xf32> to vector<512xf32>
    %78 = vector.shape_cast %77 : vector<512xf32> to vector<1x512xf32>
    %cst_45 = arith.constant 2.000000e+00 : f32
    %79 = vector.broadcast %cst_45 : f32 to vector<1x512xf32>
    %80 = arith.divf %78, %79 : vector<1x512xf32>
    %81 = vector.broadcast %80 : vector<1x512xf32> to vector<2x512xf32>
    %82 = arith.subf %74, %81 : vector<2x512xf32>
    %83 = vector.broadcast %80 : vector<1x512xf32> to vector<2x512xf32>
    %84 = arith.subf %74, %83 : vector<2x512xf32>
    %85 = arith.mulf %82, %84 : vector<2x512xf32>
    %cst_46 = arith.constant dense<0.000000e+00> : vector<512xf32>
    %86 = vector.multi_reduction <add>, %85, %cst_46 [0] : vector<2x512xf32> to vector<512xf32>
    %87 = vector.shape_cast %86 : vector<512xf32> to vector<1x512xf32>
    %cst_47 = arith.constant 2.000000e+00 : f32
    %88 = vector.broadcast %cst_47 : f32 to vector<1x512xf32>
    %89 = arith.divf %87, %88 : vector<1x512xf32>
    %90 = vector.broadcast %80 : vector<1x512xf32> to vector<2x512xf32>
    %91 = arith.subf %74, %90 : vector<2x512xf32>
    %cst_48 = arith.constant 9.99999974E-6 : f32
    %92 = vector.broadcast %cst_48 : f32 to vector<1x512xf32>
    %93 = arith.addf %89, %92 : vector<1x512xf32>
    %94 = math.rsqrt %93 : vector<1x512xf32>
    %95 = vector.broadcast %94 : vector<1x512xf32> to vector<2x512xf32>
    %96 = arith.mulf %91, %95 : vector<2x512xf32>
    %97 = vector.broadcast %75 : vector<1x512xf32> to vector<2x512xf32>
    %98 = arith.mulf %96, %97 : vector<2x512xf32>
    %99 = vector.broadcast %76 : vector<1x512xf32> to vector<2x512xf32>
    %100 = arith.addf %98, %99 : vector<2x512xf32>
    %c0_49 = arith.constant 0 : index
    %c0_50 = arith.constant 0 : index
    %101 = vector.load %arg15[%c0_49, %c0_50] : memref<512x512xf32, #tpu.memory_space<vmem>>, vector<512x512xf32>
    %102 = arith.truncf %100 : vector<2x512xf32> to vector<2x512xbf16>
    %103 = arith.truncf %101 : vector<512x512xf32> to vector<512x512xbf16>
    %cst_51 = arith.constant dense<0.000000e+00> : vector<2x512xf32>
    %104 = tpu.matmul %102, %103, %cst_51 {dimension_numbers = #tpu.dot_dimension_numbers<[1], [0], [0], [1], [0, 0, 1, 1], [], []>} : vector<2x512xbf16>, vector<512x512xbf16>, vector<2x512xf32> -> vector<2x512xf32>
    %c0_52 = arith.constant 0 : index
    %c0_53 = arith.constant 0 : index
    %105 = vector.load %arg16[%c0_52, %c0_53] : memref<1x512xf32, #tpu.memory_space<vmem>>, vector<1x512xf32>
    %106 = vector.broadcast %105 : vector<1x512xf32> to vector<2x512xf32>
    %107 = arith.addf %104, %106 : vector<2x512xf32>
    %cst_54 = arith.constant 0.000000e+00 : f32
    %108 = vector.broadcast %cst_54 : f32 to vector<2x512xf32>
    %109 = arith.maximumf %107, %108 : vector<2x512xf32>
    %c0_55 = arith.constant 0 : index
    %c0_56 = arith.constant 0 : index
    %110 = vector.load %arg19[%c0_55, %c0_56] : memref<4x2xf32, #tpu.memory_space<vmem>>, vector<4x2xf32>
    %111 = arith.truncf %110 : vector<4x2xf32> to vector<4x2xbf16>
    %112 = arith.truncf %109 : vector<2x512xf32> to vector<2x512xbf16>
    %cst_57 = arith.constant dense<0.000000e+00> : vector<4x512xf32>
    %113 = tpu.matmul %111, %112, %cst_57 {dimension_numbers = #tpu.dot_dimension_numbers<[1], [0], [0], [1], [0, 0, 1, 1], [], []>} : vector<4x2xbf16>, vector<2x512xbf16>, vector<4x512xf32> -> vector<4x512xf32>
    %c0_58 = arith.constant 0 : index
    %c0_59 = arith.constant 0 : index
    %114 = vector.load %arg20[%c0_58, %c0_59] : memref<4x2xf32, #tpu.memory_space<vmem>>, vector<4x2xf32>
    %115 = arith.truncf %114 : vector<4x2xf32> to vector<4x2xbf16>
    %116 = arith.truncf %109 : vector<2x512xf32> to vector<2x512xbf16>
    %cst_60 = arith.constant dense<0.000000e+00> : vector<4x512xf32>
    %117 = tpu.matmul %115, %116, %cst_60 {dimension_numbers = #tpu.dot_dimension_numbers<[1], [0], [0], [1], [0, 0, 1, 1], [], []>} : vector<4x2xbf16>, vector<2x512xbf16>, vector<4x512xf32> -> vector<4x512xf32>
    %118 = arith.mulf %113, %117 : vector<4x512xf32>
    %c0_61 = arith.constant 0 : index
    %c0_62 = arith.constant 0 : index
    %119 = vector.load %arg17[%c0_61, %c0_62] : memref<512x64xf32, #tpu.memory_space<vmem>>, vector<512x64xf32>
    %120 = arith.truncf %118 : vector<4x512xf32> to vector<4x512xbf16>
    %121 = arith.truncf %119 : vector<512x64xf32> to vector<512x64xbf16>
    %cst_63 = arith.constant dense<0.000000e+00> : vector<4x64xf32>
    %122 = tpu.matmul %120, %121, %cst_63 {dimension_numbers = #tpu.dot_dimension_numbers<[1], [0], [0], [1], [0, 0, 1, 1], [], []>} : vector<4x512xbf16>, vector<512x64xbf16>, vector<4x64xf32> -> vector<4x64xf32>
    %c0_64 = arith.constant 0 : index
    %c0_65 = arith.constant 0 : index
    %123 = vector.load %arg18[%c0_64, %c0_65] : memref<1x64xf32, #tpu.memory_space<vmem>>, vector<1x64xf32>
    %124 = vector.broadcast %123 : vector<1x64xf32> to vector<4x64xf32>
    %125 = arith.addf %122, %124 : vector<4x64xf32>
    %c0_66 = arith.constant 0 : index
    %c0_67 = arith.constant 0 : index
    %126 = vector.load %arg21[%c0_66, %c0_67] : memref<7x64xf32, #tpu.memory_space<vmem>>, vector<7x64xf32>
    %127 = arith.truncf %125 : vector<4x64xf32> to vector<4x64xbf16>
    %128 = arith.truncf %126 : vector<7x64xf32> to vector<7x64xbf16>
    %cst_68 = arith.constant dense<0.000000e+00> : vector<4x7xf32>
    %129 = tpu.matmul %127, %128, %cst_68 {dimension_numbers = #tpu.dot_dimension_numbers<[1], [1], [0], [0], [0, 0, 1, 0], [], []>} : vector<4x64xbf16>, vector<7x64xbf16>, vector<4x7xf32> -> vector<4x7xf32>
    %c0_69 = arith.constant 0 : index
    %c0_70 = arith.constant 0 : index
    %130 = vector.load %arg22[%c0_69, %c0_70] : memref<4x7xf32, #tpu.memory_space<vmem>>, vector<4x7xf32>
    tpu.vector_store %arg22[%c0_69, %c0_70], %129 {strides = array<i32>} : memref<4x7xf32, #tpu.memory_space<vmem>>, vector<4x7xf32>,
    return
  }
}

</mosaic_0001>

<llo_original>
// kernel: _fwd.6
$region0: #{_fwd.6}
  #allocation0 [shape = 'u32[]', space=smem, size = 0x4, offset = 0x4, fixed_abs, tag = 'smem constant byte address 0x4 - core index']
  #allocation1 [shape = 'u32[144,128]{1,0:T(1,128)}', space=vmem, size = 0x12000, scoped, tag = 'internal scratch']
  #allocation2 [shape = 'f32[1,1]{1,0:T(1,128)S(1)}', space=vmem, size = 0x200, scoped, tag = 'scoped memory for _fwd.6']
  %s0 = inlined_call_operand.vmem [shape: f32[16,16], index: 0, kind: input, shape index: {}]
  %s1 = inlined_call_operand.vmem [shape: f32[16,7], index: 1, kind: input, shape index: {}]
  %s2 = inlined_call_operand.vmem [shape: f32[7,128], index: 2, kind: input, shape index: {}]
  %s3 = inlined_call_operand.vmem [shape: f32[1,128], index: 3, kind: input, shape index: {}]
  %s4 = inlined_call_operand.vmem [shape: f32[128,128], index: 4, kind: input, shape index: {}]
  %s5 = inlined_call_operand.vmem [shape: f32[1,128], index: 5, kind: input, shape index: {}]
  %s6 = inlined_call_operand.vmem [shape: f32[1,128], index: 6, kind: input, shape index: {}]
  %s7 = inlined_call_operand.hbm [shape: f32[1,128], index: 7, kind: input, shape index: {}]
  %s8 = inlined_call_operand.vmem [shape: f32[128,1], index: 8, kind: input, shape index: {}]
  %s9 = inlined_call_operand.vmem [shape: f32[128,1], index: 9, kind: input, shape index: {}]
  %s10 = inlined_call_operand.<no memory space> [shape: f32[1,1], index: 10, kind: input, shape index: {}]
  %s11 = inlined_call_operand.vmem [shape: f32[16,128], index: 11, kind: output, shape index: {0}]
  %s12 = inlined_call_operand.vmem [shape: f32[16,128], index: 12, kind: output, shape index: {1}]
  %13 = xla_tuple %s11, %s12
  %s14 = sld [smem:[#allocation0]]
  $region66: #{_fwd.6} parent=0
    _
  %s16 = ssub.s32 1, %s14
  %s17 = scalar_select 0, %s16, %s14
  %v18 = vstv %s10
  %19 = vst [vmem:[#allocation2] sm:$0x1] %v18
  $region1: #{_fwd.6} parent=0
    #allocation3 [shape = 'u8[512]{0}', space=vmem, size = 0x400, scoped, tag = 'input window, operand 7, single buffered']
    #allocation4 [shape = 's32[1]{0}', space=sflag, size = 0x4, scoped, tag = 'scoped memory for _fwd.6']
    %20 = vsyncpa [#allocation4], 0
    // Predicated region
    $region2: #{_fwd.6} parent=1 // pred_check
      _
    $region3: #{_fwd.6} parent=1 // pred_check_branch
      %22 = sbr.rel (0) target = $region5
    $region4: #{_fwd.6} parent=1 // pred_region
      _
    $region5: #{_fwd.6} parent=1 // pred_fallthru
      _
    // Predicated region
    $region6: #{_fwd.6} parent=1 // pred_check
      _
    $region7: #{_fwd.6} parent=1 // pred_check_branch
      %24 = sbr.rel (0) target = $region9
    $region8: #{_fwd.6} parent=1 // pred_region
      _
    $region9: #{_fwd.6} parent=1 // pred_fallthru
      _
    // Predicated region
    $region10: #{_fwd.6} parent=1 // pred_check
      _
    $region11: #{_fwd.6} parent=1 // pred_check_branch
      %26 = sbr.rel (0) target = $region13
    $region12: #{_fwd.6} parent=1 // pred_region
      _
    $region13: #{_fwd.6} parent=1 // pred_fallthru
      _
    // Predicated region
    $region14: #{_fwd.6} parent=1 // pred_check
      _
    $region15: #{_fwd.6} parent=1 // pred_check_branch
      %28 = sbr.rel (0) target = $region17
    $region16: #{_fwd.6} parent=1 // pred_region
      _
    $region17: #{_fwd.6} parent=1 // pred_fallthru
      _
    // Predicated region
    $region18: #{_fwd.6} parent=1 // pred_check
      _
    $region19: #{_fwd.6} parent=1 // pred_check_branch
      %30 = sbr.rel (0) target = $region21
    $region20: #{_fwd.6} parent=1 // pred_region
      _
    $region21: #{_fwd.6} parent=1 // pred_fallthru
      _
    // Predicated region
    $region22: #{_fwd.6} parent=1 // pred_check
      _
    $region23: #{_fwd.6} parent=1 // pred_check_branch
      %32 = sbr.rel (0) target = $region25
    $region24: #{_fwd.6} parent=1 // pred_region
      _
    $region25: #{_fwd.6} parent=1 // pred_fallthru
      _
    // Predicated region
    $region26: #{_fwd.6} parent=1 // pred_check
      _
    $region27: #{_fwd.6} parent=1 // pred_check_branch
      %34 = sbr.rel (0) target = $region29
    $region28: #{_fwd.6} parent=1 // pred_region
      _
    $region29: #{_fwd.6} parent=1 // pred_fallthru
      _
    // Predicated region
    $region30: #{_fwd.6} parent=1 // pred_check
      _
    $region31: #{_fwd.6} parent=1 // pred_check_branch
      %36 = sbr.rel (0) target = $region33
    $region32: #{_fwd.6} parent=1 // pred_region
      %s38 = ssub.s32 16, 16
      %39 = vsyncadd [#allocation4], %s38
      %s41 = sshll.u32 [#allocation3], 4
      %s42 = int_to_ptr.vmem [resolvable:$true] %s41
      %44 = dma.hbm_to_vmem [thread:$0]  %s7, 16, %s42, [#allocation4]
    $region33: #{_fwd.6} parent=1 // pred_fallthru
      _
    // Predicated region
    $region34: #{_fwd.6} parent=1 // pred_check
      _
    $region35: #{_fwd.6} parent=1 // pred_check_branch
      %46 = sbr.rel (0) target = $region37
    $region36: #{_fwd.6} parent=1 // pred_region
      _
    $region37: #{_fwd.6} parent=1 // pred_fallthru
      _
    // Predicated region
    $region38: #{_fwd.6} parent=1 // pred_check
      _
    $region39: #{_fwd.6} parent=1 // pred_check_branch
      %48 = sbr.rel (0) target = $region41
    $region40: #{_fwd.6} parent=1 // pred_region
      _
    $region41: #{_fwd.6} parent=1 // pred_fallthru
      _
    // Predicated region
    $region42: #{_fwd.6} parent=1 // pred_check
      _
    $region43: #{_fwd.6} parent=1 // pred_check_branch
      %50 = sbr.rel (0) target = $region45
    $region44: #{_fwd.6} parent=1 // pred_region
      _
    $region45: #{_fwd.6} parent=1 // pred_fallthru
      _
    // Predicated region
    $region46: #{_fwd.6} parent=1 // pred_check
      _
    $region47: #{_fwd.6} parent=1 // pred_check_branch
      %52 = sbr.rel (0) target = $region49
    $region48: #{_fwd.6} parent=1 // pred_region
      %53 = dma.done [#allocation4], 16
    $region49: #{_fwd.6} parent=1 // pred_fallthru
      _
    %v55 = vld [vmem:[%s0] sm:$0xff]
    %v56 = vld [vmem:[%s0 + $0x8] sm:$0xff]
    %v57 = vld [vmem:[%s1] sm:$0xff]
    %v58 = vld [vmem:[%s1 + $0x8] sm:$0xff]
    %v59 = vld [vmem:[%s2] sm:$0x7f]
    %v60 = vpack.c.bf16 %v58, %v57
    %v61 = vpack.c.bf16 %v59, %v59
    %vm62 = vcmask 56320
    %v64 = vsel %vm62, %v60, 0
    %vm66 = vcmask 1042432
    %vm67 = vcmask 1043456
    %v68 = vsel %vm66, 4294967295, 65535
    %v69 = vsel %vm67, %v68, 0
    %v71 = vand.u32 %v61, %v69
    %73 = vmatprep.subr.bf16.mxu0 0
    %74 = vmatpush1.bf16.msra.mxu0 0
    %75 = vmatprep.subr.bf16.mxu0 0
    %76 = vmatpush1.bf16.msra.mxu0 0
    %77 = vmatprep.subr.bf16.mxu0 0
    %78 = vmatpush1.bf16.msra.mxu0 0
    %79 = vmatprep.subr.bf16.mxu0 0
    %80 = vmatpush1.bf16.msra.mxu0 0
    %81 = vmatprep.subr.bf16.mxu0 0
    %82 = vmatpush1.bf16.msra.mxu0 0
    %83 = vmatprep.subr.bf16.mxu0 0
    %84 = vmatpush1.bf16.msra.mxu0 0
    %85 = vmatprep.subr.bf16.mxu0 0
    %86 = vmatpush1.bf16.msra.mxu0 0
    %87 = vmatprep.subr.bf16.mxu0 0
    %88 = vmatpush1.bf16.msra.mxu0 %v71
    %89 = vmatprep.subr.bf16.mxu0 0
    %90 = vmatpush2.bf16.msra.mxu0 0
    %91 = vmatprep.subr.bf16.mxu0 0
    %92 = vmatpush2.bf16.msra.mxu0 0
    %93 = vmatprep.subr.bf16.mxu0 0
    %94 = vmatpush2.bf16.msra.mxu0 0
    %95 = vmatprep.subr.bf16.mxu0 0
    %96 = vmatpush2.bf16.msra.mxu0 0
    %97 = vmatprep.subr.bf16.mxu0 0
    %98 = vmatpush2.bf16.msra.mxu0 0
    %99 = vmatprep.subr.bf16.mxu0 0
    %100 = vmatpush2.bf16.msra.mxu0 0
    %101 = vmatprep.subr.bf16.mxu0 0
    %102 = vmatpush2.bf16.msra.mxu0 0
    %103 = vmatprep.subr.bf16.mxu0 0
    %104 = vmatpush2.bf16.msra.mxu0 0
    %105 = vmatprep.mubr.bf16.mxu0 0
    %106 = vmatmul.mubr.bf16.gmra.mxu0 %v64
    %v107 = vpop.f32.mrf.mxu0
    %v108 = vadd.f32 0.0, %v107
    %v109 = vpop.f32.mrf.mxu0
    %v110 = vpop.f32.mrf.mxu0
    %v111 = vadd.f32 0.0, %v110
    %v112 = vpop.f32.mrf.mxu0
    %113 = vdwg.mxu0
    %v114 = vlaneseq
    %v115 = vshrl.u32 %v114, 7
    %v116 = vadd.s32 %v115, 8
    %v117 = vlaneseq
    %v118 = vand.u32 %v117, 127
    %vm119 = vcmp.eq.s32.totalorder %v115, %v118
    %vm120 = vcmp.eq.s32.totalorder %v116, %v118
    %v121 = vsel %vm119, 1, 0
    %v122 = vsel %vm120, 1, 0
    %v123 = vcvt.s32.f32 %v121
    %v124 = vcvt.s32.f32 %v122
    %v125 = vadd.f32 %v55, %v123
    %v126 = vadd.f32 %v56, %v124
    %vm127 = vcmask 130048
    %v128 = vsel %vm127, %v125, 0.0
    %129 = vadd.xlane.f32.xlu0 %v128
    %v130 = vpop.xlane.xlu0 %129
    %v131 = vsel %vm127, %v126, 0.0
    %132 = vadd.xlane.f32.xlu0 %v131
    %v133 = vpop.xlane.xlu0 %132
    %v134 = vmax.f32 %v130, 1e-12
    %v135 = vmax.f32 %v133, 1e-12
    %v136 = vrsqrt.pop %v134
    %v137 = vrsqrt.pop %v135
    %v138 = vmul.f32 %v136, %v108
    %v139 = vmul.f32 %v137, %v111
    %v140 = vpack.c.bf16 %v126, %v125
    %v141 = vpack.c.bf16 %v139, %v138
    %v143 = vsel %vm127, %v140, 0
    %145 = vmatprep.subr.bf16.mxu0 0
    %146 = vmatpush1.bf16.msra.mxu0 0
    %147 = vmatprep.subr.bf16.mxu0 0
    %148 = vmatpush1.bf16.msra.mxu0 0
    %149 = vmatprep.subr.bf16.mxu0 0
    %150 = vmatpush1.bf16.msra.mxu0 0
    %151 = vmatprep.subr.bf16.mxu0 0
    %152 = vmatpush1.bf16.msra.mxu0 0
    %153 = vmatprep.subr.bf16.mxu0 0
    %154 = vmatpush1.bf16.msra.mxu0 0
    %155 = vmatprep.subr.bf16.mxu0 0
    %156 = vmatpush1.bf16.msra.mxu0 0
    %157 = vmatprep.subr.bf16.mxu0 0
    %158 = vmatpush1.bf16.msra.mxu0 0
    %159 = vmatprep.subr.bf16.mxu0 0
    %160 = vmatpush1.bf16.msra.mxu0 %v141
    %161 = vmatprep.subr.bf16.mxu0 0
    %162 = vmatpush2.bf16.msra.mxu0 0
    %163 = vmatprep.subr.bf16.mxu0 0
    %164 = vmatpush2.bf16.msra.mxu0 0
    %165 = vmatprep.subr.bf16.mxu0 0
    %166 = vmatpush2.bf16.msra.mxu0 0
    %167 = vmatprep.subr.bf16.mxu0 0
    %168 = vmatpush2.bf16.msra.mxu0 0
    %169 = vmatprep.subr.bf16.mxu0 0
    %170 = vmatpush2.bf16.msra.mxu0 0
    %171 = vmatprep.subr.bf16.mxu0 0
    %172 = vmatpush2.bf16.msra.mxu0 0
    %173 = vmatprep.subr.bf16.mxu0 0
    %174 = vmatpush2.bf16.msra.mxu0 0
    %175 = vmatprep.subr.bf16.mxu0 0
    %176 = vmatpush2.bf16.msra.mxu0 0
    %177 = vmatprep.mubr.bf16.mxu0 0
    %178 = vmatmul.mubr.bf16.gmra.mxu0 %v143
    %v179 = vpop.f32.mrf.mxu0
    %v180 = vadd.f32 0.0, %v179
    %v181 = vpop.f32.mrf.mxu0
    %v182 = vpop.f32.mrf.mxu0
    %v183 = vadd.f32 0.0, %v182
    %v184 = vpop.f32.mrf.mxu0
    %185 = vdwg.mxu0
    %v186 = vmul.f32 %v136, %v180
    %v187 = vmul.f32 %v137, %v183
    %v188 = vld [vmem:[%s3] sm:$0x1]
    %v190 = vlaneseq
    %v191 = vshrl.u32 %v190, 7
    %v192 = vsub.s32 0, %v191
    %v193 = vrot.slane %v188, %v192
    %v195 = vadd.f32 %v186, %v193
    %v196 = vadd.f32 %v187, %v193
    %v197 = vld [vmem:[%s4] sm:$0xff]
    %v198 = vld [vmem:[%s4 + $0x8] sm:$0xff]
    %v199 = vld [vmem:[%s4 + $0x10] sm:$0xff]
    %v200 = vld [vmem:[%s4 + $0x18] sm:$0xff]
    %v201 = vld [vmem:[%s4 + $0x20] sm:$0xff]
    %v202 = vld [vmem:[%s4 + $0x28] sm:$0xff]
    %v203 = vld [vmem:[%s4 + $0x30] sm:$0xff]
    %v204 = vld [vmem:[%s4 + $0x38] sm:$0xff]
    %v205 = vld [vmem:[%s4 + $0x40] sm:$0xff]
    %v206 = vld [vmem:[%s4 + $0x48] sm:$0xff]
    %v207 = vld [vmem:[%s4 + $0x50] sm:$0xff]
    %v208 = vld [vmem:[%s4 + $0x58] sm:$0xff]
    %v209 = vld [vmem:[%s4 + $0x60] sm:$0xff]
    %v210 = vld [vmem:[%s4 + $0x68] sm:$0xff]
    %v211 = vld [vmem:[%s4 + $0x70] sm:$0xff]
    %v212 = vld [vmem:[%s4 + $0x78] sm:$0xff]
    %v213 = vpack.c.bf16 %v196, %v195
    %v214 = vpack.c.bf16 %v198, %v197
    %v215 = vpack.c.bf16 %v200, %v199
    %v216 = vpack.c.bf16 %v202, %v201
    %v217 = vpack.c.bf16 %v204, %v203
    %v218 = vpack.c.bf16 %v206, %v205
    %v219 = vpack.c.bf16 %v208, %v207
    %v220 = vpack.c.bf16 %v210, %v209
    %v221 = vpack.c.bf16 %v212, %v211
    %v222 = vld [vmem:[%s5] sm:$0x1]
    %v224 = vlaneseq
    %v225 = vshrl.u32 %v224, 7
    %v226 = vsub.s32 0, %v225
    %v227 = vrot.slane %v222, %v226
    %229 = vmatprep.subr.bf16.mxu0 0
    %230 = vmatpush1.bf16.msra.mxu0 %v221
    %231 = vmatprep.subr.bf16.mxu0 0
    %232 = vmatpush1.bf16.msra.mxu0 %v220
    %233 = vmatprep.subr.bf16.mxu0 0
    %234 = vmatpush1.bf16.msra.mxu0 %v219
    %235 = vmatprep.subr.bf16.mxu0 0
    %236 = vmatpush1.bf16.msra.mxu0 %v218
    %237 = vmatprep.subr.bf16.mxu0 0
    %238 = vmatpush1.bf16.msra.mxu0 %v217
    %239 = vmatprep.subr.bf16.mxu0 0
    %240 = vmatpush1.bf16.msra.mxu0 %v216
    %241 = vmatprep.subr.bf16.mxu0 0
    %242 = vmatpush1.bf16.msra.mxu0 %v215
    %243 = vmatprep.subr.bf16.mxu0 0
    %244 = vmatpush1.bf16.msra.mxu0 %v214
    %245 = vmatprep.subr.bf16.mxu0 0
    %246 = vmatpush2.bf16.msra.mxu0 0
    %247 = vmatprep.subr.bf16.mxu0 0
    %248 = vmatpush2.bf16.msra.mxu0 0
    %249 = vmatprep.subr.bf16.mxu0 0
    %250 = vmatpush2.bf16.msra.mxu0 0
    %251 = vmatprep.subr.bf16.mxu0 0
    %252 = vmatpush2.bf16.msra.mxu0 0
    %253 = vmatprep.subr.bf16.mxu0 0
    %254 = vmatpush2.bf16.msra.mxu0 0
    %255 = vmatprep.subr.bf16.mxu0 0
    %256 = vmatpush2.bf16.msra.mxu0 0
    %257 = vmatprep.subr.bf16.mxu0 0
    %258 = vmatpush2.bf16.msra.mxu0 0
    %259 = vmatprep.subr.bf16.mxu0 0
    %260 = vmatpush2.bf16.msra.mxu0 0
    %261 = vmatprep.mubr.bf16.mxu0 0
    %262 = vmatmul.mubr.bf16.gmra.mxu0 %v213
    %v263 = vpop.f32.mrf.mxu0
    %v264 = vadd.f32 %v227, %v263
    %v265 = vpop.f32.mrf.mxu0
    %v266 = vpop.f32.mrf.mxu0
    %v267 = vadd.f32 %v227, %v266
    %v268 = vpop.f32.mrf.mxu0
    %269 = vdwg.mxu0
    %v270 = vmax.f32 %v264, 0.0
    %v271 = vmax.f32 %v267, 0.0
    %v272 = vld [vmem:[%s6] sm:$0x1]
    %v273 = vld [vmem:[#allocation3] sm:$0x1]
    %v274 = vadd.f32 %v270, %v271
    %v275 = vrot.slane %v274, 4
    %v276 = vadd.f32 %v274, %v275
    %v277 = vrot.slane %v276, 2
    %v278 = vadd.f32 %v276, %v277
    %v279 = vrot.slane %v278, 1
    %v280 = vadd.f32 %v278, %v279
    %v281 = vrcp.pop 16.0
    %v282 = vmul.f32 %v280, %v281
    %v283 = vsub.f32 %v270, %v282
    %v284 = vsub.f32 %v271, %v282
    %v285 = vmul.f32 %v283, %v283
    %v286 = vmul.f32 %v284, %v284
    %v287 = vadd.f32 %v285, %v286
    %v288 = vrot.slane %v287, 4
    %v289 = vadd.f32 %v287, %v288
    %v290 = vrot.slane %v289, 2
    %v291 = vadd.f32 %v289, %v290
    %v292 = vrot.slane %v291, 1
    %v293 = vadd.f32 %v291, %v292
    %v294 = vmul.f32 %v293, %v281
    %v295 = vadd.f32 %v294, 1e-05
    %v296 = vrsqrt.pop %v295
    %v297 = vmul.f32 %v283, %v296
    %v298 = vmul.f32 %v284, %v296
    %v300 = vlaneseq
    %v301 = vshrl.u32 %v300, 7
    %v302 = vsub.s32 0, %v301
    %v303 = vrot.slane %v272, %v302
    %v305 = vmul.f32 %v297, %v303
    %v306 = vmul.f32 %v298, %v303
    %v308 = vlaneseq
    %v309 = vshrl.u32 %v308, 7
    %v310 = vsub.s32 0, %v309
    %v311 = vrot.slane %v273, %v310
    %v313 = vadd.f32 %v305, %v311
    %v314 = vadd.f32 %v306, %v311
    %v315 = vld [vmem:[%s8] sm:$0xff]
    %v316 = vld [vmem:[%s8 + $0x8] sm:$0xff]
    %v317 = vld [vmem:[%s8 + $0x10] sm:$0xff]
    %v318 = vld [vmem:[%s8 + $0x18] sm:$0xff]
    %v319 = vld [vmem:[%s8 + $0x20] sm:$0xff]
    %v320 = vld [vmem:[%s8 + $0x28] sm:$0xff]
    %v321 = vld [vmem:[%s8 + $0x30] sm:$0xff]
    %v322 = vld [vmem:[%s8 + $0x38] sm:$0xff]
    %v323 = vld [vmem:[%s8 + $0x40] sm:$0xff]
    %v324 = vld [vmem:[%s8 + $0x48] sm:$0xff]
    %v325 = vld [vmem:[%s8 + $0x50] sm:$0xff]
    %v326 = vld [vmem:[%s8 + $0x58] sm:$0xff]
    %v327 = vld [vmem:[%s8 + $0x60] sm:$0xff]
    %v328 = vld [vmem:[%s8 + $0x68] sm:$0xff]
    %v329 = vld [vmem:[%s8 + $0x70] sm:$0xff]
    %v330 = vld [vmem:[%s8 + $0x78] sm:$0xff]
    %v331 = vpack.c.bf16 %v314, %v313
    %v332 = vpack.c.bf16 %v316, %v315
    %v333 = vpack.c.bf16 %v318, %v317
    %v334 = vpack.c.bf16 %v320, %v319
    %v335 = vpack.c.bf16 %v322, %v321
    %v336 = vpack.c.bf16 %v324, %v323
    %v337 = vpack.c.bf16 %v326, %v325
    %v338 = vpack.c.bf16 %v328, %v327
    %v339 = vpack.c.bf16 %v330, %v329
    %v340 = vld [vmem:[%s9] sm:$0xff]
    %v341 = vld [vmem:[%s9 + $0x8] sm:$0xff]
    %v342 = vld [vmem:[%s9 + $0x10] sm:$0xff]
    %v343 = vld [vmem:[%s9 + $0x18] sm:$0xff]
    %v344 = vld [vmem:[%s9 + $0x20] sm:$0xff]
    %v345 = vld [vmem:[%s9 + $0x28] sm:$0xff]
    %v346 = vld [vmem:[%s9 + $0x30] sm:$0xff]
    %v347 = vld [vmem:[%s9 + $0x38] sm:$0xff]
    %v348 = vld [vmem:[%s9 + $0x40] sm:$0xff]
    %v349 = vld [vmem:[%s9 + $0x48] sm:$0xff]
    %v350 = vld [vmem:[%s9 + $0x50] sm:$0xff]
    %v351 = vld [vmem:[%s9 + $0x58] sm:$0xff]
    %v352 = vld [vmem:[%s9 + $0x60] sm:$0xff]
    %v353 = vld [vmem:[%s9 + $0x68] sm:$0xff]
    %v354 = vld [vmem:[%s9 + $0x70] sm:$0xff]
    %v355 = vld [vmem:[%s9 + $0x78] sm:$0xff]
    %v356 = vpack.c.bf16 %v341, %v340
    %v357 = vpack.c.bf16 %v343, %v342
    %v358 = vpack.c.bf16 %v345, %v344
    %v359 = vpack.c.bf16 %v347, %v346
    %v360 = vpack.c.bf16 %v349, %v348
    %v361 = vpack.c.bf16 %v351, %v350
    %v362 = vpack.c.bf16 %v353, %v352
    %v363 = vpack.c.bf16 %v355, %v354
    %364 = vmatprep.subr.bf16.mxu0 0
    %365 = vmatpush1.bf16.msra.mxu0 %v363
    %366 = vmatprep.subr.bf16.mxu0 0
    %367 = vmatpush1.bf16.msra.mxu0 %v362
    %368 = vmatprep.subr.bf16.mxu0 0
    %369 = vmatpush1.bf16.msra.mxu0 %v361
    %370 = vmatprep.subr.bf16.mxu0 0
    %371 = vmatpush1.bf16.msra.mxu0 %v360
    %372 = vmatprep.subr.bf16.mxu0 0
    %373 = vmatpush1.bf16.msra.mxu0 %v359
    %374 = vmatprep.subr.bf16.mxu0 0
    %375 = vmatpush1.bf16.msra.mxu0 %v358
    %376 = vmatprep.subr.bf16.mxu0 0
    %377 = vmatpush1.bf16.msra.mxu0 %v357
    %378 = vmatprep.subr.bf16.mxu0 0
    %379 = vmatpush1.bf16.msra.mxu0 %v356
    %380 = vmatprep.subr.bf16.mxu0 0
    %381 = vmatpush2.bf16.msra.mxu0 0
    %382 = vmatprep.subr.bf16.mxu0 0
    %383 = vmatpush2.bf16.msra.mxu0 0
    %384 = vmatprep.subr.bf16.mxu0 0
    %385 = vmatpush2.bf16.msra.mxu0 0
    %386 = vmatprep.subr.bf16.mxu0 0
    %387 = vmatpush2.bf16.msra.mxu0 0
    %388 = vmatprep.subr.bf16.mxu0 0
    %389 = vmatpush2.bf16.msra.mxu0 0
    %390 = vmatprep.subr.bf16.mxu0 0
    %391 = vmatpush2.bf16.msra.mxu0 0
    %392 = vmatprep.subr.bf16.mxu0 0
    %393 = vmatpush2.bf16.msra.mxu0 0
    %394 = vmatprep.subr.bf16.mxu0 0
    %395 = vmatpush2.bf16.msra.mxu0 0
    %396 = vmatprep.mubr.bf16.mxu0 0
    %397 = vmatmul.mubr.bf16.gmra.mxu0 %v331
    %v398 = vpop.f32.mrf.mxu0
    %v399 = vadd.f32 0.0, %v398
    %v400 = vpop.f32.mrf.mxu0
    %v401 = vpop.f32.mrf.mxu0
    %v402 = vadd.f32 0.0, %v401
    %v403 = vpop.f32.mrf.mxu0
    %404 = vdwg.mxu0
    %v405 = vpack.c.bf16 %v56, %v55
    %v406 = vpack.c.bf16 %v402, %v399
    %v408 = vsel %vm127, %v405, 0
    %410 = vmatprep.subr.bf16.mxu0 0
    %411 = vmatpush1.bf16.msra.mxu0 0
    %412 = vmatprep.subr.bf16.mxu0 0
    %413 = vmatpush1.bf16.msra.mxu0 0
    %414 = vmatprep.subr.bf16.mxu0 0
    %415 = vmatpush1.bf16.msra.mxu0 0
    %416 = vmatprep.subr.bf16.mxu0 0
    %417 = vmatpush1.bf16.msra.mxu0 0
    %418 = vmatprep.subr.bf16.mxu0 0
    %419 = vmatpush1.bf16.msra.mxu0 0
    %420 = vmatprep.subr.bf16.mxu0 0
    %421 = vmatpush1.bf16.msra.mxu0 0
    %422 = vmatprep.subr.bf16.mxu0 0
    %423 = vmatpush1.bf16.msra.mxu0 0
    %424 = vmatprep.subr.bf16.mxu0 0
    %425 = vmatpush1.bf16.msra.mxu0 %v406
    %426 = vmatprep.subr.bf16.mxu0 0
    %427 = vmatpush2.bf16.msra.mxu0 0
    %428 = vmatprep.subr.bf16.mxu0 0
    %429 = vmatpush2.bf16.msra.mxu0 0
    %430 = vmatprep.subr.bf16.mxu0 0
    %431 = vmatpush2.bf16.msra.mxu0 0
    %432 = vmatprep.subr.bf16.mxu0 0
    %433 = vmatpush2.bf16.msra.mxu0 0
    %434 = vmatprep.subr.bf16.mxu0 0
    %435 = vmatpush2.bf16.msra.mxu0 0
    %436 = vmatprep.subr.bf16.mxu0 0
    %437 = vmatpush2.bf16.msra.mxu0 0
    %438 = vmatprep.subr.bf16.mxu0 0
    %439 = vmatpush2.bf16.msra.mxu0 0
    %440 = vmatprep.subr.bf16.mxu0 0
    %441 = vmatpush2.bf16.msra.mxu0 0
    %442 = vmatprep.mubr.bf16.mxu0 0
    %443 = vmatmul.mubr.bf16.gmra.mxu0 %v408
    %v444 = vpop.f32.mrf.mxu0
    %v445 = vadd.f32 0.0, %v444
    %v446 = vpop.f32.mrf.mxu0
    %v447 = vpop.f32.mrf.mxu0
    %v448 = vadd.f32 0.0, %v447
    %v449 = vpop.f32.mrf.mxu0
    %450 = vdwg.mxu0
    %451 = vmatprep.subr.bf16.mxu0 0
    %452 = vmatpush1.bf16.msra.mxu0 %v339
    %453 = vmatprep.subr.bf16.mxu0 0
    %454 = vmatpush1.bf16.msra.mxu0 %v338
    %455 = vmatprep.subr.bf16.mxu0 0
    %456 = vmatpush1.bf16.msra.mxu0 %v337
    %457 = vmatprep.subr.bf16.mxu0 0
    %458 = vmatpush1.bf16.msra.mxu0 %v336
    %459 = vmatprep.subr.bf16.mxu0 0
    %460 = vmatpush1.bf16.msra.mxu0 %v335
    %461 = vmatprep.subr.bf16.mxu0 0
    %462 = vmatpush1.bf16.msra.mxu0 %v334
    %463 = vmatprep.subr.bf16.mxu0 0
    %464 = vmatpush1.bf16.msra.mxu0 %v333
    %465 = vmatprep.subr.bf16.mxu0 0
    %466 = vmatpush1.bf16.msra.mxu0 %v332
    %467 = vmatprep.subr.bf16.mxu0 0
    %468 = vmatpush2.bf16.msra.mxu0 0
    %469 = vmatprep.subr.bf16.mxu0 0
    %470 = vmatpush2.bf16.msra.mxu0 0
    %471 = vmatprep.subr.bf16.mxu0 0
    %472 = vmatpush2.bf16.msra.mxu0 0
    %473 = vmatprep.subr.bf16.mxu0 0
    %474 = vmatpush2.bf16.msra.mxu0 0
    %475 = vmatprep.subr.bf16.mxu0 0
    %476 = vmatpush2.bf16.msra.mxu0 0
    %477 = vmatprep.subr.bf16.mxu0 0
    %478 = vmatpush2.bf16.msra.mxu0 0
    %479 = vmatprep.subr.bf16.mxu0 0
    %480 = vmatpush2.bf16.msra.mxu0 0
    %481 = vmatprep.subr.bf16.mxu0 0
    %482 = vmatpush2.bf16.msra.mxu0 0
    %483 = vmatprep.mubr.bf16.mxu0 0
    %484 = vmatmul.mubr.bf16.gmra.mxu0 %v331
    %v485 = vpop.f32.mrf.mxu0
    %v486 = vadd.f32 %v445, %v485
    %v487 = vpop.f32.mrf.mxu0
    %v488 = vpop.f32.mrf.mxu0
    %v489 = vadd.f32 %v448, %v488
    %v490 = vpop.f32.mrf.mxu0
    %491 = vdwg.mxu0
    %v492 = vld [vmem:[#allocation2] sm:$0x1]
    %v494 = vlaneseq
    %v495 = vshrl.u32 %v494, 7
    %v496 = vsub.s32 0, %v495
    %v497 = vrot.slane %v492, %v496
    %v499 = vadd.f32 %v486, %v497
    %v500 = vadd.f32 %v489, %v497
    %v501 = vtanh.pop %v499
    %v502 = vtanh.pop %v500
    %504 = vset.pattern.permute.xlu0 0
    %505 = vperm.xlu0 %504, %v501
    %v506 = vpop.permute.xlu0 %505
    %509 = vset.pattern.permute.xlu0 0
    %510 = vperm.xlu0 %509, %v502
    %v511 = vpop.permute.xlu0 %510
    %v513 = vmul.f32 %v313, %v506
    %v514 = vmul.f32 %v314, %v511
    %515 = vst [vmem:[%s11] sm:$0xff] %v513
    %516 = vst [vmem:[%s11 + $0x8] sm:$0xff] %v514
    %518 = vset.pattern.permute.xlu0 0
    %519 = vperm.xlu0 %518, %v499
    %v520 = vpop.permute.xlu0 %519
    %523 = vset.pattern.permute.xlu0 0
    %524 = vperm.xlu0 %523, %v500
    %v525 = vpop.permute.xlu0 %524
    %527 = vst [vmem:[%s12] sm:$0xff] %v520
    %528 = vst [vmem:[%s12 + $0x8] sm:$0xff] %v525
    // Predicated region
    $region50: #{_fwd.6} parent=1 // pred_check
      _
    $region51: #{_fwd.6} parent=1 // pred_check_branch
      %530 = sbr.rel (0) target = $region53
    $region52: #{_fwd.6} parent=1 // pred_region
      _
    $region53: #{_fwd.6} parent=1 // pred_fallthru
      _
    // Predicated region
    $region54: #{_fwd.6} parent=1 // pred_check
      _
    $region55: #{_fwd.6} parent=1 // pred_check_branch
      %532 = sbr.rel (0) target = $region57
    $region56: #{_fwd.6} parent=1 // pred_region
      _
    $region57: #{_fwd.6} parent=1 // pred_fallthru
      _
    // Predicated region
    $region58: #{_fwd.6} parent=1 // pred_check
      _
    $region59: #{_fwd.6} parent=1 // pred_check_branch
      %534 = sbr.rel (0) target = $region61
    $region60: #{_fwd.6} parent=1 // pred_region
      _
    $region61: #{_fwd.6} parent=1 // pred_fallthru
      _
    // Predicated region
    $region62: #{_fwd.6} parent=1 // pred_check
      _
    $region63: #{_fwd.6} parent=1 // pred_check_branch
      %536 = sbr.rel (0) target = $region65
    $region64: #{_fwd.6} parent=1 // pred_region
      _
    $region65: #{_fwd.6} parent=1 // pred_fallthru
      _
    %537 = vsyncpa [#allocation4], 1

// kernel: _fwd.7
$region0: #{_fwd.7}
  #allocation0 [shape = 'u32[]', space=smem, size = 0x4, offset = 0x4, fixed_abs, tag = 'smem constant byte address 0x4 - core index']
  #allocation1 [shape = 'u32[144,128]{1,0:T(1,128)}', space=vmem, size = 0x12000, scoped, tag = 'internal scratch']
  #allocation2 [shape = 'f32[1,1]{1,0:T(1,128)S(1)}', space=vmem, size = 0x200, scoped, tag = 'scoped memory for _fwd.7']
  %s0 = inlined_call_operand.vmem [shape: f32[8,8], index: 0, kind: input, shape index: {}]
  %s1 = inlined_call_operand.vmem [shape: f32[8,128], index: 1, kind: input, shape index: {}]
  %s2 = inlined_call_operand.vmem [shape: f32[128,128], index: 2, kind: input, shape index: {}]
  %s3 = inlined_call_operand.hbm [shape: f32[1,128], index: 3, kind: input, shape index: {}]
  %s4 = inlined_call_operand.hbm [shape: f32[128,128], index: 4, kind: input, shape index: {}]
  %s5 = inlined_call_operand.hbm [shape: f32[1,128], index: 5, kind: input, shape index: {}]
  %s6 = inlined_call_operand.hbm [shape: f32[1,128], index: 6, kind: input, shape index: {}]
  %s7 = inlined_call_operand.hbm [shape: f32[1,128], index: 7, kind: input, shape index: {}]
  %s8 = inlined_call_operand.vmem [shape: f32[128,1], index: 8, kind: input, shape index: {}]
  %s9 = inlined_call_operand.vmem [shape: f32[128,1], index: 9, kind: input, shape index: {}]
  %s10 = inlined_call_operand.<no memory space> [shape: f32[1,1], index: 10, kind: input, shape index: {}]
  %s11 = inlined_call_operand.vmem [shape: f32[8,128], index: 11, kind: output, shape index: {0}]
  %s12 = inlined_call_operand.vmem [shape: f32[8,128], index: 12, kind: output, shape index: {1}]
  %13 = xla_tuple %s11, %s12
  %s14 = sld [smem:[#allocation0]]
  $region82: #{_fwd.7} parent=0
    _
  %s16 = ssub.s32 1, %s14
  %s17 = scalar_select 0, %s16, %s14
  %v18 = vstv %s10
  %19 = vst [vmem:[#allocation2] sm:$0x1] %v18
  $region1: #{_fwd.7} parent=0
    #allocation3 [shape = 'u8[512]{0}', space=vmem, size = 0x400, scoped, tag = 'input window, operand 3, single buffered']
    #allocation4 [shape = 's32[1]{0}', space=sflag, size = 0x4, scoped, tag = 'scoped memory for _fwd.7']
    #allocation5 [shape = 'u8[65536]{0}', space=vmem, size = 0x10000, scoped, tag = 'input window, operand 4, single buffered']
    #allocation6 [shape = 's32[1]{0}', space=sflag, size = 0x4, scoped, tag = 'scoped memory for _fwd.7']
    #allocation7 [shape = 'u8[512]{0}', space=vmem, size = 0x400, scoped, tag = 'input window, operand 5, single buffered']
    #allocation8 [shape = 'u8[512]{0}', space=vmem, size = 0x400, scoped, tag = 'input window, operand 6, single buffered']
    #allocation9 [shape = 's32[1]{0}', space=sflag, size = 0x4, scoped, tag = 'scoped memory for _fwd.7']
    #allocation10 [shape = 'u8[512]{0}', space=vmem, size = 0x400, scoped, tag = 'input window, operand 7, single buffered']
    %20 = vsyncpa [#allocation4], 0
    %21 = vsyncpa [#allocation6], 0
    %22 = vsyncpa [#allocation9], 0
    // Predicated region
    $region2: #{_fwd.7} parent=1 // pred_check
      _
    $region3: #{_fwd.7} parent=1 // pred_check_branch
      %24 = sbr.rel (0) target = $region5
    $region4: #{_fwd.7} parent=1 // pred_region
      _
    $region5: #{_fwd.7} parent=1 // pred_fallthru
      _
    // Predicated region
    $region6: #{_fwd.7} parent=1 // pred_check
      _
    $region7: #{_fwd.7} parent=1 // pred_check_branch
      %26 = sbr.rel (0) target = $region9
    $region8: #{_fwd.7} parent=1 // pred_region
      _
    $region9: #{_fwd.7} parent=1 // pred_fallthru
      _
    // Predicated region
    $region10: #{_fwd.7} parent=1 // pred_check
      _
    $region11: #{_fwd.7} parent=1 // pred_check_branch
      %28 = sbr.rel (0) target = $region13
    $region12: #{_fwd.7} parent=1 // pred_region
      _
    $region13: #{_fwd.7} parent=1 // pred_fallthru
      _
    // Predicated region
    $region14: #{_fwd.7} parent=1 // pred_check
      _
    $region15: #{_fwd.7} parent=1 // pred_check_branch
      %30 = sbr.rel (0) target = $region17
    $region16: #{_fwd.7} parent=1 // pred_region
      %s32 = ssub.s32 16, 16
      %33 = vsyncadd [#allocation4], %s32
      %s35 = sshll.u32 [#allocation3], 4
      %s36 = int_to_ptr.vmem [resolvable:$true] %s35
      %38 = dma.hbm_to_vmem [thread:$0]  %s3, 16, %s36, [#allocation4]
    $region17: #{_fwd.7} parent=1 // pred_fallthru
      _
    // Predicated region
    $region18: #{_fwd.7} parent=1 // pred_check
      _
    $region19: #{_fwd.7} parent=1 // pred_check_branch
      %40 = sbr.rel (0) target = $region21
    $region20: #{_fwd.7} parent=1 // pred_region
      %s42 = ssub.s32 2048, 2048
      %43 = vsyncadd [#allocation6], %s42
      %s44 = sshll.u32 [#allocation5], 4
      %s45 = int_to_ptr.vmem [resolvable:$true] %s44
      %50 = dma.hbm_to_vmem [thread:$0]  %s4, 2048, %s45, [#allocation6], 128, 128, 8
    $region21: #{_fwd.7} parent=1 // pred_fallthru
      _
    // Predicated region
    $region22: #{_fwd.7} parent=1 // pred_check
      _
    $region23: #{_fwd.7} parent=1 // pred_check_branch
      %52 = sbr.rel (0) target = $region25
    $region24: #{_fwd.7} parent=1 // pred_region
      %s54 = ssub.s32 16, 16
      %55 = vsyncadd [#allocation6], %s54
      %s57 = sshll.u32 [#allocation7], 4
      %s58 = int_to_ptr.vmem [resolvable:$true] %s57
      %60 = dma.hbm_to_vmem [thread:$0]  %s5, 16, %s58, [#allocation6]
    $region25: #{_fwd.7} parent=1 // pred_fallthru
      _
    // Predicated region
    $region26: #{_fwd.7} parent=1 // pred_check
      _
    $region27: #{_fwd.7} parent=1 // pred_check_branch
      %62 = sbr.rel (0) target = $region29
    $region28: #{_fwd.7} parent=1 // pred_region
      %s64 = ssub.s32 16, 16
      %65 = vsyncadd [#allocation9], %s64
      %s67 = sshll.u32 [#allocation8], 4
      %s68 = int_to_ptr.vmem [resolvable:$true] %s67
      %70 = dma.hbm_to_vmem [thread:$0]  %s6, 16, %s68, [#allocation9]
    $region29: #{_fwd.7} parent=1 // pred_fallthru
      _
    // Predicated region
    $region30: #{_fwd.7} parent=1 // pred_check
      _
    $region31: #{_fwd.7} parent=1 // pred_check_branch
      %72 = sbr.rel (0) target = $region33
    $region32: #{_fwd.7} parent=1 // pred_region
      %s74 = ssub.s32 16, 16
      %75 = vsyncadd [#allocation9], %s74
      %s77 = sshll.u32 [#allocation10], 4
      %s78 = int_to_ptr.vmem [resolvable:$true] %s77
      %80 = dma.hbm_to_vmem [thread:$0]  %s7, 16, %s78, [#allocation9]
    $region33: #{_fwd.7} parent=1 // pred_fallthru
      _
    // Predicated region
    $region34: #{_fwd.7} parent=1 // pred_check
      _
    $region35: #{_fwd.7} parent=1 // pred_check_branch
      %82 = sbr.rel (0) target = $region37
    $region36: #{_fwd.7} parent=1 // pred_region
      _
    $region37: #{_fwd.7} parent=1 // pred_fallthru
      _
    // Predicated region
    $region38: #{_fwd.7} parent=1 // pred_check
      _
    $region39: #{_fwd.7} parent=1 // pred_check_branch
      %84 = sbr.rel (0) target = $region41
    $region40: #{_fwd.7} parent=1 // pred_region
      _
    $region41: #{_fwd.7} parent=1 // pred_fallthru
      _
    // Predicated region
    $region42: #{_fwd.7} parent=1 // pred_check
      _
    $region43: #{_fwd.7} parent=1 // pred_check_branch
      %86 = sbr.rel (0) target = $region45
    $region44: #{_fwd.7} parent=1 // pred_region
      _
    $region45: #{_fwd.7} parent=1 // pred_fallthru
      _
    // Predicated region
    $region46: #{_fwd.7} parent=1 // pred_check
      _
    $region47: #{_fwd.7} parent=1 // pred_check_branch
      %88 = sbr.rel (0) target = $region49
    $region48: #{_fwd.7} parent=1 // pred_region
      %89 = dma.done [#allocation4], 16
    $region49: #{_fwd.7} parent=1 // pred_fallthru
      _
    // Predicated region
    $region50: #{_fwd.7} parent=1 // pred_check
      _
    $region51: #{_fwd.7} parent=1 // pred_check_branch
      %91 = sbr.rel (0) target = $region53
    $region52: #{_fwd.7} parent=1 // pred_region
      %92 = dma.done [#allocation6], 2048
    $region53: #{_fwd.7} parent=1 // pred_fallthru
      _
    // Predicated region
    $region54: #{_fwd.7} parent=1 // pred_check
      _
    $region55: #{_fwd.7} parent=1 // pred_check_branch
      %94 = sbr.rel (0) target = $region57
    $region56: #{_fwd.7} parent=1 // pred_region
      %95 = dma.done [#allocation6], 16
    $region57: #{_fwd.7} parent=1 // pred_fallthru
      _
    // Predicated region
    $region58: #{_fwd.7} parent=1 // pred_check
      _
    $region59: #{_fwd.7} parent=1 // pred_check_branch
      %97 = sbr.rel (0) target = $region61
    $region60: #{_fwd.7} parent=1 // pred_region
      %98 = dma.done [#allocation9], 16
    $region61: #{_fwd.7} parent=1 // pred_fallthru
      _
    // Predicated region
    $region62: #{_fwd.7} parent=1 // pred_check
      _
    $region63: #{_fwd.7} parent=1 // pred_check_branch
      %100 = sbr.rel (0) target = $region65
    $region64: #{_fwd.7} parent=1 // pred_region
      %101 = dma.done [#allocation9], 16
    $region65: #{_fwd.7} parent=1 // pred_fallthru
      _
    %v103 = vld [vmem:[%s0] sm:$0xff]
    %v104 = vld [vmem:[%s1] sm:$0xff]
    %v105 = vld [vmem:[%s2] sm:$0xff]
    %v106 = vld [vmem:[%s2 + $0x8] sm:$0xff]
    %v107 = vld [vmem:[%s2 + $0x10] sm:$0xff]
    %v108 = vld [vmem:[%s2 + $0x18] sm:$0xff]
    %v109 = vld [vmem:[%s2 + $0x20] sm:$0xff]
    %v110 = vld [vmem:[%s2 + $0x28] sm:$0xff]
    %v111 = vld [vmem:[%s2 + $0x30] sm:$0xff]
    %v112 = vld [vmem:[%s2 + $0x38] sm:$0xff]
    %v113 = vld [vmem:[%s2 + $0x40] sm:$0xff]
    %v114 = vld [vmem:[%s2 + $0x48] sm:$0xff]
    %v115 = vld [vmem:[%s2 + $0x50] sm:$0xff]
    %v116 = vld [vmem:[%s2 + $0x58] sm:$0xff]
    %v117 = vld [vmem:[%s2 + $0x60] sm:$0xff]
    %v118 = vld [vmem:[%s2 + $0x68] sm:$0xff]
    %v119 = vld [vmem:[%s2 + $0x70] sm:$0xff]
    %v120 = vld [vmem:[%s2 + $0x78] sm:$0xff]
    %v121 = vpack.c.bf16 %v104, %v104
    %v122 = vpack.c.bf16 %v106, %v105
    %v123 = vpack.c.bf16 %v108, %v107
    %v124 = vpack.c.bf16 %v110, %v109
    %v125 = vpack.c.bf16 %v112, %v111
    %v126 = vpack.c.bf16 %v114, %v113
    %v127 = vpack.c.bf16 %v116, %v115
    %v128 = vpack.c.bf16 %v118, %v117
    %v129 = vpack.c.bf16 %v120, %v119
    %130 = vmatprep.subr.bf16.mxu0 0
    %131 = vmatpush1.bf16.msra.mxu0 %v129
    %132 = vmatprep.subr.bf16.mxu0 0
    %133 = vmatpush1.bf16.msra.mxu0 %v128
    %134 = vmatprep.subr.bf16.mxu0 0
    %135 = vmatpush1.bf16.msra.mxu0 %v127
    %136 = vmatprep.subr.bf16.mxu0 0
    %137 = vmatpush1.bf16.msra.mxu0 %v126
    %138 = vmatprep.subr.bf16.mxu0 0
    %139 = vmatpush1.bf16.msra.mxu0 %v125
    %140 = vmatprep.subr.bf16.mxu0 0
    %141 = vmatpush1.bf16.msra.mxu0 %v124
    %142 = vmatprep.subr.bf16.mxu0 0
    %143 = vmatpush1.bf16.msra.mxu0 %v123
    %144 = vmatprep.subr.bf16.mxu0 0
    %145 = vmatpush1.bf16.msra.mxu0 %v122
    %146 = vmatprep.subr.bf16.mxu0 0
    %147 = vmatpush2.bf16.msra.mxu0 0
    %148 = vmatprep.subr.bf16.mxu0 0
    %149 = vmatpush2.bf16.msra.mxu0 0
    %150 = vmatprep.subr.bf16.mxu0 0
    %151 = vmatpush2.bf16.msra.mxu0 0
    %152 = vmatprep.subr.bf16.mxu0 0
    %153 = vmatpush2.bf16.msra.mxu0 0
    %154 = vmatprep.subr.bf16.mxu0 0
    %155 = vmatpush2.bf16.msra.mxu0 0
    %156 = vmatprep.subr.bf16.mxu0 0
    %157 = vmatpush2.bf16.msra.mxu0 0
    %158 = vmatprep.subr.bf16.mxu0 0
    %159 = vmatpush2.bf16.msra.mxu0 0
    %160 = vmatprep.subr.bf16.mxu0 0
    %161 = vmatpush2.bf16.msra.mxu0 0
    %162 = vmatprep.mubr.bf16.mxu0 0
    %163 = vmatmul.mubr.bf16.gmra.mxu0 %v121
    %v164 = vpop.f32.mrf.mxu0
    %v165 = vadd.f32 0.0, %v164
    %v166 = vpop.f32.mrf.mxu0
    %v167 = vpop.f32.mrf.mxu0
    %v168 = vpop.f32.mrf.mxu0
    %169 = vdwg.mxu0
    %v170 = vlaneseq
    %v171 = vshrl.u32 %v170, 7
    %v172 = vlaneseq
    %v173 = vand.u32 %v172, 127
    %vm174 = vcmp.eq.s32.totalorder %v171, %v173
    %v175 = vsel %vm174, 1, 0
    %v176 = vcvt.s32.f32 %v175
    %v177 = vadd.f32 %v103, %v176
    %vm178 = vcmask 64512
    %v179 = vsel %vm178, %v177, 0.0
    %180 = vadd.xlane.f32.xlu0 %v179
    %v181 = vpop.xlane.xlu0 %180
    %v182 = vmax.f32 %v181, 1e-12
    %v183 = vrsqrt.pop %v182
    %v184 = vmul.f32 %v183, %v165
    %v185 = vpack.c.bf16 %v177, %v177
    %v186 = vpack.c.bf16 %v184, %v184
    %v188 = vsel %vm178, %v185, 0
    %vm190 = vcmask 1043456
    %v192 = vsel %vm190, %v186, 0
    %194 = vmatprep.subr.bf16.mxu0 0
    %195 = vmatpush1.bf16.msra.mxu0 0
    %196 = vmatprep.subr.bf16.mxu0 0
    %197 = vmatpush1.bf16.msra.mxu0 0
    %198 = vmatprep.subr.bf16.mxu0 0
    %199 = vmatpush1.bf16.msra.mxu0 0
    %200 = vmatprep.subr.bf16.mxu0 0
    %201 = vmatpush1.bf16.msra.mxu0 0
    %202 = vmatprep.subr.bf16.mxu0 0
    %203 = vmatpush1.bf16.msra.mxu0 0
    %204 = vmatprep.subr.bf16.mxu0 0
    %205 = vmatpush1.bf16.msra.mxu0 0
    %206 = vmatprep.subr.bf16.mxu0 0
    %207 = vmatpush1.bf16.msra.mxu0 0
    %208 = vmatprep.subr.bf16.mxu0 0
    %209 = vmatpush1.bf16.msra.mxu0 %v192
    %210 = vmatprep.subr.bf16.mxu0 0
    %211 = vmatpush2.bf16.msra.mxu0 0
    %212 = vmatprep.subr.bf16.mxu0 0
    %213 = vmatpush2.bf16.msra.mxu0 0
    %214 = vmatprep.subr.bf16.mxu0 0
    %215 = vmatpush2.bf16.msra.mxu0 0
    %216 = vmatprep.subr.bf16.mxu0 0
    %217 = vmatpush2.bf16.msra.mxu0 0
    %218 = vmatprep.subr.bf16.mxu0 0
    %219 = vmatpush2.bf16.msra.mxu0 0
    %220 = vmatprep.subr.bf16.mxu0 0
    %221 = vmatpush2.bf16.msra.mxu0 0
    %222 = vmatprep.subr.bf16.mxu0 0
    %223 = vmatpush2.bf16.msra.mxu0 0
    %224 = vmatprep.subr.bf16.mxu0 0
    %225 = vmatpush2.bf16.msra.mxu0 0
    %226 = vmatprep.mubr.bf16.mxu0 0
    %227 = vmatmul.mubr.bf16.gmra.mxu0 %v188
    %v228 = vpop.f32.mrf.mxu0
    %v229 = vadd.f32 0.0, %v228
    %v230 = vpop.f32.mrf.mxu0
    %v231 = vpop.f32.mrf.mxu0
    %v232 = vpop.f32.mrf.mxu0
    %233 = vdwg.mxu0
    %v234 = vmul.f32 %v183, %v229
    %v235 = vld [vmem:[#allocation3] sm:$0x1]
    %v237 = vlaneseq
    %v238 = vshrl.u32 %v237, 7
    %v239 = vsub.s32 0, %v238
    %v240 = vrot.slane %v235, %v239
    %v242 = vadd.f32 %v234, %v240
    %v243 = vld [vmem:[#allocation5] sm:$0xff]
    %v244 = vld [vmem:[#allocation5 + $0x8] sm:$0xff]
    %v245 = vld [vmem:[#allocation5 + $0x10] sm:$0xff]
    %v246 = vld [vmem:[#allocation5 + $0x18] sm:$0xff]
    %v247 = vld [vmem:[#allocation5 + $0x20] sm:$0xff]
    %v248 = vld [vmem:[#allocation5 + $0x28] sm:$0xff]
    %v249 = vld [vmem:[#allocation5 + $0x30] sm:$0xff]
    %v250 = vld [vmem:[#allocation5 + $0x38] sm:$0xff]
    %v251 = vld [vmem:[#allocation5 + $0x40] sm:$0xff]
    %v252 = vld [vmem:[#allocation5 + $0x48] sm:$0xff]
    %v253 = vld [vmem:[#allocation5 + $0x50] sm:$0xff]
    %v254 = vld [vmem:[#allocation5 + $0x58] sm:$0xff]
    %v255 = vld [vmem:[#allocation5 + $0x60] sm:$0xff]
    %v256 = vld [vmem:[#allocation5 + $0x68] sm:$0xff]
    %v257 = vld [vmem:[#allocation5 + $0x70] sm:$0xff]
    %v258 = vld [vmem:[#allocation5 + $0x78] sm:$0xff]
    %v259 = vpack.c.bf16 %v242, %v242
    %v260 = vpack.c.bf16 %v244, %v243
    %v261 = vpack.c.bf16 %v246, %v245
    %v262 = vpack.c.bf16 %v248, %v247
    %v263 = vpack.c.bf16 %v250, %v249
    %v264 = vpack.c.bf16 %v252, %v251
    %v265 = vpack.c.bf16 %v254, %v253
    %v266 = vpack.c.bf16 %v256, %v255
    %v267 = vpack.c.bf16 %v258, %v257
    %v268 = vld [vmem:[#allocation7] sm:$0x1]
    %v270 = vlaneseq
    %v271 = vshrl.u32 %v270, 7
    %v272 = vsub.s32 0, %v271
    %v273 = vrot.slane %v268, %v272
    %275 = vmatprep.subr.bf16.mxu0 0
    %276 = vmatpush1.bf16.msra.mxu0 %v267
    %277 = vmatprep.subr.bf16.mxu0 0
    %278 = vmatpush1.bf16.msra.mxu0 %v266
    %279 = vmatprep.subr.bf16.mxu0 0
    %280 = vmatpush1.bf16.msra.mxu0 %v265
    %281 = vmatprep.subr.bf16.mxu0 0
    %282 = vmatpush1.bf16.msra.mxu0 %v264
    %283 = vmatprep.subr.bf16.mxu0 0
    %284 = vmatpush1.bf16.msra.mxu0 %v263
    %285 = vmatprep.subr.bf16.mxu0 0
    %286 = vmatpush1.bf16.msra.mxu0 %v262
    %287 = vmatprep.subr.bf16.mxu0 0
    %288 = vmatpush1.bf16.msra.mxu0 %v261
    %289 = vmatprep.subr.bf16.mxu0 0
    %290 = vmatpush1.bf16.msra.mxu0 %v260
    %291 = vmatprep.subr.bf16.mxu0 0
    %292 = vmatpush2.bf16.msra.mxu0 0
    %293 = vmatprep.subr.bf16.mxu0 0
    %294 = vmatpush2.bf16.msra.mxu0 0
    %295 = vmatprep.subr.bf16.mxu0 0
    %296 = vmatpush2.bf16.msra.mxu0 0
    %297 = vmatprep.subr.bf16.mxu0 0
    %298 = vmatpush2.bf16.msra.mxu0 0
    %299 = vmatprep.subr.bf16.mxu0 0
    %300 = vmatpush2.bf16.msra.mxu0 0
    %301 = vmatprep.subr.bf16.mxu0 0
    %302 = vmatpush2.bf16.msra.mxu0 0
    %303 = vmatprep.subr.bf16.mxu0 0
    %304 = vmatpush2.bf16.msra.mxu0 0
    %305 = vmatprep.subr.bf16.mxu0 0
    %306 = vmatpush2.bf16.msra.mxu0 0
    %307 = vmatprep.mubr.bf16.mxu0 0
    %308 = vmatmul.mubr.bf16.gmra.mxu0 %v259
    %v309 = vpop.f32.mrf.mxu0
    %v310 = vadd.f32 %v273, %v309
    %v311 = vpop.f32.mrf.mxu0
    %v312 = vpop.f32.mrf.mxu0
    %v313 = vpop.f32.mrf.mxu0
    %314 = vdwg.mxu0
    %v315 = vmax.f32 %v310, 0.0
    %v316 = vld [vmem:[#allocation8] sm:$0x1]
    %v317 = vld [vmem:[#allocation10] sm:$0x1]
    %v318 = vrot.slane %v315, 4
    %v319 = vadd.f32 %v315, %v318
    %v320 = vrot.slane %v319, 2
    %v321 = vadd.f32 %v319, %v320
    %v322 = vrot.slane %v321, 1
    %v323 = vadd.f32 %v321, %v322
    %v324 = vrcp.pop 8.0
    %v325 = vmul.f32 %v323, %v324
    %v326 = vsub.f32 %v315, %v325
    %v327 = vmul.f32 %v326, %v326
    %v328 = vrot.slane %v327, 4
    %v329 = vadd.f32 %v327, %v328
    %v330 = vrot.slane %v329, 2
    %v331 = vadd.f32 %v329, %v330
    %v332 = vrot.slane %v331, 1
    %v333 = vadd.f32 %v331, %v332
    %v334 = vmul.f32 %v333, %v324
    %v335 = vadd.f32 %v334, 1e-05
    %v336 = vrsqrt.pop %v335
    %v337 = vmul.f32 %v326, %v336
    %v339 = vlaneseq
    %v340 = vshrl.u32 %v339, 7
    %v341 = vsub.s32 0, %v340
    %v342 = vrot.slane %v316, %v341
    %v344 = vmul.f32 %v337, %v342
    %v346 = vlaneseq
    %v347 = vshrl.u32 %v346, 7
    %v348 = vsub.s32 0, %v347
    %v349 = vrot.slane %v317, %v348
    %v351 = vadd.f32 %v344, %v349
    %v352 = vld [vmem:[%s8] sm:$0xff]
    %v353 = vld [vmem:[%s8 + $0x8] sm:$0xff]
    %v354 = vld [vmem:[%s8 + $0x10] sm:$0xff]
    %v355 = vld [vmem:[%s8 + $0x18] sm:$0xff]
    %v356 = vld [vmem:[%s8 + $0x20] sm:$0xff]
    %v357 = vld [vmem:[%s8 + $0x28] sm:$0xff]
    %v358 = vld [vmem:[%s8 + $0x30] sm:$0xff]
    %v359 = vld [vmem:[%s8 + $0x38] sm:$0xff]
    %v360 = vld [vmem:[%s8 + $0x40] sm:$0xff]
    %v361 = vld [vmem:[%s8 + $0x48] sm:$0xff]
    %v362 = vld [vmem:[%s8 + $0x50] sm:$0xff]
    %v363 = vld [vmem:[%s8 + $0x58] sm:$0xff]
    %v364 = vld [vmem:[%s8 + $0x60] sm:$0xff]
    %v365 = vld [vmem:[%s8 + $0x68] sm:$0xff]
    %v366 = vld [vmem:[%s8 + $0x70] sm:$0xff]
    %v367 = vld [vmem:[%s8 + $0x78] sm:$0xff]
    %v368 = vpack.c.bf16 %v351, %v351
    %v369 = vpack.c.bf16 %v353, %v352
    %v370 = vpack.c.bf16 %v355, %v354
    %v371 = vpack.c.bf16 %v357, %v356
    %v372 = vpack.c.bf16 %v359, %v358
    %v373 = vpack.c.bf16 %v361, %v360
    %v374 = vpack.c.bf16 %v363, %v362
    %v375 = vpack.c.bf16 %v365, %v364
    %v376 = vpack.c.bf16 %v367, %v366
    %v377 = vld [vmem:[%s9] sm:$0xff]
    %v378 = vld [vmem:[%s9 + $0x8] sm:$0xff]
    %v379 = vld [vmem:[%s9 + $0x10] sm:$0xff]
    %v380 = vld [vmem:[%s9 + $0x18] sm:$0xff]
    %v381 = vld [vmem:[%s9 + $0x20] sm:$0xff]
    %v382 = vld [vmem:[%s9 + $0x28] sm:$0xff]
    %v383 = vld [vmem:[%s9 + $0x30] sm:$0xff]
    %v384 = vld [vmem:[%s9 + $0x38] sm:$0xff]
    %v385 = vld [vmem:[%s9 + $0x40] sm:$0xff]
    %v386 = vld [vmem:[%s9 + $0x48] sm:$0xff]
    %v387 = vld [vmem:[%s9 + $0x50] sm:$0xff]
    %v388 = vld [vmem:[%s9 + $0x58] sm:$0xff]
    %v389 = vld [vmem:[%s9 + $0x60] sm:$0xff]
    %v390 = vld [vmem:[%s9 + $0x68] sm:$0xff]
    %v391 = vld [vmem:[%s9 + $0x70] sm:$0xff]
    %v392 = vld [vmem:[%s9 + $0x78] sm:$0xff]
    %v393 = vpack.c.bf16 %v378, %v377
    %v394 = vpack.c.bf16 %v380, %v379
    %v395 = vpack.c.bf16 %v382, %v381
    %v396 = vpack.c.bf16 %v384, %v383
    %v397 = vpack.c.bf16 %v386, %v385
    %v398 = vpack.c.bf16 %v388, %v387
    %v399 = vpack.c.bf16 %v390, %v389
    %v400 = vpack.c.bf16 %v392, %v391
    %401 = vmatprep.subr.bf16.mxu0 0
    %402 = vmatpush1.bf16.msra.mxu0 %v400
    %403 = vmatprep.subr.bf16.mxu0 0
    %404 = vmatpush1.bf16.msra.mxu0 %v399
    %405 = vmatprep.subr.bf16.mxu0 0
    %406 = vmatpush1.bf16.msra.mxu0 %v398
    %407 = vmatprep.subr.bf16.mxu0 0
    %408 = vmatpush1.bf16.msra.mxu0 %v397
    %409 = vmatprep.subr.bf16.mxu0 0
    %410 = vmatpush1.bf16.msra.mxu0 %v396
    %411 = vmatprep.subr.bf16.mxu0 0
    %412 = vmatpush1.bf16.msra.mxu0 %v395
    %413 = vmatprep.subr.bf16.mxu0 0
    %414 = vmatpush1.bf16.msra.mxu0 %v394
    %415 = vmatprep.subr.bf16.mxu0 0
    %416 = vmatpush1.bf16.msra.mxu0 %v393
    %417 = vmatprep.subr.bf16.mxu0 0
    %418 = vmatpush2.bf16.msra.mxu0 0
    %419 = vmatprep.subr.bf16.mxu0 0
    %420 = vmatpush2.bf16.msra.mxu0 0
    %421 = vmatprep.subr.bf16.mxu0 0
    %422 = vmatpush2.bf16.msra.mxu0 0
    %423 = vmatprep.subr.bf16.mxu0 0
    %424 = vmatpush2.bf16.msra.mxu0 0
    %425 = vmatprep.subr.bf16.mxu0 0
    %426 = vmatpush2.bf16.msra.mxu0 0
    %427 = vmatprep.subr.bf16.mxu0 0
    %428 = vmatpush2.bf16.msra.mxu0 0
    %429 = vmatprep.subr.bf16.mxu0 0
    %430 = vmatpush2.bf16.msra.mxu0 0
    %431 = vmatprep.subr.bf16.mxu0 0
    %432 = vmatpush2.bf16.msra.mxu0 0
    %433 = vmatprep.mubr.bf16.mxu0 0
    %434 = vmatmul.mubr.bf16.gmra.mxu0 %v368
    %v435 = vpop.f32.mrf.mxu0
    %v436 = vadd.f32 0.0, %v435
    %v437 = vpop.f32.mrf.mxu0
    %v438 = vpop.f32.mrf.mxu0
    %v439 = vpop.f32.mrf.mxu0
    %440 = vdwg.mxu0
    %v441 = vpack.c.bf16 %v103, %v103
    %v442 = vpack.c.bf16 %v436, %v436
    %v444 = vsel %vm178, %v441, 0
    %v447 = vsel %vm190, %v442, 0
    %449 = vmatprep.subr.bf16.mxu0 0
    %450 = vmatpush1.bf16.msra.mxu0 0
    %451 = vmatprep.subr.bf16.mxu0 0
    %452 = vmatpush1.bf16.msra.mxu0 0
    %453 = vmatprep.subr.bf16.mxu0 0
    %454 = vmatpush1.bf16.msra.mxu0 0
    %455 = vmatprep.subr.bf16.mxu0 0
    %456 = vmatpush1.bf16.msra.mxu0 0
    %457 = vmatprep.subr.bf16.mxu0 0
    %458 = vmatpush1.bf16.msra.mxu0 0
    %459 = vmatprep.subr.bf16.mxu0 0
    %460 = vmatpush1.bf16.msra.mxu0 0
    %461 = vmatprep.subr.bf16.mxu0 0
    %462 = vmatpush1.bf16.msra.mxu0 0
    %463 = vmatprep.subr.bf16.mxu0 0
    %464 = vmatpush1.bf16.msra.mxu0 %v447
    %465 = vmatprep.subr.bf16.mxu0 0
    %466 = vmatpush2.bf16.msra.mxu0 0
    %467 = vmatprep.subr.bf16.mxu0 0
    %468 = vmatpush2.bf16.msra.mxu0 0
    %469 = vmatprep.subr.bf16.mxu0 0
    %470 = vmatpush2.bf16.msra.mxu0 0
    %471 = vmatprep.subr.bf16.mxu0 0
    %472 = vmatpush2.bf16.msra.mxu0 0
    %473 = vmatprep.subr.bf16.mxu0 0
    %474 = vmatpush2.bf16.msra.mxu0 0
    %475 = vmatprep.subr.bf16.mxu0 0
    %476 = vmatpush2.bf16.msra.mxu0 0
    %477 = vmatprep.subr.bf16.mxu0 0
    %478 = vmatpush2.bf16.msra.mxu0 0
    %479 = vmatprep.subr.bf16.mxu0 0
    %480 = vmatpush2.bf16.msra.mxu0 0
    %481 = vmatprep.mubr.bf16.mxu0 0
    %482 = vmatmul.mubr.bf16.gmra.mxu0 %v444
    %v483 = vpop.f32.mrf.mxu0
    %v484 = vadd.f32 0.0, %v483
    %v485 = vpop.f32.mrf.mxu0
    %v486 = vpop.f32.mrf.mxu0
    %v487 = vpop.f32.mrf.mxu0
    %488 = vdwg.mxu0
    %489 = vmatprep.subr.bf16.mxu0 0
    %490 = vmatpush1.bf16.msra.mxu0 %v376
    %491 = vmatprep.subr.bf16.mxu0 0
    %492 = vmatpush1.bf16.msra.mxu0 %v375
    %493 = vmatprep.subr.bf16.mxu0 0
    %494 = vmatpush1.bf16.msra.mxu0 %v374
    %495 = vmatprep.subr.bf16.mxu0 0
    %496 = vmatpush1.bf16.msra.mxu0 %v373
    %497 = vmatprep.subr.bf16.mxu0 0
    %498 = vmatpush1.bf16.msra.mxu0 %v372
    %499 = vmatprep.subr.bf16.mxu0 0
    %500 = vmatpush1.bf16.msra.mxu0 %v371
    %501 = vmatprep.subr.bf16.mxu0 0
    %502 = vmatpush1.bf16.msra.mxu0 %v370
    %503 = vmatprep.subr.bf16.mxu0 0
    %504 = vmatpush1.bf16.msra.mxu0 %v369
    %505 = vmatprep.subr.bf16.mxu0 0
    %506 = vmatpush2.bf16.msra.mxu0 0
    %507 = vmatprep.subr.bf16.mxu0 0
    %508 = vmatpush2.bf16.msra.mxu0 0
    %509 = vmatprep.subr.bf16.mxu0 0
    %510 = vmatpush2.bf16.msra.mxu0 0
    %511 = vmatprep.subr.bf16.mxu0 0
    %512 = vmatpush2.bf16.msra.mxu0 0
    %513 = vmatprep.subr.bf16.mxu0 0
    %514 = vmatpush2.bf16.msra.mxu0 0
    %515 = vmatprep.subr.bf16.mxu0 0
    %516 = vmatpush2.bf16.msra.mxu0 0
    %517 = vmatprep.subr.bf16.mxu0 0
    %518 = vmatpush2.bf16.msra.mxu0 0
    %519 = vmatprep.subr.bf16.mxu0 0
    %520 = vmatpush2.bf16.msra.mxu0 0
    %521 = vmatprep.mubr.bf16.mxu0 0
    %522 = vmatmul.mubr.bf16.gmra.mxu0 %v368
    %v523 = vpop.f32.mrf.mxu0
    %v524 = vadd.f32 %v484, %v523
    %v525 = vpop.f32.mrf.mxu0
    %v526 = vpop.f32.mrf.mxu0
    %v527 = vpop.f32.mrf.mxu0
    %528 = vdwg.mxu0
    %v529 = vld [vmem:[#allocation2] sm:$0x1]
    %v531 = vlaneseq
    %v532 = vshrl.u32 %v531, 7
    %v533 = vsub.s32 0, %v532
    %v534 = vrot.slane %v529, %v533
    %v536 = vadd.f32 %v524, %v534
    %v537 = vtanh.pop %v536
    %539 = vset.pattern.permute.xlu0 0
    %540 = vperm.xlu0 %539, %v537
    %v541 = vpop.permute.xlu0 %540
    %v543 = vmul.f32 %v351, %v541
    %544 = vst [vmem:[%s11] sm:$0xff] %v543
    %546 = vset.pattern.permute.xlu0 0
    %547 = vperm.xlu0 %546, %v536
    %v548 = vpop.permute.xlu0 %547
    %550 = vst [vmem:[%s12] sm:$0xff] %v548
    // Predicated region
    $region66: #{_fwd.7} parent=1 // pred_check
      _
    $region67: #{_fwd.7} parent=1 // pred_check_branch
      %552 = sbr.rel (0) target = $region69
    $region68: #{_fwd.7} parent=1 // pred_region
      _
    $region69: #{_fwd.7} parent=1 // pred_fallthru
      _
    // Predicated region
    $region70: #{_fwd.7} parent=1 // pred_check
      _
    $region71: #{_fwd.7} parent=1 // pred_check_branch
      %554 = sbr.rel (0) target = $region73
    $region72: #{_fwd.7} parent=1 // pred_region
      _
    $region73: #{_fwd.7} parent=1 // pred_fallthru
      _
    // Predicated region
    $region74: #{_fwd.7} parent=1 // pred_check
      _
    $region75: #{_fwd.7} parent=1 // pred_check_branch
      %556 = sbr.rel (0) target = $region77
    $region76: #{_fwd.7} parent=1 // pred_region
      _
    $region77: #{_fwd.7} parent=1 // pred_fallthru
      _
    // Predicated region
    $region78: #{_fwd.7} parent=1 // pred_check
      _
    $region79: #{_fwd.7} parent=1 // pred_check_branch
      %558 = sbr.rel (0) target = $region81
    $region80: #{_fwd.7} parent=1 // pred_region
      _
    $region81: #{_fwd.7} parent=1 // pred_fallthru
      _
    %559 = vsyncpa [#allocation4], 1
    %560 = vsyncpa [#allocation6], 1
    %561 = vsyncpa [#allocation9], 1

// kernel: _fwd.8
$region0: #{_fwd.8}
  #allocation0 [shape = 'u32[]', space=smem, size = 0x4, offset = 0x4, fixed_abs, tag = 'smem constant byte address 0x4 - core index']
  #allocation1 [shape = 'u32[144,128]{1,0:T(1,128)}', space=vmem, size = 0x12000, scoped, tag = 'internal scratch']
  #allocation2 [shape = 'f32[1,1]{1,0:T(1,128)S(1)}', space=vmem, size = 0x200, scoped, tag = 'scoped memory for _fwd.8']
  %s0 = inlined_call_operand.vmem [shape: f32[4,4], index: 0, kind: input, shape index: {}]
  %s1 = inlined_call_operand.vmem [shape: f32[4,128], index: 1, kind: input, shape index: {}]
  %s2 = inlined_call_operand.hbm [shape: f32[128,128], index: 2, kind: input, shape index: {}]
  %s3 = inlined_call_operand.hbm [shape: f32[1,128], index: 3, kind: input, shape index: {}]
  %s4 = inlined_call_operand.hbm [shape: f32[128,128], index: 4, kind: input, shape index: {}]
  %s5 = inlined_call_operand.hbm [shape: f32[1,128], index: 5, kind: input, shape index: {}]
  %s6 = inlined_call_operand.hbm [shape: f32[1,128], index: 6, kind: input, shape index: {}]
  %s7 = inlined_call_operand.hbm [shape: f32[1,128], index: 7, kind: input, shape index: {}]
  %s8 = inlined_call_operand.vmem [shape: f32[128,1], index: 8, kind: input, shape index: {}]
  %s9 = inlined_call_operand.vmem [shape: f32[128,1], index: 9, kind: input, shape index: {}]
  %s10 = inlined_call_operand.<no memory space> [shape: f32[1,1], index: 10, kind: input, shape index: {}]
  %s11 = inlined_call_operand.vmem [shape: f32[4,128], index: 11, kind: output, shape index: {0}]
  %s12 = inlined_call_operand.vmem [shape: f32[4,128], index: 12, kind: output, shape index: {1}]
  %13 = xla_tuple %s11, %s12
  %s14 = sld [smem:[#allocation0]]
  $region86: #{_fwd.8} parent=0
    _
  %s16 = ssub.s32 1, %s14
  %s17 = scalar_select 0, %s16, %s14
  %v18 = vstv %s10
  %19 = vst [vmem:[#allocation2] sm:$0x1] %v18
  $region1: #{_fwd.8} parent=0
    #allocation3 [shape = 'u8[65536]{0}', space=vmem, size = 0x10000, scoped, tag = 'input window, operand 2, single buffered']
    #allocation4 [shape = 's32[1]{0}', space=sflag, size = 0x4, scoped, tag = 'scoped memory for _fwd.8']
    #allocation5 [shape = 'u8[512]{0}', space=vmem, size = 0x400, scoped, tag = 'input window, operand 3, single buffered']
    #allocation6 [shape = 's32[1]{0}', space=sflag, size = 0x4, scoped, tag = 'scoped memory for _fwd.8']
    #allocation7 [shape = 'u8[65536]{0}', space=vmem, size = 0x10000, scoped, tag = 'input window, operand 4, single buffered']
    #allocation8 [shape = 'u8[512]{0}', space=vmem, size = 0x400, scoped, tag = 'input window, operand 5, single buffered']
    #allocation9 [shape = 's32[1]{0}', space=sflag, size = 0x4, scoped, tag = 'scoped memory for _fwd.8']
    #allocation10 [shape = 'u8[512]{0}', space=vmem, size = 0x400, scoped, tag = 'input window, operand 6, single buffered']
    #allocation11 [shape = 'u8[512]{0}', space=vmem, size = 0x400, scoped, tag = 'input window, operand 7, single buffered']
    #allocation12 [shape = 's32[1]{0}', space=sflag, size = 0x4, scoped, tag = 'scoped memory for _fwd.8']
    %20 = vsyncpa [#allocation4], 0
    %21 = vsyncpa [#allocation6], 0
    %22 = vsyncpa [#allocation9], 0
    %23 = vsyncpa [#allocation12], 0
    // Predicated region
    $region2: #{_fwd.8} parent=1 // pred_check
      _
    $region3: #{_fwd.8} parent=1 // pred_check_branch
      %25 = sbr.rel (0) target = $region5
    $region4: #{_fwd.8} parent=1 // pred_region
      _
    $region5: #{_fwd.8} parent=1 // pred_fallthru
      _
    // Predicated region
    $region6: #{_fwd.8} parent=1 // pred_check
      _
    $region7: #{_fwd.8} parent=1 // pred_check_branch
      %27 = sbr.rel (0) target = $region9
    $region8: #{_fwd.8} parent=1 // pred_region
      _
    $region9: #{_fwd.8} parent=1 // pred_fallthru
      _
    // Predicated region
    $region10: #{_fwd.8} parent=1 // pred_check
      _
    $region11: #{_fwd.8} parent=1 // pred_check_branch
      %29 = sbr.rel (0) target = $region13
    $region12: #{_fwd.8} parent=1 // pred_region
      %s31 = ssub.s32 2048, 2048
      %32 = vsyncadd [#allocation4], %s31
      %s33 = sshll.u32 [#allocation3], 4
      %s34 = int_to_ptr.vmem [resolvable:$true] %s33
      %39 = dma.hbm_to_vmem [thread:$0]  %s2, 2048, %s34, [#allocation4], 128, 128, 8
    $region13: #{_fwd.8} parent=1 // pred_fallthru
      _
    // Predicated region
    $region14: #{_fwd.8} parent=1 // pred_check
      _
    $region15: #{_fwd.8} parent=1 // pred_check_branch
      %41 = sbr.rel (0) target = $region17
    $region16: #{_fwd.8} parent=1 // pred_region
      %s43 = ssub.s32 16, 16
      %44 = vsyncadd [#allocation6], %s43
      %s46 = sshll.u32 [#allocation5], 4
      %s47 = int_to_ptr.vmem [resolvable:$true] %s46
      %49 = dma.hbm_to_vmem [thread:$0]  %s3, 16, %s47, [#allocation6]
    $region17: #{_fwd.8} parent=1 // pred_fallthru
      _
    // Predicated region
    $region18: #{_fwd.8} parent=1 // pred_check
      _
    $region19: #{_fwd.8} parent=1 // pred_check_branch
      %51 = sbr.rel (0) target = $region21
    $region20: #{_fwd.8} parent=1 // pred_region
      %s53 = ssub.s32 2048, 2048
      %54 = vsyncadd [#allocation6], %s53
      %s55 = sshll.u32 [#allocation7], 4
      %s56 = int_to_ptr.vmem [resolvable:$true] %s55
      %61 = dma.hbm_to_vmem [thread:$0]  %s4, 2048, %s56, [#allocation6], 128, 128, 8
    $region21: #{_fwd.8} parent=1 // pred_fallthru
      _
    // Predicated region
    $region22: #{_fwd.8} parent=1 // pred_check
      _
    $region23: #{_fwd.8} parent=1 // pred_check_branch
      %63 = sbr.rel (0) target = $region25
    $region24: #{_fwd.8} parent=1 // pred_region
      %s65 = ssub.s32 16, 16
      %66 = vsyncadd [#allocation9], %s65
      %s68 = sshll.u32 [#allocation8], 4
      %s69 = int_to_ptr.vmem [resolvable:$true] %s68
      %71 = dma.hbm_to_vmem [thread:$0]  %s5, 16, %s69, [#allocation9]
    $region25: #{_fwd.8} parent=1 // pred_fallthru
      _
    // Predicated region
    $region26: #{_fwd.8} parent=1 // pred_check
      _
    $region27: #{_fwd.8} parent=1 // pred_check_branch
      %73 = sbr.rel (0) target = $region29
    $region28: #{_fwd.8} parent=1 // pred_region
      %s75 = ssub.s32 16, 16
      %76 = vsyncadd [#allocation9], %s75
      %s78 = sshll.u32 [#allocation10], 4
      %s79 = int_to_ptr.vmem [resolvable:$true] %s78
      %81 = dma.hbm_to_vmem [thread:$0]  %s6, 16, %s79, [#allocation9]
    $region29: #{_fwd.8} parent=1 // pred_fallthru
      _
    // Predicated region
    $region30: #{_fwd.8} parent=1 // pred_check
      _
    $region31: #{_fwd.8} parent=1 // pred_check_branch
      %83 = sbr.rel (0) target = $region33
    $region32: #{_fwd.8} parent=1 // pred_region
      %s85 = ssub.s32 16, 16
      %86 = vsyncadd [#allocation12], %s85
      %s88 = sshll.u32 [#allocation11], 4
      %s89 = int_to_ptr.vmem [resolvable:$true] %s88
      %91 = dma.hbm_to_vmem [thread:$0]  %s7, 16, %s89, [#allocation12]
    $region33: #{_fwd.8} parent=1 // pred_fallthru
      _
    // Predicated region
    $region34: #{_fwd.8} parent=1 // pred_check
      _
    $region35: #{_fwd.8} parent=1 // pred_check_branch
      %93 = sbr.rel (0) target = $region37
    $region36: #{_fwd.8} parent=1 // pred_region
      _
    $region37: #{_fwd.8} parent=1 // pred_fallthru
      _
    // Predicated region
    $region38: #{_fwd.8} parent=1 // pred_check
      _
    $region39: #{_fwd.8} parent=1 // pred_check_branch
      %95 = sbr.rel (0) target = $region41
    $region40: #{_fwd.8} parent=1 // pred_region
      _
    $region41: #{_fwd.8} parent=1 // pred_fallthru
      _
    // Predicated region
    $region42: #{_fwd.8} parent=1 // pred_check
      _
    $region43: #{_fwd.8} parent=1 // pred_check_branch
      %97 = sbr.rel (0) target = $region45
    $region44: #{_fwd.8} parent=1 // pred_region
      _
    $region45: #{_fwd.8} parent=1 // pred_fallthru
      _
    // Predicated region
    $region46: #{_fwd.8} parent=1 // pred_check
      _
    $region47: #{_fwd.8} parent=1 // pred_check_branch
      %99 = sbr.rel (0) target = $region49
    $region48: #{_fwd.8} parent=1 // pred_region
      %100 = dma.done [#allocation4], 2048
    $region49: #{_fwd.8} parent=1 // pred_fallthru
      _
    // Predicated region
    $region50: #{_fwd.8} parent=1 // pred_check
      _
    $region51: #{_fwd.8} parent=1 // pred_check_branch
      %102 = sbr.rel (0) target = $region53
    $region52: #{_fwd.8} parent=1 // pred_region
      %103 = dma.done [#allocation6], 16
    $region53: #{_fwd.8} parent=1 // pred_fallthru
      _
    // Predicated region
    $region54: #{_fwd.8} parent=1 // pred_check
      _
    $region55: #{_fwd.8} parent=1 // pred_check_branch
      %105 = sbr.rel (0) target = $region57
    $region56: #{_fwd.8} parent=1 // pred_region
      %106 = dma.done [#allocation6], 2048
    $region57: #{_fwd.8} parent=1 // pred_fallthru
      _
    // Predicated region
    $region58: #{_fwd.8} parent=1 // pred_check
      _
    $region59: #{_fwd.8} parent=1 // pred_check_branch
      %108 = sbr.rel (0) target = $region61
    $region60: #{_fwd.8} parent=1 // pred_region
      %109 = dma.done [#allocation9], 16
    $region61: #{_fwd.8} parent=1 // pred_fallthru
      _
    // Predicated region
    $region62: #{_fwd.8} parent=1 // pred_check
      _
    $region63: #{_fwd.8} parent=1 // pred_check_branch
      %111 = sbr.rel (0) target = $region65
    $region64: #{_fwd.8} parent=1 // pred_region
      %112 = dma.done [#allocation9], 16
    $region65: #{_fwd.8} parent=1 // pred_fallthru
      _
    // Predicated region
    $region66: #{_fwd.8} parent=1 // pred_check
      _
    $region67: #{_fwd.8} parent=1 // pred_check_branch
      %114 = sbr.rel (0) target = $region69
    $region68: #{_fwd.8} parent=1 // pred_region
      %115 = dma.done [#allocation12], 16
    $region69: #{_fwd.8} parent=1 // pred_fallthru
      _
    %v117 = vld [vmem:[%s0] sm:$0xf]
    %v118 = vld [vmem:[%s1] sm:$0xf]
    %v119 = vld [vmem:[#allocation3] sm:$0xff]
    %v120 = vld [vmem:[#allocation3 + $0x8] sm:$0xff]
    %v121 = vld [vmem:[#allocation3 + $0x10] sm:$0xff]
    %v122 = vld [vmem:[#allocation3 + $0x18] sm:$0xff]
    %v123 = vld [vmem:[#allocation3 + $0x20] sm:$0xff]
    %v124 = vld [vmem:[#allocation3 + $0x28] sm:$0xff]
    %v125 = vld [vmem:[#allocation3 + $0x30] sm:$0xff]
    %v126 = vld [vmem:[#allocation3 + $0x38] sm:$0xff]
    %v127 = vld [vmem:[#allocation3 + $0x40] sm:$0xff]
    %v128 = vld [vmem:[#allocation3 + $0x48] sm:$0xff]
    %v129 = vld [vmem:[#allocation3 + $0x50] sm:$0xff]
    %v130 = vld [vmem:[#allocation3 + $0x58] sm:$0xff]
    %v131 = vld [vmem:[#allocation3 + $0x60] sm:$0xff]
    %v132 = vld [vmem:[#allocation3 + $0x68] sm:$0xff]
    %v133 = vld [vmem:[#allocation3 + $0x70] sm:$0xff]
    %v134 = vld [vmem:[#allocation3 + $0x78] sm:$0xff]
    %v135 = vpack.c.bf16 %v118, %v118
    %v136 = vpack.c.bf16 %v120, %v119
    %v137 = vpack.c.bf16 %v122, %v121
    %v138 = vpack.c.bf16 %v124, %v123
    %v139 = vpack.c.bf16 %v126, %v125
    %v140 = vpack.c.bf16 %v128, %v127
    %v141 = vpack.c.bf16 %v130, %v129
    %v142 = vpack.c.bf16 %v132, %v131
    %v143 = vpack.c.bf16 %v134, %v133
    %144 = vmatprep.subr.bf16.mxu0 0
    %145 = vmatpush1.bf16.msra.mxu0 %v143
    %146 = vmatprep.subr.bf16.mxu0 0
    %147 = vmatpush1.bf16.msra.mxu0 %v142
    %148 = vmatprep.subr.bf16.mxu0 0
    %149 = vmatpush1.bf16.msra.mxu0 %v141
    %150 = vmatprep.subr.bf16.mxu0 0
    %151 = vmatpush1.bf16.msra.mxu0 %v140
    %152 = vmatprep.subr.bf16.mxu0 0
    %153 = vmatpush1.bf16.msra.mxu0 %v139
    %154 = vmatprep.subr.bf16.mxu0 0
    %155 = vmatpush1.bf16.msra.mxu0 %v138
    %156 = vmatprep.subr.bf16.mxu0 0
    %157 = vmatpush1.bf16.msra.mxu0 %v137
    %158 = vmatprep.subr.bf16.mxu0 0
    %159 = vmatpush1.bf16.msra.mxu0 %v136
    %160 = vmatprep.subr.bf16.mxu0 0
    %161 = vmatpush2.bf16.msra.mxu0 0
    %162 = vmatprep.subr.bf16.mxu0 0
    %163 = vmatpush2.bf16.msra.mxu0 0
    %164 = vmatprep.subr.bf16.mxu0 0
    %165 = vmatpush2.bf16.msra.mxu0 0
    %166 = vmatprep.subr.bf16.mxu0 0
    %167 = vmatpush2.bf16.msra.mxu0 0
    %168 = vmatprep.subr.bf16.mxu0 0
    %169 = vmatpush2.bf16.msra.mxu0 0
    %170 = vmatprep.subr.bf16.mxu0 0
    %171 = vmatpush2.bf16.msra.mxu0 0
    %172 = vmatprep.subr.bf16.mxu0 0
    %173 = vmatpush2.bf16.msra.mxu0 0
    %174 = vmatprep.subr.bf16.mxu0 0
    %175 = vmatpush2.bf16.msra.mxu0 0
    %176 = vmatprep.mubr.bf16.mxu0 0
    %177 = vmatmul.mubr.bf16.gmra.mxu0 %v135
    %v178 = vpop.f32.mrf.mxu0
    %v179 = vadd.f32 0.0, %v178
    %v180 = vpop.f32.mrf.mxu0
    %v181 = vpop.f32.mrf.mxu0
    %v182 = vpop.f32.mrf.mxu0
    %183 = vdwg.mxu0
    %v184 = vlaneseq
    %v185 = vshrl.u32 %v184, 7
    %v186 = vlaneseq
    %v187 = vand.u32 %v186, 127
    %vm188 = vcmp.eq.s32.totalorder %v185, %v187
    %v189 = vsel %vm188, 1, 0
    %v190 = vcvt.s32.f32 %v189
    %v191 = vadd.f32 %v117, %v190
    %vm192 = vcmask 27648
    %v193 = vsel %vm192, %v191, 0.0
    %194 = vadd.xlane.f32.xlu0 %v193
    %v195 = vpop.xlane.xlu0 %194
    %v196 = vmax.f32 %v195, 1e-12
    %v197 = vrsqrt.pop %v196
    %v198 = vmul.f32 %v197, %v179
    %v199 = vpack.c.bf16 %v191, %v191
    %v200 = vpack.c.bf16 %v198, %v198
    %vm201 = vcmask 31744
    %v203 = vsel %vm201, %v199, 0
    %vm205 = vcmask 1041408
    %v207 = vsel %vm205, %v200, 0
    %209 = vmatprep.subr.bf16.mxu0 0
    %210 = vmatpush1.bf16.msra.mxu0 0
    %211 = vmatprep.subr.bf16.mxu0 0
    %212 = vmatpush1.bf16.msra.mxu0 0
    %213 = vmatprep.subr.bf16.mxu0 0
    %214 = vmatpush1.bf16.msra.mxu0 0
    %215 = vmatprep.subr.bf16.mxu0 0
    %216 = vmatpush1.bf16.msra.mxu0 0
    %217 = vmatprep.subr.bf16.mxu0 0
    %218 = vmatpush1.bf16.msra.mxu0 0
    %219 = vmatprep.subr.bf16.mxu0 0
    %220 = vmatpush1.bf16.msra.mxu0 0
    %221 = vmatprep.subr.bf16.mxu0 0
    %222 = vmatpush1.bf16.msra.mxu0 0
    %223 = vmatprep.subr.bf16.mxu0 0
    %224 = vmatpush1.bf16.msra.mxu0 %v207
    %225 = vmatprep.subr.bf16.mxu0 0
    %226 = vmatpush2.bf16.msra.mxu0 0
    %227 = vmatprep.subr.bf16.mxu0 0
    %228 = vmatpush2.bf16.msra.mxu0 0
    %229 = vmatprep.subr.bf16.mxu0 0
    %230 = vmatpush2.bf16.msra.mxu0 0
    %231 = vmatprep.subr.bf16.mxu0 0
    %232 = vmatpush2.bf16.msra.mxu0 0
    %233 = vmatprep.subr.bf16.mxu0 0
    %234 = vmatpush2.bf16.msra.mxu0 0
    %235 = vmatprep.subr.bf16.mxu0 0
    %236 = vmatpush2.bf16.msra.mxu0 0
    %237 = vmatprep.subr.bf16.mxu0 0
    %238 = vmatpush2.bf16.msra.mxu0 0
    %239 = vmatprep.subr.bf16.mxu0 0
    %240 = vmatpush2.bf16.msra.mxu0 0
    %241 = vmatprep.mubr.bf16.mxu0 0
    %242 = vmatmul.mubr.bf16.gmra.mxu0 %v203
    %v243 = vpop.f32.mrf.mxu0
    %v244 = vadd.f32 0.0, %v243
    %v245 = vpop.f32.mrf.mxu0
    %v246 = vpop.f32.mrf.mxu0
    %v247 = vpop.f32.mrf.mxu0
    %248 = vdwg.mxu0
    %v249 = vmul.f32 %v197, %v244
    %v250 = vld [vmem:[#allocation5] sm:$0x1]
    %v252 = vlaneseq
    %v253 = vshrl.u32 %v252, 7
    %v254 = vsub.s32 0, %v253
    %v255 = vrot.slane %v250, %v254
    %v257 = vadd.f32 %v249, %v255
    %v258 = vld [vmem:[#allocation7] sm:$0xff]
    %v259 = vld [vmem:[#allocation7 + $0x8] sm:$0xff]
    %v260 = vld [vmem:[#allocation7 + $0x10] sm:$0xff]
    %v261 = vld [vmem:[#allocation7 + $0x18] sm:$0xff]
    %v262 = vld [vmem:[#allocation7 + $0x20] sm:$0xff]
    %v263 = vld [vmem:[#allocation7 + $0x28] sm:$0xff]
    %v264 = vld [vmem:[#allocation7 + $0x30] sm:$0xff]
    %v265 = vld [vmem:[#allocation7 + $0x38] sm:$0xff]
    %v266 = vld [vmem:[#allocation7 + $0x40] sm:$0xff]
    %v267 = vld [vmem:[#allocation7 + $0x48] sm:$0xff]
    %v268 = vld [vmem:[#allocation7 + $0x50] sm:$0xff]
    %v269 = vld [vmem:[#allocation7 + $0x58] sm:$0xff]
    %v270 = vld [vmem:[#allocation7 + $0x60] sm:$0xff]
    %v271 = vld [vmem:[#allocation7 + $0x68] sm:$0xff]
    %v272 = vld [vmem:[#allocation7 + $0x70] sm:$0xff]
    %v273 = vld [vmem:[#allocation7 + $0x78] sm:$0xff]
    %v274 = vpack.c.bf16 %v257, %v257
    %v275 = vpack.c.bf16 %v259, %v258
    %v276 = vpack.c.bf16 %v261, %v260
    %v277 = vpack.c.bf16 %v263, %v262
    %v278 = vpack.c.bf16 %v265, %v264
    %v279 = vpack.c.bf16 %v267, %v266
    %v280 = vpack.c.bf16 %v269, %v268
    %v281 = vpack.c.bf16 %v271, %v270
    %v282 = vpack.c.bf16 %v273, %v272
    %v283 = vld [vmem:[#allocation8] sm:$0x1]
    %v285 = vlaneseq
    %v286 = vshrl.u32 %v285, 7
    %v287 = vsub.s32 0, %v286
    %v288 = vrot.slane %v283, %v287
    %290 = vmatprep.subr.bf16.mxu0 0
    %291 = vmatpush1.bf16.msra.mxu0 %v282
    %292 = vmatprep.subr.bf16.mxu0 0
    %293 = vmatpush1.bf16.msra.mxu0 %v281
    %294 = vmatprep.subr.bf16.mxu0 0
    %295 = vmatpush1.bf16.msra.mxu0 %v280
    %296 = vmatprep.subr.bf16.mxu0 0
    %297 = vmatpush1.bf16.msra.mxu0 %v279
    %298 = vmatprep.subr.bf16.mxu0 0
    %299 = vmatpush1.bf16.msra.mxu0 %v278
    %300 = vmatprep.subr.bf16.mxu0 0
    %301 = vmatpush1.bf16.msra.mxu0 %v277
    %302 = vmatprep.subr.bf16.mxu0 0
    %303 = vmatpush1.bf16.msra.mxu0 %v276
    %304 = vmatprep.subr.bf16.mxu0 0
    %305 = vmatpush1.bf16.msra.mxu0 %v275
    %306 = vmatprep.subr.bf16.mxu0 0
    %307 = vmatpush2.bf16.msra.mxu0 0
    %308 = vmatprep.subr.bf16.mxu0 0
    %309 = vmatpush2.bf16.msra.mxu0 0
    %310 = vmatprep.subr.bf16.mxu0 0
    %311 = vmatpush2.bf16.msra.mxu0 0
    %312 = vmatprep.subr.bf16.mxu0 0
    %313 = vmatpush2.bf16.msra.mxu0 0
    %314 = vmatprep.subr.bf16.mxu0 0
    %315 = vmatpush2.bf16.msra.mxu0 0
    %316 = vmatprep.subr.bf16.mxu0 0
    %317 = vmatpush2.bf16.msra.mxu0 0
    %318 = vmatprep.subr.bf16.mxu0 0
    %319 = vmatpush2.bf16.msra.mxu0 0
    %320 = vmatprep.subr.bf16.mxu0 0
    %321 = vmatpush2.bf16.msra.mxu0 0
    %322 = vmatprep.mubr.bf16.mxu0 0
    %323 = vmatmul.mubr.bf16.gmra.mxu0 %v274
    %v324 = vpop.f32.mrf.mxu0
    %v325 = vadd.f32 %v288, %v324
    %v326 = vpop.f32.mrf.mxu0
    %v327 = vpop.f32.mrf.mxu0
    %v328 = vpop.f32.mrf.mxu0
    %329 = vdwg.mxu0
    %v330 = vmax.f32 %v325, 0.0
    %v331 = vld [vmem:[#allocation10] sm:$0x1]
    %v332 = vld [vmem:[#allocation11] sm:$0x1]
    %vm333 = vcmask 1043456
    %v334 = vsel %vm333, %v330, 0.0
    %v335 = vrot.slane %v334, 4
    %v336 = vadd.f32 %v334, %v335
    %v337 = vrot.slane %v336, 2
    %v338 = vadd.f32 %v336, %v337
    %v339 = vrot.slane %v338, 1
    %v340 = vadd.f32 %v338, %v339
    %v341 = vrcp.pop 4.0
    %v342 = vmul.f32 %v340, %v341
    %v343 = vsub.f32 %v330, %v342
    %v344 = vmul.f32 %v343, %v343
    %v345 = vsel %vm333, %v344, 0.0
    %v346 = vrot.slane %v345, 4
    %v347 = vadd.f32 %v345, %v346
    %v348 = vrot.slane %v347, 2
    %v349 = vadd.f32 %v347, %v348
    %v350 = vrot.slane %v349, 1
    %v351 = vadd.f32 %v349, %v350
    %v352 = vmul.f32 %v351, %v341
    %v353 = vadd.f32 %v352, 1e-05
    %v354 = vrsqrt.pop %v353
    %v355 = vmul.f32 %v343, %v354
    %v357 = vlaneseq
    %v358 = vshrl.u32 %v357, 7
    %v359 = vsub.s32 0, %v358
    %v360 = vrot.slane %v331, %v359
    %v362 = vmul.f32 %v355, %v360
    %v364 = vlaneseq
    %v365 = vshrl.u32 %v364, 7
    %v366 = vsub.s32 0, %v365
    %v367 = vrot.slane %v332, %v366
    %v369 = vadd.f32 %v362, %v367
    %v370 = vld [vmem:[%s8] sm:$0xff]
    %v371 = vld [vmem:[%s8 + $0x8] sm:$0xff]
    %v372 = vld [vmem:[%s8 + $0x10] sm:$0xff]
    %v373 = vld [vmem:[%s8 + $0x18] sm:$0xff]
    %v374 = vld [vmem:[%s8 + $0x20] sm:$0xff]
    %v375 = vld [vmem:[%s8 + $0x28] sm:$0xff]
    %v376 = vld [vmem:[%s8 + $0x30] sm:$0xff]
    %v377 = vld [vmem:[%s8 + $0x38] sm:$0xff]
    %v378 = vld [vmem:[%s8 + $0x40] sm:$0xff]
    %v379 = vld [vmem:[%s8 + $0x48] sm:$0xff]
    %v380 = vld [vmem:[%s8 + $0x50] sm:$0xff]
    %v381 = vld [vmem:[%s8 + $0x58] sm:$0xff]
    %v382 = vld [vmem:[%s8 + $0x60] sm:$0xff]
    %v383 = vld [vmem:[%s8 + $0x68] sm:$0xff]
    %v384 = vld [vmem:[%s8 + $0x70] sm:$0xff]
    %v385 = vld [vmem:[%s8 + $0x78] sm:$0xff]
    %v386 = vpack.c.bf16 %v369, %v369
    %v387 = vpack.c.bf16 %v371, %v370
    %v388 = vpack.c.bf16 %v373, %v372
    %v389 = vpack.c.bf16 %v375, %v374
    %v390 = vpack.c.bf16 %v377, %v376
    %v391 = vpack.c.bf16 %v379, %v378
    %v392 = vpack.c.bf16 %v381, %v380
    %v393 = vpack.c.bf16 %v383, %v382
    %v394 = vpack.c.bf16 %v385, %v384
    %v395 = vld [vmem:[%s9] sm:$0xff]
    %v396 = vld [vmem:[%s9 + $0x8] sm:$0xff]
    %v397 = vld [vmem:[%s9 + $0x10] sm:$0xff]
    %v398 = vld [vmem:[%s9 + $0x18] sm:$0xff]
    %v399 = vld [vmem:[%s9 + $0x20] sm:$0xff]
    %v400 = vld [vmem:[%s9 + $0x28] sm:$0xff]
    %v401 = vld [vmem:[%s9 + $0x30] sm:$0xff]
    %v402 = vld [vmem:[%s9 + $0x38] sm:$0xff]
    %v403 = vld [vmem:[%s9 + $0x40] sm:$0xff]
    %v404 = vld [vmem:[%s9 + $0x48] sm:$0xff]
    %v405 = vld [vmem:[%s9 + $0x50] sm:$0xff]
    %v406 = vld [vmem:[%s9 + $0x58] sm:$0xff]
    %v407 = vld [vmem:[%s9 + $0x60] sm:$0xff]
    %v408 = vld [vmem:[%s9 + $0x68] sm:$0xff]
    %v409 = vld [vmem:[%s9 + $0x70] sm:$0xff]
    %v410 = vld [vmem:[%s9 + $0x78] sm:$0xff]
    %v411 = vpack.c.bf16 %v396, %v395
    %v412 = vpack.c.bf16 %v398, %v397
    %v413 = vpack.c.bf16 %v400, %v399
    %v414 = vpack.c.bf16 %v402, %v401
    %v415 = vpack.c.bf16 %v404, %v403
    %v416 = vpack.c.bf16 %v406, %v405
    %v417 = vpack.c.bf16 %v408, %v407
    %v418 = vpack.c.bf16 %v410, %v409
    %419 = vmatprep.subr.bf16.mxu0 0
    %420 = vmatpush1.bf16.msra.mxu0 %v418
    %421 = vmatprep.subr.bf16.mxu0 0
    %422 = vmatpush1.bf16.msra.mxu0 %v417
    %423 = vmatprep.subr.bf16.mxu0 0
    %424 = vmatpush1.bf16.msra.mxu0 %v416
    %425 = vmatprep.subr.bf16.mxu0 0
    %426 = vmatpush1.bf16.msra.mxu0 %v415
    %427 = vmatprep.subr.bf16.mxu0 0
    %428 = vmatpush1.bf16.msra.mxu0 %v414
    %429 = vmatprep.subr.bf16.mxu0 0
    %430 = vmatpush1.bf16.msra.mxu0 %v413
    %431 = vmatprep.subr.bf16.mxu0 0
    %432 = vmatpush1.bf16.msra.mxu0 %v412
    %433 = vmatprep.subr.bf16.mxu0 0
    %434 = vmatpush1.bf16.msra.mxu0 %v411
    %435 = vmatprep.subr.bf16.mxu0 0
    %436 = vmatpush2.bf16.msra.mxu0 0
    %437 = vmatprep.subr.bf16.mxu0 0
    %438 = vmatpush2.bf16.msra.mxu0 0
    %439 = vmatprep.subr.bf16.mxu0 0
    %440 = vmatpush2.bf16.msra.mxu0 0
    %441 = vmatprep.subr.bf16.mxu0 0
    %442 = vmatpush2.bf16.msra.mxu0 0
    %443 = vmatprep.subr.bf16.mxu0 0
    %444 = vmatpush2.bf16.msra.mxu0 0
    %445 = vmatprep.subr.bf16.mxu0 0
    %446 = vmatpush2.bf16.msra.mxu0 0
    %447 = vmatprep.subr.bf16.mxu0 0
    %448 = vmatpush2.bf16.msra.mxu0 0
    %449 = vmatprep.subr.bf16.mxu0 0
    %450 = vmatpush2.bf16.msra.mxu0 0
    %451 = vmatprep.mubr.bf16.mxu0 0
    %452 = vmatmul.mubr.bf16.gmra.mxu0 %v386
    %v453 = vpop.f32.mrf.mxu0
    %v454 = vadd.f32 0.0, %v453
    %v455 = vpop.f32.mrf.mxu0
    %v456 = vpop.f32.mrf.mxu0
    %v457 = vpop.f32.mrf.mxu0
    %458 = vdwg.mxu0
    %v459 = vpack.c.bf16 %v117, %v117
    %v460 = vpack.c.bf16 %v454, %v454
    %v462 = vsel %vm201, %v459, 0
    %v465 = vsel %vm205, %v460, 0
    %467 = vmatprep.subr.bf16.mxu0 0
    %468 = vmatpush1.bf16.msra.mxu0 0
    %469 = vmatprep.subr.bf16.mxu0 0
    %470 = vmatpush1.bf16.msra.mxu0 0
    %471 = vmatprep.subr.bf16.mxu0 0
    %472 = vmatpush1.bf16.msra.mxu0 0
    %473 = vmatprep.subr.bf16.mxu0 0
    %474 = vmatpush1.bf16.msra.mxu0 0
    %475 = vmatprep.subr.bf16.mxu0 0
    %476 = vmatpush1.bf16.msra.mxu0 0
    %477 = vmatprep.subr.bf16.mxu0 0
    %478 = vmatpush1.bf16.msra.mxu0 0
    %479 = vmatprep.subr.bf16.mxu0 0
    %480 = vmatpush1.bf16.msra.mxu0 0
    %481 = vmatprep.subr.bf16.mxu0 0
    %482 = vmatpush1.bf16.msra.mxu0 %v465
    %483 = vmatprep.subr.bf16.mxu0 0
    %484 = vmatpush2.bf16.msra.mxu0 0
    %485 = vmatprep.subr.bf16.mxu0 0
    %486 = vmatpush2.bf16.msra.mxu0 0
    %487 = vmatprep.subr.bf16.mxu0 0
    %488 = vmatpush2.bf16.msra.mxu0 0
    %489 = vmatprep.subr.bf16.mxu0 0
    %490 = vmatpush2.bf16.msra.mxu0 0
    %491 = vmatprep.subr.bf16.mxu0 0
    %492 = vmatpush2.bf16.msra.mxu0 0
    %493 = vmatprep.subr.bf16.mxu0 0
    %494 = vmatpush2.bf16.msra.mxu0 0
    %495 = vmatprep.subr.bf16.mxu0 0
    %496 = vmatpush2.bf16.msra.mxu0 0
    %497 = vmatprep.subr.bf16.mxu0 0
    %498 = vmatpush2.bf16.msra.mxu0 0
    %499 = vmatprep.mubr.bf16.mxu0 0
    %500 = vmatmul.mubr.bf16.gmra.mxu0 %v462
    %v501 = vpop.f32.mrf.mxu0
    %v502 = vadd.f32 0.0, %v501
    %v503 = vpop.f32.mrf.mxu0
    %v504 = vpop.f32.mrf.mxu0
    %v505 = vpop.f32.mrf.mxu0
    %506 = vdwg.mxu0
    %507 = vmatprep.subr.bf16.mxu0 0
    %508 = vmatpush1.bf16.msra.mxu0 %v394
    %509 = vmatprep.subr.bf16.mxu0 0
    %510 = vmatpush1.bf16.msra.mxu0 %v393
    %511 = vmatprep.subr.bf16.mxu0 0
    %512 = vmatpush1.bf16.msra.mxu0 %v392
    %513 = vmatprep.subr.bf16.mxu0 0
    %514 = vmatpush1.bf16.msra.mxu0 %v391
    %515 = vmatprep.subr.bf16.mxu0 0
    %516 = vmatpush1.bf16.msra.mxu0 %v390
    %517 = vmatprep.subr.bf16.mxu0 0
    %518 = vmatpush1.bf16.msra.mxu0 %v389
    %519 = vmatprep.subr.bf16.mxu0 0
    %520 = vmatpush1.bf16.msra.mxu0 %v388
    %521 = vmatprep.subr.bf16.mxu0 0
    %522 = vmatpush1.bf16.msra.mxu0 %v387
    %523 = vmatprep.subr.bf16.mxu0 0
    %524 = vmatpush2.bf16.msra.mxu0 0
    %525 = vmatprep.subr.bf16.mxu0 0
    %526 = vmatpush2.bf16.msra.mxu0 0
    %527 = vmatprep.subr.bf16.mxu0 0
    %528 = vmatpush2.bf16.msra.mxu0 0
    %529 = vmatprep.subr.bf16.mxu0 0
    %530 = vmatpush2.bf16.msra.mxu0 0
    %531 = vmatprep.subr.bf16.mxu0 0
    %532 = vmatpush2.bf16.msra.mxu0 0
    %533 = vmatprep.subr.bf16.mxu0 0
    %534 = vmatpush2.bf16.msra.mxu0 0
    %535 = vmatprep.subr.bf16.mxu0 0
    %536 = vmatpush2.bf16.msra.mxu0 0
    %537 = vmatprep.subr.bf16.mxu0 0
    %538 = vmatpush2.bf16.msra.mxu0 0
    %539 = vmatprep.mubr.bf16.mxu0 0
    %540 = vmatmul.mubr.bf16.gmra.mxu0 %v386
    %v541 = vpop.f32.mrf.mxu0
    %v542 = vadd.f32 %v502, %v541
    %v543 = vpop.f32.mrf.mxu0
    %v544 = vpop.f32.mrf.mxu0
    %v545 = vpop.f32.mrf.mxu0
    %546 = vdwg.mxu0
    %v547 = vld [vmem:[#allocation2] sm:$0x1]
    %v549 = vlaneseq
    %v550 = vshrl.u32 %v549, 7
    %v551 = vsub.s32 0, %v550
    %v552 = vrot.slane %v547, %v551
    %v554 = vadd.f32 %v542, %v552
    %v555 = vtanh.pop %v554
    %557 = vset.pattern.permute.xlu0 0
    %558 = vperm.xlu0 %557, %v555
    %v559 = vpop.permute.xlu0 %558
    %v561 = vmul.f32 %v369, %v559
    %562 = vst [vmem:[%s11] sm:$0xf] %v561
    %564 = vset.pattern.permute.xlu0 0
    %565 = vperm.xlu0 %564, %v554
    %v566 = vpop.permute.xlu0 %565
    %568 = vst [vmem:[%s12] sm:$0xf] %v566
    // Predicated region
    $region70: #{_fwd.8} parent=1 // pred_check
      _
    $region71: #{_fwd.8} parent=1 // pred_check_branch
      %570 = sbr.rel (0) target = $region73
    $region72: #{_fwd.8} parent=1 // pred_region
      _
    $region73: #{_fwd.8} parent=1 // pred_fallthru
      _
    // Predicated region
    $region74: #{_fwd.8} parent=1 // pred_check
      _
    $region75: #{_fwd.8} parent=1 // pred_check_branch
      %572 = sbr.rel (0) target = $region77
    $region76: #{_fwd.8} parent=1 // pred_region
      _
    $region77: #{_fwd.8} parent=1 // pred_fallthru
      _
    // Predicated region
    $region78: #{_fwd.8} parent=1 // pred_check
      _
    $region79: #{_fwd.8} parent=1 // pred_check_branch
      %574 = sbr.rel (0) target = $region81
    $region80: #{_fwd.8} parent=1 // pred_region
      _
    $region81: #{_fwd.8} parent=1 // pred_fallthru
      _
    // Predicated region
    $region82: #{_fwd.8} parent=1 // pred_check
      _
    $region83: #{_fwd.8} parent=1 // pred_check_branch
      %576 = sbr.rel (0) target = $region85
    $region84: #{_fwd.8} parent=1 // pred_region
      _
    $region85: #{_fwd.8} parent=1 // pred_fallthru
      _
    %577 = vsyncpa [#allocation4], 1
    %578 = vsyncpa [#allocation6], 1
    %579 = vsyncpa [#allocation9], 1
    %580 = vsyncpa [#allocation12], 1

// kernel: _fwd.10
$region0: #{_fwd.10}
  #allocation0 [shape = 'u32[]', space=smem, size = 0x4, offset = 0x4, fixed_abs, tag = 'smem constant byte address 0x4 - core index']
  #allocation1 [shape = 'u32[144,128]{1,0:T(1,128)}', space=vmem, size = 0x12000, scoped, tag = 'internal scratch']
  %s0 = inlined_call_operand.vmem [shape: f32[7,7], index: 0, kind: input, shape index: {}]
  %s1 = inlined_call_operand.vmem [shape: f32[7,200], index: 1, kind: input, shape index: {}]
  %s2 = inlined_call_operand.vmem [shape: f32[200,64], index: 2, kind: input, shape index: {}]
  %s3 = inlined_call_operand.vmem [shape: f32[1,64], index: 3, kind: input, shape index: {}]
  %s4 = inlined_call_operand.hbm [shape: f32[1,64], index: 4, kind: input, shape index: {}]
  %s5 = inlined_call_operand.hbm [shape: f32[1,64], index: 5, kind: input, shape index: {}]
  %s6 = inlined_call_operand.vmem [shape: f32[7,64], index: 6, kind: output, shape index: {}]
  %s7 = sld [smem:[#allocation0]]
  $region42: #{_fwd.10} parent=0
    _
  %s9 = ssub.s32 1, %s7
  %s10 = scalar_select 0, %s9, %s7
  $region1: #{_fwd.10} parent=0
    #allocation2 [shape = 'u8[512]{0}', space=vmem, size = 0x400, scoped, tag = 'input window, operand 4, single buffered']
    #allocation3 [shape = 's32[1]{0}', space=sflag, size = 0x4, scoped, tag = 'scoped memory for _fwd.10']
    #allocation4 [shape = 'u8[512]{0}', space=vmem, size = 0x400, scoped, tag = 'input window, operand 5, single buffered']
    #allocation5 [shape = 's32[1]{0}', space=sflag, size = 0x4, scoped, tag = 'scoped memory for _fwd.10']
    %11 = vsyncpa [#allocation3], 0
    %12 = vsyncpa [#allocation5], 0
    // Predicated region
    $region2: #{_fwd.10} parent=1 // pred_check
      _
    $region3: #{_fwd.10} parent=1 // pred_check_branch
      %14 = sbr.rel (0) target = $region5
    $region4: #{_fwd.10} parent=1 // pred_region
      _
    $region5: #{_fwd.10} parent=1 // pred_fallthru
      _
    // Predicated region
    $region6: #{_fwd.10} parent=1 // pred_check
      _
    $region7: #{_fwd.10} parent=1 // pred_check_branch
      %16 = sbr.rel (0) target = $region9
    $region8: #{_fwd.10} parent=1 // pred_region
      _
    $region9: #{_fwd.10} parent=1 // pred_fallthru
      _
    // Predicated region
    $region10: #{_fwd.10} parent=1 // pred_check
      _
    $region11: #{_fwd.10} parent=1 // pred_check_branch
      %18 = sbr.rel (0) target = $region13
    $region12: #{_fwd.10} parent=1 // pred_region
      _
    $region13: #{_fwd.10} parent=1 // pred_fallthru
      _
    // Predicated region
    $region14: #{_fwd.10} parent=1 // pred_check
      _
    $region15: #{_fwd.10} parent=1 // pred_check_branch
      %20 = sbr.rel (0) target = $region17
    $region16: #{_fwd.10} parent=1 // pred_region
      _
    $region17: #{_fwd.10} parent=1 // pred_fallthru
      _
    // Predicated region
    $region18: #{_fwd.10} parent=1 // pred_check
      _
    $region19: #{_fwd.10} parent=1 // pred_check_branch
      %22 = sbr.rel (0) target = $region21
    $region20: #{_fwd.10} parent=1 // pred_region
      %s24 = ssub.s32 16, 16
      %25 = vsyncadd [#allocation3], %s24
      %s27 = sshll.u32 [#allocation2], 4
      %s28 = int_to_ptr.vmem [resolvable:$true] %s27
      %30 = dma.hbm_to_vmem [thread:$0]  %s4, 16, %s28, [#allocation3]
    $region21: #{_fwd.10} parent=1 // pred_fallthru
      _
    // Predicated region
    $region22: #{_fwd.10} parent=1 // pred_check
      _
    $region23: #{_fwd.10} parent=1 // pred_check_branch
      %32 = sbr.rel (0) target = $region25
    $region24: #{_fwd.10} parent=1 // pred_region
      %s34 = ssub.s32 16, 16
      %35 = vsyncadd [#allocation5], %s34
      %s37 = sshll.u32 [#allocation4], 4
      %s38 = int_to_ptr.vmem [resolvable:$true] %s37
      %40 = dma.hbm_to_vmem [thread:$0]  %s5, 16, %s38, [#allocation5]
    $region25: #{_fwd.10} parent=1 // pred_fallthru
      _
    // Predicated region
    $region26: #{_fwd.10} parent=1 // pred_check
      _
    $region27: #{_fwd.10} parent=1 // pred_check_branch
      %42 = sbr.rel (0) target = $region29
    $region28: #{_fwd.10} parent=1 // pred_region
      %43 = dma.done [#allocation3], 16
    $region29: #{_fwd.10} parent=1 // pred_fallthru
      _
    // Predicated region
    $region30: #{_fwd.10} parent=1 // pred_check
      _
    $region31: #{_fwd.10} parent=1 // pred_check_branch
      %45 = sbr.rel (0) target = $region33
    $region32: #{_fwd.10} parent=1 // pred_region
      %46 = dma.done [#allocation5], 16
    $region33: #{_fwd.10} parent=1 // pred_fallthru
      _
    %v48 = vld [vmem:[%s0] sm:$0x7f]
    %v49 = vld [vmem:[%s1] sm:$0x7f]
    %v50 = vld [vmem:[%s1 + $0x8] sm:$0x7f]
    %v51 = vld [vmem:[%s2] sm:$0xff]
    %v52 = vld [vmem:[%s2 + $0x8] sm:$0xff]
    %v53 = vld [vmem:[%s2 + $0x10] sm:$0xff]
    %v54 = vld [vmem:[%s2 + $0x18] sm:$0xff]
    %v55 = vld [vmem:[%s2 + $0x20] sm:$0xff]
    %v56 = vld [vmem:[%s2 + $0x28] sm:$0xff]
    %v57 = vld [vmem:[%s2 + $0x30] sm:$0xff]
    %v58 = vld [vmem:[%s2 + $0x38] sm:$0xff]
    %v59 = vld [vmem:[%s2 + $0x40] sm:$0xff]
    %v60 = vld [vmem:[%s2 + $0x48] sm:$0xff]
    %v61 = vld [vmem:[%s2 + $0x50] sm:$0xff]
    %v62 = vld [vmem:[%s2 + $0x58] sm:$0xff]
    %v63 = vld [vmem:[%s2 + $0x60] sm:$0xff]
    %v64 = vld [vmem:[%s2 + $0x68] sm:$0xff]
    %v65 = vld [vmem:[%s2 + $0x70] sm:$0xff]
    %v66 = vld [vmem:[%s2 + $0x78] sm:$0xff]
    %v67 = vld [vmem:[%s2 + $0x80] sm:$0xff]
    %v68 = vld [vmem:[%s2 + $0x88] sm:$0xff]
    %v69 = vld [vmem:[%s2 + $0x90] sm:$0xff]
    %v70 = vld [vmem:[%s2 + $0x98] sm:$0xff]
    %v71 = vld [vmem:[%s2 + $0xa0] sm:$0xff]
    %v72 = vld [vmem:[%s2 + $0xa8] sm:$0xff]
    %v73 = vld [vmem:[%s2 + $0xb0] sm:$0xff]
    %v74 = vld [vmem:[%s2 + $0xb8] sm:$0xff]
    %v75 = vld [vmem:[%s2 + $0xc0] sm:$0xff]
    %v76 = vpack.c.bf16 %v49, %v49
    %v77 = vpack.c.bf16 %v50, %v50
    %v78 = vpack.c.bf16 %v52, %v51
    %v79 = vpack.c.bf16 %v54, %v53
    %v80 = vpack.c.bf16 %v56, %v55
    %v81 = vpack.c.bf16 %v58, %v57
    %v82 = vpack.c.bf16 %v60, %v59
    %v83 = vpack.c.bf16 %v62, %v61
    %v84 = vpack.c.bf16 %v64, %v63
    %v85 = vpack.c.bf16 %v66, %v65
    %v86 = vpack.c.bf16 %v68, %v67
    %v87 = vpack.c.bf16 %v70, %v69
    %v88 = vpack.c.bf16 %v72, %v71
    %v89 = vpack.c.bf16 %v74, %v73
    %v90 = vpack.c.bf16 %v75, %v75
    %vm91 = vcmask 588800
    %v93 = vsel %vm91, %v77, 0
    %vm95 = vcmask 1043456
    %v97 = vsel %vm95, %v90, 0
    %99 = vmatprep.subr.bf16.mxu0 0
    %100 = vmatpush1.bf16.msra.mxu0 %v85
    %101 = vmatprep.subr.bf16.mxu0 0
    %102 = vmatpush1.bf16.msra.mxu0 %v84
    %103 = vmatprep.subr.bf16.mxu0 0
    %104 = vmatpush1.bf16.msra.mxu0 %v83
    %105 = vmatprep.subr.bf16.mxu0 0
    %106 = vmatpush1.bf16.msra.mxu0 %v82
    %107 = vmatprep.subr.bf16.mxu0 0
    %108 = vmatpush1.bf16.msra.mxu0 %v81
    %109 = vmatprep.subr.bf16.mxu0 0
    %110 = vmatpush1.bf16.msra.mxu0 %v80
    %111 = vmatprep.subr.bf16.mxu0 0
    %112 = vmatpush1.bf16.msra.mxu0 %v79
    %113 = vmatprep.subr.bf16.mxu0 0
    %114 = vmatpush1.bf16.msra.mxu0 %v78
    %115 = vmatprep.subr.bf16.mxu0 0
    %116 = vmatpush2.bf16.msra.mxu0 0
    %117 = vmatprep.subr.bf16.mxu0 0
    %118 = vmatpush2.bf16.msra.mxu0 0
    %119 = vmatprep.subr.bf16.mxu0 0
    %120 = vmatpush2.bf16.msra.mxu0 0
    %121 = vmatprep.subr.bf16.mxu0 0
    %122 = vmatpush2.bf16.msra.mxu0 %v97
    %123 = vmatprep.subr.bf16.mxu0 0
    %124 = vmatpush2.bf16.msra.mxu0 %v89
    %125 = vmatprep.subr.bf16.mxu0 0
    %126 = vmatpush2.bf16.msra.mxu0 %v88
    %127 = vmatprep.subr.bf16.mxu0 0
    %128 = vmatpush2.bf16.msra.mxu0 %v87
    %129 = vmatprep.subr.bf16.mxu0 0
    %130 = vmatpush2.bf16.msra.mxu0 %v86
    %131 = vmatprep.mubr.bf16.mxu0 %v93
    %132 = vmatmul.mubr.bf16.gmra.mxu0 %v76
    %v133 = vpop.f32.mrf.mxu0
    %v134 = vadd.f32 0.0, %v133
    %v135 = vpop.f32.mrf.mxu0
    %v136 = vpop.f32.mrf.mxu0
    %v137 = vpop.f32.mrf.mxu0
    %138 = vdwg.mxu0
    %v139 = vlaneseq
    %v140 = vshrl.u32 %v139, 7
    %v141 = vlaneseq
    %v142 = vand.u32 %v141, 127
    %vm143 = vcmp.eq.s32.totalorder %v140, %v142
    %v144 = vsel %vm143, 1, 0
    %v145 = vcvt.s32.f32 %v144
    %v146 = vadd.f32 %v48, %v145
    %vm147 = vcmask 55296
    %v148 = vsel %vm147, %v146, 0.0
    %149 = vadd.xlane.f32.xlu0 %v148
    %v150 = vpop.xlane.xlu0 %149
    %v151 = vmax.f32 %v150, 1e-12
    %v152 = vrsqrt.pop %v151
    %v153 = vmul.f32 %v152, %v134
    %v154 = vpack.c.bf16 %v146, %v146
    %v155 = vpack.c.bf16 %v153, %v153
    %vm156 = vcmask 56320
    %v158 = vsel %vm156, %v154, 0
    %vm160 = vcmask 1042432
    %v161 = vsel %vm160, 4294967295, 65535
    %v162 = vsel %vm95, %v161, 0
    %v164 = vand.u32 %v155, %v162
    %166 = vmatprep.subr.bf16.mxu0 0
    %167 = vmatpush1.bf16.msra.mxu0 0
    %168 = vmatprep.subr.bf16.mxu0 0
    %169 = vmatpush1.bf16.msra.mxu0 0
    %170 = vmatprep.subr.bf16.mxu0 0
    %171 = vmatpush1.bf16.msra.mxu0 0
    %172 = vmatprep.subr.bf16.mxu0 0
    %173 = vmatpush1.bf16.msra.mxu0 0
    %174 = vmatprep.subr.bf16.mxu0 0
    %175 = vmatpush1.bf16.msra.mxu0 0
    %176 = vmatprep.subr.bf16.mxu0 0
    %177 = vmatpush1.bf16.msra.mxu0 0
    %178 = vmatprep.subr.bf16.mxu0 0
    %179 = vmatpush1.bf16.msra.mxu0 0
    %180 = vmatprep.subr.bf16.mxu0 0
    %181 = vmatpush1.bf16.msra.mxu0 %v164
    %182 = vmatprep.subr.bf16.mxu0 0
    %183 = vmatpush2.bf16.msra.mxu0 0
    %184 = vmatprep.subr.bf16.mxu0 0
    %185 = vmatpush2.bf16.msra.mxu0 0
    %186 = vmatprep.subr.bf16.mxu0 0
    %187 = vmatpush2.bf16.msra.mxu0 0
    %188 = vmatprep.subr.bf16.mxu0 0
    %189 = vmatpush2.bf16.msra.mxu0 0
    %190 = vmatprep.subr.bf16.mxu0 0
    %191 = vmatpush2.bf16.msra.mxu0 0
    %192 = vmatprep.subr.bf16.mxu0 0
    %193 = vmatpush2.bf16.msra.mxu0 0
    %194 = vmatprep.subr.bf16.mxu0 0
    %195 = vmatpush2.bf16.msra.mxu0 0
    %196 = vmatprep.subr.bf16.mxu0 0
    %197 = vmatpush2.bf16.msra.mxu0 0
    %198 = vmatprep.mubr.bf16.mxu0 0
    %199 = vmatmul.mubr.bf16.gmra.mxu0 %v158
    %v200 = vpop.f32.mrf.mxu0
    %v201 = vadd.f32 0.0, %v200
    %v202 = vpop.f32.mrf.mxu0
    %v203 = vpop.f32.mrf.mxu0
    %v204 = vpop.f32.mrf.mxu0
    %205 = vdwg.mxu0
    %v206 = vmul.f32 %v152, %v201
    %v207 = vld [vmem:[%s3] sm:$0x1]
    %v209 = vlaneseq
    %v210 = vshrl.u32 %v209, 7
    %v211 = vsub.s32 0, %v210
    %v212 = vrot.slane %v207, %v211
    %v214 = vadd.f32 %v206, %v212
    %v215 = vmax.f32 %v214, 0.0
    %v216 = vld [vmem:[#allocation2] sm:$0x1]
    %v217 = vld [vmem:[#allocation4] sm:$0x1]
    %vm218 = vcmask 522240
    %v219 = vsel %vm218, %v215, 0.0
    %v220 = vrot.slane %v219, 4
    %v221 = vadd.f32 %v219, %v220
    %v222 = vrot.slane %v221, 2
    %v223 = vadd.f32 %v221, %v222
    %v224 = vrot.slane %v223, 1
    %v225 = vadd.f32 %v223, %v224
    %v226 = vrcp.pop 7.0
    %v227 = vmul.f32 %v225, %v226
    %v228 = vsub.f32 %v215, %v227
    %v229 = vmul.f32 %v228, %v228
    %v230 = vsel %vm218, %v229, 0.0
    %v231 = vrot.slane %v230, 4
    %v232 = vadd.f32 %v230, %v231
    %v233 = vrot.slane %v232, 2
    %v234 = vadd.f32 %v232, %v233
    %v235 = vrot.slane %v234, 1
    %v236 = vadd.f32 %v234, %v235
    %v237 = vmul.f32 %v236, %v226
    %v238 = vadd.f32 %v237, 1e-05
    %v239 = vrsqrt.pop %v238
    %v240 = vmul.f32 %v228, %v239
    %v242 = vlaneseq
    %v243 = vshrl.u32 %v242, 7
    %v244 = vsub.s32 0, %v243
    %v245 = vrot.slane %v216, %v244
    %v247 = vmul.f32 %v240, %v245
    %v249 = vlaneseq
    %v250 = vshrl.u32 %v249, 7
    %v251 = vsub.s32 0, %v250
    %v252 = vrot.slane %v217, %v251
    %v254 = vadd.f32 %v247, %v252
    %255 = vst.msk [vmem:[%s6] sm:$0x7f] %vm218, %v254
    // Predicated region
    $region34: #{_fwd.10} parent=1 // pred_check
      _
    $region35: #{_fwd.10} parent=1 // pred_check_branch
      %257 = sbr.rel (0) target = $region37
    $region36: #{_fwd.10} parent=1 // pred_region
      _
    $region37: #{_fwd.10} parent=1 // pred_fallthru
      _
    // Predicated region
    $region38: #{_fwd.10} parent=1 // pred_check
      _
    $region39: #{_fwd.10} parent=1 // pred_check_branch
      %259 = sbr.rel (0) target = $region41
    $region40: #{_fwd.10} parent=1 // pred_region
      _
    $region41: #{_fwd.10} parent=1 // pred_fallthru
      _
    %260 = vsyncpa [#allocation3], 1
    %261 = vsyncpa [#allocation5], 1

// kernel: _fwd.9
$region0: #{_fwd.9}
  #allocation0 [shape = 'u32[]', space=smem, size = 0x4, offset = 0x4, fixed_abs, tag = 'smem constant byte address 0x4 - core index']
  #allocation1 [shape = 'u32[144,128]{1,0:T(1,128)}', space=vmem, size = 0x12000, scoped, tag = 'internal scratch']
  #allocation2 [shape = 'f32[1,1]{1,0:T(1,128)S(1)}', space=vmem, size = 0x200, scoped, tag = 'scoped memory for _fwd.9']
  %s0 = inlined_call_operand.vmem [shape: f32[2,2], index: 0, kind: input, shape index: {}]
  %s1 = inlined_call_operand.vmem [shape: f32[2,128], index: 1, kind: input, shape index: {}]
  %s2 = inlined_call_operand.hbm [shape: f32[128,128], index: 2, kind: input, shape index: {}]
  %s3 = inlined_call_operand.hbm [shape: f32[1,128], index: 3, kind: input, shape index: {}]
  %s4 = inlined_call_operand.hbm [shape: f32[128,128], index: 4, kind: input, shape index: {}]
  %s5 = inlined_call_operand.hbm [shape: f32[1,128], index: 5, kind: input, shape index: {}]
  %s6 = inlined_call_operand.hbm [shape: f32[1,128], index: 6, kind: input, shape index: {}]
  %s7 = inlined_call_operand.hbm [shape: f32[1,128], index: 7, kind: input, shape index: {}]
  %s8 = inlined_call_operand.vmem [shape: f32[128,1], index: 8, kind: input, shape index: {}]
  %s9 = inlined_call_operand.vmem [shape: f32[128,1], index: 9, kind: input, shape index: {}]
  %s10 = inlined_call_operand.<no memory space> [shape: f32[1,1], index: 10, kind: input, shape index: {}]
  %s11 = inlined_call_operand.vmem [shape: f32[2,128], index: 11, kind: output, shape index: {0}]
  %s12 = inlined_call_operand.hbm [shape: f32[2,128], index: 12, kind: output, shape index: {1}]
  %13 = xla_tuple %s11, %s12
  %s14 = sld [smem:[#allocation0]]
  $region86: #{_fwd.9} parent=0
    _
  %s16 = ssub.s32 1, %s14
  %s17 = scalar_select 0, %s16, %s14
  %v18 = vstv %s10
  %19 = vst [vmem:[#allocation2] sm:$0x1] %v18
  $region1: #{_fwd.9} parent=0
    #allocation3 [shape = 'u8[65536]{0}', space=vmem, size = 0x10000, scoped, tag = 'input window, operand 2, single buffered']
    #allocation4 [shape = 's32[1]{0}', space=sflag, size = 0x4, scoped, tag = 'scoped memory for _fwd.9']
    #allocation5 [shape = 's32[1]{0}', space=sflag, size = 0x4, scoped, tag = 'scoped memory for _fwd.9']
    #allocation6 [shape = 'u8[512]{0}', space=vmem, size = 0x400, scoped, tag = 'input window, operand 3, single buffered']
    #allocation7 [shape = 's32[1]{0}', space=sflag, size = 0x4, scoped, tag = 'scoped memory for _fwd.9']
    #allocation8 [shape = 'u8[65536]{0}', space=vmem, size = 0x10000, scoped, tag = 'input window, operand 4, single buffered']
    #allocation9 [shape = 'u8[512]{0}', space=vmem, size = 0x400, scoped, tag = 'input window, operand 5, single buffered']
    #allocation10 [shape = 's32[1]{0}', space=sflag, size = 0x4, scoped, tag = 'scoped memory for _fwd.9']
    #allocation11 [shape = 'u8[512]{0}', space=vmem, size = 0x400, scoped, tag = 'input window, operand 6, single buffered']
    #allocation12 [shape = 'u8[512]{0}', space=vmem, size = 0x400, scoped, tag = 'input window, operand 7, single buffered']
    #allocation13 [shape = 's32[1]{0}', space=sflag, size = 0x4, scoped, tag = 'scoped memory for _fwd.9']
    #allocation14 [shape = 'u8[1024]{0}', space=vmem, size = 0x400, scoped, tag = 'output window, operand 1, single buffered']
    %20 = vsyncpa [#allocation4], 0
    %21 = vsyncpa [#allocation7], 0
    %22 = vsyncpa [#allocation10], 0
    %23 = vsyncpa [#allocation13], 0
    %24 = vsyncpa [#allocation5], 0
    // Predicated region
    $region2: #{_fwd.9} parent=1 // pred_check
      _
    $region3: #{_fwd.9} parent=1 // pred_check_branch
      %26 = sbr.rel (0) target = $region5
    $region4: #{_fwd.9} parent=1 // pred_region
      _
    $region5: #{_fwd.9} parent=1 // pred_fallthru
      _
    // Predicated region
    $region6: #{_fwd.9} parent=1 // pred_check
      _
    $region7: #{_fwd.9} parent=1 // pred_check_branch
      %28 = sbr.rel (0) target = $region9
    $region8: #{_fwd.9} parent=1 // pred_region
      _
    $region9: #{_fwd.9} parent=1 // pred_fallthru
      _
    // Predicated region
    $region10: #{_fwd.9} parent=1 // pred_check
      _
    $region11: #{_fwd.9} parent=1 // pred_check_branch
      %30 = sbr.rel (0) target = $region13
    $region12: #{_fwd.9} parent=1 // pred_region
      %s32 = ssub.s32 2048, 2048
      %33 = vsyncadd [#allocation4], %s32
      %s34 = sshll.u32 [#allocation3], 4
      %s35 = int_to_ptr.vmem [resolvable:$true] %s34
      %40 = dma.hbm_to_vmem [thread:$0]  %s2, 2048, %s35, [#allocation4], 128, 128, 8
    $region13: #{_fwd.9} parent=1 // pred_fallthru
      _
    // Predicated region
    $region14: #{_fwd.9} parent=1 // pred_check
      _
    $region15: #{_fwd.9} parent=1 // pred_check_branch
      %42 = sbr.rel (0) target = $region17
    $region16: #{_fwd.9} parent=1 // pred_region
      %s44 = ssub.s32 16, 16
      %45 = vsyncadd [#allocation7], %s44
      %s47 = sshll.u32 [#allocation6], 4
      %s48 = int_to_ptr.vmem [resolvable:$true] %s47
      %50 = dma.hbm_to_vmem [thread:$0]  %s3, 16, %s48, [#allocation7]
    $region17: #{_fwd.9} parent=1 // pred_fallthru
      _
    // Predicated region
    $region18: #{_fwd.9} parent=1 // pred_check
      _
    $region19: #{_fwd.9} parent=1 // pred_check_branch
      %52 = sbr.rel (0) target = $region21
    $region20: #{_fwd.9} parent=1 // pred_region
      %s54 = ssub.s32 2048, 2048
      %55 = vsyncadd [#allocation7], %s54
      %s56 = sshll.u32 [#allocation8], 4
      %s57 = int_to_ptr.vmem [resolvable:$true] %s56
      %62 = dma.hbm_to_vmem [thread:$0]  %s4, 2048, %s57, [#allocation7], 128, 128, 8
    $region21: #{_fwd.9} parent=1 // pred_fallthru
      _
    // Predicated region
    $region22: #{_fwd.9} parent=1 // pred_check
      _
    $region23: #{_fwd.9} parent=1 // pred_check_branch
      %64 = sbr.rel (0) target = $region25
    $region24: #{_fwd.9} parent=1 // pred_region
      %s66 = ssub.s32 16, 16
      %67 = vsyncadd [#allocation10], %s66
      %s69 = sshll.u32 [#allocation9], 4
      %s70 = int_to_ptr.vmem [resolvable:$true] %s69
      %72 = dma.hbm_to_vmem [thread:$0]  %s5, 16, %s70, [#allocation10]
    $region25: #{_fwd.9} parent=1 // pred_fallthru
      _
    // Predicated region
    $region26: #{_fwd.9} parent=1 // pred_check
      _
    $region27: #{_fwd.9} parent=1 // pred_check_branch
      %74 = sbr.rel (0) target = $region29
    $region28: #{_fwd.9} parent=1 // pred_region
      %s76 = ssub.s32 16, 16
      %77 = vsyncadd [#allocation10], %s76
      %s79 = sshll.u32 [#allocation11], 4
      %s80 = int_to_ptr.vmem [resolvable:$true] %s79
      %82 = dma.hbm_to_vmem [thread:$0]  %s6, 16, %s80, [#allocation10]
    $region29: #{_fwd.9} parent=1 // pred_fallthru
      _
    // Predicated region
    $region30: #{_fwd.9} parent=1 // pred_check
      _
    $region31: #{_fwd.9} parent=1 // pred_check_branch
      %84 = sbr.rel (0) target = $region33
    $region32: #{_fwd.9} parent=1 // pred_region
      %s86 = ssub.s32 16, 16
      %87 = vsyncadd [#allocation13], %s86
      %s89 = sshll.u32 [#allocation12], 4
      %s90 = int_to_ptr.vmem [resolvable:$true] %s89
      %92 = dma.hbm_to_vmem [thread:$0]  %s7, 16, %s90, [#allocation13]
    $region33: #{_fwd.9} parent=1 // pred_fallthru
      _
    // Predicated region
    $region34: #{_fwd.9} parent=1 // pred_check
      _
    $region35: #{_fwd.9} parent=1 // pred_check_branch
      %94 = sbr.rel (0) target = $region37
    $region36: #{_fwd.9} parent=1 // pred_region
      _
    $region37: #{_fwd.9} parent=1 // pred_fallthru
      _
    // Predicated region
    $region38: #{_fwd.9} parent=1 // pred_check
      _
    $region39: #{_fwd.9} parent=1 // pred_check_branch
      %96 = sbr.rel (0) target = $region41
    $region40: #{_fwd.9} parent=1 // pred_region
      _
    $region41: #{_fwd.9} parent=1 // pred_fallthru
      _
    // Predicated region
    $region42: #{_fwd.9} parent=1 // pred_check
      _
    $region43: #{_fwd.9} parent=1 // pred_check_branch
      %98 = sbr.rel (0) target = $region45
    $region44: #{_fwd.9} parent=1 // pred_region
      _
    $region45: #{_fwd.9} parent=1 // pred_fallthru
      _
    // Predicated region
    $region46: #{_fwd.9} parent=1 // pred_check
      _
    $region47: #{_fwd.9} parent=1 // pred_check_branch
      %100 = sbr.rel (0) target = $region49
    $region48: #{_fwd.9} parent=1 // pred_region
      %101 = dma.done [#allocation4], 2048
    $region49: #{_fwd.9} parent=1 // pred_fallthru
      _
    // Predicated region
    $region50: #{_fwd.9} parent=1 // pred_check
      _
    $region51: #{_fwd.9} parent=1 // pred_check_branch
      %103 = sbr.rel (0) target = $region53
    $region52: #{_fwd.9} parent=1 // pred_region
      %104 = dma.done [#allocation7], 16
    $region53: #{_fwd.9} parent=1 // pred_fallthru
      _
    // Predicated region
    $region54: #{_fwd.9} parent=1 // pred_check
      _
    $region55: #{_fwd.9} parent=1 // pred_check_branch
      %106 = sbr.rel (0) target = $region57
    $region56: #{_fwd.9} parent=1 // pred_region
      %107 = dma.done [#allocation7], 2048
    $region57: #{_fwd.9} parent=1 // pred_fallthru
      _
    // Predicated region
    $region58: #{_fwd.9} parent=1 // pred_check
      _
    $region59: #{_fwd.9} parent=1 // pred_check_branch
      %109 = sbr.rel (0) target = $region61
    $region60: #{_fwd.9} parent=1 // pred_region
      %110 = dma.done [#allocation10], 16
    $region61: #{_fwd.9} parent=1 // pred_fallthru
      _
    // Predicated region
    $region62: #{_fwd.9} parent=1 // pred_check
      _
    $region63: #{_fwd.9} parent=1 // pred_check_branch
      %112 = sbr.rel (0) target = $region65
    $region64: #{_fwd.9} parent=1 // pred_region
      %113 = dma.done [#allocation10], 16
    $region65: #{_fwd.9} parent=1 // pred_fallthru
      _
    // Predicated region
    $region66: #{_fwd.9} parent=1 // pred_check
      _
    $region67: #{_fwd.9} parent=1 // pred_check_branch
      %115 = sbr.rel (0) target = $region69
    $region68: #{_fwd.9} parent=1 // pred_region
      %116 = dma.done [#allocation13], 16
    $region69: #{_fwd.9} parent=1 // pred_fallthru
      _
    %v118 = vld [vmem:[%s0] sm:$0x3]
    %v119 = vld [vmem:[%s1] sm:$0x3]
    %v120 = vld [vmem:[#allocation3] sm:$0xff]
    %v121 = vld [vmem:[#allocation3 + $0x8] sm:$0xff]
    %v122 = vld [vmem:[#allocation3 + $0x10] sm:$0xff]
    %v123 = vld [vmem:[#allocation3 + $0x18] sm:$0xff]
    %v124 = vld [vmem:[#allocation3 + $0x20] sm:$0xff]
    %v125 = vld [vmem:[#allocation3 + $0x28] sm:$0xff]
    %v126 = vld [vmem:[#allocation3 + $0x30] sm:$0xff]
    %v127 = vld [vmem:[#allocation3 + $0x38] sm:$0xff]
    %v128 = vld [vmem:[#allocation3 + $0x40] sm:$0xff]
    %v129 = vld [vmem:[#allocation3 + $0x48] sm:$0xff]
    %v130 = vld [vmem:[#allocation3 + $0x50] sm:$0xff]
    %v131 = vld [vmem:[#allocation3 + $0x58] sm:$0xff]
    %v132 = vld [vmem:[#allocation3 + $0x60] sm:$0xff]
    %v133 = vld [vmem:[#allocation3 + $0x68] sm:$0xff]
    %v134 = vld [vmem:[#allocation3 + $0x70] sm:$0xff]
    %v135 = vld [vmem:[#allocation3 + $0x78] sm:$0xff]
    %v136 = vpack.c.bf16 %v119, %v119
    %v137 = vpack.c.bf16 %v121, %v120
    %v138 = vpack.c.bf16 %v123, %v122
    %v139 = vpack.c.bf16 %v125, %v124
    %v140 = vpack.c.bf16 %v127, %v126
    %v141 = vpack.c.bf16 %v129, %v128
    %v142 = vpack.c.bf16 %v131, %v130
    %v143 = vpack.c.bf16 %v133, %v132
    %v144 = vpack.c.bf16 %v135, %v134
    %145 = vmatprep.subr.bf16.mxu0 0
    %146 = vmatpush1.bf16.msra.mxu0 %v144
    %147 = vmatprep.subr.bf16.mxu0 0
    %148 = vmatpush1.bf16.msra.mxu0 %v143
    %149 = vmatprep.subr.bf16.mxu0 0
    %150 = vmatpush1.bf16.msra.mxu0 %v142
    %151 = vmatprep.subr.bf16.mxu0 0
    %152 = vmatpush1.bf16.msra.mxu0 %v141
    %153 = vmatprep.subr.bf16.mxu0 0
    %154 = vmatpush1.bf16.msra.mxu0 %v140
    %155 = vmatprep.subr.bf16.mxu0 0
    %156 = vmatpush1.bf16.msra.mxu0 %v139
    %157 = vmatprep.subr.bf16.mxu0 0
    %158 = vmatpush1.bf16.msra.mxu0 %v138
    %159 = vmatprep.subr.bf16.mxu0 0
    %160 = vmatpush1.bf16.msra.mxu0 %v137
    %161 = vmatprep.subr.bf16.mxu0 0
    %162 = vmatpush2.bf16.msra.mxu0 0
    %163 = vmatprep.subr.bf16.mxu0 0
    %164 = vmatpush2.bf16.msra.mxu0 0
    %165 = vmatprep.subr.bf16.mxu0 0
    %166 = vmatpush2.bf16.msra.mxu0 0
    %167 = vmatprep.subr.bf16.mxu0 0
    %168 = vmatpush2.bf16.msra.mxu0 0
    %169 = vmatprep.subr.bf16.mxu0 0
    %170 = vmatpush2.bf16.msra.mxu0 0
    %171 = vmatprep.subr.bf16.mxu0 0
    %172 = vmatpush2.bf16.msra.mxu0 0
    %173 = vmatprep.subr.bf16.mxu0 0
    %174 = vmatpush2.bf16.msra.mxu0 0
    %175 = vmatprep.subr.bf16.mxu0 0
    %176 = vmatpush2.bf16.msra.mxu0 0
    %177 = vmatprep.mubr.bf16.mxu0 0
    %178 = vmatmul.mubr.bf16.gmra.mxu0 %v136
    %v179 = vpop.f32.mrf.mxu0
    %v180 = vadd.f32 0.0, %v179
    %v181 = vpop.f32.mrf.mxu0
    %v182 = vpop.f32.mrf.mxu0
    %v183 = vpop.f32.mrf.mxu0
    %184 = vdwg.mxu0
    %v185 = vlaneseq
    %v186 = vshrl.u32 %v185, 7
    %v187 = vlaneseq
    %v188 = vand.u32 %v187, 127
    %vm189 = vcmp.eq.s32.totalorder %v186, %v188
    %v190 = vsel %vm189, 1, 0
    %v191 = vcvt.s32.f32 %v190
    %v192 = vadd.f32 %v118, %v191
    %vm193 = vcmask 9216
    %v194 = vsel %vm193, %v192, 0.0
    %195 = vadd.xlane.f32.xlu0 %v194
    %v196 = vpop.xlane.xlu0 %195
    %v197 = vmax.f32 %v196, 1e-12
    %v198 = vrsqrt.pop %v197
    %v199 = vmul.f32 %v198, %v180
    %v200 = vpack.c.bf16 %v192, %v192
    %v201 = vpack.c.bf16 %v199, %v199
    %vm202 = vcmask 15360
    %v204 = vsel %vm202, %v200, 0
    %vm206 = vcmask 1040384
    %v208 = vsel %vm206, %v201, 0
    %210 = vmatprep.subr.bf16.mxu0 0
    %211 = vmatpush1.bf16.msra.mxu0 0
    %212 = vmatprep.subr.bf16.mxu0 0
    %213 = vmatpush1.bf16.msra.mxu0 0
    %214 = vmatprep.subr.bf16.mxu0 0
    %215 = vmatpush1.bf16.msra.mxu0 0
    %216 = vmatprep.subr.bf16.mxu0 0
    %217 = vmatpush1.bf16.msra.mxu0 0
    %218 = vmatprep.subr.bf16.mxu0 0
    %219 = vmatpush1.bf16.msra.mxu0 0
    %220 = vmatprep.subr.bf16.mxu0 0
    %221 = vmatpush1.bf16.msra.mxu0 0
    %222 = vmatprep.subr.bf16.mxu0 0
    %223 = vmatpush1.bf16.msra.mxu0 0
    %224 = vmatprep.subr.bf16.mxu0 0
    %225 = vmatpush1.bf16.msra.mxu0 %v208
    %226 = vmatprep.subr.bf16.mxu0 0
    %227 = vmatpush2.bf16.msra.mxu0 0
    %228 = vmatprep.subr.bf16.mxu0 0
    %229 = vmatpush2.bf16.msra.mxu0 0
    %230 = vmatprep.subr.bf16.mxu0 0
    %231 = vmatpush2.bf16.msra.mxu0 0
    %232 = vmatprep.subr.bf16.mxu0 0
    %233 = vmatpush2.bf16.msra.mxu0 0
    %234 = vmatprep.subr.bf16.mxu0 0
    %235 = vmatpush2.bf16.msra.mxu0 0
    %236 = vmatprep.subr.bf16.mxu0 0
    %237 = vmatpush2.bf16.msra.mxu0 0
    %238 = vmatprep.subr.bf16.mxu0 0
    %239 = vmatpush2.bf16.msra.mxu0 0
    %240 = vmatprep.subr.bf16.mxu0 0
    %241 = vmatpush2.bf16.msra.mxu0 0
    %242 = vmatprep.mubr.bf16.mxu0 0
    %243 = vmatmul.mubr.bf16.gmra.mxu0 %v204
    %v244 = vpop.f32.mrf.mxu0
    %v245 = vadd.f32 0.0, %v244
    %v246 = vpop.f32.mrf.mxu0
    %v247 = vpop.f32.mrf.mxu0
    %v248 = vpop.f32.mrf.mxu0
    %249 = vdwg.mxu0
    %v250 = vmul.f32 %v198, %v245
    %v251 = vld [vmem:[#allocation6] sm:$0x1]
    %v253 = vlaneseq
    %v254 = vshrl.u32 %v253, 7
    %v255 = vsub.s32 0, %v254
    %v256 = vrot.slane %v251, %v255
    %v258 = vadd.f32 %v250, %v256
    %v259 = vld [vmem:[#allocation8] sm:$0xff]
    %v260 = vld [vmem:[#allocation8 + $0x8] sm:$0xff]
    %v261 = vld [vmem:[#allocation8 + $0x10] sm:$0xff]
    %v262 = vld [vmem:[#allocation8 + $0x18] sm:$0xff]
    %v263 = vld [vmem:[#allocation8 + $0x20] sm:$0xff]
    %v264 = vld [vmem:[#allocation8 + $0x28] sm:$0xff]
    %v265 = vld [vmem:[#allocation8 + $0x30] sm:$0xff]
    %v266 = vld [vmem:[#allocation8 + $0x38] sm:$0xff]
    %v267 = vld [vmem:[#allocation8 + $0x40] sm:$0xff]
    %v268 = vld [vmem:[#allocation8 + $0x48] sm:$0xff]
    %v269 = vld [vmem:[#allocation8 + $0x50] sm:$0xff]
    %v270 = vld [vmem:[#allocation8 + $0x58] sm:$0xff]
    %v271 = vld [vmem:[#allocation8 + $0x60] sm:$0xff]
    %v272 = vld [vmem:[#allocation8 + $0x68] sm:$0xff]
    %v273 = vld [vmem:[#allocation8 + $0x70] sm:$0xff]
    %v274 = vld [vmem:[#allocation8 + $0x78] sm:$0xff]
    %v275 = vpack.c.bf16 %v258, %v258
    %v276 = vpack.c.bf16 %v260, %v259
    %v277 = vpack.c.bf16 %v262, %v261
    %v278 = vpack.c.bf16 %v264, %v263
    %v279 = vpack.c.bf16 %v266, %v265
    %v280 = vpack.c.bf16 %v268, %v267
    %v281 = vpack.c.bf16 %v270, %v269
    %v282 = vpack.c.bf16 %v272, %v271
    %v283 = vpack.c.bf16 %v274, %v273
    %v284 = vld [vmem:[#allocation9] sm:$0x1]
    %v286 = vlaneseq
    %v287 = vshrl.u32 %v286, 7
    %v288 = vsub.s32 0, %v287
    %v289 = vrot.slane %v284, %v288
    %291 = vmatprep.subr.bf16.mxu0 0
    %292 = vmatpush1.bf16.msra.mxu0 %v283
    %293 = vmatprep.subr.bf16.mxu0 0
    %294 = vmatpush1.bf16.msra.mxu0 %v282
    %295 = vmatprep.subr.bf16.mxu0 0
    %296 = vmatpush1.bf16.msra.mxu0 %v281
    %297 = vmatprep.subr.bf16.mxu0 0
    %298 = vmatpush1.bf16.msra.mxu0 %v280
    %299 = vmatprep.subr.bf16.mxu0 0
    %300 = vmatpush1.bf16.msra.mxu0 %v279
    %301 = vmatprep.subr.bf16.mxu0 0
    %302 = vmatpush1.bf16.msra.mxu0 %v278
    %303 = vmatprep.subr.bf16.mxu0 0
    %304 = vmatpush1.bf16.msra.mxu0 %v277
    %305 = vmatprep.subr.bf16.mxu0 0
    %306 = vmatpush1.bf16.msra.mxu0 %v276
    %307 = vmatprep.subr.bf16.mxu0 0
    %308 = vmatpush2.bf16.msra.mxu0 0
    %309 = vmatprep.subr.bf16.mxu0 0
    %310 = vmatpush2.bf16.msra.mxu0 0
    %311 = vmatprep.subr.bf16.mxu0 0
    %312 = vmatpush2.bf16.msra.mxu0 0
    %313 = vmatprep.subr.bf16.mxu0 0
    %314 = vmatpush2.bf16.msra.mxu0 0
    %315 = vmatprep.subr.bf16.mxu0 0
    %316 = vmatpush2.bf16.msra.mxu0 0
    %317 = vmatprep.subr.bf16.mxu0 0
    %318 = vmatpush2.bf16.msra.mxu0 0
    %319 = vmatprep.subr.bf16.mxu0 0
    %320 = vmatpush2.bf16.msra.mxu0 0
    %321 = vmatprep.subr.bf16.mxu0 0
    %322 = vmatpush2.bf16.msra.mxu0 0
    %323 = vmatprep.mubr.bf16.mxu0 0
    %324 = vmatmul.mubr.bf16.gmra.mxu0 %v275
    %v325 = vpop.f32.mrf.mxu0
    %v326 = vadd.f32 %v289, %v325
    %v327 = vpop.f32.mrf.mxu0
    %v328 = vpop.f32.mrf.mxu0
    %v329 = vpop.f32.mrf.mxu0
    %330 = vdwg.mxu0
    %v331 = vmax.f32 %v326, 0.0
    %v332 = vld [vmem:[#allocation11] sm:$0x1]
    %v333 = vld [vmem:[#allocation12] sm:$0x1]
    %vm334 = vcmask 1041408
    %v335 = vsel %vm334, %v331, 0.0
    %v336 = vrot.slane %v335, 4
    %v337 = vadd.f32 %v335, %v336
    %v338 = vrot.slane %v337, 2
    %v339 = vadd.f32 %v337, %v338
    %v340 = vrot.slane %v339, 1
    %v341 = vadd.f32 %v339, %v340
    %v342 = vrcp.pop 2.0
    %v343 = vmul.f32 %v341, %v342
    %v344 = vsub.f32 %v331, %v343
    %v345 = vmul.f32 %v344, %v344
    %v346 = vsel %vm334, %v345, 0.0
    %v347 = vrot.slane %v346, 4
    %v348 = vadd.f32 %v346, %v347
    %v349 = vrot.slane %v348, 2
    %v350 = vadd.f32 %v348, %v349
    %v351 = vrot.slane %v350, 1
    %v352 = vadd.f32 %v350, %v351
    %v353 = vmul.f32 %v352, %v342
    %v354 = vadd.f32 %v353, 1e-05
    %v355 = vrsqrt.pop %v354
    %v356 = vmul.f32 %v344, %v355
    %v358 = vlaneseq
    %v359 = vshrl.u32 %v358, 7
    %v360 = vsub.s32 0, %v359
    %v361 = vrot.slane %v332, %v360
    %v363 = vmul.f32 %v356, %v361
    %v365 = vlaneseq
    %v366 = vshrl.u32 %v365, 7
    %v367 = vsub.s32 0, %v366
    %v368 = vrot.slane %v333, %v367
    %v370 = vadd.f32 %v363, %v368
    %v371 = vld [vmem:[%s8] sm:$0xff]
    %v372 = vld [vmem:[%s8 + $0x8] sm:$0xff]
    %v373 = vld [vmem:[%s8 + $0x10] sm:$0xff]
    %v374 = vld [vmem:[%s8 + $0x18] sm:$0xff]
    %v375 = vld [vmem:[%s8 + $0x20] sm:$0xff]
    %v376 = vld [vmem:[%s8 + $0x28] sm:$0xff]
    %v377 = vld [vmem:[%s8 + $0x30] sm:$0xff]
    %v378 = vld [vmem:[%s8 + $0x38] sm:$0xff]
    %v379 = vld [vmem:[%s8 + $0x40] sm:$0xff]
    %v380 = vld [vmem:[%s8 + $0x48] sm:$0xff]
    %v381 = vld [vmem:[%s8 + $0x50] sm:$0xff]
    %v382 = vld [vmem:[%s8 + $0x58] sm:$0xff]
    %v383 = vld [vmem:[%s8 + $0x60] sm:$0xff]
    %v384 = vld [vmem:[%s8 + $0x68] sm:$0xff]
    %v385 = vld [vmem:[%s8 + $0x70] sm:$0xff]
    %v386 = vld [vmem:[%s8 + $0x78] sm:$0xff]
    %v387 = vpack.c.bf16 %v370, %v370
    %v388 = vpack.c.bf16 %v372, %v371
    %v389 = vpack.c.bf16 %v374, %v373
    %v390 = vpack.c.bf16 %v376, %v375
    %v391 = vpack.c.bf16 %v378, %v377
    %v392 = vpack.c.bf16 %v380, %v379
    %v393 = vpack.c.bf16 %v382, %v381
    %v394 = vpack.c.bf16 %v384, %v383
    %v395 = vpack.c.bf16 %v386, %v385
    %v396 = vld [vmem:[%s9] sm:$0xff]
    %v397 = vld [vmem:[%s9 + $0x8] sm:$0xff]
    %v398 = vld [vmem:[%s9 + $0x10] sm:$0xff]
    %v399 = vld [vmem:[%s9 + $0x18] sm:$0xff]
    %v400 = vld [vmem:[%s9 + $0x20] sm:$0xff]
    %v401 = vld [vmem:[%s9 + $0x28] sm:$0xff]
    %v402 = vld [vmem:[%s9 + $0x30] sm:$0xff]
    %v403 = vld [vmem:[%s9 + $0x38] sm:$0xff]
    %v404 = vld [vmem:[%s9 + $0x40] sm:$0xff]
    %v405 = vld [vmem:[%s9 + $0x48] sm:$0xff]
    %v406 = vld [vmem:[%s9 + $0x50] sm:$0xff]
    %v407 = vld [vmem:[%s9 + $0x58] sm:$0xff]
    %v408 = vld [vmem:[%s9 + $0x60] sm:$0xff]
    %v409 = vld [vmem:[%s9 + $0x68] sm:$0xff]
    %v410 = vld [vmem:[%s9 + $0x70] sm:$0xff]
    %v411 = vld [vmem:[%s9 + $0x78] sm:$0xff]
    %v412 = vpack.c.bf16 %v397, %v396
    %v413 = vpack.c.bf16 %v399, %v398
    %v414 = vpack.c.bf16 %v401, %v400
    %v415 = vpack.c.bf16 %v403, %v402
    %v416 = vpack.c.bf16 %v405, %v404
    %v417 = vpack.c.bf16 %v407, %v406
    %v418 = vpack.c.bf16 %v409, %v408
    %v419 = vpack.c.bf16 %v411, %v410
    %420 = vmatprep.subr.bf16.mxu0 0
    %421 = vmatpush1.bf16.msra.mxu0 %v419
    %422 = vmatprep.subr.bf16.mxu0 0
    %423 = vmatpush1.bf16.msra.mxu0 %v418
    %424 = vmatprep.subr.bf16.mxu0 0
    %425 = vmatpush1.bf16.msra.mxu0 %v417
    %426 = vmatprep.subr.bf16.mxu0 0
    %427 = vmatpush1.bf16.msra.mxu0 %v416
    %428 = vmatprep.subr.bf16.mxu0 0
    %429 = vmatpush1.bf16.msra.mxu0 %v415
    %430 = vmatprep.subr.bf16.mxu0 0
    %431 = vmatpush1.bf16.msra.mxu0 %v414
    %432 = vmatprep.subr.bf16.mxu0 0
    %433 = vmatpush1.bf16.msra.mxu0 %v413
    %434 = vmatprep.subr.bf16.mxu0 0
    %435 = vmatpush1.bf16.msra.mxu0 %v412
    %436 = vmatprep.subr.bf16.mxu0 0
    %437 = vmatpush2.bf16.msra.mxu0 0
    %438 = vmatprep.subr.bf16.mxu0 0
    %439 = vmatpush2.bf16.msra.mxu0 0
    %440 = vmatprep.subr.bf16.mxu0 0
    %441 = vmatpush2.bf16.msra.mxu0 0
    %442 = vmatprep.subr.bf16.mxu0 0
    %443 = vmatpush2.bf16.msra.mxu0 0
    %444 = vmatprep.subr.bf16.mxu0 0
    %445 = vmatpush2.bf16.msra.mxu0 0
    %446 = vmatprep.subr.bf16.mxu0 0
    %447 = vmatpush2.bf16.msra.mxu0 0
    %448 = vmatprep.subr.bf16.mxu0 0
    %449 = vmatpush2.bf16.msra.mxu0 0
    %450 = vmatprep.subr.bf16.mxu0 0
    %451 = vmatpush2.bf16.msra.mxu0 0
    %452 = vmatprep.mubr.bf16.mxu0 0
    %453 = vmatmul.mubr.bf16.gmra.mxu0 %v387
    %v454 = vpop.f32.mrf.mxu0
    %v455 = vadd.f32 0.0, %v454
    %v456 = vpop.f32.mrf.mxu0
    %v457 = vpop.f32.mrf.mxu0
    %v458 = vpop.f32.mrf.mxu0
    %459 = vdwg.mxu0
    %v460 = vpack.c.bf16 %v118, %v118
    %v461 = vpack.c.bf16 %v455, %v455
    %v463 = vsel %vm202, %v460, 0
    %v466 = vsel %vm206, %v461, 0
    %468 = vmatprep.subr.bf16.mxu0 0
    %469 = vmatpush1.bf16.msra.mxu0 0
    %470 = vmatprep.subr.bf16.mxu0 0
    %471 = vmatpush1.bf16.msra.mxu0 0
    %472 = vmatprep.subr.bf16.mxu0 0
    %473 = vmatpush1.bf16.msra.mxu0 0
    %474 = vmatprep.subr.bf16.mxu0 0
    %475 = vmatpush1.bf16.msra.mxu0 0
    %476 = vmatprep.subr.bf16.mxu0 0
    %477 = vmatpush1.bf16.msra.mxu0 0
    %478 = vmatprep.subr.bf16.mxu0 0
    %479 = vmatpush1.bf16.msra.mxu0 0
    %480 = vmatprep.subr.bf16.mxu0 0
    %481 = vmatpush1.bf16.msra.mxu0 0
    %482 = vmatprep.subr.bf16.mxu0 0
    %483 = vmatpush1.bf16.msra.mxu0 %v466
    %484 = vmatprep.subr.bf16.mxu0 0
    %485 = vmatpush2.bf16.msra.mxu0 0
    %486 = vmatprep.subr.bf16.mxu0 0
    %487 = vmatpush2.bf16.msra.mxu0 0
    %488 = vmatprep.subr.bf16.mxu0 0
    %489 = vmatpush2.bf16.msra.mxu0 0
    %490 = vmatprep.subr.bf16.mxu0 0
    %491 = vmatpush2.bf16.msra.mxu0 0
    %492 = vmatprep.subr.bf16.mxu0 0
    %493 = vmatpush2.bf16.msra.mxu0 0
    %494 = vmatprep.subr.bf16.mxu0 0
    %495 = vmatpush2.bf16.msra.mxu0 0
    %496 = vmatprep.subr.bf16.mxu0 0
    %497 = vmatpush2.bf16.msra.mxu0 0
    %498 = vmatprep.subr.bf16.mxu0 0
    %499 = vmatpush2.bf16.msra.mxu0 0
    %500 = vmatprep.mubr.bf16.mxu0 0
    %501 = vmatmul.mubr.bf16.gmra.mxu0 %v463
    %v502 = vpop.f32.mrf.mxu0
    %v503 = vadd.f32 0.0, %v502
    %v504 = vpop.f32.mrf.mxu0
    %v505 = vpop.f32.mrf.mxu0
    %v506 = vpop.f32.mrf.mxu0
    %507 = vdwg.mxu0
    %508 = vmatprep.subr.bf16.mxu0 0
    %509 = vmatpush1.bf16.msra.mxu0 %v395
    %510 = vmatprep.subr.bf16.mxu0 0
    %511 = vmatpush1.bf16.msra.mxu0 %v394
    %512 = vmatprep.subr.bf16.mxu0 0
    %513 = vmatpush1.bf16.msra.mxu0 %v393
    %514 = vmatprep.subr.bf16.mxu0 0
    %515 = vmatpush1.bf16.msra.mxu0 %v392
    %516 = vmatprep.subr.bf16.mxu0 0
    %517 = vmatpush1.bf16.msra.mxu0 %v391
    %518 = vmatprep.subr.bf16.mxu0 0
    %519 = vmatpush1.bf16.msra.mxu0 %v390
    %520 = vmatprep.subr.bf16.mxu0 0
    %521 = vmatpush1.bf16.msra.mxu0 %v389
    %522 = vmatprep.subr.bf16.mxu0 0
    %523 = vmatpush1.bf16.msra.mxu0 %v388
    %524 = vmatprep.subr.bf16.mxu0 0
    %525 = vmatpush2.bf16.msra.mxu0 0
    %526 = vmatprep.subr.bf16.mxu0 0
    %527 = vmatpush2.bf16.msra.mxu0 0
    %528 = vmatprep.subr.bf16.mxu0 0
    %529 = vmatpush2.bf16.msra.mxu0 0
    %530 = vmatprep.subr.bf16.mxu0 0
    %531 = vmatpush2.bf16.msra.mxu0 0
    %532 = vmatprep.subr.bf16.mxu0 0
    %533 = vmatpush2.bf16.msra.mxu0 0
    %534 = vmatprep.subr.bf16.mxu0 0
    %535 = vmatpush2.bf16.msra.mxu0 0
    %536 = vmatprep.subr.bf16.mxu0 0
    %537 = vmatpush2.bf16.msra.mxu0 0
    %538 = vmatprep.subr.bf16.mxu0 0
    %539 = vmatpush2.bf16.msra.mxu0 0
    %540 = vmatprep.mubr.bf16.mxu0 0
    %541 = vmatmul.mubr.bf16.gmra.mxu0 %v387
    %v542 = vpop.f32.mrf.mxu0
    %v543 = vadd.f32 %v503, %v542
    %v544 = vpop.f32.mrf.mxu0
    %v545 = vpop.f32.mrf.mxu0
    %v546 = vpop.f32.mrf.mxu0
    %547 = vdwg.mxu0
    %v548 = vld [vmem:[#allocation2] sm:$0x1]
    %v550 = vlaneseq
    %v551 = vshrl.u32 %v550, 7
    %v552 = vsub.s32 0, %v551
    %v553 = vrot.slane %v548, %v552
    %v555 = vadd.f32 %v543, %v553
    %v556 = vtanh.pop %v555
    %558 = vset.pattern.permute.xlu0 0
    %559 = vperm.xlu0 %558, %v556
    %v560 = vpop.permute.xlu0 %559
    %v562 = vmul.f32 %v370, %v560
    %563 = vst [vmem:[%s11] sm:$0x3] %v562
    %565 = vset.pattern.permute.xlu0 0
    %566 = vperm.xlu0 %565, %v555
    %v567 = vpop.permute.xlu0 %566
    %569 = vst [vmem:[#allocation14] sm:$0x3] %v567
    // Predicated region
    $region70: #{_fwd.9} parent=1 // pred_check
      _
    $region71: #{_fwd.9} parent=1 // pred_check_branch
      %571 = sbr.rel (0) target = $region73
    $region72: #{_fwd.9} parent=1 // pred_region
      _
    $region73: #{_fwd.9} parent=1 // pred_fallthru
      _
    // Predicated region
    $region74: #{_fwd.9} parent=1 // pred_check
      _
    $region75: #{_fwd.9} parent=1 // pred_check_branch
      %573 = sbr.rel (0) target = $region77
    $region76: #{_fwd.9} parent=1 // pred_region
      %s575 = ssub.s32 32, 32
      %576 = vsyncadd [#allocation5], %s575
      %s578 = sshll.u32 [#allocation14], 4
      %s579 = int_to_ptr.vmem [resolvable:$true] %s578
      %581 = dma.vmem_to_hbm [thread:$0]  %s579, 32, %s12, [#allocation5]
    $region77: #{_fwd.9} parent=1 // pred_fallthru
      _
    // Predicated region
    $region78: #{_fwd.9} parent=1 // pred_check
      _
    $region79: #{_fwd.9} parent=1 // pred_check_branch
      %583 = sbr.rel (0) target = $region81
    $region80: #{_fwd.9} parent=1 // pred_region
      _
    $region81: #{_fwd.9} parent=1 // pred_fallthru
      _
    // Predicated region
    $region82: #{_fwd.9} parent=1 // pred_check
      _
    $region83: #{_fwd.9} parent=1 // pred_check_branch
      %585 = sbr.rel (0) target = $region85
    $region84: #{_fwd.9} parent=1 // pred_region
      %586 = dma.done [#allocation5], 32
    $region85: #{_fwd.9} parent=1 // pred_fallthru
      _
    %587 = vsyncpa [#allocation4], 1
    %588 = vsyncpa [#allocation7], 1
    %589 = vsyncpa [#allocation10], 1
    %590 = vsyncpa [#allocation13], 1
    %591 = vsyncpa [#allocation5], 1

// kernel: _fwd.11
$region0: #{_fwd.11}
  #allocation0 [shape = 'u32[]', space=smem, size = 0x4, offset = 0x4, fixed_abs, tag = 'smem constant byte address 0x4 - core index']
  #allocation1 [shape = 'u32[144,128]{1,0:T(1,128)}', space=vmem, size = 0x12000, scoped, tag = 'internal scratch']
  #allocation2 [shape = 'f32[1,1]{1,0:T(1,128)S(6)}', space=smem, size = 0x200, scoped, tag = 'scoped memory for _fwd.11']
  #allocation3 [shape = 'f32[1,1]{1,0:T(1,128)S(6)}', space=smem, size = 0x200, scoped, tag = 'scoped memory for _fwd.11']
  %s0 = inlined_call_operand.<no memory space> [shape: f32[1,1], index: 0, kind: input, shape index: {}]
  %s1 = inlined_call_operand.<no memory space> [shape: f32[1,1], index: 1, kind: input, shape index: {}]
  %s2 = inlined_call_operand.vmem [shape: f32[2,2], index: 2, kind: input, shape index: {}]
  %s3 = inlined_call_operand.vmem [shape: f32[2,128], index: 3, kind: input, shape index: {}]
  %s4 = inlined_call_operand.vmem [shape: f32[2,2], index: 4, kind: input, shape index: {}]
  %s5 = inlined_call_operand.vmem [shape: f32[128,512], index: 5, kind: input, shape index: {}]
  %s6 = inlined_call_operand.vmem [shape: f32[1,512], index: 6, kind: input, shape index: {}]
  %s7 = inlined_call_operand.vmem [shape: f32[512,512], index: 7, kind: input, shape index: {}]
  %s8 = inlined_call_operand.vmem [shape: f32[1,512], index: 8, kind: input, shape index: {}]
  %s9 = inlined_call_operand.vmem [shape: f32[1,512], index: 9, kind: input, shape index: {}]
  %s10 = inlined_call_operand.vmem [shape: f32[1,512], index: 10, kind: input, shape index: {}]
  %s11 = inlined_call_operand.vmem [shape: f32[512,512], index: 11, kind: input, shape index: {}]
  %s12 = inlined_call_operand.vmem [shape: f32[1,512], index: 12, kind: input, shape index: {}]
  %s13 = inlined_call_operand.vmem [shape: f32[1,512], index: 13, kind: input, shape index: {}]
  %s14 = inlined_call_operand.vmem [shape: f32[1,512], index: 14, kind: input, shape index: {}]
  %s15 = inlined_call_operand.hbm [shape: f32[512,512], index: 15, kind: input, shape index: {}]
  %s16 = inlined_call_operand.vmem [shape: f32[1,512], index: 16, kind: input, shape index: {}]
  %s17 = inlined_call_operand.vmem [shape: f32[512,64], index: 17, kind: input, shape index: {}]
  %s18 = inlined_call_operand.hbm [shape: f32[1,64], index: 18, kind: input, shape index: {}]
  %s19 = inlined_call_operand.vmem [shape: f32[4,2], index: 19, kind: input, shape index: {}]
  %s20 = inlined_call_operand.vmem [shape: f32[4,2], index: 20, kind: input, shape index: {}]
  %s21 = inlined_call_operand.vmem [shape: f32[7,64], index: 21, kind: input, shape index: {}]
  %s22 = inlined_call_operand.hbm [shape: f32[4,7], index: 22, kind: output, shape index: {}]
  %s23 = sld [smem:[#allocation0]]
  $region106: #{_fwd.11} parent=0
    _
  %s25 = ssub.s32 1, %s23
  %s26 = scalar_select 0, %s25, %s23
  %27 = sst [smem:[#allocation2]] %s0
  %28 = sst [smem:[#allocation3]] %s1
  $region1: #{_fwd.11} parent=0
    #allocation4 [shape = 'u8[1048576]{0}', space=vmem, size = 0x100000, scoped, tag = 'input window, operand 15, single buffered']
    #allocation5 [shape = 's32[1]{0}', space=sflag, size = 0x4, scoped, tag = 'scoped memory for _fwd.11']
    #allocation6 [shape = 's32[1]{0}', space=sflag, size = 0x4, scoped, tag = 'scoped memory for _fwd.11']
    #allocation7 [shape = 'u8[512]{0}', space=vmem, size = 0x400, scoped, tag = 'input window, operand 18, single buffered']
    #allocation8 [shape = 's32[1]{0}', space=sflag, size = 0x4, scoped, tag = 'scoped memory for _fwd.11']
    #allocation9 [shape = 'u8[2048]{0}', space=vmem, size = 0x800, scoped, tag = 'output window, operand 0, single buffered']
    %29 = vsyncpa [#allocation5], 0
    %30 = vsyncpa [#allocation8], 0
    %31 = vsyncpa [#allocation6], 0
    // Predicated region
    $region2: #{_fwd.11} parent=1 // pred_check
      _
    $region3: #{_fwd.11} parent=1 // pred_check_branch
      %33 = sbr.rel (0) target = $region5
    $region4: #{_fwd.11} parent=1 // pred_region
      _
    $region5: #{_fwd.11} parent=1 // pred_fallthru
      _
    // Predicated region
    $region6: #{_fwd.11} parent=1 // pred_check
      _
    $region7: #{_fwd.11} parent=1 // pred_check_branch
      %35 = sbr.rel (0) target = $region9
    $region8: #{_fwd.11} parent=1 // pred_region
      _
    $region9: #{_fwd.11} parent=1 // pred_fallthru
      _
    // Predicated region
    $region10: #{_fwd.11} parent=1 // pred_check
      _
    $region11: #{_fwd.11} parent=1 // pred_check_branch
      %37 = sbr.rel (0) target = $region13
    $region12: #{_fwd.11} parent=1 // pred_region
      _
    $region13: #{_fwd.11} parent=1 // pred_fallthru
      _
    // Predicated region
    $region14: #{_fwd.11} parent=1 // pred_check
      _
    $region15: #{_fwd.11} parent=1 // pred_check_branch
      %39 = sbr.rel (0) target = $region17
    $region16: #{_fwd.11} parent=1 // pred_region
      _
    $region17: #{_fwd.11} parent=1 // pred_fallthru
      _
    // Predicated region
    $region18: #{_fwd.11} parent=1 // pred_check
      _
    $region19: #{_fwd.11} parent=1 // pred_check_branch
      %41 = sbr.rel (0) target = $region21
    $region20: #{_fwd.11} parent=1 // pred_region
      _
    $region21: #{_fwd.11} parent=1 // pred_fallthru
      _
    // Predicated region
    $region22: #{_fwd.11} parent=1 // pred_check
      _
    $region23: #{_fwd.11} parent=1 // pred_check_branch
      %43 = sbr.rel (0) target = $region25
    $region24: #{_fwd.11} parent=1 // pred_region
      _
    $region25: #{_fwd.11} parent=1 // pred_fallthru
      _
    // Predicated region
    $region26: #{_fwd.11} parent=1 // pred_check
      _
    $region27: #{_fwd.11} parent=1 // pred_check_branch
      %45 = sbr.rel (0) target = $region29
    $region28: #{_fwd.11} parent=1 // pred_region
      _
    $region29: #{_fwd.11} parent=1 // pred_fallthru
      _
    // Predicated region
    $region30: #{_fwd.11} parent=1 // pred_check
      _
    $region31: #{_fwd.11} parent=1 // pred_check_branch
      %47 = sbr.rel (0) target = $region33
    $region32: #{_fwd.11} parent=1 // pred_region
      _
    $region33: #{_fwd.11} parent=1 // pred_fallthru
      _
    // Predicated region
    $region34: #{_fwd.11} parent=1 // pred_check
      _
    $region35: #{_fwd.11} parent=1 // pred_check_branch
      %49 = sbr.rel (0) target = $region37
    $region36: #{_fwd.11} parent=1 // pred_region
      _
    $region37: #{_fwd.11} parent=1 // pred_fallthru
      _
    // Predicated region
    $region38: #{_fwd.11} parent=1 // pred_check
      _
    $region39: #{_fwd.11} parent=1 // pred_check_branch
      %51 = sbr.rel (0) target = $region41
    $region40: #{_fwd.11} parent=1 // pred_region
      _
    $region41: #{_fwd.11} parent=1 // pred_fallthru
      _
    // Predicated region
    $region42: #{_fwd.11} parent=1 // pred_check
      _
    $region43: #{_fwd.11} parent=1 // pred_check_branch
      %53 = sbr.rel (0) target = $region45
    $region44: #{_fwd.11} parent=1 // pred_region
      _
    $region45: #{_fwd.11} parent=1 // pred_fallthru
      _
    // Predicated region
    $region46: #{_fwd.11} parent=1 // pred_check
      _
    $region47: #{_fwd.11} parent=1 // pred_check_branch
      %55 = sbr.rel (0) target = $region49
    $region48: #{_fwd.11} parent=1 // pred_region
      _
    $region49: #{_fwd.11} parent=1 // pred_fallthru
      _
    // Predicated region
    $region50: #{_fwd.11} parent=1 // pred_check
      _
    $region51: #{_fwd.11} parent=1 // pred_check_branch
      %57 = sbr.rel (0) target = $region53
    $region52: #{_fwd.11} parent=1 // pred_region
      _
    $region53: #{_fwd.11} parent=1 // pred_fallthru
      _
    // Predicated region
    $region54: #{_fwd.11} parent=1 // pred_check
      _
    $region55: #{_fwd.11} parent=1 // pred_check_branch
      %59 = sbr.rel (0) target = $region57
    $region56: #{_fwd.11} parent=1 // pred_region
      _
    $region57: #{_fwd.11} parent=1 // pred_fallthru
      _
    // Predicated region
    $region58: #{_fwd.11} parent=1 // pred_check
      _
    $region59: #{_fwd.11} parent=1 // pred_check_branch
      %61 = sbr.rel (0) target = $region61
    $region60: #{_fwd.11} parent=1 // pred_region
      _
    $region61: #{_fwd.11} parent=1 // pred_fallthru
      _
    // Predicated region
    $region62: #{_fwd.11} parent=1 // pred_check
      _
    $region63: #{_fwd.11} parent=1 // pred_check_branch
      %63 = sbr.rel (0) target = $region65
    $region64: #{_fwd.11} parent=1 // pred_region
      %s65 = ssub.s32 32768, 32768
      %66 = vsyncadd [#allocation5], %s65
      %s67 = sshll.u32 [#allocation4], 4
      %s68 = int_to_ptr.vmem [resolvable:$true] %s67
      %73 = dma.hbm_to_vmem [thread:$0]  %s15, 32768, %s68, [#allocation5], 512, 512, 32
    $region65: #{_fwd.11} parent=1 // pred_fallthru
      _
    // Predicated region
    $region66: #{_fwd.11} parent=1 // pred_check
      _
    $region67: #{_fwd.11} parent=1 // pred_check_branch
      %75 = sbr.rel (0) target = $region69
    $region68: #{_fwd.11} parent=1 // pred_region
      _
    $region69: #{_fwd.11} parent=1 // pred_fallthru
      _
    // Predicated region
    $region70: #{_fwd.11} parent=1 // pred_check
      _
    $region71: #{_fwd.11} parent=1 // pred_check_branch
      %77 = sbr.rel (0) target = $region73
    $region72: #{_fwd.11} parent=1 // pred_region
      _
    $region73: #{_fwd.11} parent=1 // pred_fallthru
      _
    // Predicated region
    $region74: #{_fwd.11} parent=1 // pred_check
      _
    $region75: #{_fwd.11} parent=1 // pred_check_branch
      %79 = sbr.rel (0) target = $region77
    $region76: #{_fwd.11} parent=1 // pred_region
      %s81 = ssub.s32 16, 16
      %82 = vsyncadd [#allocation8], %s81
      %s84 = sshll.u32 [#allocation7], 4
      %s85 = int_to_ptr.vmem [resolvable:$true] %s84
      %87 = dma.hbm_to_vmem [thread:$0]  %s18, 16, %s85, [#allocation8]
    $region77: #{_fwd.11} parent=1 // pred_fallthru
      _
    // Predicated region
    $region78: #{_fwd.11} parent=1 // pred_check
      _
    $region79: #{_fwd.11} parent=1 // pred_check_branch
      %89 = sbr.rel (0) target = $region81
    $region80: #{_fwd.11} parent=1 // pred_region
      _
    $region81: #{_fwd.11} parent=1 // pred_fallthru
      _
    // Predicated region
    $region82: #{_fwd.11} parent=1 // pred_check
      _
    $region83: #{_fwd.11} parent=1 // pred_check_branch
      %91 = sbr.rel (0) target = $region85
    $region84: #{_fwd.11} parent=1 // pred_region
      _
    $region85: #{_fwd.11} parent=1 // pred_fallthru
      _
    // Predicated region
    $region86: #{_fwd.11} parent=1 // pred_check
      _
    $region87: #{_fwd.11} parent=1 // pred_check_branch
      %93 = sbr.rel (0) target = $region89
    $region88: #{_fwd.11} parent=1 // pred_region
      _
    $region89: #{_fwd.11} parent=1 // pred_fallthru
      _
    // Predicated region
    $region90: #{_fwd.11} parent=1 // pred_check
      _
    $region91: #{_fwd.11} parent=1 // pred_check_branch
      %95 = sbr.rel (0) target = $region93
    $region92: #{_fwd.11} parent=1 // pred_region
      %96 = dma.done [#allocation5], 32768
    $region93: #{_fwd.11} parent=1 // pred_fallthru
      _
    // Predicated region
    $region94: #{_fwd.11} parent=1 // pred_check
      _
    $region95: #{_fwd.11} parent=1 // pred_check_branch
      %98 = sbr.rel (0) target = $region97
    $region96: #{_fwd.11} parent=1 // pred_region
      %99 = dma.done [#allocation8], 16
    $region97: #{_fwd.11} parent=1 // pred_fallthru
      _
    %v101 = vld [vmem:[%s2] sm:$0x3]
    %v102 = vld [vmem:[%s3] sm:$0x3]
    %v103 = vpack.c.bf16 %v101, %v101
    %v104 = vpack.c.bf16 %v102, %v102
    %vm105 = vcmask 15360
    %v107 = vsel %vm105, %v103, 0
    %vm109 = vcmask 1040384
    %v111 = vsel %vm109, %v104, 0
    %113 = vmatprep.subr.bf16.mxu0 0
    %114 = vmatpush1.bf16.msra.mxu0 0
    %115 = vmatprep.subr.bf16.mxu0 0
    %116 = vmatpush1.bf16.msra.mxu0 0
    %117 = vmatprep.subr.bf16.mxu0 0
    %118 = vmatpush1.bf16.msra.mxu0 0
    %119 = vmatprep.subr.bf16.mxu0 0
    %120 = vmatpush1.bf16.msra.mxu0 0
    %121 = vmatprep.subr.bf16.mxu0 0
    %122 = vmatpush1.bf16.msra.mxu0 0
    %123 = vmatprep.subr.bf16.mxu0 0
    %124 = vmatpush1.bf16.msra.mxu0 0
    %125 = vmatprep.subr.bf16.mxu0 0
    %126 = vmatpush1.bf16.msra.mxu0 0
    %127 = vmatprep.subr.bf16.mxu0 0
    %128 = vmatpush1.bf16.msra.mxu0 %v111
    %129 = vmatprep.subr.bf16.mxu0 0
    %130 = vmatpush2.bf16.msra.mxu0 0
    %131 = vmatprep.subr.bf16.mxu0 0
    %132 = vmatpush2.bf16.msra.mxu0 0
    %133 = vmatprep.subr.bf16.mxu0 0
    %134 = vmatpush2.bf16.msra.mxu0 0
    %135 = vmatprep.subr.bf16.mxu0 0
    %136 = vmatpush2.bf16.msra.mxu0 0
    %137 = vmatprep.subr.bf16.mxu0 0
    %138 = vmatpush2.bf16.msra.mxu0 0
    %139 = vmatprep.subr.bf16.mxu0 0
    %140 = vmatpush2.bf16.msra.mxu0 0
    %141 = vmatprep.subr.bf16.mxu0 0
    %142 = vmatpush2.bf16.msra.mxu0 0
    %143 = vmatprep.subr.bf16.mxu0 0
    %144 = vmatpush2.bf16.msra.mxu0 0
    %145 = vmatprep.mubr.bf16.mxu0 0
    %146 = vmatmul.mubr.bf16.gmra.mxu0 %v107
    %v147 = vpop.f32.mrf.mxu0
    %v148 = vadd.f32 0.0, %v147
    %v149 = vpop.f32.mrf.mxu0
    %v150 = vpop.f32.mrf.mxu0
    %v151 = vpop.f32.mrf.mxu0
    %152 = vdwg.mxu0
    %v153 = vld [vmem:[%s4] sm:$0x3]
    %s154 = sld [smem:[#allocation2]]
    %s155 = sld [smem:[#allocation3]]
    %s156 = sadd.f32 %s154, 1.0
    %v157 = vstv %s156
    %v158 = vmul.f32 %v157, %v148
    %v159 = vpack.c.bf16 %v153, %v153
    %v160 = vpack.c.bf16 %v148, %v148
    %v162 = vsel %vm105, %v159, 0
    %v165 = vsel %vm109, %v160, 0
    %167 = vmatprep.subr.bf16.mxu0 0
    %168 = vmatpush1.bf16.msra.mxu0 0
    %169 = vmatprep.subr.bf16.mxu0 0
    %170 = vmatpush1.bf16.msra.mxu0 0
    %171 = vmatprep.subr.bf16.mxu0 0
    %172 = vmatpush1.bf16.msra.mxu0 0
    %173 = vmatprep.subr.bf16.mxu0 0
    %174 = vmatpush1.bf16.msra.mxu0 0
    %175 = vmatprep.subr.bf16.mxu0 0
    %176 = vmatpush1.bf16.msra.mxu0 0
    %177 = vmatprep.subr.bf16.mxu0 0
    %178 = vmatpush1.bf16.msra.mxu0 0
    %179 = vmatprep.subr.bf16.mxu0 0
    %180 = vmatpush1.bf16.msra.mxu0 0
    %181 = vmatprep.subr.bf16.mxu0 0
    %182 = vmatpush1.bf16.msra.mxu0 %v165
    %183 = vmatprep.subr.bf16.mxu0 0
    %184 = vmatpush2.bf16.msra.mxu0 0
    %185 = vmatprep.subr.bf16.mxu0 0
    %186 = vmatpush2.bf16.msra.mxu0 0
    %187 = vmatprep.subr.bf16.mxu0 0
    %188 = vmatpush2.bf16.msra.mxu0 0
    %189 = vmatprep.subr.bf16.mxu0 0
    %190 = vmatpush2.bf16.msra.mxu0 0
    %191 = vmatprep.subr.bf16.mxu0 0
    %192 = vmatpush2.bf16.msra.mxu0 0
    %193 = vmatprep.subr.bf16.mxu0 0
    %194 = vmatpush2.bf16.msra.mxu0 0
    %195 = vmatprep.subr.bf16.mxu0 0
    %196 = vmatpush2.bf16.msra.mxu0 0
    %197 = vmatprep.subr.bf16.mxu0 0
    %198 = vmatpush2.bf16.msra.mxu0 0
    %199 = vmatprep.mubr.bf16.mxu0 0
    %200 = vmatmul.mubr.bf16.gmra.mxu0 %v162
    %v201 = vpop.f32.mrf.mxu0
    %v202 = vadd.f32 0.0, %v201
    %v203 = vpop.f32.mrf.mxu0
    %v204 = vpop.f32.mrf.mxu0
    %v205 = vpop.f32.mrf.mxu0
    %206 = vdwg.mxu0
    %v207 = vadd.f32 %v158, %v202
    %v208 = vld [vmem:[%s5] sm:$0xff]
    %v209 = vld [vmem:[%s5 + $0x8] sm:$0xff]
    %v210 = vld [vmem:[%s5 + $0x10] sm:$0xff]
    %v211 = vld [vmem:[%s5 + $0x18] sm:$0xff]
    %v212 = vld [vmem:[%s5 + $0x20] sm:$0xff]
    %v213 = vld [vmem:[%s5 + $0x28] sm:$0xff]
    %v214 = vld [vmem:[%s5 + $0x30] sm:$0xff]
    %v215 = vld [vmem:[%s5 + $0x38] sm:$0xff]
    %v216 = vld [vmem:[%s5 + $0x40] sm:$0xff]
    %v217 = vld [vmem:[%s5 + $0x48] sm:$0xff]
    %v218 = vld [vmem:[%s5 + $0x50] sm:$0xff]
    %v219 = vld [vmem:[%s5 + $0x58] sm:$0xff]
    %v220 = vld [vmem:[%s5 + $0x60] sm:$0xff]
    %v221 = vld [vmem:[%s5 + $0x68] sm:$0xff]
    %v222 = vld [vmem:[%s5 + $0x70] sm:$0xff]
    %v223 = vld [vmem:[%s5 + $0x78] sm:$0xff]
    %v224 = vld [vmem:[%s5 + $0x80] sm:$0xff]
    %v225 = vld [vmem:[%s5 + $0x88] sm:$0xff]
    %v226 = vld [vmem:[%s5 + $0x90] sm:$0xff]
    %v227 = vld [vmem:[%s5 + $0x98] sm:$0xff]
    %v228 = vld [vmem:[%s5 + $0xa0] sm:$0xff]
    %v229 = vld [vmem:[%s5 + $0xa8] sm:$0xff]
    %v230 = vld [vmem:[%s5 + $0xb0] sm:$0xff]
    %v231 = vld [vmem:[%s5 + $0xb8] sm:$0xff]
    %v232 = vld [vmem:[%s5 + $0xc0] sm:$0xff]
    %v233 = vld [vmem:[%s5 + $0xc8] sm:$0xff]
    %v234 = vld [vmem:[%s5 + $0xd0] sm:$0xff]
    %v235 = vld [vmem:[%s5 + $0xd8] sm:$0xff]
    %v236 = vld [vmem:[%s5 + $0xe0] sm:$0xff]
    %v237 = vld [vmem:[%s5 + $0xe8] sm:$0xff]
    %v238 = vld [vmem:[%s5 + $0xf0] sm:$0xff]
    %v239 = vld [vmem:[%s5 + $0xf8] sm:$0xff]
    %v240 = vld [vmem:[%s5 + $0x100] sm:$0xff]
    %v241 = vld [vmem:[%s5 + $0x108] sm:$0xff]
    %v242 = vld [vmem:[%s5 + $0x110] sm:$0xff]
    %v243 = vld [vmem:[%s5 + $0x118] sm:$0xff]
    %v244 = vld [vmem:[%s5 + $0x120] sm:$0xff]
    %v245 = vld [vmem:[%s5 + $0x128] sm:$0xff]
    %v246 = vld [vmem:[%s5 + $0x130] sm:$0xff]
    %v247 = vld [vmem:[%s5 + $0x138] sm:$0xff]
    %v248 = vld [vmem:[%s5 + $0x140] sm:$0xff]
    %v249 = vld [vmem:[%s5 + $0x148] sm:$0xff]
    %v250 = vld [vmem:[%s5 + $0x150] sm:$0xff]
    %v251 = vld [vmem:[%s5 + $0x158] sm:$0xff]
    %v252 = vld [vmem:[%s5 + $0x160] sm:$0xff]
    %v253 = vld [vmem:[%s5 + $0x168] sm:$0xff]
    %v254 = vld [vmem:[%s5 + $0x170] sm:$0xff]
    %v255 = vld [vmem:[%s5 + $0x178] sm:$0xff]
    %v256 = vld [vmem:[%s5 + $0x180] sm:$0xff]
    %v257 = vld [vmem:[%s5 + $0x188] sm:$0xff]
    %v258 = vld [vmem:[%s5 + $0x190] sm:$0xff]
    %v259 = vld [vmem:[%s5 + $0x198] sm:$0xff]
    %v260 = vld [vmem:[%s5 + $0x1a0] sm:$0xff]
    %v261 = vld [vmem:[%s5 + $0x1a8] sm:$0xff]
    %v262 = vld [vmem:[%s5 + $0x1b0] sm:$0xff]
    %v263 = vld [vmem:[%s5 + $0x1b8] sm:$0xff]
    %v264 = vld [vmem:[%s5 + $0x1c0] sm:$0xff]
    %v265 = vld [vmem:[%s5 + $0x1c8] sm:$0xff]
    %v266 = vld [vmem:[%s5 + $0x1d0] sm:$0xff]
    %v267 = vld [vmem:[%s5 + $0x1d8] sm:$0xff]
    %v268 = vld [vmem:[%s5 + $0x1e0] sm:$0xff]
    %v269 = vld [vmem:[%s5 + $0x1e8] sm:$0xff]
    %v270 = vld [vmem:[%s5 + $0x1f0] sm:$0xff]
    %v271 = vld [vmem:[%s5 + $0x1f8] sm:$0xff]
    %v272 = vpack.c.bf16 %v207, %v207
    %v273 = vpack.c.bf16 %v212, %v208
    %v274 = vpack.c.bf16 %v213, %v209
    %v275 = vpack.c.bf16 %v214, %v210
    %v276 = vpack.c.bf16 %v215, %v211
    %v277 = vpack.c.bf16 %v220, %v216
    %v278 = vpack.c.bf16 %v221, %v217
    %v279 = vpack.c.bf16 %v222, %v218
    %v280 = vpack.c.bf16 %v223, %v219
    %v281 = vpack.c.bf16 %v228, %v224
    %v282 = vpack.c.bf16 %v229, %v225
    %v283 = vpack.c.bf16 %v230, %v226
    %v284 = vpack.c.bf16 %v231, %v227
    %v285 = vpack.c.bf16 %v236, %v232
    %v286 = vpack.c.bf16 %v237, %v233
    %v287 = vpack.c.bf16 %v238, %v234
    %v288 = vpack.c.bf16 %v239, %v235
    %v289 = vpack.c.bf16 %v244, %v240
    %v290 = vpack.c.bf16 %v245, %v241
    %v291 = vpack.c.bf16 %v246, %v242
    %v292 = vpack.c.bf16 %v247, %v243
    %v293 = vpack.c.bf16 %v252, %v248
    %v294 = vpack.c.bf16 %v253, %v249
    %v295 = vpack.c.bf16 %v254, %v250
    %v296 = vpack.c.bf16 %v255, %v251
    %v297 = vpack.c.bf16 %v260, %v256
    %v298 = vpack.c.bf16 %v261, %v257
    %v299 = vpack.c.bf16 %v262, %v258
    %v300 = vpack.c.bf16 %v263, %v259
    %v301 = vpack.c.bf16 %v268, %v264
    %v302 = vpack.c.bf16 %v269, %v265
    %v303 = vpack.c.bf16 %v270, %v266
    %v304 = vpack.c.bf16 %v271, %v267
    %v305 = vld [vmem:[%s6] sm:$0xf]
    %v307 = vlaneseq
    %v308 = vshrl.u32 %v307, 7
    %v309 = vsub.s32 0, %v308
    %v310 = vrot.slane %v305, %v309
    %v311 = vlaneseq
    %v312 = vshrl.u32 %v311, 7
    %v313 = vsub.s32 1, %v312
    %v314 = vrot.slane %v305, %v313
    %v315 = vlaneseq
    %v316 = vshrl.u32 %v315, 7
    %v317 = vsub.s32 2, %v316
    %v318 = vrot.slane %v305, %v317
    %v319 = vlaneseq
    %v320 = vshrl.u32 %v319, 7
    %v321 = vsub.s32 3, %v320
    %v322 = vrot.slane %v305, %v321
    %327 = vmatprep.subr.bf16.mxu0 %v302
    %328 = vmatpush1.bf16.msra.mxu0 %v301
    %329 = vmatprep.subr.bf16.mxu0 %v298
    %330 = vmatpush1.bf16.msra.mxu0 %v297
    %331 = vmatprep.subr.bf16.mxu0 %v294
    %332 = vmatpush1.bf16.msra.mxu0 %v293
    %333 = vmatprep.subr.bf16.mxu0 %v290
    %334 = vmatpush1.bf16.msra.mxu0 %v289
    %335 = vmatprep.subr.bf16.mxu0 %v286
    %336 = vmatpush1.bf16.msra.mxu0 %v285
    %337 = vmatprep.subr.bf16.mxu0 %v282
    %338 = vmatpush1.bf16.msra.mxu0 %v281
    %339 = vmatprep.subr.bf16.mxu0 %v278
    %340 = vmatpush1.bf16.msra.mxu0 %v277
    %341 = vmatprep.subr.bf16.mxu0 %v274
    %342 = vmatpush1.bf16.msra.mxu0 %v273
    %343 = vmatprep.subr.bf16.mxu0 0
    %344 = vmatpush2.bf16.msra.mxu0 0
    %345 = vmatprep.subr.bf16.mxu0 0
    %346 = vmatpush2.bf16.msra.mxu0 0
    %347 = vmatprep.subr.bf16.mxu0 0
    %348 = vmatpush2.bf16.msra.mxu0 0
    %349 = vmatprep.subr.bf16.mxu0 0
    %350 = vmatpush2.bf16.msra.mxu0 0
    %351 = vmatprep.subr.bf16.mxu0 0
    %352 = vmatpush2.bf16.msra.mxu0 0
    %353 = vmatprep.subr.bf16.mxu0 0
    %354 = vmatpush2.bf16.msra.mxu0 0
    %355 = vmatprep.subr.bf16.mxu0 0
    %356 = vmatpush2.bf16.msra.mxu0 0
    %357 = vmatprep.subr.bf16.mxu0 0
    %358 = vmatpush2.bf16.msra.mxu0 0
    %359 = vmatprep.mubr.bf16.mxu0 0
    %360 = vmatmul.mubr.bf16.gmra.mxu0 %v272
    %v361 = vpop.f32.mrf.mxu0
    %v362 = vadd.f32 %v310, %v361
    %v363 = vpop.f32.mrf.mxu0
    %v364 = vadd.f32 %v314, %v363
    %v365 = vpop.f32.mrf.mxu0
    %v366 = vpop.f32.mrf.mxu0
    %367 = vdwg.mxu0
    %368 = vmatprep.subr.bf16.mxu0 %v304
    %369 = vmatpush1.bf16.msra.mxu0 %v303
    %370 = vmatprep.subr.bf16.mxu0 %v300
    %371 = vmatpush1.bf16.msra.mxu0 %v299
    %372 = vmatprep.subr.bf16.mxu0 %v296
    %373 = vmatpush1.bf16.msra.mxu0 %v295
    %374 = vmatprep.subr.bf16.mxu0 %v292
    %375 = vmatpush1.bf16.msra.mxu0 %v291
    %376 = vmatprep.subr.bf16.mxu0 %v288
    %377 = vmatpush1.bf16.msra.mxu0 %v287
    %378 = vmatprep.subr.bf16.mxu0 %v284
    %379 = vmatpush1.bf16.msra.mxu0 %v283
    %380 = vmatprep.subr.bf16.mxu0 %v280
    %381 = vmatpush1.bf16.msra.mxu0 %v279
    %382 = vmatprep.subr.bf16.mxu0 %v276
    %383 = vmatpush1.bf16.msra.mxu0 %v275
    %384 = vmatprep.subr.bf16.mxu0 0
    %385 = vmatpush2.bf16.msra.mxu0 0
    %386 = vmatprep.subr.bf16.mxu0 0
    %387 = vmatpush2.bf16.msra.mxu0 0
    %388 = vmatprep.subr.bf16.mxu0 0
    %389 = vmatpush2.bf16.msra.mxu0 0
    %390 = vmatprep.subr.bf16.mxu0 0
    %391 = vmatpush2.bf16.msra.mxu0 0
    %392 = vmatprep.subr.bf16.mxu0 0
    %393 = vmatpush2.bf16.msra.mxu0 0
    %394 = vmatprep.subr.bf16.mxu0 0
    %395 = vmatpush2.bf16.msra.mxu0 0
    %396 = vmatprep.subr.bf16.mxu0 0
    %397 = vmatpush2.bf16.msra.mxu0 0
    %398 = vmatprep.subr.bf16.mxu0 0
    %399 = vmatpush2.bf16.msra.mxu0 0
    %400 = vmatprep.mubr.bf16.mxu0 0
    %401 = vmatmul.mubr.bf16.gmra.mxu0 %v272
    %v402 = vpop.f32.mrf.mxu0
    %v403 = vadd.f32 %v318, %v402
    %v404 = vpop.f32.mrf.mxu0
    %v405 = vadd.f32 %v322, %v404
    %v406 = vpop.f32.mrf.mxu0
    %v407 = vpop.f32.mrf.mxu0
    %408 = vdwg.mxu0
    %v409 = vmax.f32 %v362, 0.0
    %v410 = vmax.f32 %v364, 0.0
    %v411 = vmax.f32 %v403, 0.0
    %v412 = vmax.f32 %v405, 0.0
    %v413 = vld [vmem:[%s7] sm:$0xff]
    %v414 = vld [vmem:[%s7 + $0x8] sm:$0xff]
    %v415 = vld [vmem:[%s7 + $0x10] sm:$0xff]
    %v416 = vld [vmem:[%s7 + $0x18] sm:$0xff]
    %v417 = vld [vmem:[%s7 + $0x20] sm:$0xff]
    %v418 = vld [vmem:[%s7 + $0x28] sm:$0xff]
    %v419 = vld [vmem:[%s7 + $0x30] sm:$0xff]
    %v420 = vld [vmem:[%s7 + $0x38] sm:$0xff]
    %v421 = vld [vmem:[%s7 + $0x40] sm:$0xff]
    %v422 = vld [vmem:[%s7 + $0x48] sm:$0xff]
    %v423 = vld [vmem:[%s7 + $0x50] sm:$0xff]
    %v424 = vld [vmem:[%s7 + $0x58] sm:$0xff]
    %v425 = vld [vmem:[%s7 + $0x60] sm:$0xff]
    %v426 = vld [vmem:[%s7 + $0x68] sm:$0xff]
    %v427 = vld [vmem:[%s7 + $0x70] sm:$0xff]
    %v428 = vld [vmem:[%s7 + $0x78] sm:$0xff]
    %v429 = vld [vmem:[%s7 + $0x80] sm:$0xff]
    %v430 = vld [vmem:[%s7 + $0x88] sm:$0xff]
    %v431 = vld [vmem:[%s7 + $0x90] sm:$0xff]
    %v432 = vld [vmem:[%s7 + $0x98] sm:$0xff]
    %v433 = vld [vmem:[%s7 + $0xa0] sm:$0xff]
    %v434 = vld [vmem:[%s7 + $0xa8] sm:$0xff]
    %v435 = vld [vmem:[%s7 + $0xb0] sm:$0xff]
    %v436 = vld [vmem:[%s7 + $0xb8] sm:$0xff]
    %v437 = vld [vmem:[%s7 + $0xc0] sm:$0xff]
    %v438 = vld [vmem:[%s7 + $0xc8] sm:$0xff]
    %v439 = vld [vmem:[%s7 + $0xd0] sm:$0xff]
    %v440 = vld [vmem:[%s7 + $0xd8] sm:$0xff]
    %v441 = vld [vmem:[%s7 + $0xe0] sm:$0xff]
    %v442 = vld [vmem:[%s7 + $0xe8] sm:$0xff]
    %v443 = vld [vmem:[%s7 + $0xf0] sm:$0xff]
    %v444 = vld [vmem:[%s7 + $0xf8] sm:$0xff]
    %v445 = vld [vmem:[%s7 + $0x100] sm:$0xff]
    %v446 = vld [vmem:[%s7 + $0x108] sm:$0xff]
    %v447 = vld [vmem:[%s7 + $0x110] sm:$0xff]
    %v448 = vld [vmem:[%s7 + $0x118] sm:$0xff]
    %v449 = vld [vmem:[%s7 + $0x120] sm:$0xff]
    %v450 = vld [vmem:[%s7 + $0x128] sm:$0xff]
    %v451 = vld [vmem:[%s7 + $0x130] sm:$0xff]
    %v452 = vld [vmem:[%s7 + $0x138] sm:$0xff]
    %v453 = vld [vmem:[%s7 + $0x140] sm:$0xff]
    %v454 = vld [vmem:[%s7 + $0x148] sm:$0xff]
    %v455 = vld [vmem:[%s7 + $0x150] sm:$0xff]
    %v456 = vld [vmem:[%s7 + $0x158] sm:$0xff]
    %v457 = vld [vmem:[%s7 + $0x160] sm:$0xff]
    %v458 = vld [vmem:[%s7 + $0x168] sm:$0xff]
    %v459 = vld [vmem:[%s7 + $0x170] sm:$0xff]
    %v460 = vld [vmem:[%s7 + $0x178] sm:$0xff]
    %v461 = vld [vmem:[%s7 + $0x180] sm:$0xff]
    %v462 = vld [vmem:[%s7 + $0x188] sm:$0xff]
    %v463 = vld [vmem:[%s7 + $0x190] sm:$0xff]
    %v464 = vld [vmem:[%s7 + $0x198] sm:$0xff]
    %v465 = vld [vmem:[%s7 + $0x1a0] sm:$0xff]
    %v466 = vld [vmem:[%s7 + $0x1a8] sm:$0xff]
    %v467 = vld [vmem:[%s7 + $0x1b0] sm:$0xff]
    %v468 = vld [vmem:[%s7 + $0x1b8] sm:$0xff]
    %v469 = vld [vmem:[%s7 + $0x1c0] sm:$0xff]
    %v470 = vld [vmem:[%s7 + $0x1c8] sm:$0xff]
    %v471 = vld [vmem:[%s7 + $0x1d0] sm:$0xff]
    %v472 = vld [vmem:[%s7 + $0x1d8] sm:$0xff]
    %v473 = vld [vmem:[%s7 + $0x1e0] sm:$0xff]
    %v474 = vld [vmem:[%s7 + $0x1e8] sm:$0xff]
    %v475 = vld [vmem:[%s7 + $0x1f0] sm:$0xff]
    %v476 = vld [vmem:[%s7 + $0x1f8] sm:$0xff]
    %v477 = vld [vmem:[%s7 + $0x200] sm:$0xff]
    %v478 = vld [vmem:[%s7 + $0x208] sm:$0xff]
    %v479 = vld [vmem:[%s7 + $0x210] sm:$0xff]
    %v480 = vld [vmem:[%s7 + $0x218] sm:$0xff]
    %v481 = vld [vmem:[%s7 + $0x220] sm:$0xff]
    %v482 = vld [vmem:[%s7 + $0x228] sm:$0xff]
    %v483 = vld [vmem:[%s7 + $0x230] sm:$0xff]
    %v484 = vld [vmem:[%s7 + $0x238] sm:$0xff]
    %v485 = vld [vmem:[%s7 + $0x240] sm:$0xff]
    %v486 = vld [vmem:[%s7 + $0x248] sm:$0xff]
    %v487 = vld [vmem:[%s7 + $0x250] sm:$0xff]
    %v488 = vld [vmem:[%s7 + $0x258] sm:$0xff]
    %v489 = vld [vmem:[%s7 + $0x260] sm:$0xff]
    %v490 = vld [vmem:[%s7 + $0x268] sm:$0xff]
    %v491 = vld [vmem:[%s7 + $0x270] sm:$0xff]
    %v492 = vld [vmem:[%s7 + $0x278] sm:$0xff]
    %v493 = vld [vmem:[%s7 + $0x280] sm:$0xff]
    %v494 = vld [vmem:[%s7 + $0x288] sm:$0xff]
    %v495 = vld [vmem:[%s7 + $0x290] sm:$0xff]
    %v496 = vld [vmem:[%s7 + $0x298] sm:$0xff]
    %v497 = vld [vmem:[%s7 + $0x2a0] sm:$0xff]
    %v498 = vld [vmem:[%s7 + $0x2a8] sm:$0xff]
    %v499 = vld [vmem:[%s7 + $0x2b0] sm:$0xff]
    %v500 = vld [vmem:[%s7 + $0x2b8] sm:$0xff]
    %v501 = vld [vmem:[%s7 + $0x2c0] sm:$0xff]
    %v502 = vld [vmem:[%s7 + $0x2c8] sm:$0xff]
    %v503 = vld [vmem:[%s7 + $0x2d0] sm:$0xff]
    %v504 = vld [vmem:[%s7 + $0x2d8] sm:$0xff]
    %v505 = vld [vmem:[%s7 + $0x2e0] sm:$0xff]
    %v506 = vld [vmem:[%s7 + $0x2e8] sm:$0xff]
    %v507 = vld [vmem:[%s7 + $0x2f0] sm:$0xff]
    %v508 = vld [vmem:[%s7 + $0x2f8] sm:$0xff]
    %v509 = vld [vmem:[%s7 + $0x300] sm:$0xff]
    %v510 = vld [vmem:[%s7 + $0x308] sm:$0xff]
    %v511 = vld [vmem:[%s7 + $0x310] sm:$0xff]
    %v512 = vld [vmem:[%s7 + $0x318] sm:$0xff]
    %v513 = vld [vmem:[%s7 + $0x320] sm:$0xff]
    %v514 = vld [vmem:[%s7 + $0x328] sm:$0xff]
    %v515 = vld [vmem:[%s7 + $0x330] sm:$0xff]
    %v516 = vld [vmem:[%s7 + $0x338] sm:$0xff]
    %v517 = vld [vmem:[%s7 + $0x340] sm:$0xff]
    %v518 = vld [vmem:[%s7 + $0x348] sm:$0xff]
    %v519 = vld [vmem:[%s7 + $0x350] sm:$0xff]
    %v520 = vld [vmem:[%s7 + $0x358] sm:$0xff]
    %v521 = vld [vmem:[%s7 + $0x360] sm:$0xff]
    %v522 = vld [vmem:[%s7 + $0x368] sm:$0xff]
    %v523 = vld [vmem:[%s7 + $0x370] sm:$0xff]
    %v524 = vld [vmem:[%s7 + $0x378] sm:$0xff]
    %v525 = vld [vmem:[%s7 + $0x380] sm:$0xff]
    %v526 = vld [vmem:[%s7 + $0x388] sm:$0xff]
    %v527 = vld [vmem:[%s7 + $0x390] sm:$0xff]
    %v528 = vld [vmem:[%s7 + $0x398] sm:$0xff]
    %v529 = vld [vmem:[%s7 + $0x3a0] sm:$0xff]
    %v530 = vld [vmem:[%s7 + $0x3a8] sm:$0xff]
    %v531 = vld [vmem:[%s7 + $0x3b0] sm:$0xff]
    %v532 = vld [vmem:[%s7 + $0x3b8] sm:$0xff]
    %v533 = vld [vmem:[%s7 + $0x3c0] sm:$0xff]
    %v534 = vld [vmem:[%s7 + $0x3c8] sm:$0xff]
    %v535 = vld [vmem:[%s7 + $0x3d0] sm:$0xff]
    %v536 = vld [vmem:[%s7 + $0x3d8] sm:$0xff]
    %v537 = vld [vmem:[%s7 + $0x3e0] sm:$0xff]
    %v538 = vld [vmem:[%s7 + $0x3e8] sm:$0xff]
    %v539 = vld [vmem:[%s7 + $0x3f0] sm:$0xff]
    %v540 = vld [vmem:[%s7 + $0x3f8] sm:$0xff]
    %v541 = vld [vmem:[%s7 + $0x400] sm:$0xff]
    %v542 = vld [vmem:[%s7 + $0x408] sm:$0xff]
    %v543 = vld [vmem:[%s7 + $0x410] sm:$0xff]
    %v544 = vld [vmem:[%s7 + $0x418] sm:$0xff]
    %v545 = vld [vmem:[%s7 + $0x420] sm:$0xff]
    %v546 = vld [vmem:[%s7 + $0x428] sm:$0xff]
    %v547 = vld [vmem:[%s7 + $0x430] sm:$0xff]
    %v548 = vld [vmem:[%s7 + $0x438] sm:$0xff]
    %v549 = vld [vmem:[%s7 + $0x440] sm:$0xff]
    %v550 = vld [vmem:[%s7 + $0x448] sm:$0xff]
    %v551 = vld [vmem:[%s7 + $0x450] sm:$0xff]
    %v552 = vld [vmem:[%s7 + $0x458] sm:$0xff]
    %v553 = vld [vmem:[%s7 + $0x460] sm:$0xff]
    %v554 = vld [vmem:[%s7 + $0x468] sm:$0xff]
    %v555 = vld [vmem:[%s7 + $0x470] sm:$0xff]
    %v556 = vld [vmem:[%s7 + $0x478] sm:$0xff]
    %v557 = vld [vmem:[%s7 + $0x480] sm:$0xff]
    %v558 = vld [vmem:[%s7 + $0x488] sm:$0xff]
    %v559 = vld [vmem:[%s7 + $0x490] sm:$0xff]
    %v560 = vld [vmem:[%s7 + $0x498] sm:$0xff]
    %v561 = vld [vmem:[%s7 + $0x4a0] sm:$0xff]
    %v562 = vld [vmem:[%s7 + $0x4a8] sm:$0xff]
    %v563 = vld [vmem:[%s7 + $0x4b0] sm:$0xff]
    %v564 = vld [vmem:[%s7 + $0x4b8] sm:$0xff]
    %v565 = vld [vmem:[%s7 + $0x4c0] sm:$0xff]
    %v566 = vld [vmem:[%s7 + $0x4c8] sm:$0xff]
    %v567 = vld [vmem:[%s7 + $0x4d0] sm:$0xff]
    %v568 = vld [vmem:[%s7 + $0x4d8] sm:$0xff]
    %v569 = vld [vmem:[%s7 + $0x4e0] sm:$0xff]
    %v570 = vld [vmem:[%s7 + $0x4e8] sm:$0xff]
    %v571 = vld [vmem:[%s7 + $0x4f0] sm:$0xff]
    %v572 = vld [vmem:[%s7 + $0x4f8] sm:$0xff]
    %v573 = vld [vmem:[%s7 + $0x500] sm:$0xff]
    %v574 = vld [vmem:[%s7 + $0x508] sm:$0xff]
    %v575 = vld [vmem:[%s7 + $0x510] sm:$0xff]
    %v576 = vld [vmem:[%s7 + $0x518] sm:$0xff]
    %v577 = vld [vmem:[%s7 + $0x520] sm:$0xff]
    %v578 = vld [vmem:[%s7 + $0x528] sm:$0xff]
    %v579 = vld [vmem:[%s7 + $0x530] sm:$0xff]
    %v580 = vld [vmem:[%s7 + $0x538] sm:$0xff]
    %v581 = vld [vmem:[%s7 + $0x540] sm:$0xff]
    %v582 = vld [vmem:[%s7 + $0x548] sm:$0xff]
    %v583 = vld [vmem:[%s7 + $0x550] sm:$0xff]
    %v584 = vld [vmem:[%s7 + $0x558] sm:$0xff]
    %v585 = vld [vmem:[%s7 + $0x560] sm:$0xff]
    %v586 = vld [vmem:[%s7 + $0x568] sm:$0xff]
    %v587 = vld [vmem:[%s7 + $0x570] sm:$0xff]
    %v588 = vld [vmem:[%s7 + $0x578] sm:$0xff]
    %v589 = vld [vmem:[%s7 + $0x580] sm:$0xff]
    %v590 = vld [vmem:[%s7 + $0x588] sm:$0xff]
    %v591 = vld [vmem:[%s7 + $0x590] sm:$0xff]
    %v592 = vld [vmem:[%s7 + $0x598] sm:$0xff]
    %v593 = vld [vmem:[%s7 + $0x5a0] sm:$0xff]
    %v594 = vld [vmem:[%s7 + $0x5a8] sm:$0xff]
    %v595 = vld [vmem:[%s7 + $0x5b0] sm:$0xff]
    %v596 = vld [vmem:[%s7 + $0x5b8] sm:$0xff]
    %v597 = vld [vmem:[%s7 + $0x5c0] sm:$0xff]
    %v598 = vld [vmem:[%s7 + $0x5c8] sm:$0xff]
    %v599 = vld [vmem:[%s7 + $0x5d0] sm:$0xff]
    %v600 = vld [vmem:[%s7 + $0x5d8] sm:$0xff]
    %v601 = vld [vmem:[%s7 + $0x5e0] sm:$0xff]
    %v602 = vld [vmem:[%s7 + $0x5e8] sm:$0xff]
    %v603 = vld [vmem:[%s7 + $0x5f0] sm:$0xff]
    %v604 = vld [vmem:[%s7 + $0x5f8] sm:$0xff]
    %v605 = vld [vmem:[%s7 + $0x600] sm:$0xff]
    %v606 = vld [vmem:[%s7 + $0x608] sm:$0xff]
    %v607 = vld [vmem:[%s7 + $0x610] sm:$0xff]
    %v608 = vld [vmem:[%s7 + $0x618] sm:$0xff]
    %v609 = vld [vmem:[%s7 + $0x620] sm:$0xff]
    %v610 = vld [vmem:[%s7 + $0x628] sm:$0xff]
    %v611 = vld [vmem:[%s7 + $0x630] sm:$0xff]
    %v612 = vld [vmem:[%s7 + $0x638] sm:$0xff]
    %v613 = vld [vmem:[%s7 + $0x640] sm:$0xff]
    %v614 = vld [vmem:[%s7 + $0x648] sm:$0xff]
    %v615 = vld [vmem:[%s7 + $0x650] sm:$0xff]
    %v616 = vld [vmem:[%s7 + $0x658] sm:$0xff]
    %v617 = vld [vmem:[%s7 + $0x660] sm:$0xff]
    %v618 = vld [vmem:[%s7 + $0x668] sm:$0xff]
    %v619 = vld [vmem:[%s7 + $0x670] sm:$0xff]
    %v620 = vld [vmem:[%s7 + $0x678] sm:$0xff]
    %v621 = vld [vmem:[%s7 + $0x680] sm:$0xff]
    %v622 = vld [vmem:[%s7 + $0x688] sm:$0xff]
    %v623 = vld [vmem:[%s7 + $0x690] sm:$0xff]
    %v624 = vld [vmem:[%s7 + $0x698] sm:$0xff]
    %v625 = vld [vmem:[%s7 + $0x6a0] sm:$0xff]
    %v626 = vld [vmem:[%s7 + $0x6a8] sm:$0xff]
    %v627 = vld [vmem:[%s7 + $0x6b0] sm:$0xff]
    %v628 = vld [vmem:[%s7 + $0x6b8] sm:$0xff]
    %v629 = vld [vmem:[%s7 + $0x6c0] sm:$0xff]
    %v630 = vld [vmem:[%s7 + $0x6c8] sm:$0xff]
    %v631 = vld [vmem:[%s7 + $0x6d0] sm:$0xff]
    %v632 = vld [vmem:[%s7 + $0x6d8] sm:$0xff]
    %v633 = vld [vmem:[%s7 + $0x6e0] sm:$0xff]
    %v634 = vld [vmem:[%s7 + $0x6e8] sm:$0xff]
    %v635 = vld [vmem:[%s7 + $0x6f0] sm:$0xff]
    %v636 = vld [vmem:[%s7 + $0x6f8] sm:$0xff]
    %v637 = vld [vmem:[%s7 + $0x700] sm:$0xff]
    %v638 = vld [vmem:[%s7 + $0x708] sm:$0xff]
    %v639 = vld [vmem:[%s7 + $0x710] sm:$0xff]
    %v640 = vld [vmem:[%s7 + $0x718] sm:$0xff]
    %v641 = vld [vmem:[%s7 + $0x720] sm:$0xff]
    %v642 = vld [vmem:[%s7 + $0x728] sm:$0xff]
    %v643 = vld [vmem:[%s7 + $0x730] sm:$0xff]
    %v644 = vld [vmem:[%s7 + $0x738] sm:$0xff]
    %v645 = vld [vmem:[%s7 + $0x740] sm:$0xff]
    %v646 = vld [vmem:[%s7 + $0x748] sm:$0xff]
    %v647 = vld [vmem:[%s7 + $0x750] sm:$0xff]
    %v648 = vld [vmem:[%s7 + $0x758] sm:$0xff]
    %v649 = vld [vmem:[%s7 + $0x760] sm:$0xff]
    %v650 = vld [vmem:[%s7 + $0x768] sm:$0xff]
    %v651 = vld [vmem:[%s7 + $0x770] sm:$0xff]
    %v652 = vld [vmem:[%s7 + $0x778] sm:$0xff]
    %v653 = vld [vmem:[%s7 + $0x780] sm:$0xff]
    %v654 = vld [vmem:[%s7 + $0x788] sm:$0xff]
    %v655 = vld [vmem:[%s7 + $0x790] sm:$0xff]
    %v656 = vld [vmem:[%s7 + $0x798] sm:$0xff]
    %v657 = vld [vmem:[%s7 + $0x7a0] sm:$0xff]
    %v658 = vld [vmem:[%s7 + $0x7a8] sm:$0xff]
    %v659 = vld [vmem:[%s7 + $0x7b0] sm:$0xff]
    %v660 = vld [vmem:[%s7 + $0x7b8] sm:$0xff]
    %v661 = vld [vmem:[%s7 + $0x7c0] sm:$0xff]
    %v662 = vld [vmem:[%s7 + $0x7c8] sm:$0xff]
    %v663 = vld [vmem:[%s7 + $0x7d0] sm:$0xff]
    %v664 = vld [vmem:[%s7 + $0x7d8] sm:$0xff]
    %v665 = vld [vmem:[%s7 + $0x7e0] sm:$0xff]
    %v666 = vld [vmem:[%s7 + $0x7e8] sm:$0xff]
    %v667 = vld [vmem:[%s7 + $0x7f0] sm:$0xff]
    %v668 = vld [vmem:[%s7 + $0x7f8] sm:$0xff]
    %v669 = vpack.c.bf16 %v409, %v409
    %v670 = vpack.c.bf16 %v410, %v410
    %v671 = vpack.c.bf16 %v411, %v411
    %v672 = vpack.c.bf16 %v412, %v412
    %v673 = vpack.c.bf16 %v417, %v413
    %v674 = vpack.c.bf16 %v418, %v414
    %v675 = vpack.c.bf16 %v419, %v415
    %v676 = vpack.c.bf16 %v420, %v416
    %v677 = vpack.c.bf16 %v425, %v421
    %v678 = vpack.c.bf16 %v426, %v422
    %v679 = vpack.c.bf16 %v427, %v423
    %v680 = vpack.c.bf16 %v428, %v424
    %v681 = vpack.c.bf16 %v433, %v429
    %v682 = vpack.c.bf16 %v434, %v430
    %v683 = vpack.c.bf16 %v435, %v431
    %v684 = vpack.c.bf16 %v436, %v432
    %v685 = vpack.c.bf16 %v441, %v437
    %v686 = vpack.c.bf16 %v442, %v438
    %v687 = vpack.c.bf16 %v443, %v439
    %v688 = vpack.c.bf16 %v444, %v440
    %v689 = vpack.c.bf16 %v449, %v445
    %v690 = vpack.c.bf16 %v450, %v446
    %v691 = vpack.c.bf16 %v451, %v447
    %v692 = vpack.c.bf16 %v452, %v448
    %v693 = vpack.c.bf16 %v457, %v453
    %v694 = vpack.c.bf16 %v458, %v454
    %v695 = vpack.c.bf16 %v459, %v455
    %v696 = vpack.c.bf16 %v460, %v456
    %v697 = vpack.c.bf16 %v465, %v461
    %v698 = vpack.c.bf16 %v466, %v462
    %v699 = vpack.c.bf16 %v467, %v463
    %v700 = vpack.c.bf16 %v468, %v464
    %v701 = vpack.c.bf16 %v473, %v469
    %v702 = vpack.c.bf16 %v474, %v470
    %v703 = vpack.c.bf16 %v475, %v471
    %v704 = vpack.c.bf16 %v476, %v472
    %v705 = vpack.c.bf16 %v481, %v477
    %v706 = vpack.c.bf16 %v482, %v478
    %v707 = vpack.c.bf16 %v483, %v479
    %v708 = vpack.c.bf16 %v484, %v480
    %v709 = vpack.c.bf16 %v489, %v485
    %v710 = vpack.c.bf16 %v490, %v486
    %v711 = vpack.c.bf16 %v491, %v487
    %v712 = vpack.c.bf16 %v492, %v488
    %v713 = vpack.c.bf16 %v497, %v493
    %v714 = vpack.c.bf16 %v498, %v494
    %v715 = vpack.c.bf16 %v499, %v495
    %v716 = vpack.c.bf16 %v500, %v496
    %v717 = vpack.c.bf16 %v505, %v501
    %v718 = vpack.c.bf16 %v506, %v502
    %v719 = vpack.c.bf16 %v507, %v503
    %v720 = vpack.c.bf16 %v508, %v504
    %v721 = vpack.c.bf16 %v513, %v509
    %v722 = vpack.c.bf16 %v514, %v510
    %v723 = vpack.c.bf16 %v515, %v511
    %v724 = vpack.c.bf16 %v516, %v512
    %v725 = vpack.c.bf16 %v521, %v517
    %v726 = vpack.c.bf16 %v522, %v518
    %v727 = vpack.c.bf16 %v523, %v519
    %v728 = vpack.c.bf16 %v524, %v520
    %v729 = vpack.c.bf16 %v529, %v525
    %v730 = vpack.c.bf16 %v530, %v526
    %v731 = vpack.c.bf16 %v531, %v527
    %v732 = vpack.c.bf16 %v532, %v528
    %v733 = vpack.c.bf16 %v537, %v533
    %v734 = vpack.c.bf16 %v538, %v534
    %v735 = vpack.c.bf16 %v539, %v535
    %v736 = vpack.c.bf16 %v540, %v536
    %v737 = vpack.c.bf16 %v545, %v541
    %v738 = vpack.c.bf16 %v546, %v542
    %v739 = vpack.c.bf16 %v547, %v543
    %v740 = vpack.c.bf16 %v548, %v544
    %v741 = vpack.c.bf16 %v553, %v549
    %v742 = vpack.c.bf16 %v554, %v550
    %v743 = vpack.c.bf16 %v555, %v551
    %v744 = vpack.c.bf16 %v556, %v552
    %v745 = vpack.c.bf16 %v561, %v557
    %v746 = vpack.c.bf16 %v562, %v558
    %v747 = vpack.c.bf16 %v563, %v559
    %v748 = vpack.c.bf16 %v564, %v560
    %v749 = vpack.c.bf16 %v569, %v565
    %v750 = vpack.c.bf16 %v570, %v566
    %v751 = vpack.c.bf16 %v571, %v567
    %v752 = vpack.c.bf16 %v572, %v568
    %v753 = vpack.c.bf16 %v577, %v573
    %v754 = vpack.c.bf16 %v578, %v574
    %v755 = vpack.c.bf16 %v579, %v575
    %v756 = vpack.c.bf16 %v580, %v576
    %v757 = vpack.c.bf16 %v585, %v581
    %v758 = vpack.c.bf16 %v586, %v582
    %v759 = vpack.c.bf16 %v587, %v583
    %v760 = vpack.c.bf16 %v588, %v584
    %v761 = vpack.c.bf16 %v593, %v589
    %v762 = vpack.c.bf16 %v594, %v590
    %v763 = vpack.c.bf16 %v595, %v591
    %v764 = vpack.c.bf16 %v596, %v592
    %v765 = vpack.c.bf16 %v601, %v597
    %v766 = vpack.c.bf16 %v602, %v598
    %v767 = vpack.c.bf16 %v603, %v599
    %v768 = vpack.c.bf16 %v604, %v600
    %v769 = vpack.c.bf16 %v609, %v605
    %v770 = vpack.c.bf16 %v610, %v606
    %v771 = vpack.c.bf16 %v611, %v607
    %v772 = vpack.c.bf16 %v612, %v608
    %v773 = vpack.c.bf16 %v617, %v613
    %v774 = vpack.c.bf16 %v618, %v614
    %v775 = vpack.c.bf16 %v619, %v615
    %v776 = vpack.c.bf16 %v620, %v616
    %v777 = vpack.c.bf16 %v625, %v621
    %v778 = vpack.c.bf16 %v626, %v622
    %v779 = vpack.c.bf16 %v627, %v623
    %v780 = vpack.c.bf16 %v628, %v624
    %v781 = vpack.c.bf16 %v633, %v629
    %v782 = vpack.c.bf16 %v634, %v630
    %v783 = vpack.c.bf16 %v635, %v631
    %v784 = vpack.c.bf16 %v636, %v632
    %v785 = vpack.c.bf16 %v641, %v637
    %v786 = vpack.c.bf16 %v642, %v638
    %v787 = vpack.c.bf16 %v643, %v639
    %v788 = vpack.c.bf16 %v644, %v640
    %v789 = vpack.c.bf16 %v649, %v645
    %v790 = vpack.c.bf16 %v650, %v646
    %v791 = vpack.c.bf16 %v651, %v647
    %v792 = vpack.c.bf16 %v652, %v648
    %v793 = vpack.c.bf16 %v657, %v653
    %v794 = vpack.c.bf16 %v658, %v654
    %v795 = vpack.c.bf16 %v659, %v655
    %v796 = vpack.c.bf16 %v660, %v656
    %v797 = vpack.c.bf16 %v665, %v661
    %v798 = vpack.c.bf16 %v666, %v662
    %v799 = vpack.c.bf16 %v667, %v663
    %v800 = vpack.c.bf16 %v668, %v664
    %v801 = vld [vmem:[%s8] sm:$0xf]
    %v803 = vlaneseq
    %v804 = vshrl.u32 %v803, 7
    %v805 = vsub.s32 0, %v804
    %v806 = vrot.slane %v801, %v805
    %v807 = vlaneseq
    %v808 = vshrl.u32 %v807, 7
    %v809 = vsub.s32 1, %v808
    %v810 = vrot.slane %v801, %v809
    %v811 = vlaneseq
    %v812 = vshrl.u32 %v811, 7
    %v813 = vsub.s32 2, %v812
    %v814 = vrot.slane %v801, %v813
    %v815 = vlaneseq
    %v816 = vshrl.u32 %v815, 7
    %v817 = vsub.s32 3, %v816
    %v818 = vrot.slane %v801, %v817
    %823 = vmatprep.subr.bf16.mxu0 %v702
    %824 = vmatpush1.bf16.msra.mxu0 %v701
    %825 = vmatprep.subr.bf16.mxu0 %v698
    %826 = vmatpush1.bf16.msra.mxu0 %v697
    %827 = vmatprep.subr.bf16.mxu0 %v694
    %828 = vmatpush1.bf16.msra.mxu0 %v693
    %829 = vmatprep.subr.bf16.mxu0 %v690
    %830 = vmatpush1.bf16.msra.mxu0 %v689
    %831 = vmatprep.subr.bf16.mxu0 %v686
    %832 = vmatpush1.bf16.msra.mxu0 %v685
    %833 = vmatprep.subr.bf16.mxu0 %v682
    %834 = vmatpush1.bf16.msra.mxu0 %v681
    %835 = vmatprep.subr.bf16.mxu0 %v678
    %836 = vmatpush1.bf16.msra.mxu0 %v677
    %837 = vmatprep.subr.bf16.mxu0 %v674
    %838 = vmatpush1.bf16.msra.mxu0 %v673
    %839 = vmatprep.subr.bf16.mxu0 %v734
    %840 = vmatpush2.bf16.msra.mxu0 %v733
    %841 = vmatprep.subr.bf16.mxu0 %v730
    %842 = vmatpush2.bf16.msra.mxu0 %v729
    %843 = vmatprep.subr.bf16.mxu0 %v726
    %844 = vmatpush2.bf16.msra.mxu0 %v725
    %845 = vmatprep.subr.bf16.mxu0 %v722
    %846 = vmatpush2.bf16.msra.mxu0 %v721
    %847 = vmatprep.subr.bf16.mxu0 %v718
    %848 = vmatpush2.bf16.msra.mxu0 %v717
    %849 = vmatprep.subr.bf16.mxu0 %v714
    %850 = vmatpush2.bf16.msra.mxu0 %v713
    %851 = vmatprep.subr.bf16.mxu0 %v710
    %852 = vmatpush2.bf16.msra.mxu0 %v709
    %853 = vmatprep.subr.bf16.mxu0 %v706
    %854 = vmatpush2.bf16.msra.mxu0 %v705
    %855 = vmatprep.mubr.bf16.mxu0 %v670
    %856 = vmatmul.mubr.bf16.gmra.mxu0 %v669
    %v857 = vpop.f32.mrf.mxu0
    %v858 = vadd.f32 %v806, %v857
    %v859 = vpop.f32.mrf.mxu0
    %v860 = vadd.f32 %v810, %v859
    %v861 = vpop.f32.mrf.mxu0
    %v862 = vpop.f32.mrf.mxu0
    %863 = vdwg.mxu0
    %864 = vmatprep.subr.bf16.mxu0 %v766
    %865 = vmatpush1.bf16.msra.mxu0 %v765
    %866 = vmatprep.subr.bf16.mxu0 %v762
    %867 = vmatpush1.bf16.msra.mxu0 %v761
    %868 = vmatprep.subr.bf16.mxu0 %v758
    %869 = vmatpush1.bf16.msra.mxu0 %v757
    %870 = vmatprep.subr.bf16.mxu0 %v754
    %871 = vmatpush1.bf16.msra.mxu0 %v753
    %872 = vmatprep.subr.bf16.mxu0 %v750
    %873 = vmatpush1.bf16.msra.mxu0 %v749
    %874 = vmatprep.subr.bf16.mxu0 %v746
    %875 = vmatpush1.bf16.msra.mxu0 %v745
    %876 = vmatprep.subr.bf16.mxu0 %v742
    %877 = vmatpush1.bf16.msra.mxu0 %v741
    %878 = vmatprep.subr.bf16.mxu0 %v738
    %879 = vmatpush1.bf16.msra.mxu0 %v737
    %880 = vmatprep.subr.bf16.mxu0 %v798
    %881 = vmatpush2.bf16.msra.mxu0 %v797
    %882 = vmatprep.subr.bf16.mxu0 %v794
    %883 = vmatpush2.bf16.msra.mxu0 %v793
    %884 = vmatprep.subr.bf16.mxu0 %v790
    %885 = vmatpush2.bf16.msra.mxu0 %v789
    %886 = vmatprep.subr.bf16.mxu0 %v786
    %887 = vmatpush2.bf16.msra.mxu0 %v785
    %888 = vmatprep.subr.bf16.mxu0 %v782
    %889 = vmatpush2.bf16.msra.mxu0 %v781
    %890 = vmatprep.subr.bf16.mxu0 %v778
    %891 = vmatpush2.bf16.msra.mxu0 %v777
    %892 = vmatprep.subr.bf16.mxu0 %v774
    %893 = vmatpush2.bf16.msra.mxu0 %v773
    %894 = vmatprep.subr.bf16.mxu0 %v770
    %895 = vmatpush2.bf16.msra.mxu0 %v769
    %896 = vmatprep.mubr.bf16.mxu0 %v672
    %897 = vmatmul.mubr.bf16.gmra.mxu0 %v671
    %v898 = vpop.f32.mrf.mxu0
    %v899 = vadd.f32 %v858, %v898
    %v900 = vpop.f32.mrf.mxu0
    %v901 = vadd.f32 %v860, %v900
    %v902 = vpop.f32.mrf.mxu0
    %v903 = vpop.f32.mrf.mxu0
    %904 = vdwg.mxu0
    %905 = vmatprep.subr.bf16.mxu0 %v704
    %906 = vmatpush1.bf16.msra.mxu0 %v703
    %907 = vmatprep.subr.bf16.mxu0 %v700
    %908 = vmatpush1.bf16.msra.mxu0 %v699
    %909 = vmatprep.subr.bf16.mxu0 %v696
    %910 = vmatpush1.bf16.msra.mxu0 %v695
    %911 = vmatprep.subr.bf16.mxu0 %v692
    %912 = vmatpush1.bf16.msra.mxu0 %v691
    %913 = vmatprep.subr.bf16.mxu0 %v688
    %914 = vmatpush1.bf16.msra.mxu0 %v687
    %915 = vmatprep.subr.bf16.mxu0 %v684
    %916 = vmatpush1.bf16.msra.mxu0 %v683
    %917 = vmatprep.subr.bf16.mxu0 %v680
    %918 = vmatpush1.bf16.msra.mxu0 %v679
    %919 = vmatprep.subr.bf16.mxu0 %v676
    %920 = vmatpush1.bf16.msra.mxu0 %v675
    %921 = vmatprep.subr.bf16.mxu0 %v736
    %922 = vmatpush2.bf16.msra.mxu0 %v735
    %923 = vmatprep.subr.bf16.mxu0 %v732
    %924 = vmatpush2.bf16.msra.mxu0 %v731
    %925 = vmatprep.subr.bf16.mxu0 %v728
    %926 = vmatpush2.bf16.msra.mxu0 %v727
    %927 = vmatprep.subr.bf16.mxu0 %v724
    %928 = vmatpush2.bf16.msra.mxu0 %v723
    %929 = vmatprep.subr.bf16.mxu0 %v720
    %930 = vmatpush2.bf16.msra.mxu0 %v719
    %931 = vmatprep.subr.bf16.mxu0 %v716
    %932 = vmatpush2.bf16.msra.mxu0 %v715
    %933 = vmatprep.subr.bf16.mxu0 %v712
    %934 = vmatpush2.bf16.msra.mxu0 %v711
    %935 = vmatprep.subr.bf16.mxu0 %v708
    %936 = vmatpush2.bf16.msra.mxu0 %v707
    %937 = vmatprep.mubr.bf16.mxu0 %v670
    %938 = vmatmul.mubr.bf16.gmra.mxu0 %v669
    %v939 = vpop.f32.mrf.mxu0
    %v940 = vadd.f32 %v814, %v939
    %v941 = vpop.f32.mrf.mxu0
    %v942 = vadd.f32 %v818, %v941
    %v943 = vpop.f32.mrf.mxu0
    %v944 = vpop.f32.mrf.mxu0
    %945 = vdwg.mxu0
    %946 = vmatprep.subr.bf16.mxu0 %v768
    %947 = vmatpush1.bf16.msra.mxu0 %v767
    %948 = vmatprep.subr.bf16.mxu0 %v764
    %949 = vmatpush1.bf16.msra.mxu0 %v763
    %950 = vmatprep.subr.bf16.mxu0 %v760
    %951 = vmatpush1.bf16.msra.mxu0 %v759
    %952 = vmatprep.subr.bf16.mxu0 %v756
    %953 = vmatpush1.bf16.msra.mxu0 %v755
    %954 = vmatprep.subr.bf16.mxu0 %v752
    %955 = vmatpush1.bf16.msra.mxu0 %v751
    %956 = vmatprep.subr.bf16.mxu0 %v748
    %957 = vmatpush1.bf16.msra.mxu0 %v747
    %958 = vmatprep.subr.bf16.mxu0 %v744
    %959 = vmatpush1.bf16.msra.mxu0 %v743
    %960 = vmatprep.subr.bf16.mxu0 %v740
    %961 = vmatpush1.bf16.msra.mxu0 %v739
    %962 = vmatprep.subr.bf16.mxu0 %v800
    %963 = vmatpush2.bf16.msra.mxu0 %v799
    %964 = vmatprep.subr.bf16.mxu0 %v796
    %965 = vmatpush2.bf16.msra.mxu0 %v795
    %966 = vmatprep.subr.bf16.mxu0 %v792
    %967 = vmatpush2.bf16.msra.mxu0 %v791
    %968 = vmatprep.subr.bf16.mxu0 %v788
    %969 = vmatpush2.bf16.msra.mxu0 %v787
    %970 = vmatprep.subr.bf16.mxu0 %v784
    %971 = vmatpush2.bf16.msra.mxu0 %v783
    %972 = vmatprep.subr.bf16.mxu0 %v780
    %973 = vmatpush2.bf16.msra.mxu0 %v779
    %974 = vmatprep.subr.bf16.mxu0 %v776
    %975 = vmatpush2.bf16.msra.mxu0 %v775
    %976 = vmatprep.subr.bf16.mxu0 %v772
    %977 = vmatpush2.bf16.msra.mxu0 %v771
    %978 = vmatprep.mubr.bf16.mxu0 %v672
    %979 = vmatmul.mubr.bf16.gmra.mxu0 %v671
    %v980 = vpop.f32.mrf.mxu0
    %v981 = vadd.f32 %v940, %v980
    %v982 = vpop.f32.mrf.mxu0
    %v983 = vadd.f32 %v942, %v982
    %v984 = vpop.f32.mrf.mxu0
    %v985 = vpop.f32.mrf.mxu0
    %986 = vdwg.mxu0
    %v987 = vmax.f32 %v899, 0.0
    %v988 = vmax.f32 %v901, 0.0
    %v989 = vmax.f32 %v981, 0.0
    %v990 = vmax.f32 %v983, 0.0
    %v991 = vld [vmem:[%s9] sm:$0xf]
    %v992 = vld [vmem:[%s10] sm:$0xf]
    %vm993 = vcmask 1041408
    %v994 = vsel %vm993, %v987, 0.0
    %v995 = vrot.slane %v994, 4
    %v996 = vadd.f32 %v994, %v995
    %v997 = vrot.slane %v996, 2
    %v998 = vadd.f32 %v996, %v997
    %v999 = vrot.slane %v998, 1
    %v1000 = vadd.f32 %v998, %v999
    %v1001 = vsel %vm993, %v988, 0.0
    %v1002 = vrot.slane %v1001, 4
    %v1003 = vadd.f32 %v1001, %v1002
    %v1004 = vrot.slane %v1003, 2
    %v1005 = vadd.f32 %v1003, %v1004
    %v1006 = vrot.slane %v1005, 1
    %v1007 = vadd.f32 %v1005, %v1006
    %v1008 = vsel %vm993, %v989, 0.0
    %v1009 = vrot.slane %v1008, 4
    %v1010 = vadd.f32 %v1008, %v1009
    %v1011 = vrot.slane %v1010, 2
    %v1012 = vadd.f32 %v1010, %v1011
    %v1013 = vrot.slane %v1012, 1
    %v1014 = vadd.f32 %v1012, %v1013
    %v1015 = vsel %vm993, %v990, 0.0
    %v1016 = vrot.slane %v1015, 4
    %v1017 = vadd.f32 %v1015, %v1016
    %v1018 = vrot.slane %v1017, 2
    %v1019 = vadd.f32 %v1017, %v1018
    %v1020 = vrot.slane %v1019, 1
    %v1021 = vadd.f32 %v1019, %v1020
    %v1022 = vrcp.pop 2.0
    %v1023 = vmul.f32 %v1000, %v1022
    %v1024 = vmul.f32 %v1007, %v1022
    %v1025 = vmul.f32 %v1014, %v1022
    %v1026 = vmul.f32 %v1021, %v1022
    %v1027 = vsub.f32 %v987, %v1023
    %v1028 = vsub.f32 %v988, %v1024
    %v1029 = vsub.f32 %v989, %v1025
    %v1030 = vsub.f32 %v990, %v1026
    %v1031 = vmul.f32 %v1027, %v1027
    %v1032 = vmul.f32 %v1028, %v1028
    %v1033 = vmul.f32 %v1029, %v1029
    %v1034 = vmul.f32 %v1030, %v1030
    %v1035 = vsel %vm993, %v1031, 0.0
    %v1036 = vrot.slane %v1035, 4
    %v1037 = vadd.f32 %v1035, %v1036
    %v1038 = vrot.slane %v1037, 2
    %v1039 = vadd.f32 %v1037, %v1038
    %v1040 = vrot.slane %v1039, 1
    %v1041 = vadd.f32 %v1039, %v1040
    %v1042 = vsel %vm993, %v1032, 0.0
    %v1043 = vrot.slane %v1042, 4
    %v1044 = vadd.f32 %v1042, %v1043
    %v1045 = vrot.slane %v1044, 2
    %v1046 = vadd.f32 %v1044, %v1045
    %v1047 = vrot.slane %v1046, 1
    %v1048 = vadd.f32 %v1046, %v1047
    %v1049 = vsel %vm993, %v1033, 0.0
    %v1050 = vrot.slane %v1049, 4
    %v1051 = vadd.f32 %v1049, %v1050
    %v1052 = vrot.slane %v1051, 2
    %v1053 = vadd.f32 %v1051, %v1052
    %v1054 = vrot.slane %v1053, 1
    %v1055 = vadd.f32 %v1053, %v1054
    %v1056 = vsel %vm993, %v1034, 0.0
    %v1057 = vrot.slane %v1056, 4
    %v1058 = vadd.f32 %v1056, %v1057
    %v1059 = vrot.slane %v1058, 2
    %v1060 = vadd.f32 %v1058, %v1059
    %v1061 = vrot.slane %v1060, 1
    %v1062 = vadd.f32 %v1060, %v1061
    %v1063 = vmul.f32 %v1041, %v1022
    %v1064 = vmul.f32 %v1048, %v1022
    %v1065 = vmul.f32 %v1055, %v1022
    %v1066 = vmul.f32 %v1062, %v1022
    %v1067 = vadd.f32 %v1063, 1e-05
    %v1068 = vadd.f32 %v1064, 1e-05
    %v1069 = vadd.f32 %v1065, 1e-05
    %v1070 = vadd.f32 %v1066, 1e-05
    %v1071 = vrsqrt.pop %v1067
    %v1072 = vrsqrt.pop %v1068
    %v1073 = vrsqrt.pop %v1069
    %v1074 = vrsqrt.pop %v1070
    %v1075 = vmul.f32 %v1027, %v1071
    %v1076 = vmul.f32 %v1028, %v1072
    %v1077 = vmul.f32 %v1029, %v1073
    %v1078 = vmul.f32 %v1030, %v1074
    %v1080 = vlaneseq
    %v1081 = vshrl.u32 %v1080, 7
    %v1082 = vsub.s32 0, %v1081
    %v1083 = vrot.slane %v991, %v1082
    %v1084 = vlaneseq
    %v1085 = vshrl.u32 %v1084, 7
    %v1086 = vsub.s32 1, %v1085
    %v1087 = vrot.slane %v991, %v1086
    %v1088 = vlaneseq
    %v1089 = vshrl.u32 %v1088, 7
    %v1090 = vsub.s32 2, %v1089
    %v1091 = vrot.slane %v991, %v1090
    %v1092 = vlaneseq
    %v1093 = vshrl.u32 %v1092, 7
    %v1094 = vsub.s32 3, %v1093
    %v1095 = vrot.slane %v991, %v1094
    %v1100 = vmul.f32 %v1075, %v1083
    %v1101 = vmul.f32 %v1076, %v1087
    %v1102 = vmul.f32 %v1077, %v1091
    %v1103 = vmul.f32 %v1078, %v1095
    %v1105 = vlaneseq
    %v1106 = vshrl.u32 %v1105, 7
    %v1107 = vsub.s32 0, %v1106
    %v1108 = vrot.slane %v992, %v1107
    %v1109 = vlaneseq
    %v1110 = vshrl.u32 %v1109, 7
    %v1111 = vsub.s32 1, %v1110
    %v1112 = vrot.slane %v992, %v1111
    %v1113 = vlaneseq
    %v1114 = vshrl.u32 %v1113, 7
    %v1115 = vsub.s32 2, %v1114
    %v1116 = vrot.slane %v992, %v1115
    %v1117 = vlaneseq
    %v1118 = vshrl.u32 %v1117, 7
    %v1119 = vsub.s32 3, %v1118
    %v1120 = vrot.slane %v992, %v1119
    %v1125 = vadd.f32 %v1100, %v1108
    %v1126 = vadd.f32 %v1101, %v1112
    %v1127 = vadd.f32 %v1102, %v1116
    %v1128 = vadd.f32 %v1103, %v1120
    %s1129 = sadd.f32 %s155, 1.0
    %v1130 = vstv %s1129
    %v1131 = vmul.f32 %v1130, %v1125
    %v1132 = vmul.f32 %v1130, %v1126
    %v1133 = vmul.f32 %v1130, %v1127
    %v1134 = vmul.f32 %v1130, %v1128
    %v1135 = vpack.c.bf16 %v1125, %v1125
    %v1136 = vpack.c.bf16 %v1126, %v1126
    %v1137 = vpack.c.bf16 %v1127, %v1127
    %v1138 = vpack.c.bf16 %v1128, %v1128
    %v1140 = vsel %vm109, %v1135, 0
    %v1143 = vsel %vm109, %v1136, 0
    %v1146 = vsel %vm109, %v1137, 0
    %v1149 = vsel %vm109, %v1138, 0
    %1151 = vmatprep.subr.bf16.mxu0 0
    %1152 = vmatpush1.bf16.msra.mxu0 0
    %1153 = vmatprep.subr.bf16.mxu0 0
    %1154 = vmatpush1.bf16.msra.mxu0 0
    %1155 = vmatprep.subr.bf16.mxu0 0
    %1156 = vmatpush1.bf16.msra.mxu0 0
    %1157 = vmatprep.subr.bf16.mxu0 0
    %1158 = vmatpush1.bf16.msra.mxu0 0
    %1159 = vmatprep.subr.bf16.mxu0 0
    %1160 = vmatpush1.bf16.msra.mxu0 0
    %1161 = vmatprep.subr.bf16.mxu0 0
    %1162 = vmatpush1.bf16.msra.mxu0 0
    %1163 = vmatprep.subr.bf16.mxu0 0
    %1164 = vmatpush1.bf16.msra.mxu0 0
    %1165 = vmatprep.subr.bf16.mxu0 %v1143
    %1166 = vmatpush1.bf16.msra.mxu0 %v1140
    %1167 = vmatprep.subr.bf16.mxu0 0
    %1168 = vmatpush2.bf16.msra.mxu0 0
    %1169 = vmatprep.subr.bf16.mxu0 0
    %1170 = vmatpush2.bf16.msra.mxu0 0
    %1171 = vmatprep.subr.bf16.mxu0 0
    %1172 = vmatpush2.bf16.msra.mxu0 0
    %1173 = vmatprep.subr.bf16.mxu0 0
    %1174 = vmatpush2.bf16.msra.mxu0 0
    %1175 = vmatprep.subr.bf16.mxu0 0
    %1176 = vmatpush2.bf16.msra.mxu0 0
    %1177 = vmatprep.subr.bf16.mxu0 0
    %1178 = vmatpush2.bf16.msra.mxu0 0
    %1179 = vmatprep.subr.bf16.mxu0 0
    %1180 = vmatpush2.bf16.msra.mxu0 0
    %1181 = vmatprep.subr.bf16.mxu0 0
    %1182 = vmatpush2.bf16.msra.mxu0 0
    %1183 = vmatprep.mubr.bf16.mxu0 0
    %1184 = vmatmul.mubr.bf16.gmra.mxu0 %v162
    %v1185 = vpop.f32.mrf.mxu0
    %v1186 = vadd.f32 0.0, %v1185
    %v1187 = vpop.f32.mrf.mxu0
    %v1188 = vadd.f32 0.0, %v1187
    %v1189 = vpop.f32.mrf.mxu0
    %v1190 = vpop.f32.mrf.mxu0
    %1191 = vdwg.mxu0
    %1192 = vmatprep.subr.bf16.mxu0 0
    %1193 = vmatpush1.bf16.msra.mxu0 0
    %1194 = vmatprep.subr.bf16.mxu0 0
    %1195 = vmatpush1.bf16.msra.mxu0 0
    %1196 = vmatprep.subr.bf16.mxu0 0
    %1197 = vmatpush1.bf16.msra.mxu0 0
    %1198 = vmatprep.subr.bf16.mxu0 0
    %1199 = vmatpush1.bf16.msra.mxu0 0
    %1200 = vmatprep.subr.bf16.mxu0 0
    %1201 = vmatpush1.bf16.msra.mxu0 0
    %1202 = vmatprep.subr.bf16.mxu0 0
    %1203 = vmatpush1.bf16.msra.mxu0 0
    %1204 = vmatprep.subr.bf16.mxu0 0
    %1205 = vmatpush1.bf16.msra.mxu0 0
    %1206 = vmatprep.subr.bf16.mxu0 %v1149
    %1207 = vmatpush1.bf16.msra.mxu0 %v1146
    %1208 = vmatprep.subr.bf16.mxu0 0
    %1209 = vmatpush2.bf16.msra.mxu0 0
    %1210 = vmatprep.subr.bf16.mxu0 0
    %1211 = vmatpush2.bf16.msra.mxu0 0
    %1212 = vmatprep.subr.bf16.mxu0 0
    %1213 = vmatpush2.bf16.msra.mxu0 0
    %1214 = vmatprep.subr.bf16.mxu0 0
    %1215 = vmatpush2.bf16.msra.mxu0 0
    %1216 = vmatprep.subr.bf16.mxu0 0
    %1217 = vmatpush2.bf16.msra.mxu0 0
    %1218 = vmatprep.subr.bf16.mxu0 0
    %1219 = vmatpush2.bf16.msra.mxu0 0
    %1220 = vmatprep.subr.bf16.mxu0 0
    %1221 = vmatpush2.bf16.msra.mxu0 0
    %1222 = vmatprep.subr.bf16.mxu0 0
    %1223 = vmatpush2.bf16.msra.mxu0 0
    %1224 = vmatprep.mubr.bf16.mxu0 0
    %1225 = vmatmul.mubr.bf16.gmra.mxu0 %v162
    %v1226 = vpop.f32.mrf.mxu0
    %v1227 = vadd.f32 0.0, %v1226
    %v1228 = vpop.f32.mrf.mxu0
    %v1229 = vadd.f32 0.0, %v1228
    %v1230 = vpop.f32.mrf.mxu0
    %v1231 = vpop.f32.mrf.mxu0
    %1232 = vdwg.mxu0
    %v1233 = vadd.f32 %v1131, %v1186
    %v1234 = vadd.f32 %v1132, %v1188
    %v1235 = vadd.f32 %v1133, %v1227
    %v1236 = vadd.f32 %v1134, %v1229
    %v1237 = vld [vmem:[%s11] sm:$0xff]
    %v1238 = vld [vmem:[%s11 + $0x8] sm:$0xff]
    %v1239 = vld [vmem:[%s11 + $0x10] sm:$0xff]
    %v1240 = vld [vmem:[%s11 + $0x18] sm:$0xff]
    %v1241 = vld [vmem:[%s11 + $0x20] sm:$0xff]
    %v1242 = vld [vmem:[%s11 + $0x28] sm:$0xff]
    %v1243 = vld [vmem:[%s11 + $0x30] sm:$0xff]
    %v1244 = vld [vmem:[%s11 + $0x38] sm:$0xff]
    %v1245 = vld [vmem:[%s11 + $0x40] sm:$0xff]
    %v1246 = vld [vmem:[%s11 + $0x48] sm:$0xff]
    %v1247 = vld [vmem:[%s11 + $0x50] sm:$0xff]
    %v1248 = vld [vmem:[%s11 + $0x58] sm:$0xff]
    %v1249 = vld [vmem:[%s11 + $0x60] sm:$0xff]
    %v1250 = vld [vmem:[%s11 + $0x68] sm:$0xff]
    %v1251 = vld [vmem:[%s11 + $0x70] sm:$0xff]
    %v1252 = vld [vmem:[%s11 + $0x78] sm:$0xff]
    %v1253 = vld [vmem:[%s11 + $0x80] sm:$0xff]
    %v1254 = vld [vmem:[%s11 + $0x88] sm:$0xff]
    %v1255 = vld [vmem:[%s11 + $0x90] sm:$0xff]
    %v1256 = vld [vmem:[%s11 + $0x98] sm:$0xff]
    %v1257 = vld [vmem:[%s11 + $0xa0] sm:$0xff]
    %v1258 = vld [vmem:[%s11 + $0xa8] sm:$0xff]
    %v1259 = vld [vmem:[%s11 + $0xb0] sm:$0xff]
    %v1260 = vld [vmem:[%s11 + $0xb8] sm:$0xff]
    %v1261 = vld [vmem:[%s11 + $0xc0] sm:$0xff]
    %v1262 = vld [vmem:[%s11 + $0xc8] sm:$0xff]
    %v1263 = vld [vmem:[%s11 + $0xd0] sm:$0xff]
    %v1264 = vld [vmem:[%s11 + $0xd8] sm:$0xff]
    %v1265 = vld [vmem:[%s11 + $0xe0] sm:$0xff]
    %v1266 = vld [vmem:[%s11 + $0xe8] sm:$0xff]
    %v1267 = vld [vmem:[%s11 + $0xf0] sm:$0xff]
    %v1268 = vld [vmem:[%s11 + $0xf8] sm:$0xff]
    %v1269 = vld [vmem:[%s11 + $0x100] sm:$0xff]
    %v1270 = vld [vmem:[%s11 + $0x108] sm:$0xff]
    %v1271 = vld [vmem:[%s11 + $0x110] sm:$0xff]
    %v1272 = vld [vmem:[%s11 + $0x118] sm:$0xff]
    %v1273 = vld [vmem:[%s11 + $0x120] sm:$0xff]
    %v1274 = vld [vmem:[%s11 + $0x128] sm:$0xff]
    %v1275 = vld [vmem:[%s11 + $0x130] sm:$0xff]
    %v1276 = vld [vmem:[%s11 + $0x138] sm:$0xff]
    %v1277 = vld [vmem:[%s11 + $0x140] sm:$0xff]
    %v1278 = vld [vmem:[%s11 + $0x148] sm:$0xff]
    %v1279 = vld [vmem:[%s11 + $0x150] sm:$0xff]
    %v1280 = vld [vmem:[%s11 + $0x158] sm:$0xff]
    %v1281 = vld [vmem:[%s11 + $0x160] sm:$0xff]
    %v1282 = vld [vmem:[%s11 + $0x168] sm:$0xff]
    %v1283 = vld [vmem:[%s11 + $0x170] sm:$0xff]
    %v1284 = vld [vmem:[%s11 + $0x178] sm:$0xff]
    %v1285 = vld [vmem:[%s11 + $0x180] sm:$0xff]
    %v1286 = vld [vmem:[%s11 + $0x188] sm:$0xff]
    %v1287 = vld [vmem:[%s11 + $0x190] sm:$0xff]
    %v1288 = vld [vmem:[%s11 + $0x198] sm:$0xff]
    %v1289 = vld [vmem:[%s11 + $0x1a0] sm:$0xff]
    %v1290 = vld [vmem:[%s11 + $0x1a8] sm:$0xff]
    %v1291 = vld [vmem:[%s11 + $0x1b0] sm:$0xff]
    %v1292 = vld [vmem:[%s11 + $0x1b8] sm:$0xff]
    %v1293 = vld [vmem:[%s11 + $0x1c0] sm:$0xff]
    %v1294 = vld [vmem:[%s11 + $0x1c8] sm:$0xff]
    %v1295 = vld [vmem:[%s11 + $0x1d0] sm:$0xff]
    %v1296 = vld [vmem:[%s11 + $0x1d8] sm:$0xff]
    %v1297 = vld [vmem:[%s11 + $0x1e0] sm:$0xff]
    %v1298 = vld [vmem:[%s11 + $0x1e8] sm:$0xff]
    %v1299 = vld [vmem:[%s11 + $0x1f0] sm:$0xff]
    %v1300 = vld [vmem:[%s11 + $0x1f8] sm:$0xff]
    %v1301 = vld [vmem:[%s11 + $0x200] sm:$0xff]
    %v1302 = vld [vmem:[%s11 + $0x208] sm:$0xff]
    %v1303 = vld [vmem:[%s11 + $0x210] sm:$0xff]
    %v1304 = vld [vmem:[%s11 + $0x218] sm:$0xff]
    %v1305 = vld [vmem:[%s11 + $0x220] sm:$0xff]
    %v1306 = vld [vmem:[%s11 + $0x228] sm:$0xff]
    %v1307 = vld [vmem:[%s11 + $0x230] sm:$0xff]
    %v1308 = vld [vmem:[%s11 + $0x238] sm:$0xff]
    %v1309 = vld [vmem:[%s11 + $0x240] sm:$0xff]
    %v1310 = vld [vmem:[%s11 + $0x248] sm:$0xff]
    %v1311 = vld [vmem:[%s11 + $0x250] sm:$0xff]
    %v1312 = vld [vmem:[%s11 + $0x258] sm:$0xff]
    %v1313 = vld [vmem:[%s11 + $0x260] sm:$0xff]
    %v1314 = vld [vmem:[%s11 + $0x268] sm:$0xff]
    %v1315 = vld [vmem:[%s11 + $0x270] sm:$0xff]
    %v1316 = vld [vmem:[%s11 + $0x278] sm:$0xff]
    %v1317 = vld [vmem:[%s11 + $0x280] sm:$0xff]
    %v1318 = vld [vmem:[%s11 + $0x288] sm:$0xff]
    %v1319 = vld [vmem:[%s11 + $0x290] sm:$0xff]
    %v1320 = vld [vmem:[%s11 + $0x298] sm:$0xff]
    %v1321 = vld [vmem:[%s11 + $0x2a0] sm:$0xff]
    %v1322 = vld [vmem:[%s11 + $0x2a8] sm:$0xff]
    %v1323 = vld [vmem:[%s11 + $0x2b0] sm:$0xff]
    %v1324 = vld [vmem:[%s11 + $0x2b8] sm:$0xff]
    %v1325 = vld [vmem:[%s11 + $0x2c0] sm:$0xff]
    %v1326 = vld [vmem:[%s11 + $0x2c8] sm:$0xff]
    %v1327 = vld [vmem:[%s11 + $0x2d0] sm:$0xff]
    %v1328 = vld [vmem:[%s11 + $0x2d8] sm:$0xff]
    %v1329 = vld [vmem:[%s11 + $0x2e0] sm:$0xff]
    %v1330 = vld [vmem:[%s11 + $0x2e8] sm:$0xff]
    %v1331 = vld [vmem:[%s11 + $0x2f0] sm:$0xff]
    %v1332 = vld [vmem:[%s11 + $0x2f8] sm:$0xff]
    %v1333 = vld [vmem:[%s11 + $0x300] sm:$0xff]
    %v1334 = vld [vmem:[%s11 + $0x308] sm:$0xff]
    %v1335 = vld [vmem:[%s11 + $0x310] sm:$0xff]
    %v1336 = vld [vmem:[%s11 + $0x318] sm:$0xff]
    %v1337 = vld [vmem:[%s11 + $0x320] sm:$0xff]
    %v1338 = vld [vmem:[%s11 + $0x328] sm:$0xff]
    %v1339 = vld [vmem:[%s11 + $0x330] sm:$0xff]
    %v1340 = vld [vmem:[%s11 + $0x338] sm:$0xff]
    %v1341 = vld [vmem:[%s11 + $0x340] sm:$0xff]
    %v1342 = vld [vmem:[%s11 + $0x348] sm:$0xff]
    %v1343 = vld [vmem:[%s11 + $0x350] sm:$0xff]
    %v1344 = vld [vmem:[%s11 + $0x358] sm:$0xff]
    %v1345 = vld [vmem:[%s11 + $0x360] sm:$0xff]
    %v1346 = vld [vmem:[%s11 + $0x368] sm:$0xff]
    %v1347 = vld [vmem:[%s11 + $0x370] sm:$0xff]
    %v1348 = vld [vmem:[%s11 + $0x378] sm:$0xff]
    %v1349 = vld [vmem:[%s11 + $0x380] sm:$0xff]
    %v1350 = vld [vmem:[%s11 + $0x388] sm:$0xff]
    %v1351 = vld [vmem:[%s11 + $0x390] sm:$0xff]
    %v1352 = vld [vmem:[%s11 + $0x398] sm:$0xff]
    %v1353 = vld [vmem:[%s11 + $0x3a0] sm:$0xff]
    %v1354 = vld [vmem:[%s11 + $0x3a8] sm:$0xff]
    %v1355 = vld [vmem:[%s11 + $0x3b0] sm:$0xff]
    %v1356 = vld [vmem:[%s11 + $0x3b8] sm:$0xff]
    %v1357 = vld [vmem:[%s11 + $0x3c0] sm:$0xff]
    %v1358 = vld [vmem:[%s11 + $0x3c8] sm:$0xff]
    %v1359 = vld [vmem:[%s11 + $0x3d0] sm:$0xff]
    %v1360 = vld [vmem:[%s11 + $0x3d8] sm:$0xff]
    %v1361 = vld [vmem:[%s11 + $0x3e0] sm:$0xff]
    %v1362 = vld [vmem:[%s11 + $0x3e8] sm:$0xff]
    %v1363 = vld [vmem:[%s11 + $0x3f0] sm:$0xff]
    %v1364 = vld [vmem:[%s11 + $0x3f8] sm:$0xff]
    %v1365 = vld [vmem:[%s11 + $0x400] sm:$0xff]
    %v1366 = vld [vmem:[%s11 + $0x408] sm:$0xff]
    %v1367 = vld [vmem:[%s11 + $0x410] sm:$0xff]
    %v1368 = vld [vmem:[%s11 + $0x418] sm:$0xff]
    %v1369 = vld [vmem:[%s11 + $0x420] sm:$0xff]
    %v1370 = vld [vmem:[%s11 + $0x428] sm:$0xff]
    %v1371 = vld [vmem:[%s11 + $0x430] sm:$0xff]
    %v1372 = vld [vmem:[%s11 + $0x438] sm:$0xff]
    %v1373 = vld [vmem:[%s11 + $0x440] sm:$0xff]
    %v1374 = vld [vmem:[%s11 + $0x448] sm:$0xff]
    %v1375 = vld [vmem:[%s11 + $0x450] sm:$0xff]
    %v1376 = vld [vmem:[%s11 + $0x458] sm:$0xff]
    %v1377 = vld [vmem:[%s11 + $0x460] sm:$0xff]
    %v1378 = vld [vmem:[%s11 + $0x468] sm:$0xff]
    %v1379 = vld [vmem:[%s11 + $0x470] sm:$0xff]
    %v1380 = vld [vmem:[%s11 + $0x478] sm:$0xff]
    %v1381 = vld [vmem:[%s11 + $0x480] sm:$0xff]
    %v1382 = vld [vmem:[%s11 + $0x488] sm:$0xff]
    %v1383 = vld [vmem:[%s11 + $0x490] sm:$0xff]
    %v1384 = vld [vmem:[%s11 + $0x498] sm:$0xff]
    %v1385 = vld [vmem:[%s11 + $0x4a0] sm:$0xff]
    %v1386 = vld [vmem:[%s11 + $0x4a8] sm:$0xff]
    %v1387 = vld [vmem:[%s11 + $0x4b0] sm:$0xff]
    %v1388 = vld [vmem:[%s11 + $0x4b8] sm:$0xff]
    %v1389 = vld [vmem:[%s11 + $0x4c0] sm:$0xff]
    %v1390 = vld [vmem:[%s11 + $0x4c8] sm:$0xff]
    %v1391 = vld [vmem:[%s11 + $0x4d0] sm:$0xff]
    %v1392 = vld [vmem:[%s11 + $0x4d8] sm:$0xff]
    %v1393 = vld [vmem:[%s11 + $0x4e0] sm:$0xff]
    %v1394 = vld [vmem:[%s11 + $0x4e8] sm:$0xff]
    %v1395 = vld [vmem:[%s11 + $0x4f0] sm:$0xff]
    %v1396 = vld [vmem:[%s11 + $0x4f8] sm:$0xff]
    %v1397 = vld [vmem:[%s11 + $0x500] sm:$0xff]
    %v1398 = vld [vmem:[%s11 + $0x508] sm:$0xff]
    %v1399 = vld [vmem:[%s11 + $0x510] sm:$0xff]
    %v1400 = vld [vmem:[%s11 + $0x518] sm:$0xff]
    %v1401 = vld [vmem:[%s11 + $0x520] sm:$0xff]
    %v1402 = vld [vmem:[%s11 + $0x528] sm:$0xff]
    %v1403 = vld [vmem:[%s11 + $0x530] sm:$0xff]
    %v1404 = vld [vmem:[%s11 + $0x538] sm:$0xff]
    %v1405 = vld [vmem:[%s11 + $0x540] sm:$0xff]
    %v1406 = vld [vmem:[%s11 + $0x548] sm:$0xff]
    %v1407 = vld [vmem:[%s11 + $0x550] sm:$0xff]
    %v1408 = vld [vmem:[%s11 + $0x558] sm:$0xff]
    %v1409 = vld [vmem:[%s11 + $0x560] sm:$0xff]
    %v1410 = vld [vmem:[%s11 + $0x568] sm:$0xff]
    %v1411 = vld [vmem:[%s11 + $0x570] sm:$0xff]
    %v1412 = vld [vmem:[%s11 + $0x578] sm:$0xff]
    %v1413 = vld [vmem:[%s11 + $0x580] sm:$0xff]
    %v1414 = vld [vmem:[%s11 + $0x588] sm:$0xff]
    %v1415 = vld [vmem:[%s11 + $0x590] sm:$0xff]
    %v1416 = vld [vmem:[%s11 + $0x598] sm:$0xff]
    %v1417 = vld [vmem:[%s11 + $0x5a0] sm:$0xff]
    %v1418 = vld [vmem:[%s11 + $0x5a8] sm:$0xff]
    %v1419 = vld [vmem:[%s11 + $0x5b0] sm:$0xff]
    %v1420 = vld [vmem:[%s11 + $0x5b8] sm:$0xff]
    %v1421 = vld [vmem:[%s11 + $0x5c0] sm:$0xff]
    %v1422 = vld [vmem:[%s11 + $0x5c8] sm:$0xff]
    %v1423 = vld [vmem:[%s11 + $0x5d0] sm:$0xff]
    %v1424 = vld [vmem:[%s11 + $0x5d8] sm:$0xff]
    %v1425 = vld [vmem:[%s11 + $0x5e0] sm:$0xff]
    %v1426 = vld [vmem:[%s11 + $0x5e8] sm:$0xff]
    %v1427 = vld [vmem:[%s11 + $0x5f0] sm:$0xff]
    %v1428 = vld [vmem:[%s11 + $0x5f8] sm:$0xff]
    %v1429 = vld [vmem:[%s11 + $0x600] sm:$0xff]
    %v1430 = vld [vmem:[%s11 + $0x608] sm:$0xff]
    %v1431 = vld [vmem:[%s11 + $0x610] sm:$0xff]
    %v1432 = vld [vmem:[%s11 + $0x618] sm:$0xff]
    %v1433 = vld [vmem:[%s11 + $0x620] sm:$0xff]
    %v1434 = vld [vmem:[%s11 + $0x628] sm:$0xff]
    %v1435 = vld [vmem:[%s11 + $0x630] sm:$0xff]
    %v1436 = vld [vmem:[%s11 + $0x638] sm:$0xff]
    %v1437 = vld [vmem:[%s11 + $0x640] sm:$0xff]
    %v1438 = vld [vmem:[%s11 + $0x648] sm:$0xff]
    %v1439 = vld [vmem:[%s11 + $0x650] sm:$0xff]
    %v1440 = vld [vmem:[%s11 + $0x658] sm:$0xff]
    %v1441 = vld [vmem:[%s11 + $0x660] sm:$0xff]
    %v1442 = vld [vmem:[%s11 + $0x668] sm:$0xff]
    %v1443 = vld [vmem:[%s11 + $0x670] sm:$0xff]
    %v1444 = vld [vmem:[%s11 + $0x678] sm:$0xff]
    %v1445 = vld [vmem:[%s11 + $0x680] sm:$0xff]
    %v1446 = vld [vmem:[%s11 + $0x688] sm:$0xff]
    %v1447 = vld [vmem:[%s11 + $0x690] sm:$0xff]
    %v1448 = vld [vmem:[%s11 + $0x698] sm:$0xff]
    %v1449 = vld [vmem:[%s11 + $0x6a0] sm:$0xff]
    %v1450 = vld [vmem:[%s11 + $0x6a8] sm:$0xff]
    %v1451 = vld [vmem:[%s11 + $0x6b0] sm:$0xff]
    %v1452 = vld [vmem:[%s11 + $0x6b8] sm:$0xff]
    %v1453 = vld [vmem:[%s11 + $0x6c0] sm:$0xff]
    %v1454 = vld [vmem:[%s11 + $0x6c8] sm:$0xff]
    %v1455 = vld [vmem:[%s11 + $0x6d0] sm:$0xff]
    %v1456 = vld [vmem:[%s11 + $0x6d8] sm:$0xff]
    %v1457 = vld [vmem:[%s11 + $0x6e0] sm:$0xff]
    %v1458 = vld [vmem:[%s11 + $0x6e8] sm:$0xff]
    %v1459 = vld [vmem:[%s11 + $0x6f0] sm:$0xff]
    %v1460 = vld [vmem:[%s11 + $0x6f8] sm:$0xff]
    %v1461 = vld [vmem:[%s11 + $0x700] sm:$0xff]
    %v1462 = vld [vmem:[%s11 + $0x708] sm:$0xff]
    %v1463 = vld [vmem:[%s11 + $0x710] sm:$0xff]
    %v1464 = vld [vmem:[%s11 + $0x718] sm:$0xff]
    %v1465 = vld [vmem:[%s11 + $0x720] sm:$0xff]
    %v1466 = vld [vmem:[%s11 + $0x728] sm:$0xff]
    %v1467 = vld [vmem:[%s11 + $0x730] sm:$0xff]
    %v1468 = vld [vmem:[%s11 + $0x738] sm:$0xff]
    %v1469 = vld [vmem:[%s11 + $0x740] sm:$0xff]
    %v1470 = vld [vmem:[%s11 + $0x748] sm:$0xff]
    %v1471 = vld [vmem:[%s11 + $0x750] sm:$0xff]
    %v1472 = vld [vmem:[%s11 + $0x758] sm:$0xff]
    %v1473 = vld [vmem:[%s11 + $0x760] sm:$0xff]
    %v1474 = vld [vmem:[%s11 + $0x768] sm:$0xff]
    %v1475 = vld [vmem:[%s11 + $0x770] sm:$0xff]
    %v1476 = vld [vmem:[%s11 + $0x778] sm:$0xff]
    %v1477 = vld [vmem:[%s11 + $0x780] sm:$0xff]
    %v1478 = vld [vmem:[%s11 + $0x788] sm:$0xff]
    %v1479 = vld [vmem:[%s11 + $0x790] sm:$0xff]
    %v1480 = vld [vmem:[%s11 + $0x798] sm:$0xff]
    %v1481 = vld [vmem:[%s11 + $0x7a0] sm:$0xff]
    %v1482 = vld [vmem:[%s11 + $0x7a8] sm:$0xff]
    %v1483 = vld [vmem:[%s11 + $0x7b0] sm:$0xff]
    %v1484 = vld [vmem:[%s11 + $0x7b8] sm:$0xff]
    %v1485 = vld [vmem:[%s11 + $0x7c0] sm:$0xff]
    %v1486 = vld [vmem:[%s11 + $0x7c8] sm:$0xff]
    %v1487 = vld [vmem:[%s11 + $0x7d0] sm:$0xff]
    %v1488 = vld [vmem:[%s11 + $0x7d8] sm:$0xff]
    %v1489 = vld [vmem:[%s11 + $0x7e0] sm:$0xff]
    %v1490 = vld [vmem:[%s11 + $0x7e8] sm:$0xff]
    %v1491 = vld [vmem:[%s11 + $0x7f0] sm:$0xff]
    %v1492 = vld [vmem:[%s11 + $0x7f8] sm:$0xff]
    %v1493 = vpack.c.bf16 %v1233, %v1233
    %v1494 = vpack.c.bf16 %v1234, %v1234
    %v1495 = vpack.c.bf16 %v1235, %v1235
    %v1496 = vpack.c.bf16 %v1236, %v1236
    %v1497 = vpack.c.bf16 %v1241, %v1237
    %v1498 = vpack.c.bf16 %v1242, %v1238
    %v1499 = vpack.c.bf16 %v1243, %v1239
    %v1500 = vpack.c.bf16 %v1244, %v1240
    %v1501 = vpack.c.bf16 %v1249, %v1245
    %v1502 = vpack.c.bf16 %v1250, %v1246
    %v1503 = vpack.c.bf16 %v1251, %v1247
    %v1504 = vpack.c.bf16 %v1252, %v1248
    %v1505 = vpack.c.bf16 %v1257, %v1253
    %v1506 = vpack.c.bf16 %v1258, %v1254
    %v1507 = vpack.c.bf16 %v1259, %v1255
    %v1508 = vpack.c.bf16 %v1260, %v1256
    %v1509 = vpack.c.bf16 %v1265, %v1261
    %v1510 = vpack.c.bf16 %v1266, %v1262
    %v1511 = vpack.c.bf16 %v1267, %v1263
    %v1512 = vpack.c.bf16 %v1268, %v1264
    %v1513 = vpack.c.bf16 %v1273, %v1269
    %v1514 = vpack.c.bf16 %v1274, %v1270
    %v1515 = vpack.c.bf16 %v1275, %v1271
    %v1516 = vpack.c.bf16 %v1276, %v1272
    %v1517 = vpack.c.bf16 %v1281, %v1277
    %v1518 = vpack.c.bf16 %v1282, %v1278
    %v1519 = vpack.c.bf16 %v1283, %v1279
    %v1520 = vpack.c.bf16 %v1284, %v1280
    %v1521 = vpack.c.bf16 %v1289, %v1285
    %v1522 = vpack.c.bf16 %v1290, %v1286
    %v1523 = vpack.c.bf16 %v1291, %v1287
    %v1524 = vpack.c.bf16 %v1292, %v1288
    %v1525 = vpack.c.bf16 %v1297, %v1293
    %v1526 = vpack.c.bf16 %v1298, %v1294
    %v1527 = vpack.c.bf16 %v1299, %v1295
    %v1528 = vpack.c.bf16 %v1300, %v1296
    %v1529 = vpack.c.bf16 %v1305, %v1301
    %v1530 = vpack.c.bf16 %v1306, %v1302
    %v1531 = vpack.c.bf16 %v1307, %v1303
    %v1532 = vpack.c.bf16 %v1308, %v1304
    %v1533 = vpack.c.bf16 %v1313, %v1309
    %v1534 = vpack.c.bf16 %v1314, %v1310
    %v1535 = vpack.c.bf16 %v1315, %v1311
    %v1536 = vpack.c.bf16 %v1316, %v1312
    %v1537 = vpack.c.bf16 %v1321, %v1317
    %v1538 = vpack.c.bf16 %v1322, %v1318
    %v1539 = vpack.c.bf16 %v1323, %v1319
    %v1540 = vpack.c.bf16 %v1324, %v1320
    %v1541 = vpack.c.bf16 %v1329, %v1325
    %v1542 = vpack.c.bf16 %v1330, %v1326
    %v1543 = vpack.c.bf16 %v1331, %v1327
    %v1544 = vpack.c.bf16 %v1332, %v1328
    %v1545 = vpack.c.bf16 %v1337, %v1333
    %v1546 = vpack.c.bf16 %v1338, %v1334
    %v1547 = vpack.c.bf16 %v1339, %v1335
    %v1548 = vpack.c.bf16 %v1340, %v1336
    %v1549 = vpack.c.bf16 %v1345, %v1341
    %v1550 = vpack.c.bf16 %v1346, %v1342
    %v1551 = vpack.c.bf16 %v1347, %v1343
    %v1552 = vpack.c.bf16 %v1348, %v1344
    %v1553 = vpack.c.bf16 %v1353, %v1349
    %v1554 = vpack.c.bf16 %v1354, %v1350
    %v1555 = vpack.c.bf16 %v1355, %v1351
    %v1556 = vpack.c.bf16 %v1356, %v1352
    %v1557 = vpack.c.bf16 %v1361, %v1357
    %v1558 = vpack.c.bf16 %v1362, %v1358
    %v1559 = vpack.c.bf16 %v1363, %v1359
    %v1560 = vpack.c.bf16 %v1364, %v1360
    %v1561 = vpack.c.bf16 %v1369, %v1365
    %v1562 = vpack.c.bf16 %v1370, %v1366
    %v1563 = vpack.c.bf16 %v1371, %v1367
    %v1564 = vpack.c.bf16 %v1372, %v1368
    %v1565 = vpack.c.bf16 %v1377, %v1373
    %v1566 = vpack.c.bf16 %v1378, %v1374
    %v1567 = vpack.c.bf16 %v1379, %v1375
    %v1568 = vpack.c.bf16 %v1380, %v1376
    %v1569 = vpack.c.bf16 %v1385, %v1381
    %v1570 = vpack.c.bf16 %v1386, %v1382
    %v1571 = vpack.c.bf16 %v1387, %v1383
    %v1572 = vpack.c.bf16 %v1388, %v1384
    %v1573 = vpack.c.bf16 %v1393, %v1389
    %v1574 = vpack.c.bf16 %v1394, %v1390
    %v1575 = vpack.c.bf16 %v1395, %v1391
    %v1576 = vpack.c.bf16 %v1396, %v1392
    %v1577 = vpack.c.bf16 %v1401, %v1397
    %v1578 = vpack.c.bf16 %v1402, %v1398
    %v1579 = vpack.c.bf16 %v1403, %v1399
    %v1580 = vpack.c.bf16 %v1404, %v1400
    %v1581 = vpack.c.bf16 %v1409, %v1405
    %v1582 = vpack.c.bf16 %v1410, %v1406
    %v1583 = vpack.c.bf16 %v1411, %v1407
    %v1584 = vpack.c.bf16 %v1412, %v1408
    %v1585 = vpack.c.bf16 %v1417, %v1413
    %v1586 = vpack.c.bf16 %v1418, %v1414
    %v1587 = vpack.c.bf16 %v1419, %v1415
    %v1588 = vpack.c.bf16 %v1420, %v1416
    %v1589 = vpack.c.bf16 %v1425, %v1421
    %v1590 = vpack.c.bf16 %v1426, %v1422
    %v1591 = vpack.c.bf16 %v1427, %v1423
    %v1592 = vpack.c.bf16 %v1428, %v1424
    %v1593 = vpack.c.bf16 %v1433, %v1429
    %v1594 = vpack.c.bf16 %v1434, %v1430
    %v1595 = vpack.c.bf16 %v1435, %v1431
    %v1596 = vpack.c.bf16 %v1436, %v1432
    %v1597 = vpack.c.bf16 %v1441, %v1437
    %v1598 = vpack.c.bf16 %v1442, %v1438
    %v1599 = vpack.c.bf16 %v1443, %v1439
    %v1600 = vpack.c.bf16 %v1444, %v1440
    %v1601 = vpack.c.bf16 %v1449, %v1445
    %v1602 = vpack.c.bf16 %v1450, %v1446
    %v1603 = vpack.c.bf16 %v1451, %v1447
    %v1604 = vpack.c.bf16 %v1452, %v1448
    %v1605 = vpack.c.bf16 %v1457, %v1453
    %v1606 = vpack.c.bf16 %v1458, %v1454
    %v1607 = vpack.c.bf16 %v1459, %v1455
    %v1608 = vpack.c.bf16 %v1460, %v1456
    %v1609 = vpack.c.bf16 %v1465, %v1461
    %v1610 = vpack.c.bf16 %v1466, %v1462
    %v1611 = vpack.c.bf16 %v1467, %v1463
    %v1612 = vpack.c.bf16 %v1468, %v1464
    %v1613 = vpack.c.bf16 %v1473, %v1469
    %v1614 = vpack.c.bf16 %v1474, %v1470
    %v1615 = vpack.c.bf16 %v1475, %v1471
    %v1616 = vpack.c.bf16 %v1476, %v1472
    %v1617 = vpack.c.bf16 %v1481, %v1477
    %v1618 = vpack.c.bf16 %v1482, %v1478
    %v1619 = vpack.c.bf16 %v1483, %v1479
    %v1620 = vpack.c.bf16 %v1484, %v1480
    %v1621 = vpack.c.bf16 %v1489, %v1485
    %v1622 = vpack.c.bf16 %v1490, %v1486
    %v1623 = vpack.c.bf16 %v1491, %v1487
    %v1624 = vpack.c.bf16 %v1492, %v1488
    %v1625 = vld [vmem:[%s12] sm:$0xf]
    %v1627 = vlaneseq
    %v1628 = vshrl.u32 %v1627, 7
    %v1629 = vsub.s32 0, %v1628
    %v1630 = vrot.slane %v1625, %v1629
    %v1631 = vlaneseq
    %v1632 = vshrl.u32 %v1631, 7
    %v1633 = vsub.s32 1, %v1632
    %v1634 = vrot.slane %v1625, %v1633
    %v1635 = vlaneseq
    %v1636 = vshrl.u32 %v1635, 7
    %v1637 = vsub.s32 2, %v1636
    %v1638 = vrot.slane %v1625, %v1637
    %v1639 = vlaneseq
    %v1640 = vshrl.u32 %v1639, 7
    %v1641 = vsub.s32 3, %v1640
    %v1642 = vrot.slane %v1625, %v1641
    %1647 = vmatprep.subr.bf16.mxu0 %v1526
    %1648 = vmatpush1.bf16.msra.mxu0 %v1525
    %1649 = vmatprep.subr.bf16.mxu0 %v1522
    %1650 = vmatpush1.bf16.msra.mxu0 %v1521
    %1651 = vmatprep.subr.bf16.mxu0 %v1518
    %1652 = vmatpush1.bf16.msra.mxu0 %v1517
    %1653 = vmatprep.subr.bf16.mxu0 %v1514
    %1654 = vmatpush1.bf16.msra.mxu0 %v1513
    %1655 = vmatprep.subr.bf16.mxu0 %v1510
    %1656 = vmatpush1.bf16.msra.mxu0 %v1509
    %1657 = vmatprep.subr.bf16.mxu0 %v1506
    %1658 = vmatpush1.bf16.msra.mxu0 %v1505
    %1659 = vmatprep.subr.bf16.mxu0 %v1502
    %1660 = vmatpush1.bf16.msra.mxu0 %v1501
    %1661 = vmatprep.subr.bf16.mxu0 %v1498
    %1662 = vmatpush1.bf16.msra.mxu0 %v1497
    %1663 = vmatprep.subr.bf16.mxu0 %v1558
    %1664 = vmatpush2.bf16.msra.mxu0 %v1557
    %1665 = vmatprep.subr.bf16.mxu0 %v1554
    %1666 = vmatpush2.bf16.msra.mxu0 %v1553
    %1667 = vmatprep.subr.bf16.mxu0 %v1550
    %1668 = vmatpush2.bf16.msra.mxu0 %v1549
    %1669 = vmatprep.subr.bf16.mxu0 %v1546
    %1670 = vmatpush2.bf16.msra.mxu0 %v1545
    %1671 = vmatprep.subr.bf16.mxu0 %v1542
    %1672 = vmatpush2.bf16.msra.mxu0 %v1541
    %1673 = vmatprep.subr.bf16.mxu0 %v1538
    %1674 = vmatpush2.bf16.msra.mxu0 %v1537
    %1675 = vmatprep.subr.bf16.mxu0 %v1534
    %1676 = vmatpush2.bf16.msra.mxu0 %v1533
    %1677 = vmatprep.subr.bf16.mxu0 %v1530
    %1678 = vmatpush2.bf16.msra.mxu0 %v1529
    %1679 = vmatprep.mubr.bf16.mxu0 %v1494
    %1680 = vmatmul.mubr.bf16.gmra.mxu0 %v1493
    %v1681 = vpop.f32.mrf.mxu0
    %v1682 = vadd.f32 %v1630, %v1681
    %v1683 = vpop.f32.mrf.mxu0
    %v1684 = vadd.f32 %v1634, %v1683
    %v1685 = vpop.f32.mrf.mxu0
    %v1686 = vpop.f32.mrf.mxu0
    %1687 = vdwg.mxu0
    %1688 = vmatprep.subr.bf16.mxu0 %v1590
    %1689 = vmatpush1.bf16.msra.mxu0 %v1589
    %1690 = vmatprep.subr.bf16.mxu0 %v1586
    %1691 = vmatpush1.bf16.msra.mxu0 %v1585
    %1692 = vmatprep.subr.bf16.mxu0 %v1582
    %1693 = vmatpush1.bf16.msra.mxu0 %v1581
    %1694 = vmatprep.subr.bf16.mxu0 %v1578
    %1695 = vmatpush1.bf16.msra.mxu0 %v1577
    %1696 = vmatprep.subr.bf16.mxu0 %v1574
    %1697 = vmatpush1.bf16.msra.mxu0 %v1573
    %1698 = vmatprep.subr.bf16.mxu0 %v1570
    %1699 = vmatpush1.bf16.msra.mxu0 %v1569
    %1700 = vmatprep.subr.bf16.mxu0 %v1566
    %1701 = vmatpush1.bf16.msra.mxu0 %v1565
    %1702 = vmatprep.subr.bf16.mxu0 %v1562
    %1703 = vmatpush1.bf16.msra.mxu0 %v1561
    %1704 = vmatprep.subr.bf16.mxu0 %v1622
    %1705 = vmatpush2.bf16.msra.mxu0 %v1621
    %1706 = vmatprep.subr.bf16.mxu0 %v1618
    %1707 = vmatpush2.bf16.msra.mxu0 %v1617
    %1708 = vmatprep.subr.bf16.mxu0 %v1614
    %1709 = vmatpush2.bf16.msra.mxu0 %v1613
    %1710 = vmatprep.subr.bf16.mxu0 %v1610
    %1711 = vmatpush2.bf16.msra.mxu0 %v1609
    %1712 = vmatprep.subr.bf16.mxu0 %v1606
    %1713 = vmatpush2.bf16.msra.mxu0 %v1605
    %1714 = vmatprep.subr.bf16.mxu0 %v1602
    %1715 = vmatpush2.bf16.msra.mxu0 %v1601
    %1716 = vmatprep.subr.bf16.mxu0 %v1598
    %1717 = vmatpush2.bf16.msra.mxu0 %v1597
    %1718 = vmatprep.subr.bf16.mxu0 %v1594
    %1719 = vmatpush2.bf16.msra.mxu0 %v1593
    %1720 = vmatprep.mubr.bf16.mxu0 %v1496
    %1721 = vmatmul.mubr.bf16.gmra.mxu0 %v1495
    %v1722 = vpop.f32.mrf.mxu0
    %v1723 = vadd.f32 %v1682, %v1722
    %v1724 = vpop.f32.mrf.mxu0
    %v1725 = vadd.f32 %v1684, %v1724
    %v1726 = vpop.f32.mrf.mxu0
    %v1727 = vpop.f32.mrf.mxu0
    %1728 = vdwg.mxu0
    %1729 = vmatprep.subr.bf16.mxu0 %v1528
    %1730 = vmatpush1.bf16.msra.mxu0 %v1527
    %1731 = vmatprep.subr.bf16.mxu0 %v1524
    %1732 = vmatpush1.bf16.msra.mxu0 %v1523
    %1733 = vmatprep.subr.bf16.mxu0 %v1520
    %1734 = vmatpush1.bf16.msra.mxu0 %v1519
    %1735 = vmatprep.subr.bf16.mxu0 %v1516
    %1736 = vmatpush1.bf16.msra.mxu0 %v1515
    %1737 = vmatprep.subr.bf16.mxu0 %v1512
    %1738 = vmatpush1.bf16.msra.mxu0 %v1511
    %1739 = vmatprep.subr.bf16.mxu0 %v1508
    %1740 = vmatpush1.bf16.msra.mxu0 %v1507
    %1741 = vmatprep.subr.bf16.mxu0 %v1504
    %1742 = vmatpush1.bf16.msra.mxu0 %v1503
    %1743 = vmatprep.subr.bf16.mxu0 %v1500
    %1744 = vmatpush1.bf16.msra.mxu0 %v1499
    %1745 = vmatprep.subr.bf16.mxu0 %v1560
    %1746 = vmatpush2.bf16.msra.mxu0 %v1559
    %1747 = vmatprep.subr.bf16.mxu0 %v1556
    %1748 = vmatpush2.bf16.msra.mxu0 %v1555
    %1749 = vmatprep.subr.bf16.mxu0 %v1552
    %1750 = vmatpush2.bf16.msra.mxu0 %v1551
    %1751 = vmatprep.subr.bf16.mxu0 %v1548
    %1752 = vmatpush2.bf16.msra.mxu0 %v1547
    %1753 = vmatprep.subr.bf16.mxu0 %v1544
    %1754 = vmatpush2.bf16.msra.mxu0 %v1543
    %1755 = vmatprep.subr.bf16.mxu0 %v1540
    %1756 = vmatpush2.bf16.msra.mxu0 %v1539
    %1757 = vmatprep.subr.bf16.mxu0 %v1536
    %1758 = vmatpush2.bf16.msra.mxu0 %v1535
    %1759 = vmatprep.subr.bf16.mxu0 %v1532
    %1760 = vmatpush2.bf16.msra.mxu0 %v1531
    %1761 = vmatprep.mubr.bf16.mxu0 %v1494
    %1762 = vmatmul.mubr.bf16.gmra.mxu0 %v1493
    %v1763 = vpop.f32.mrf.mxu0
    %v1764 = vadd.f32 %v1638, %v1763
    %v1765 = vpop.f32.mrf.mxu0
    %v1766 = vadd.f32 %v1642, %v1765
    %v1767 = vpop.f32.mrf.mxu0
    %v1768 = vpop.f32.mrf.mxu0
    %1769 = vdwg.mxu0
    %1770 = vmatprep.subr.bf16.mxu0 %v1592
    %1771 = vmatpush1.bf16.msra.mxu0 %v1591
    %1772 = vmatprep.subr.bf16.mxu0 %v1588
    %1773 = vmatpush1.bf16.msra.mxu0 %v1587
    %1774 = vmatprep.subr.bf16.mxu0 %v1584
    %1775 = vmatpush1.bf16.msra.mxu0 %v1583
    %1776 = vmatprep.subr.bf16.mxu0 %v1580
    %1777 = vmatpush1.bf16.msra.mxu0 %v1579
    %1778 = vmatprep.subr.bf16.mxu0 %v1576
    %1779 = vmatpush1.bf16.msra.mxu0 %v1575
    %1780 = vmatprep.subr.bf16.mxu0 %v1572
    %1781 = vmatpush1.bf16.msra.mxu0 %v1571
    %1782 = vmatprep.subr.bf16.mxu0 %v1568
    %1783 = vmatpush1.bf16.msra.mxu0 %v1567
    %1784 = vmatprep.subr.bf16.mxu0 %v1564
    %1785 = vmatpush1.bf16.msra.mxu0 %v1563
    %1786 = vmatprep.subr.bf16.mxu0 %v1624
    %1787 = vmatpush2.bf16.msra.mxu0 %v1623
    %1788 = vmatprep.subr.bf16.mxu0 %v1620
    %1789 = vmatpush2.bf16.msra.mxu0 %v1619
    %1790 = vmatprep.subr.bf16.mxu0 %v1616
    %1791 = vmatpush2.bf16.msra.mxu0 %v1615
    %1792 = vmatprep.subr.bf16.mxu0 %v1612
    %1793 = vmatpush2.bf16.msra.mxu0 %v1611
    %1794 = vmatprep.subr.bf16.mxu0 %v1608
    %1795 = vmatpush2.bf16.msra.mxu0 %v1607
    %1796 = vmatprep.subr.bf16.mxu0 %v1604
    %1797 = vmatpush2.bf16.msra.mxu0 %v1603
    %1798 = vmatprep.subr.bf16.mxu0 %v1600
    %1799 = vmatpush2.bf16.msra.mxu0 %v1599
    %1800 = vmatprep.subr.bf16.mxu0 %v1596
    %1801 = vmatpush2.bf16.msra.mxu0 %v1595
    %1802 = vmatprep.mubr.bf16.mxu0 %v1496
    %1803 = vmatmul.mubr.bf16.gmra.mxu0 %v1495
    %v1804 = vpop.f32.mrf.mxu0
    %v1805 = vadd.f32 %v1764, %v1804
    %v1806 = vpop.f32.mrf.mxu0
    %v1807 = vadd.f32 %v1766, %v1806
    %v1808 = vpop.f32.mrf.mxu0
    %v1809 = vpop.f32.mrf.mxu0
    %1810 = vdwg.mxu0
    %v1811 = vmax.f32 %v1723, 0.0
    %v1812 = vmax.f32 %v1725, 0.0
    %v1813 = vmax.f32 %v1805, 0.0
    %v1814 = vmax.f32 %v1807, 0.0
    %v1815 = vld [vmem:[%s13] sm:$0xf]
    %v1816 = vld [vmem:[%s14] sm:$0xf]
    %v1817 = vsel %vm993, %v1811, 0.0
    %v1818 = vrot.slane %v1817, 4
    %v1819 = vadd.f32 %v1817, %v1818
    %v1820 = vrot.slane %v1819, 2
    %v1821 = vadd.f32 %v1819, %v1820
    %v1822 = vrot.slane %v1821, 1
    %v1823 = vadd.f32 %v1821, %v1822
    %v1824 = vsel %vm993, %v1812, 0.0
    %v1825 = vrot.slane %v1824, 4
    %v1826 = vadd.f32 %v1824, %v1825
    %v1827 = vrot.slane %v1826, 2
    %v1828 = vadd.f32 %v1826, %v1827
    %v1829 = vrot.slane %v1828, 1
    %v1830 = vadd.f32 %v1828, %v1829
    %v1831 = vsel %vm993, %v1813, 0.0
    %v1832 = vrot.slane %v1831, 4
    %v1833 = vadd.f32 %v1831, %v1832
    %v1834 = vrot.slane %v1833, 2
    %v1835 = vadd.f32 %v1833, %v1834
    %v1836 = vrot.slane %v1835, 1
    %v1837 = vadd.f32 %v1835, %v1836
    %v1838 = vsel %vm993, %v1814, 0.0
    %v1839 = vrot.slane %v1838, 4
    %v1840 = vadd.f32 %v1838, %v1839
    %v1841 = vrot.slane %v1840, 2
    %v1842 = vadd.f32 %v1840, %v1841
    %v1843 = vrot.slane %v1842, 1
    %v1844 = vadd.f32 %v1842, %v1843
    %v1845 = vmul.f32 %v1823, %v1022
    %v1846 = vmul.f32 %v1830, %v1022
    %v1847 = vmul.f32 %v1837, %v1022
    %v1848 = vmul.f32 %v1844, %v1022
    %v1849 = vsub.f32 %v1811, %v1845
    %v1850 = vsub.f32 %v1812, %v1846
    %v1851 = vsub.f32 %v1813, %v1847
    %v1852 = vsub.f32 %v1814, %v1848
    %v1853 = vmul.f32 %v1849, %v1849
    %v1854 = vmul.f32 %v1850, %v1850
    %v1855 = vmul.f32 %v1851, %v1851
    %v1856 = vmul.f32 %v1852, %v1852
    %v1857 = vsel %vm993, %v1853, 0.0
    %v1858 = vrot.slane %v1857, 4
    %v1859 = vadd.f32 %v1857, %v1858
    %v1860 = vrot.slane %v1859, 2
    %v1861 = vadd.f32 %v1859, %v1860
    %v1862 = vrot.slane %v1861, 1
    %v1863 = vadd.f32 %v1861, %v1862
    %v1864 = vsel %vm993, %v1854, 0.0
    %v1865 = vrot.slane %v1864, 4
    %v1866 = vadd.f32 %v1864, %v1865
    %v1867 = vrot.slane %v1866, 2
    %v1868 = vadd.f32 %v1866, %v1867
    %v1869 = vrot.slane %v1868, 1
    %v1870 = vadd.f32 %v1868, %v1869
    %v1871 = vsel %vm993, %v1855, 0.0
    %v1872 = vrot.slane %v1871, 4
    %v1873 = vadd.f32 %v1871, %v1872
    %v1874 = vrot.slane %v1873, 2
    %v1875 = vadd.f32 %v1873, %v1874
    %v1876 = vrot.slane %v1875, 1
    %v1877 = vadd.f32 %v1875, %v1876
    %v1878 = vsel %vm993, %v1856, 0.0
    %v1879 = vrot.slane %v1878, 4
    %v1880 = vadd.f32 %v1878, %v1879
    %v1881 = vrot.slane %v1880, 2
    %v1882 = vadd.f32 %v1880, %v1881
    %v1883 = vrot.slane %v1882, 1
    %v1884 = vadd.f32 %v1882, %v1883
    %v1885 = vmul.f32 %v1863, %v1022
    %v1886 = vmul.f32 %v1870, %v1022
    %v1887 = vmul.f32 %v1877, %v1022
    %v1888 = vmul.f32 %v1884, %v1022
    %v1889 = vadd.f32 %v1885, 1e-05
    %v1890 = vadd.f32 %v1886, 1e-05
    %v1891 = vadd.f32 %v1887, 1e-05
    %v1892 = vadd.f32 %v1888, 1e-05
    %v1893 = vrsqrt.pop %v1889
    %v1894 = vrsqrt.pop %v1890
    %v1895 = vrsqrt.pop %v1891
    %v1896 = vrsqrt.pop %v1892
    %v1897 = vmul.f32 %v1849, %v1893
    %v1898 = vmul.f32 %v1850, %v1894
    %v1899 = vmul.f32 %v1851, %v1895
    %v1900 = vmul.f32 %v1852, %v1896
    %v1902 = vlaneseq
    %v1903 = vshrl.u32 %v1902, 7
    %v1904 = vsub.s32 0, %v1903
    %v1905 = vrot.slane %v1815, %v1904
    %v1906 = vlaneseq
    %v1907 = vshrl.u32 %v1906, 7
    %v1908 = vsub.s32 1, %v1907
    %v1909 = vrot.slane %v1815, %v1908
    %v1910 = vlaneseq
    %v1911 = vshrl.u32 %v1910, 7
    %v1912 = vsub.s32 2, %v1911
    %v1913 = vrot.slane %v1815, %v1912
    %v1914 = vlaneseq
    %v1915 = vshrl.u32 %v1914, 7
    %v1916 = vsub.s32 3, %v1915
    %v1917 = vrot.slane %v1815, %v1916
    %v1922 = vmul.f32 %v1897, %v1905
    %v1923 = vmul.f32 %v1898, %v1909
    %v1924 = vmul.f32 %v1899, %v1913
    %v1925 = vmul.f32 %v1900, %v1917
    %v1927 = vlaneseq
    %v1928 = vshrl.u32 %v1927, 7
    %v1929 = vsub.s32 0, %v1928
    %v1930 = vrot.slane %v1816, %v1929
    %v1931 = vlaneseq
    %v1932 = vshrl.u32 %v1931, 7
    %v1933 = vsub.s32 1, %v1932
    %v1934 = vrot.slane %v1816, %v1933
    %v1935 = vlaneseq
    %v1936 = vshrl.u32 %v1935, 7
    %v1937 = vsub.s32 2, %v1936
    %v1938 = vrot.slane %v1816, %v1937
    %v1939 = vlaneseq
    %v1940 = vshrl.u32 %v1939, 7
    %v1941 = vsub.s32 3, %v1940
    %v1942 = vrot.slane %v1816, %v1941
    %v1947 = vadd.f32 %v1922, %v1930
    %v1948 = vadd.f32 %v1923, %v1934
    %v1949 = vadd.f32 %v1924, %v1938
    %v1950 = vadd.f32 %v1925, %v1942
    %v1951 = vld [vmem:[#allocation4] sm:$0xff]
    %v1952 = vld [vmem:[#allocation4 + $0x8] sm:$0xff]
    %v1953 = vld [vmem:[#allocation4 + $0x10] sm:$0xff]
    %v1954 = vld [vmem:[#allocation4 + $0x18] sm:$0xff]
    %v1955 = vld [vmem:[#allocation4 + $0x20] sm:$0xff]
    %v1956 = vld [vmem:[#allocation4 + $0x28] sm:$0xff]
    %v1957 = vld [vmem:[#allocation4 + $0x30] sm:$0xff]
    %v1958 = vld [vmem:[#allocation4 + $0x38] sm:$0xff]
    %v1959 = vld [vmem:[#allocation4 + $0x40] sm:$0xff]
    %v1960 = vld [vmem:[#allocation4 + $0x48] sm:$0xff]
    %v1961 = vld [vmem:[#allocation4 + $0x50] sm:$0xff]
    %v1962 = vld [vmem:[#allocation4 + $0x58] sm:$0xff]
    %v1963 = vld [vmem:[#allocation4 + $0x60] sm:$0xff]
    %v1964 = vld [vmem:[#allocation4 + $0x68] sm:$0xff]
    %v1965 = vld [vmem:[#allocation4 + $0x70] sm:$0xff]
    %v1966 = vld [vmem:[#allocation4 + $0x78] sm:$0xff]
    %v1967 = vld [vmem:[#allocation4 + $0x80] sm:$0xff]
    %v1968 = vld [vmem:[#allocation4 + $0x88] sm:$0xff]
    %v1969 = vld [vmem:[#allocation4 + $0x90] sm:$0xff]
    %v1970 = vld [vmem:[#allocation4 + $0x98] sm:$0xff]
    %v1971 = vld [vmem:[#allocation4 + $0xa0] sm:$0xff]
    %v1972 = vld [vmem:[#allocation4 + $0xa8] sm:$0xff]
    %v1973 = vld [vmem:[#allocation4 + $0xb0] sm:$0xff]
    %v1974 = vld [vmem:[#allocation4 + $0xb8] sm:$0xff]
    %v1975 = vld [vmem:[#allocation4 + $0xc0] sm:$0xff]
    %v1976 = vld [vmem:[#allocation4 + $0xc8] sm:$0xff]
    %v1977 = vld [vmem:[#allocation4 + $0xd0] sm:$0xff]
    %v1978 = vld [vmem:[#allocation4 + $0xd8] sm:$0xff]
    %v1979 = vld [vmem:[#allocation4 + $0xe0] sm:$0xff]
    %v1980 = vld [vmem:[#allocation4 + $0xe8] sm:$0xff]
    %v1981 = vld [vmem:[#allocation4 + $0xf0] sm:$0xff]
    %v1982 = vld [vmem:[#allocation4 + $0xf8] sm:$0xff]
    %v1983 = vld [vmem:[#allocation4 + $0x100] sm:$0xff]
    %v1984 = vld [vmem:[#allocation4 + $0x108] sm:$0xff]
    %v1985 = vld [vmem:[#allocation4 + $0x110] sm:$0xff]
    %v1986 = vld [vmem:[#allocation4 + $0x118] sm:$0xff]
    %v1987 = vld [vmem:[#allocation4 + $0x120] sm:$0xff]
    %v1988 = vld [vmem:[#allocation4 + $0x128] sm:$0xff]
    %v1989 = vld [vmem:[#allocation4 + $0x130] sm:$0xff]
    %v1990 = vld [vmem:[#allocation4 + $0x138] sm:$0xff]
    %v1991 = vld [vmem:[#allocation4 + $0x140] sm:$0xff]
    %v1992 = vld [vmem:[#allocation4 + $0x148] sm:$0xff]
    %v1993 = vld [vmem:[#allocation4 + $0x150] sm:$0xff]
    %v1994 = vld [vmem:[#allocation4 + $0x158] sm:$0xff]
    %v1995 = vld [vmem:[#allocation4 + $0x160] sm:$0xff]
    %v1996 = vld [vmem:[#allocation4 + $0x168] sm:$0xff]
    %v1997 = vld [vmem:[#allocation4 + $0x170] sm:$0xff]
    %v1998 = vld [vmem:[#allocation4 + $0x178] sm:$0xff]
    %v1999 = vld [vmem:[#allocation4 + $0x180] sm:$0xff]
    %v2000 = vld [vmem:[#allocation4 + $0x188] sm:$0xff]
    %v2001 = vld [vmem:[#allocation4 + $0x190] sm:$0xff]
    %v2002 = vld [vmem:[#allocation4 + $0x198] sm:$0xff]
    %v2003 = vld [vmem:[#allocation4 + $0x1a0] sm:$0xff]
    %v2004 = vld [vmem:[#allocation4 + $0x1a8] sm:$0xff]
    %v2005 = vld [vmem:[#allocation4 + $0x1b0] sm:$0xff]
    %v2006 = vld [vmem:[#allocation4 + $0x1b8] sm:$0xff]
    %v2007 = vld [vmem:[#allocation4 + $0x1c0] sm:$0xff]
    %v2008 = vld [vmem:[#allocation4 + $0x1c8] sm:$0xff]
    %v2009 = vld [vmem:[#allocation4 + $0x1d0] sm:$0xff]
    %v2010 = vld [vmem:[#allocation4 + $0x1d8] sm:$0xff]
    %v2011 = vld [vmem:[#allocation4 + $0x1e0] sm:$0xff]
    %v2012 = vld [vmem:[#allocation4 + $0x1e8] sm:$0xff]
    %v2013 = vld [vmem:[#allocation4 + $0x1f0] sm:$0xff]
    %v2014 = vld [vmem:[#allocation4 + $0x1f8] sm:$0xff]
    %v2015 = vld [vmem:[#allocation4 + $0x200] sm:$0xff]
    %v2016 = vld [vmem:[#allocation4 + $0x208] sm:$0xff]
    %v2017 = vld [vmem:[#allocation4 + $0x210] sm:$0xff]
    %v2018 = vld [vmem:[#allocation4 + $0x218] sm:$0xff]
    %v2019 = vld [vmem:[#allocation4 + $0x220] sm:$0xff]
    %v2020 = vld [vmem:[#allocation4 + $0x228] sm:$0xff]
    %v2021 = vld [vmem:[#allocation4 + $0x230] sm:$0xff]
    %v2022 = vld [vmem:[#allocation4 + $0x238] sm:$0xff]
    %v2023 = vld [vmem:[#allocation4 + $0x240] sm:$0xff]
    %v2024 = vld [vmem:[#allocation4 + $0x248] sm:$0xff]
    %v2025 = vld [vmem:[#allocation4 + $0x250] sm:$0xff]
    %v2026 = vld [vmem:[#allocation4 + $0x258] sm:$0xff]
    %v2027 = vld [vmem:[#allocation4 + $0x260] sm:$0xff]
    %v2028 = vld [vmem:[#allocation4 + $0x268] sm:$0xff]
    %v2029 = vld [vmem:[#allocation4 + $0x270] sm:$0xff]
    %v2030 = vld [vmem:[#allocation4 + $0x278] sm:$0xff]
    %v2031 = vld [vmem:[#allocation4 + $0x280] sm:$0xff]
    %v2032 = vld [vmem:[#allocation4 + $0x288] sm:$0xff]
    %v2033 = vld [vmem:[#allocation4 + $0x290] sm:$0xff]
    %v2034 = vld [vmem:[#allocation4 + $0x298] sm:$0xff]
    %v2035 = vld [vmem:[#allocation4 + $0x2a0] sm:$0xff]
    %v2036 = vld [vmem:[#allocation4 + $0x2a8] sm:$0xff]
    %v2037 = vld [vmem:[#allocation4 + $0x2b0] sm:$0xff]
    %v2038 = vld [vmem:[#allocation4 + $0x2b8] sm:$0xff]
    %v2039 = vld [vmem:[#allocation4 + $0x2c0] sm:$0xff]
    %v2040 = vld [vmem:[#allocation4 + $0x2c8] sm:$0xff]
    %v2041 = vld [vmem:[#allocation4 + $0x2d0] sm:$0xff]
    %v2042 = vld [vmem:[#allocation4 + $0x2d8] sm:$0xff]
    %v2043 = vld [vmem:[#allocation4 + $0x2e0] sm:$0xff]
    %v2044 = vld [vmem:[#allocation4 + $0x2e8] sm:$0xff]
    %v2045 = vld [vmem:[#allocation4 + $0x2f0] sm:$0xff]
    %v2046 = vld [vmem:[#allocation4 + $0x2f8] sm:$0xff]
    %v2047 = vld [vmem:[#allocation4 + $0x300] sm:$0xff]
    %v2048 = vld [vmem:[#allocation4 + $0x308] sm:$0xff]
    %v2049 = vld [vmem:[#allocation4 + $0x310] sm:$0xff]
    %v2050 = vld [vmem:[#allocation4 + $0x318] sm:$0xff]
    %v2051 = vld [vmem:[#allocation4 + $0x320] sm:$0xff]
    %v2052 = vld [vmem:[#allocation4 + $0x328] sm:$0xff]
    %v2053 = vld [vmem:[#allocation4 + $0x330] sm:$0xff]
    %v2054 = vld [vmem:[#allocation4 + $0x338] sm:$0xff]
    %v2055 = vld [vmem:[#allocation4 + $0x340] sm:$0xff]
    %v2056 = vld [vmem:[#allocation4 + $0x348] sm:$0xff]
    %v2057 = vld [vmem:[#allocation4 + $0x350] sm:$0xff]
    %v2058 = vld [vmem:[#allocation4 + $0x358] sm:$0xff]
    %v2059 = vld [vmem:[#allocation4 + $0x360] sm:$0xff]
    %v2060 = vld [vmem:[#allocation4 + $0x368] sm:$0xff]
    %v2061 = vld [vmem:[#allocation4 + $0x370] sm:$0xff]
    %v2062 = vld [vmem:[#allocation4 + $0x378] sm:$0xff]
    %v2063 = vld [vmem:[#allocation4 + $0x380] sm:$0xff]
    %v2064 = vld [vmem:[#allocation4 + $0x388] sm:$0xff]
    %v2065 = vld [vmem:[#allocation4 + $0x390] sm:$0xff]
    %v2066 = vld [vmem:[#allocation4 + $0x398] sm:$0xff]
    %v2067 = vld [vmem:[#allocation4 + $0x3a0] sm:$0xff]
    %v2068 = vld [vmem:[#allocation4 + $0x3a8] sm:$0xff]
    %v2069 = vld [vmem:[#allocation4 + $0x3b0] sm:$0xff]
    %v2070 = vld [vmem:[#allocation4 + $0x3b8] sm:$0xff]
    %v2071 = vld [vmem:[#allocation4 + $0x3c0] sm:$0xff]
    %v2072 = vld [vmem:[#allocation4 + $0x3c8] sm:$0xff]
    %v2073 = vld [vmem:[#allocation4 + $0x3d0] sm:$0xff]
    %v2074 = vld [vmem:[#allocation4 + $0x3d8] sm:$0xff]
    %v2075 = vld [vmem:[#allocation4 + $0x3e0] sm:$0xff]
    %v2076 = vld [vmem:[#allocation4 + $0x3e8] sm:$0xff]
    %v2077 = vld [vmem:[#allocation4 + $0x3f0] sm:$0xff]
    %v2078 = vld [vmem:[#allocation4 + $0x3f8] sm:$0xff]
    %v2079 = vld [vmem:[#allocation4 + $0x400] sm:$0xff]
    %v2080 = vld [vmem:[#allocation4 + $0x408] sm:$0xff]
    %v2081 = vld [vmem:[#allocation4 + $0x410] sm:$0xff]
    %v2082 = vld [vmem:[#allocation4 + $0x418] sm:$0xff]
    %v2083 = vld [vmem:[#allocation4 + $0x420] sm:$0xff]
    %v2084 = vld [vmem:[#allocation4 + $0x428] sm:$0xff]
    %v2085 = vld [vmem:[#allocation4 + $0x430] sm:$0xff]
    %v2086 = vld [vmem:[#allocation4 + $0x438] sm:$0xff]
    %v2087 = vld [vmem:[#allocation4 + $0x440] sm:$0xff]
    %v2088 = vld [vmem:[#allocation4 + $0x448] sm:$0xff]
    %v2089 = vld [vmem:[#allocation4 + $0x450] sm:$0xff]
    %v2090 = vld [vmem:[#allocation4 + $0x458] sm:$0xff]
    %v2091 = vld [vmem:[#allocation4 + $0x460] sm:$0xff]
    %v2092 = vld [vmem:[#allocation4 + $0x468] sm:$0xff]
    %v2093 = vld [vmem:[#allocation4 + $0x470] sm:$0xff]
    %v2094 = vld [vmem:[#allocation4 + $0x478] sm:$0xff]
    %v2095 = vld [vmem:[#allocation4 + $0x480] sm:$0xff]
    %v2096 = vld [vmem:[#allocation4 + $0x488] sm:$0xff]
    %v2097 = vld [vmem:[#allocation4 + $0x490] sm:$0xff]
    %v2098 = vld [vmem:[#allocation4 + $0x498] sm:$0xff]
    %v2099 = vld [vmem:[#allocation4 + $0x4a0] sm:$0xff]
    %v2100 = vld [vmem:[#allocation4 + $0x4a8] sm:$0xff]
    %v2101 = vld [vmem:[#allocation4 + $0x4b0] sm:$0xff]
    %v2102 = vld [vmem:[#allocation4 + $0x4b8] sm:$0xff]
    %v2103 = vld [vmem:[#allocation4 + $0x4c0] sm:$0xff]
    %v2104 = vld [vmem:[#allocation4 + $0x4c8] sm:$0xff]
    %v2105 = vld [vmem:[#allocation4 + $0x4d0] sm:$0xff]
    %v2106 = vld [vmem:[#allocation4 + $0x4d8] sm:$0xff]
    %v2107 = vld [vmem:[#allocation4 + $0x4e0] sm:$0xff]
    %v2108 = vld [vmem:[#allocation4 + $0x4e8] sm:$0xff]
    %v2109 = vld [vmem:[#allocation4 + $0x4f0] sm:$0xff]
    %v2110 = vld [vmem:[#allocation4 + $0x4f8] sm:$0xff]
    %v2111 = vld [vmem:[#allocation4 + $0x500] sm:$0xff]
    %v2112 = vld [vmem:[#allocation4 + $0x508] sm:$0xff]
    %v2113 = vld [vmem:[#allocation4 + $0x510] sm:$0xff]
    %v2114 = vld [vmem:[#allocation4 + $0x518] sm:$0xff]
    %v2115 = vld [vmem:[#allocation4 + $0x520] sm:$0xff]
    %v2116 = vld [vmem:[#allocation4 + $0x528] sm:$0xff]
    %v2117 = vld [vmem:[#allocation4 + $0x530] sm:$0xff]
    %v2118 = vld [vmem:[#allocation4 + $0x538] sm:$0xff]
    %v2119 = vld [vmem:[#allocation4 + $0x540] sm:$0xff]
    %v2120 = vld [vmem:[#allocation4 + $0x548] sm:$0xff]
    %v2121 = vld [vmem:[#allocation4 + $0x550] sm:$0xff]
    %v2122 = vld [vmem:[#allocation4 + $0x558] sm:$0xff]
    %v2123 = vld [vmem:[#allocation4 + $0x560] sm:$0xff]
    %v2124 = vld [vmem:[#allocation4 + $0x568] sm:$0xff]
    %v2125 = vld [vmem:[#allocation4 + $0x570] sm:$0xff]
    %v2126 = vld [vmem:[#allocation4 + $0x578] sm:$0xff]
    %v2127 = vld [vmem:[#allocation4 + $0x580] sm:$0xff]
    %v2128 = vld [vmem:[#allocation4 + $0x588] sm:$0xff]
    %v2129 = vld [vmem:[#allocation4 + $0x590] sm:$0xff]
    %v2130 = vld [vmem:[#allocation4 + $0x598] sm:$0xff]
    %v2131 = vld [vmem:[#allocation4 + $0x5a0] sm:$0xff]
    %v2132 = vld [vmem:[#allocation4 + $0x5a8] sm:$0xff]
    %v2133 = vld [vmem:[#allocation4 + $0x5b0] sm:$0xff]
    %v2134 = vld [vmem:[#allocation4 + $0x5b8] sm:$0xff]
    %v2135 = vld [vmem:[#allocation4 + $0x5c0] sm:$0xff]
    %v2136 = vld [vmem:[#allocation4 + $0x5c8] sm:$0xff]
    %v2137 = vld [vmem:[#allocation4 + $0x5d0] sm:$0xff]
    %v2138 = vld [vmem:[#allocation4 + $0x5d8] sm:$0xff]
    %v2139 = vld [vmem:[#allocation4 + $0x5e0] sm:$0xff]
    %v2140 = vld [vmem:[#allocation4 + $0x5e8] sm:$0xff]
    %v2141 = vld [vmem:[#allocation4 + $0x5f0] sm:$0xff]
    %v2142 = vld [vmem:[#allocation4 + $0x5f8] sm:$0xff]
    %v2143 = vld [vmem:[#allocation4 + $0x600] sm:$0xff]
    %v2144 = vld [vmem:[#allocation4 + $0x608] sm:$0xff]
    %v2145 = vld [vmem:[#allocation4 + $0x610] sm:$0xff]
    %v2146 = vld [vmem:[#allocation4 + $0x618] sm:$0xff]
    %v2147 = vld [vmem:[#allocation4 + $0x620] sm:$0xff]
    %v2148 = vld [vmem:[#allocation4 + $0x628] sm:$0xff]
    %v2149 = vld [vmem:[#allocation4 + $0x630] sm:$0xff]
    %v2150 = vld [vmem:[#allocation4 + $0x638] sm:$0xff]
    %v2151 = vld [vmem:[#allocation4 + $0x640] sm:$0xff]
    %v2152 = vld [vmem:[#allocation4 + $0x648] sm:$0xff]
    %v2153 = vld [vmem:[#allocation4 + $0x650] sm:$0xff]
    %v2154 = vld [vmem:[#allocation4 + $0x658] sm:$0xff]
    %v2155 = vld [vmem:[#allocation4 + $0x660] sm:$0xff]
    %v2156 = vld [vmem:[#allocation4 + $0x668] sm:$0xff]
    %v2157 = vld [vmem:[#allocation4 + $0x670] sm:$0xff]
    %v2158 = vld [vmem:[#allocation4 + $0x678] sm:$0xff]
    %v2159 = vld [vmem:[#allocation4 + $0x680] sm:$0xff]
    %v2160 = vld [vmem:[#allocation4 + $0x688] sm:$0xff]
    %v2161 = vld [vmem:[#allocation4 + $0x690] sm:$0xff]
    %v2162 = vld [vmem:[#allocation4 + $0x698] sm:$0xff]
    %v2163 = vld [vmem:[#allocation4 + $0x6a0] sm:$0xff]
    %v2164 = vld [vmem:[#allocation4 + $0x6a8] sm:$0xff]
    %v2165 = vld [vmem:[#allocation4 + $0x6b0] sm:$0xff]
    %v2166 = vld [vmem:[#allocation4 + $0x6b8] sm:$0xff]
    %v2167 = vld [vmem:[#allocation4 + $0x6c0] sm:$0xff]
    %v2168 = vld [vmem:[#allocation4 + $0x6c8] sm:$0xff]
    %v2169 = vld [vmem:[#allocation4 + $0x6d0] sm:$0xff]
    %v2170 = vld [vmem:[#allocation4 + $0x6d8] sm:$0xff]
    %v2171 = vld [vmem:[#allocation4 + $0x6e0] sm:$0xff]
    %v2172 = vld [vmem:[#allocation4 + $0x6e8] sm:$0xff]
    %v2173 = vld [vmem:[#allocation4 + $0x6f0] sm:$0xff]
    %v2174 = vld [vmem:[#allocation4 + $0x6f8] sm:$0xff]
    %v2175 = vld [vmem:[#allocation4 + $0x700] sm:$0xff]
    %v2176 = vld [vmem:[#allocation4 + $0x708] sm:$0xff]
    %v2177 = vld [vmem:[#allocation4 + $0x710] sm:$0xff]
    %v2178 = vld [vmem:[#allocation4 + $0x718] sm:$0xff]
    %v2179 = vld [vmem:[#allocation4 + $0x720] sm:$0xff]
    %v2180 = vld [vmem:[#allocation4 + $0x728] sm:$0xff]
    %v2181 = vld [vmem:[#allocation4 + $0x730] sm:$0xff]
    %v2182 = vld [vmem:[#allocation4 + $0x738] sm:$0xff]
    %v2183 = vld [vmem:[#allocation4 + $0x740] sm:$0xff]
    %v2184 = vld [vmem:[#allocation4 + $0x748] sm:$0xff]
    %v2185 = vld [vmem:[#allocation4 + $0x750] sm:$0xff]
    %v2186 = vld [vmem:[#allocation4 + $0x758] sm:$0xff]
    %v2187 = vld [vmem:[#allocation4 + $0x760] sm:$0xff]
    %v2188 = vld [vmem:[#allocation4 + $0x768] sm:$0xff]
    %v2189 = vld [vmem:[#allocation4 + $0x770] sm:$0xff]
    %v2190 = vld [vmem:[#allocation4 + $0x778] sm:$0xff]
    %v2191 = vld [vmem:[#allocation4 + $0x780] sm:$0xff]
    %v2192 = vld [vmem:[#allocation4 + $0x788] sm:$0xff]
    %v2193 = vld [vmem:[#allocation4 + $0x790] sm:$0xff]
    %v2194 = vld [vmem:[#allocation4 + $0x798] sm:$0xff]
    %v2195 = vld [vmem:[#allocation4 + $0x7a0] sm:$0xff]
    %v2196 = vld [vmem:[#allocation4 + $0x7a8] sm:$0xff]
    %v2197 = vld [vmem:[#allocation4 + $0x7b0] sm:$0xff]
    %v2198 = vld [vmem:[#allocation4 + $0x7b8] sm:$0xff]
    %v2199 = vld [vmem:[#allocation4 + $0x7c0] sm:$0xff]
    %v2200 = vld [vmem:[#allocation4 + $0x7c8] sm:$0xff]
    %v2201 = vld [vmem:[#allocation4 + $0x7d0] sm:$0xff]
    %v2202 = vld [vmem:[#allocation4 + $0x7d8] sm:$0xff]
    %v2203 = vld [vmem:[#allocation4 + $0x7e0] sm:$0xff]
    %v2204 = vld [vmem:[#allocation4 + $0x7e8] sm:$0xff]
    %v2205 = vld [vmem:[#allocation4 + $0x7f0] sm:$0xff]
    %v2206 = vld [vmem:[#allocation4 + $0x7f8] sm:$0xff]
    %v2207 = vpack.c.bf16 %v1947, %v1947
    %v2208 = vpack.c.bf16 %v1948, %v1948
    %v2209 = vpack.c.bf16 %v1949, %v1949
    %v2210 = vpack.c.bf16 %v1950, %v1950
    %v2211 = vpack.c.bf16 %v1955, %v1951
    %v2212 = vpack.c.bf16 %v1956, %v1952
    %v2213 = vpack.c.bf16 %v1957, %v1953
    %v2214 = vpack.c.bf16 %v1958, %v1954
    %v2215 = vpack.c.bf16 %v1963, %v1959
    %v2216 = vpack.c.bf16 %v1964, %v1960
    %v2217 = vpack.c.bf16 %v1965, %v1961
    %v2218 = vpack.c.bf16 %v1966, %v1962
    %v2219 = vpack.c.bf16 %v1971, %v1967
    %v2220 = vpack.c.bf16 %v1972, %v1968
    %v2221 = vpack.c.bf16 %v1973, %v1969
    %v2222 = vpack.c.bf16 %v1974, %v1970
    %v2223 = vpack.c.bf16 %v1979, %v1975
    %v2224 = vpack.c.bf16 %v1980, %v1976
    %v2225 = vpack.c.bf16 %v1981, %v1977
    %v2226 = vpack.c.bf16 %v1982, %v1978
    %v2227 = vpack.c.bf16 %v1987, %v1983
    %v2228 = vpack.c.bf16 %v1988, %v1984
    %v2229 = vpack.c.bf16 %v1989, %v1985
    %v2230 = vpack.c.bf16 %v1990, %v1986
    %v2231 = vpack.c.bf16 %v1995, %v1991
    %v2232 = vpack.c.bf16 %v1996, %v1992
    %v2233 = vpack.c.bf16 %v1997, %v1993
    %v2234 = vpack.c.bf16 %v1998, %v1994
    %v2235 = vpack.c.bf16 %v2003, %v1999
    %v2236 = vpack.c.bf16 %v2004, %v2000
    %v2237 = vpack.c.bf16 %v2005, %v2001
    %v2238 = vpack.c.bf16 %v2006, %v2002
    %v2239 = vpack.c.bf16 %v2011, %v2007
    %v2240 = vpack.c.bf16 %v2012, %v2008
    %v2241 = vpack.c.bf16 %v2013, %v2009
    %v2242 = vpack.c.bf16 %v2014, %v2010
    %v2243 = vpack.c.bf16 %v2019, %v2015
    %v2244 = vpack.c.bf16 %v2020, %v2016
    %v2245 = vpack.c.bf16 %v2021, %v2017
    %v2246 = vpack.c.bf16 %v2022, %v2018
    %v2247 = vpack.c.bf16 %v2027, %v2023
    %v2248 = vpack.c.bf16 %v2028, %v2024
    %v2249 = vpack.c.bf16 %v2029, %v2025
    %v2250 = vpack.c.bf16 %v2030, %v2026
    %v2251 = vpack.c.bf16 %v2035, %v2031
    %v2252 = vpack.c.bf16 %v2036, %v2032
    %v2253 = vpack.c.bf16 %v2037, %v2033
    %v2254 = vpack.c.bf16 %v2038, %v2034
    %v2255 = vpack.c.bf16 %v2043, %v2039
    %v2256 = vpack.c.bf16 %v2044, %v2040
    %v2257 = vpack.c.bf16 %v2045, %v2041
    %v2258 = vpack.c.bf16 %v2046, %v2042
    %v2259 = vpack.c.bf16 %v2051, %v2047
    %v2260 = vpack.c.bf16 %v2052, %v2048
    %v2261 = vpack.c.bf16 %v2053, %v2049
    %v2262 = vpack.c.bf16 %v2054, %v2050
    %v2263 = vpack.c.bf16 %v2059, %v2055
    %v2264 = vpack.c.bf16 %v2060, %v2056
    %v2265 = vpack.c.bf16 %v2061, %v2057
    %v2266 = vpack.c.bf16 %v2062, %v2058
    %v2267 = vpack.c.bf16 %v2067, %v2063
    %v2268 = vpack.c.bf16 %v2068, %v2064
    %v2269 = vpack.c.bf16 %v2069, %v2065
    %v2270 = vpack.c.bf16 %v2070, %v2066
    %v2271 = vpack.c.bf16 %v2075, %v2071
    %v2272 = vpack.c.bf16 %v2076, %v2072
    %v2273 = vpack.c.bf16 %v2077, %v2073
    %v2274 = vpack.c.bf16 %v2078, %v2074
    %v2275 = vpack.c.bf16 %v2083, %v2079
    %v2276 = vpack.c.bf16 %v2084, %v2080
    %v2277 = vpack.c.bf16 %v2085, %v2081
    %v2278 = vpack.c.bf16 %v2086, %v2082
    %v2279 = vpack.c.bf16 %v2091, %v2087
    %v2280 = vpack.c.bf16 %v2092, %v2088
    %v2281 = vpack.c.bf16 %v2093, %v2089
    %v2282 = vpack.c.bf16 %v2094, %v2090
    %v2283 = vpack.c.bf16 %v2099, %v2095
    %v2284 = vpack.c.bf16 %v2100, %v2096
    %v2285 = vpack.c.bf16 %v2101, %v2097
    %v2286 = vpack.c.bf16 %v2102, %v2098
    %v2287 = vpack.c.bf16 %v2107, %v2103
    %v2288 = vpack.c.bf16 %v2108, %v2104
    %v2289 = vpack.c.bf16 %v2109, %v2105
    %v2290 = vpack.c.bf16 %v2110, %v2106
    %v2291 = vpack.c.bf16 %v2115, %v2111
    %v2292 = vpack.c.bf16 %v2116, %v2112
    %v2293 = vpack.c.bf16 %v2117, %v2113
    %v2294 = vpack.c.bf16 %v2118, %v2114
    %v2295 = vpack.c.bf16 %v2123, %v2119
    %v2296 = vpack.c.bf16 %v2124, %v2120
    %v2297 = vpack.c.bf16 %v2125, %v2121
    %v2298 = vpack.c.bf16 %v2126, %v2122
    %v2299 = vpack.c.bf16 %v2131, %v2127
    %v2300 = vpack.c.bf16 %v2132, %v2128
    %v2301 = vpack.c.bf16 %v2133, %v2129
    %v2302 = vpack.c.bf16 %v2134, %v2130
    %v2303 = vpack.c.bf16 %v2139, %v2135
    %v2304 = vpack.c.bf16 %v2140, %v2136
    %v2305 = vpack.c.bf16 %v2141, %v2137
    %v2306 = vpack.c.bf16 %v2142, %v2138
    %v2307 = vpack.c.bf16 %v2147, %v2143
    %v2308 = vpack.c.bf16 %v2148, %v2144
    %v2309 = vpack.c.bf16 %v2149, %v2145
    %v2310 = vpack.c.bf16 %v2150, %v2146
    %v2311 = vpack.c.bf16 %v2155, %v2151
    %v2312 = vpack.c.bf16 %v2156, %v2152
    %v2313 = vpack.c.bf16 %v2157, %v2153
    %v2314 = vpack.c.bf16 %v2158, %v2154
    %v2315 = vpack.c.bf16 %v2163, %v2159
    %v2316 = vpack.c.bf16 %v2164, %v2160
    %v2317 = vpack.c.bf16 %v2165, %v2161
    %v2318 = vpack.c.bf16 %v2166, %v2162
    %v2319 = vpack.c.bf16 %v2171, %v2167
    %v2320 = vpack.c.bf16 %v2172, %v2168
    %v2321 = vpack.c.bf16 %v2173, %v2169
    %v2322 = vpack.c.bf16 %v2174, %v2170
    %v2323 = vpack.c.bf16 %v2179, %v2175
    %v2324 = vpack.c.bf16 %v2180, %v2176
    %v2325 = vpack.c.bf16 %v2181, %v2177
    %v2326 = vpack.c.bf16 %v2182, %v2178
    %v2327 = vpack.c.bf16 %v2187, %v2183
    %v2328 = vpack.c.bf16 %v2188, %v2184
    %v2329 = vpack.c.bf16 %v2189, %v2185
    %v2330 = vpack.c.bf16 %v2190, %v2186
    %v2331 = vpack.c.bf16 %v2195, %v2191
    %v2332 = vpack.c.bf16 %v2196, %v2192
    %v2333 = vpack.c.bf16 %v2197, %v2193
    %v2334 = vpack.c.bf16 %v2198, %v2194
    %v2335 = vpack.c.bf16 %v2203, %v2199
    %v2336 = vpack.c.bf16 %v2204, %v2200
    %v2337 = vpack.c.bf16 %v2205, %v2201
    %v2338 = vpack.c.bf16 %v2206, %v2202
    %v2339 = vld [vmem:[%s16] sm:$0xf]
    %v2341 = vlaneseq
    %v2342 = vshrl.u32 %v2341, 7
    %v2343 = vsub.s32 0, %v2342
    %v2344 = vrot.slane %v2339, %v2343
    %v2345 = vlaneseq
    %v2346 = vshrl.u32 %v2345, 7
    %v2347 = vsub.s32 1, %v2346
    %v2348 = vrot.slane %v2339, %v2347
    %v2349 = vlaneseq
    %v2350 = vshrl.u32 %v2349, 7
    %v2351 = vsub.s32 2, %v2350
    %v2352 = vrot.slane %v2339, %v2351
    %v2353 = vlaneseq
    %v2354 = vshrl.u32 %v2353, 7
    %v2355 = vsub.s32 3, %v2354
    %v2356 = vrot.slane %v2339, %v2355
    %2361 = vmatprep.subr.bf16.mxu0 %v2240
    %2362 = vmatpush1.bf16.msra.mxu0 %v2239
    %2363 = vmatprep.subr.bf16.mxu0 %v2236
    %2364 = vmatpush1.bf16.msra.mxu0 %v2235
    %2365 = vmatprep.subr.bf16.mxu0 %v2232
    %2366 = vmatpush1.bf16.msra.mxu0 %v2231
    %2367 = vmatprep.subr.bf16.mxu0 %v2228
    %2368 = vmatpush1.bf16.msra.mxu0 %v2227
    %2369 = vmatprep.subr.bf16.mxu0 %v2224
    %2370 = vmatpush1.bf16.msra.mxu0 %v2223
    %2371 = vmatprep.subr.bf16.mxu0 %v2220
    %2372 = vmatpush1.bf16.msra.mxu0 %v2219
    %2373 = vmatprep.subr.bf16.mxu0 %v2216
    %2374 = vmatpush1.bf16.msra.mxu0 %v2215
    %2375 = vmatprep.subr.bf16.mxu0 %v2212
    %2376 = vmatpush1.bf16.msra.mxu0 %v2211
    %2377 = vmatprep.subr.bf16.mxu0 %v2272
    %2378 = vmatpush2.bf16.msra.mxu0 %v2271
    %2379 = vmatprep.subr.bf16.mxu0 %v2268
    %2380 = vmatpush2.bf16.msra.mxu0 %v2267
    %2381 = vmatprep.subr.bf16.mxu0 %v2264
    %2382 = vmatpush2.bf16.msra.mxu0 %v2263
    %2383 = vmatprep.subr.bf16.mxu0 %v2260
    %2384 = vmatpush2.bf16.msra.mxu0 %v2259
    %2385 = vmatprep.subr.bf16.mxu0 %v2256
    %2386 = vmatpush2.bf16.msra.mxu0 %v2255
    %2387 = vmatprep.subr.bf16.mxu0 %v2252
    %2388 = vmatpush2.bf16.msra.mxu0 %v2251
    %2389 = vmatprep.subr.bf16.mxu0 %v2248
    %2390 = vmatpush2.bf16.msra.mxu0 %v2247
    %2391 = vmatprep.subr.bf16.mxu0 %v2244
    %2392 = vmatpush2.bf16.msra.mxu0 %v2243
    %2393 = vmatprep.mubr.bf16.mxu0 %v2208
    %2394 = vmatmul.mubr.bf16.gmra.mxu0 %v2207
    %v2395 = vpop.f32.mrf.mxu0
    %v2396 = vadd.f32 %v2344, %v2395
    %v2397 = vpop.f32.mrf.mxu0
    %v2398 = vadd.f32 %v2348, %v2397
    %v2399 = vpop.f32.mrf.mxu0
    %v2400 = vpop.f32.mrf.mxu0
    %2401 = vdwg.mxu0
    %2402 = vmatprep.subr.bf16.mxu0 %v2304
    %2403 = vmatpush1.bf16.msra.mxu0 %v2303
    %2404 = vmatprep.subr.bf16.mxu0 %v2300
    %2405 = vmatpush1.bf16.msra.mxu0 %v2299
    %2406 = vmatprep.subr.bf16.mxu0 %v2296
    %2407 = vmatpush1.bf16.msra.mxu0 %v2295
    %2408 = vmatprep.subr.bf16.mxu0 %v2292
    %2409 = vmatpush1.bf16.msra.mxu0 %v2291
    %2410 = vmatprep.subr.bf16.mxu0 %v2288
    %2411 = vmatpush1.bf16.msra.mxu0 %v2287
    %2412 = vmatprep.subr.bf16.mxu0 %v2284
    %2413 = vmatpush1.bf16.msra.mxu0 %v2283
    %2414 = vmatprep.subr.bf16.mxu0 %v2280
    %2415 = vmatpush1.bf16.msra.mxu0 %v2279
    %2416 = vmatprep.subr.bf16.mxu0 %v2276
    %2417 = vmatpush1.bf16.msra.mxu0 %v2275
    %2418 = vmatprep.subr.bf16.mxu0 %v2336
    %2419 = vmatpush2.bf16.msra.mxu0 %v2335
    %2420 = vmatprep.subr.bf16.mxu0 %v2332
    %2421 = vmatpush2.bf16.msra.mxu0 %v2331
    %2422 = vmatprep.subr.bf16.mxu0 %v2328
    %2423 = vmatpush2.bf16.msra.mxu0 %v2327
    %2424 = vmatprep.subr.bf16.mxu0 %v2324
    %2425 = vmatpush2.bf16.msra.mxu0 %v2323
    %2426 = vmatprep.subr.bf16.mxu0 %v2320
    %2427 = vmatpush2.bf16.msra.mxu0 %v2319
    %2428 = vmatprep.subr.bf16.mxu0 %v2316
    %2429 = vmatpush2.bf16.msra.mxu0 %v2315
    %2430 = vmatprep.subr.bf16.mxu0 %v2312
    %2431 = vmatpush2.bf16.msra.mxu0 %v2311
    %2432 = vmatprep.subr.bf16.mxu0 %v2308
    %2433 = vmatpush2.bf16.msra.mxu0 %v2307
    %2434 = vmatprep.mubr.bf16.mxu0 %v2210
    %2435 = vmatmul.mubr.bf16.gmra.mxu0 %v2209
    %v2436 = vpop.f32.mrf.mxu0
    %v2437 = vadd.f32 %v2396, %v2436
    %v2438 = vpop.f32.mrf.mxu0
    %v2439 = vadd.f32 %v2398, %v2438
    %v2440 = vpop.f32.mrf.mxu0
    %v2441 = vpop.f32.mrf.mxu0
    %2442 = vdwg.mxu0
    %2443 = vmatprep.subr.bf16.mxu0 %v2242
    %2444 = vmatpush1.bf16.msra.mxu0 %v2241
    %2445 = vmatprep.subr.bf16.mxu0 %v2238
    %2446 = vmatpush1.bf16.msra.mxu0 %v2237
    %2447 = vmatprep.subr.bf16.mxu0 %v2234
    %2448 = vmatpush1.bf16.msra.mxu0 %v2233
    %2449 = vmatprep.subr.bf16.mxu0 %v2230
    %2450 = vmatpush1.bf16.msra.mxu0 %v2229
    %2451 = vmatprep.subr.bf16.mxu0 %v2226
    %2452 = vmatpush1.bf16.msra.mxu0 %v2225
    %2453 = vmatprep.subr.bf16.mxu0 %v2222
    %2454 = vmatpush1.bf16.msra.mxu0 %v2221
    %2455 = vmatprep.subr.bf16.mxu0 %v2218
    %2456 = vmatpush1.bf16.msra.mxu0 %v2217
    %2457 = vmatprep.subr.bf16.mxu0 %v2214
    %2458 = vmatpush1.bf16.msra.mxu0 %v2213
    %2459 = vmatprep.subr.bf16.mxu0 %v2274
    %2460 = vmatpush2.bf16.msra.mxu0 %v2273
    %2461 = vmatprep.subr.bf16.mxu0 %v2270
    %2462 = vmatpush2.bf16.msra.mxu0 %v2269
    %2463 = vmatprep.subr.bf16.mxu0 %v2266
    %2464 = vmatpush2.bf16.msra.mxu0 %v2265
    %2465 = vmatprep.subr.bf16.mxu0 %v2262
    %2466 = vmatpush2.bf16.msra.mxu0 %v2261
    %2467 = vmatprep.subr.bf16.mxu0 %v2258
    %2468 = vmatpush2.bf16.msra.mxu0 %v2257
    %2469 = vmatprep.subr.bf16.mxu0 %v2254
    %2470 = vmatpush2.bf16.msra.mxu0 %v2253
    %2471 = vmatprep.subr.bf16.mxu0 %v2250
    %2472 = vmatpush2.bf16.msra.mxu0 %v2249
    %2473 = vmatprep.subr.bf16.mxu0 %v2246
    %2474 = vmatpush2.bf16.msra.mxu0 %v2245
    %2475 = vmatprep.mubr.bf16.mxu0 %v2208
    %2476 = vmatmul.mubr.bf16.gmra.mxu0 %v2207
    %v2477 = vpop.f32.mrf.mxu0
    %v2478 = vadd.f32 %v2352, %v2477
    %v2479 = vpop.f32.mrf.mxu0
    %v2480 = vadd.f32 %v2356, %v2479
    %v2481 = vpop.f32.mrf.mxu0
    %v2482 = vpop.f32.mrf.mxu0
    %2483 = vdwg.mxu0
    %2484 = vmatprep.subr.bf16.mxu0 %v2306
    %2485 = vmatpush1.bf16.msra.mxu0 %v2305
    %2486 = vmatprep.subr.bf16.mxu0 %v2302
    %2487 = vmatpush1.bf16.msra.mxu0 %v2301
    %2488 = vmatprep.subr.bf16.mxu0 %v2298
    %2489 = vmatpush1.bf16.msra.mxu0 %v2297
    %2490 = vmatprep.subr.bf16.mxu0 %v2294
    %2491 = vmatpush1.bf16.msra.mxu0 %v2293
    %2492 = vmatprep.subr.bf16.mxu0 %v2290
    %2493 = vmatpush1.bf16.msra.mxu0 %v2289
    %2494 = vmatprep.subr.bf16.mxu0 %v2286
    %2495 = vmatpush1.bf16.msra.mxu0 %v2285
    %2496 = vmatprep.subr.bf16.mxu0 %v2282
    %2497 = vmatpush1.bf16.msra.mxu0 %v2281
    %2498 = vmatprep.subr.bf16.mxu0 %v2278
    %2499 = vmatpush1.bf16.msra.mxu0 %v2277
    %2500 = vmatprep.subr.bf16.mxu0 %v2338
    %2501 = vmatpush2.bf16.msra.mxu0 %v2337
    %2502 = vmatprep.subr.bf16.mxu0 %v2334
    %2503 = vmatpush2.bf16.msra.mxu0 %v2333
    %2504 = vmatprep.subr.bf16.mxu0 %v2330
    %2505 = vmatpush2.bf16.msra.mxu0 %v2329
    %2506 = vmatprep.subr.bf16.mxu0 %v2326
    %2507 = vmatpush2.bf16.msra.mxu0 %v2325
    %2508 = vmatprep.subr.bf16.mxu0 %v2322
    %2509 = vmatpush2.bf16.msra.mxu0 %v2321
    %2510 = vmatprep.subr.bf16.mxu0 %v2318
    %2511 = vmatpush2.bf16.msra.mxu0 %v2317
    %2512 = vmatprep.subr.bf16.mxu0 %v2314
    %2513 = vmatpush2.bf16.msra.mxu0 %v2313
    %2514 = vmatprep.subr.bf16.mxu0 %v2310
    %2515 = vmatpush2.bf16.msra.mxu0 %v2309
    %2516 = vmatprep.mubr.bf16.mxu0 %v2210
    %2517 = vmatmul.mubr.bf16.gmra.mxu0 %v2209
    %v2518 = vpop.f32.mrf.mxu0
    %v2519 = vadd.f32 %v2478, %v2518
    %v2520 = vpop.f32.mrf.mxu0
    %v2521 = vadd.f32 %v2480, %v2520
    %v2522 = vpop.f32.mrf.mxu0
    %v2523 = vpop.f32.mrf.mxu0
    %2524 = vdwg.mxu0
    %v2525 = vmax.f32 %v2437, 0.0
    %v2526 = vmax.f32 %v2439, 0.0
    %v2527 = vmax.f32 %v2519, 0.0
    %v2528 = vmax.f32 %v2521, 0.0
    %v2529 = vld [vmem:[%s19] sm:$0xf]
    %v2530 = vpack.c.bf16 %v2529, %v2529
    %v2531 = vpack.c.bf16 %v2525, %v2525
    %v2532 = vpack.c.bf16 %v2526, %v2526
    %v2533 = vpack.c.bf16 %v2527, %v2527
    %v2534 = vpack.c.bf16 %v2528, %v2528
    %v2536 = vsel %vm105, %v2530, 0
    %v2539 = vsel %vm109, %v2531, 0
    %v2542 = vsel %vm109, %v2532, 0
    %v2545 = vsel %vm109, %v2533, 0
    %v2548 = vsel %vm109, %v2534, 0
    %2550 = vmatprep.subr.bf16.mxu0 0
    %2551 = vmatpush1.bf16.msra.mxu0 0
    %2552 = vmatprep.subr.bf16.mxu0 0
    %2553 = vmatpush1.bf16.msra.mxu0 0
    %2554 = vmatprep.subr.bf16.mxu0 0
    %2555 = vmatpush1.bf16.msra.mxu0 0
    %2556 = vmatprep.subr.bf16.mxu0 0
    %2557 = vmatpush1.bf16.msra.mxu0 0
    %2558 = vmatprep.subr.bf16.mxu0 0
    %2559 = vmatpush1.bf16.msra.mxu0 0
    %2560 = vmatprep.subr.bf16.mxu0 0
    %2561 = vmatpush1.bf16.msra.mxu0 0
    %2562 = vmatprep.subr.bf16.mxu0 0
    %2563 = vmatpush1.bf16.msra.mxu0 0
    %2564 = vmatprep.subr.bf16.mxu0 %v2542
    %2565 = vmatpush1.bf16.msra.mxu0 %v2539
    %2566 = vmatprep.subr.bf16.mxu0 0
    %2567 = vmatpush2.bf16.msra.mxu0 0
    %2568 = vmatprep.subr.bf16.mxu0 0
    %2569 = vmatpush2.bf16.msra.mxu0 0
    %2570 = vmatprep.subr.bf16.mxu0 0
    %2571 = vmatpush2.bf16.msra.mxu0 0
    %2572 = vmatprep.subr.bf16.mxu0 0
    %2573 = vmatpush2.bf16.msra.mxu0 0
    %2574 = vmatprep.subr.bf16.mxu0 0
    %2575 = vmatpush2.bf16.msra.mxu0 0
    %2576 = vmatprep.subr.bf16.mxu0 0
    %2577 = vmatpush2.bf16.msra.mxu0 0
    %2578 = vmatprep.subr.bf16.mxu0 0
    %2579 = vmatpush2.bf16.msra.mxu0 0
    %2580 = vmatprep.subr.bf16.mxu0 0
    %2581 = vmatpush2.bf16.msra.mxu0 0
    %2582 = vmatprep.mubr.bf16.mxu0 0
    %2583 = vmatmul.mubr.bf16.gmra.mxu0 %v2536
    %v2584 = vpop.f32.mrf.mxu0
    %v2585 = vadd.f32 0.0, %v2584
    %v2586 = vpop.f32.mrf.mxu0
    %v2587 = vadd.f32 0.0, %v2586
    %v2588 = vpop.f32.mrf.mxu0
    %v2589 = vpop.f32.mrf.mxu0
    %2590 = vdwg.mxu0
    %2591 = vmatprep.subr.bf16.mxu0 0
    %2592 = vmatpush1.bf16.msra.mxu0 0
    %2593 = vmatprep.subr.bf16.mxu0 0
    %2594 = vmatpush1.bf16.msra.mxu0 0
    %2595 = vmatprep.subr.bf16.mxu0 0
    %2596 = vmatpush1.bf16.msra.mxu0 0
    %2597 = vmatprep.subr.bf16.mxu0 0
    %2598 = vmatpush1.bf16.msra.mxu0 0
    %2599 = vmatprep.subr.bf16.mxu0 0
    %2600 = vmatpush1.bf16.msra.mxu0 0
    %2601 = vmatprep.subr.bf16.mxu0 0
    %2602 = vmatpush1.bf16.msra.mxu0 0
    %2603 = vmatprep.subr.bf16.mxu0 0
    %2604 = vmatpush1.bf16.msra.mxu0 0
    %2605 = vmatprep.subr.bf16.mxu0 %v2548
    %2606 = vmatpush1.bf16.msra.mxu0 %v2545
    %2607 = vmatprep.subr.bf16.mxu0 0
    %2608 = vmatpush2.bf16.msra.mxu0 0
    %2609 = vmatprep.subr.bf16.mxu0 0
    %2610 = vmatpush2.bf16.msra.mxu0 0
    %2611 = vmatprep.subr.bf16.mxu0 0
    %2612 = vmatpush2.bf16.msra.mxu0 0
    %2613 = vmatprep.subr.bf16.mxu0 0
    %2614 = vmatpush2.bf16.msra.mxu0 0
    %2615 = vmatprep.subr.bf16.mxu0 0
    %2616 = vmatpush2.bf16.msra.mxu0 0
    %2617 = vmatprep.subr.bf16.mxu0 0
    %2618 = vmatpush2.bf16.msra.mxu0 0
    %2619 = vmatprep.subr.bf16.mxu0 0
    %2620 = vmatpush2.bf16.msra.mxu0 0
    %2621 = vmatprep.subr.bf16.mxu0 0
    %2622 = vmatpush2.bf16.msra.mxu0 0
    %2623 = vmatprep.mubr.bf16.mxu0 0
    %2624 = vmatmul.mubr.bf16.gmra.mxu0 %v2536
    %v2625 = vpop.f32.mrf.mxu0
    %v2626 = vadd.f32 0.0, %v2625
    %v2627 = vpop.f32.mrf.mxu0
    %v2628 = vadd.f32 0.0, %v2627
    %v2629 = vpop.f32.mrf.mxu0
    %v2630 = vpop.f32.mrf.mxu0
    %2631 = vdwg.mxu0
    %v2632 = vld [vmem:[%s20] sm:$0xf]
    %v2633 = vpack.c.bf16 %v2632, %v2632
    %v2635 = vsel %vm105, %v2633, 0
    %2637 = vmatprep.subr.bf16.mxu0 0
    %2638 = vmatpush1.bf16.msra.mxu0 0
    %2639 = vmatprep.subr.bf16.mxu0 0
    %2640 = vmatpush1.bf16.msra.mxu0 0
    %2641 = vmatprep.subr.bf16.mxu0 0
    %2642 = vmatpush1.bf16.msra.mxu0 0
    %2643 = vmatprep.subr.bf16.mxu0 0
    %2644 = vmatpush1.bf16.msra.mxu0 0
    %2645 = vmatprep.subr.bf16.mxu0 0
    %2646 = vmatpush1.bf16.msra.mxu0 0
    %2647 = vmatprep.subr.bf16.mxu0 0
    %2648 = vmatpush1.bf16.msra.mxu0 0
    %2649 = vmatprep.subr.bf16.mxu0 0
    %2650 = vmatpush1.bf16.msra.mxu0 0
    %2651 = vmatprep.subr.bf16.mxu0 %v2542
    %2652 = vmatpush1.bf16.msra.mxu0 %v2539
    %2653 = vmatprep.subr.bf16.mxu0 0
    %2654 = vmatpush2.bf16.msra.mxu0 0
    %2655 = vmatprep.subr.bf16.mxu0 0
    %2656 = vmatpush2.bf16.msra.mxu0 0
    %2657 = vmatprep.subr.bf16.mxu0 0
    %2658 = vmatpush2.bf16.msra.mxu0 0
    %2659 = vmatprep.subr.bf16.mxu0 0
    %2660 = vmatpush2.bf16.msra.mxu0 0
    %2661 = vmatprep.subr.bf16.mxu0 0
    %2662 = vmatpush2.bf16.msra.mxu0 0
    %2663 = vmatprep.subr.bf16.mxu0 0
    %2664 = vmatpush2.bf16.msra.mxu0 0
    %2665 = vmatprep.subr.bf16.mxu0 0
    %2666 = vmatpush2.bf16.msra.mxu0 0
    %2667 = vmatprep.subr.bf16.mxu0 0
    %2668 = vmatpush2.bf16.msra.mxu0 0
    %2669 = vmatprep.mubr.bf16.mxu0 0
    %2670 = vmatmul.mubr.bf16.gmra.mxu0 %v2635
    %v2671 = vpop.f32.mrf.mxu0
    %v2672 = vadd.f32 0.0, %v2671
    %v2673 = vpop.f32.mrf.mxu0
    %v2674 = vadd.f32 0.0, %v2673
    %v2675 = vpop.f32.mrf.mxu0
    %v2676 = vpop.f32.mrf.mxu0
    %2677 = vdwg.mxu0
    %2678 = vmatprep.subr.bf16.mxu0 0
    %2679 = vmatpush1.bf16.msra.mxu0 0
    %2680 = vmatprep.subr.bf16.mxu0 0
    %2681 = vmatpush1.bf16.msra.mxu0 0
    %2682 = vmatprep.subr.bf16.mxu0 0
    %2683 = vmatpush1.bf16.msra.mxu0 0
    %2684 = vmatprep.subr.bf16.mxu0 0
    %2685 = vmatpush1.bf16.msra.mxu0 0
    %2686 = vmatprep.subr.bf16.mxu0 0
    %2687 = vmatpush1.bf16.msra.mxu0 0
    %2688 = vmatprep.subr.bf16.mxu0 0
    %2689 = vmatpush1.bf16.msra.mxu0 0
    %2690 = vmatprep.subr.bf16.mxu0 0
    %2691 = vmatpush1.bf16.msra.mxu0 0
    %2692 = vmatprep.subr.bf16.mxu0 %v2548
    %2693 = vmatpush1.bf16.msra.mxu0 %v2545
    %2694 = vmatprep.subr.bf16.mxu0 0
    %2695 = vmatpush2.bf16.msra.mxu0 0
    %2696 = vmatprep.subr.bf16.mxu0 0
    %2697 = vmatpush2.bf16.msra.mxu0 0
    %2698 = vmatprep.subr.bf16.mxu0 0
    %2699 = vmatpush2.bf16.msra.mxu0 0
    %2700 = vmatprep.subr.bf16.mxu0 0
    %2701 = vmatpush2.bf16.msra.mxu0 0
    %2702 = vmatprep.subr.bf16.mxu0 0
    %2703 = vmatpush2.bf16.msra.mxu0 0
    %2704 = vmatprep.subr.bf16.mxu0 0
    %2705 = vmatpush2.bf16.msra.mxu0 0
    %2706 = vmatprep.subr.bf16.mxu0 0
    %2707 = vmatpush2.bf16.msra.mxu0 0
    %2708 = vmatprep.subr.bf16.mxu0 0
    %2709 = vmatpush2.bf16.msra.mxu0 0
    %2710 = vmatprep.mubr.bf16.mxu0 0
    %2711 = vmatmul.mubr.bf16.gmra.mxu0 %v2635
    %v2712 = vpop.f32.mrf.mxu0
    %v2713 = vadd.f32 0.0, %v2712
    %v2714 = vpop.f32.mrf.mxu0
    %v2715 = vadd.f32 0.0, %v2714
    %v2716 = vpop.f32.mrf.mxu0
    %v2717 = vpop.f32.mrf.mxu0
    %2718 = vdwg.mxu0
    %v2719 = vmul.f32 %v2585, %v2672
    %v2720 = vmul.f32 %v2587, %v2674
    %v2721 = vmul.f32 %v2626, %v2713
    %v2722 = vmul.f32 %v2628, %v2715
    %v2723 = vld [vmem:[%s17] sm:$0xff]
    %v2724 = vld [vmem:[%s17 + $0x8] sm:$0xff]
    %v2725 = vld [vmem:[%s17 + $0x10] sm:$0xff]
    %v2726 = vld [vmem:[%s17 + $0x18] sm:$0xff]
    %v2727 = vld [vmem:[%s17 + $0x20] sm:$0xff]
    %v2728 = vld [vmem:[%s17 + $0x28] sm:$0xff]
    %v2729 = vld [vmem:[%s17 + $0x30] sm:$0xff]
    %v2730 = vld [vmem:[%s17 + $0x38] sm:$0xff]
    %v2731 = vld [vmem:[%s17 + $0x40] sm:$0xff]
    %v2732 = vld [vmem:[%s17 + $0x48] sm:$0xff]
    %v2733 = vld [vmem:[%s17 + $0x50] sm:$0xff]
    %v2734 = vld [vmem:[%s17 + $0x58] sm:$0xff]
    %v2735 = vld [vmem:[%s17 + $0x60] sm:$0xff]
    %v2736 = vld [vmem:[%s17 + $0x68] sm:$0xff]
    %v2737 = vld [vmem:[%s17 + $0x70] sm:$0xff]
    %v2738 = vld [vmem:[%s17 + $0x78] sm:$0xff]
    %v2739 = vld [vmem:[%s17 + $0x80] sm:$0xff]
    %v2740 = vld [vmem:[%s17 + $0x88] sm:$0xff]
    %v2741 = vld [vmem:[%s17 + $0x90] sm:$0xff]
    %v2742 = vld [vmem:[%s17 + $0x98] sm:$0xff]
    %v2743 = vld [vmem:[%s17 + $0xa0] sm:$0xff]
    %v2744 = vld [vmem:[%s17 + $0xa8] sm:$0xff]
    %v2745 = vld [vmem:[%s17 + $0xb0] sm:$0xff]
    %v2746 = vld [vmem:[%s17 + $0xb8] sm:$0xff]
    %v2747 = vld [vmem:[%s17 + $0xc0] sm:$0xff]
    %v2748 = vld [vmem:[%s17 + $0xc8] sm:$0xff]
    %v2749 = vld [vmem:[%s17 + $0xd0] sm:$0xff]
    %v2750 = vld [vmem:[%s17 + $0xd8] sm:$0xff]
    %v2751 = vld [vmem:[%s17 + $0xe0] sm:$0xff]
    %v2752 = vld [vmem:[%s17 + $0xe8] sm:$0xff]
    %v2753 = vld [vmem:[%s17 + $0xf0] sm:$0xff]
    %v2754 = vld [vmem:[%s17 + $0xf8] sm:$0xff]
    %v2755 = vld [vmem:[%s17 + $0x100] sm:$0xff]
    %v2756 = vld [vmem:[%s17 + $0x108] sm:$0xff]
    %v2757 = vld [vmem:[%s17 + $0x110] sm:$0xff]
    %v2758 = vld [vmem:[%s17 + $0x118] sm:$0xff]
    %v2759 = vld [vmem:[%s17 + $0x120] sm:$0xff]
    %v2760 = vld [vmem:[%s17 + $0x128] sm:$0xff]
    %v2761 = vld [vmem:[%s17 + $0x130] sm:$0xff]
    %v2762 = vld [vmem:[%s17 + $0x138] sm:$0xff]
    %v2763 = vld [vmem:[%s17 + $0x140] sm:$0xff]
    %v2764 = vld [vmem:[%s17 + $0x148] sm:$0xff]
    %v2765 = vld [vmem:[%s17 + $0x150] sm:$0xff]
    %v2766 = vld [vmem:[%s17 + $0x158] sm:$0xff]
    %v2767 = vld [vmem:[%s17 + $0x160] sm:$0xff]
    %v2768 = vld [vmem:[%s17 + $0x168] sm:$0xff]
    %v2769 = vld [vmem:[%s17 + $0x170] sm:$0xff]
    %v2770 = vld [vmem:[%s17 + $0x178] sm:$0xff]
    %v2771 = vld [vmem:[%s17 + $0x180] sm:$0xff]
    %v2772 = vld [vmem:[%s17 + $0x188] sm:$0xff]
    %v2773 = vld [vmem:[%s17 + $0x190] sm:$0xff]
    %v2774 = vld [vmem:[%s17 + $0x198] sm:$0xff]
    %v2775 = vld [vmem:[%s17 + $0x1a0] sm:$0xff]
    %v2776 = vld [vmem:[%s17 + $0x1a8] sm:$0xff]
    %v2777 = vld [vmem:[%s17 + $0x1b0] sm:$0xff]
    %v2778 = vld [vmem:[%s17 + $0x1b8] sm:$0xff]
    %v2779 = vld [vmem:[%s17 + $0x1c0] sm:$0xff]
    %v2780 = vld [vmem:[%s17 + $0x1c8] sm:$0xff]
    %v2781 = vld [vmem:[%s17 + $0x1d0] sm:$0xff]
    %v2782 = vld [vmem:[%s17 + $0x1d8] sm:$0xff]
    %v2783 = vld [vmem:[%s17 + $0x1e0] sm:$0xff]
    %v2784 = vld [vmem:[%s17 + $0x1e8] sm:$0xff]
    %v2785 = vld [vmem:[%s17 + $0x1f0] sm:$0xff]
    %v2786 = vld [vmem:[%s17 + $0x1f8] sm:$0xff]
    %v2787 = vpack.c.bf16 %v2719, %v2719
    %v2788 = vpack.c.bf16 %v2720, %v2720
    %v2789 = vpack.c.bf16 %v2721, %v2721
    %v2790 = vpack.c.bf16 %v2722, %v2722
    %v2791 = vpack.c.bf16 %v2724, %v2723
    %v2792 = vpack.c.bf16 %v2726, %v2725
    %v2793 = vpack.c.bf16 %v2728, %v2727
    %v2794 = vpack.c.bf16 %v2730, %v2729
    %v2795 = vpack.c.bf16 %v2732, %v2731
    %v2796 = vpack.c.bf16 %v2734, %v2733
    %v2797 = vpack.c.bf16 %v2736, %v2735
    %v2798 = vpack.c.bf16 %v2738, %v2737
    %v2799 = vpack.c.bf16 %v2740, %v2739
    %v2800 = vpack.c.bf16 %v2742, %v2741
    %v2801 = vpack.c.bf16 %v2744, %v2743
    %v2802 = vpack.c.bf16 %v2746, %v2745
    %v2803 = vpack.c.bf16 %v2748, %v2747
    %v2804 = vpack.c.bf16 %v2750, %v2749
    %v2805 = vpack.c.bf16 %v2752, %v2751
    %v2806 = vpack.c.bf16 %v2754, %v2753
    %v2807 = vpack.c.bf16 %v2756, %v2755
    %v2808 = vpack.c.bf16 %v2758, %v2757
    %v2809 = vpack.c.bf16 %v2760, %v2759
    %v2810 = vpack.c.bf16 %v2762, %v2761
    %v2811 = vpack.c.bf16 %v2764, %v2763
    %v2812 = vpack.c.bf16 %v2766, %v2765
    %v2813 = vpack.c.bf16 %v2768, %v2767
    %v2814 = vpack.c.bf16 %v2770, %v2769
    %v2815 = vpack.c.bf16 %v2772, %v2771
    %v2816 = vpack.c.bf16 %v2774, %v2773
    %v2817 = vpack.c.bf16 %v2776, %v2775
    %v2818 = vpack.c.bf16 %v2778, %v2777
    %v2819 = vpack.c.bf16 %v2780, %v2779
    %v2820 = vpack.c.bf16 %v2782, %v2781
    %v2821 = vpack.c.bf16 %v2784, %v2783
    %v2822 = vpack.c.bf16 %v2786, %v2785
    %v2823 = vld [vmem:[#allocation7] sm:$0x1]
    %v2825 = vlaneseq
    %v2826 = vshrl.u32 %v2825, 7
    %v2827 = vsub.s32 0, %v2826
    %v2828 = vrot.slane %v2823, %v2827
    %2830 = vmatprep.subr.bf16.mxu0 0
    %2831 = vmatpush1.bf16.msra.mxu0 %v2798
    %2832 = vmatprep.subr.bf16.mxu0 0
    %2833 = vmatpush1.bf16.msra.mxu0 %v2797
    %2834 = vmatprep.subr.bf16.mxu0 0
    %2835 = vmatpush1.bf16.msra.mxu0 %v2796
    %2836 = vmatprep.subr.bf16.mxu0 0
    %2837 = vmatpush1.bf16.msra.mxu0 %v2795
    %2838 = vmatprep.subr.bf16.mxu0 0
    %2839 = vmatpush1.bf16.msra.mxu0 %v2794
    %2840 = vmatprep.subr.bf16.mxu0 0
    %2841 = vmatpush1.bf16.msra.mxu0 %v2793
    %2842 = vmatprep.subr.bf16.mxu0 0
    %2843 = vmatpush1.bf16.msra.mxu0 %v2792
    %2844 = vmatprep.subr.bf16.mxu0 0
    %2845 = vmatpush1.bf16.msra.mxu0 %v2791
    %2846 = vmatprep.subr.bf16.mxu0 0
    %2847 = vmatpush2.bf16.msra.mxu0 %v2806
    %2848 = vmatprep.subr.bf16.mxu0 0
    %2849 = vmatpush2.bf16.msra.mxu0 %v2805
    %2850 = vmatprep.subr.bf16.mxu0 0
    %2851 = vmatpush2.bf16.msra.mxu0 %v2804
    %2852 = vmatprep.subr.bf16.mxu0 0
    %2853 = vmatpush2.bf16.msra.mxu0 %v2803
    %2854 = vmatprep.subr.bf16.mxu0 0
    %2855 = vmatpush2.bf16.msra.mxu0 %v2802
    %2856 = vmatprep.subr.bf16.mxu0 0
    %2857 = vmatpush2.bf16.msra.mxu0 %v2801
    %2858 = vmatprep.subr.bf16.mxu0 0
    %2859 = vmatpush2.bf16.msra.mxu0 %v2800
    %2860 = vmatprep.subr.bf16.mxu0 0
    %2861 = vmatpush2.bf16.msra.mxu0 %v2799
    %2862 = vmatprep.mubr.bf16.mxu0 %v2788
    %2863 = vmatmul.mubr.bf16.gmra.mxu0 %v2787
    %v2864 = vpop.f32.mrf.mxu0
    %v2865 = vadd.f32 %v2828, %v2864
    %v2866 = vpop.f32.mrf.mxu0
    %v2867 = vpop.f32.mrf.mxu0
    %v2868 = vpop.f32.mrf.mxu0
    %2869 = vdwg.mxu0
    %2870 = vmatprep.subr.bf16.mxu0 0
    %2871 = vmatpush1.bf16.msra.mxu0 %v2814
    %2872 = vmatprep.subr.bf16.mxu0 0
    %2873 = vmatpush1.bf16.msra.mxu0 %v2813
    %2874 = vmatprep.subr.bf16.mxu0 0
    %2875 = vmatpush1.bf16.msra.mxu0 %v2812
    %2876 = vmatprep.subr.bf16.mxu0 0
    %2877 = vmatpush1.bf16.msra.mxu0 %v2811
    %2878 = vmatprep.subr.bf16.mxu0 0
    %2879 = vmatpush1.bf16.msra.mxu0 %v2810
    %2880 = vmatprep.subr.bf16.mxu0 0
    %2881 = vmatpush1.bf16.msra.mxu0 %v2809
    %2882 = vmatprep.subr.bf16.mxu0 0
    %2883 = vmatpush1.bf16.msra.mxu0 %v2808
    %2884 = vmatprep.subr.bf16.mxu0 0
    %2885 = vmatpush1.bf16.msra.mxu0 %v2807
    %2886 = vmatprep.subr.bf16.mxu0 0
    %2887 = vmatpush2.bf16.msra.mxu0 %v2822
    %2888 = vmatprep.subr.bf16.mxu0 0
    %2889 = vmatpush2.bf16.msra.mxu0 %v2821
    %2890 = vmatprep.subr.bf16.mxu0 0
    %2891 = vmatpush2.bf16.msra.mxu0 %v2820
    %2892 = vmatprep.subr.bf16.mxu0 0
    %2893 = vmatpush2.bf16.msra.mxu0 %v2819
    %2894 = vmatprep.subr.bf16.mxu0 0
    %2895 = vmatpush2.bf16.msra.mxu0 %v2818
    %2896 = vmatprep.subr.bf16.mxu0 0
    %2897 = vmatpush2.bf16.msra.mxu0 %v2817
    %2898 = vmatprep.subr.bf16.mxu0 0
    %2899 = vmatpush2.bf16.msra.mxu0 %v2816
    %2900 = vmatprep.subr.bf16.mxu0 0
    %2901 = vmatpush2.bf16.msra.mxu0 %v2815
    %2902 = vmatprep.mubr.bf16.mxu0 %v2790
    %2903 = vmatmul.mubr.bf16.gmra.mxu0 %v2789
    %v2904 = vpop.f32.mrf.mxu0
    %v2905 = vadd.f32 %v2865, %v2904
    %v2906 = vpop.f32.mrf.mxu0
    %v2907 = vpop.f32.mrf.mxu0
    %v2908 = vpop.f32.mrf.mxu0
    %2909 = vdwg.mxu0
    %v2910 = vld [vmem:[%s21] sm:$0x7f]
    %v2911 = vpack.c.bf16 %v2905, %v2905
    %v2912 = vpack.c.bf16 %v2910, %v2910
    %vm2913 = vcmask 523264
    %v2915 = vsel %vm2913, %v2911, 0
    %v2918 = vsel %vm2913, %v2912, 0
    %2920 = vmatprep.subr.bf16.mxu0 0
    %2921 = vmatpush1.bf16.xpose.msra.mxu0 0
    %2922 = vmatprep.subr.bf16.mxu0 0
    %2923 = vmatpush1.bf16.xpose.msra.mxu0 0
    %2924 = vmatprep.subr.bf16.mxu0 0
    %2925 = vmatpush1.bf16.xpose.msra.mxu0 0
    %2926 = vmatprep.subr.bf16.mxu0 0
    %2927 = vmatpush1.bf16.xpose.msra.mxu0 0
    %2928 = vmatprep.subr.bf16.mxu0 0
    %2929 = vmatpush1.bf16.xpose.msra.mxu0 0
    %2930 = vmatprep.subr.bf16.mxu0 0
    %2931 = vmatpush1.bf16.xpose.msra.mxu0 0
    %2932 = vmatprep.subr.bf16.mxu0 0
    %2933 = vmatpush1.bf16.xpose.msra.mxu0 0
    %2934 = vmatprep.subr.bf16.mxu0 0
    %2935 = vmatpush1.bf16.xpose.msra.mxu0 %v2918
    %2936 = vmatprep.subr.bf16.mxu0 0
    %2937 = vmatpush2.bf16.xpose.msra.mxu0 0
    %2938 = vmatprep.subr.bf16.mxu0 0
    %2939 = vmatpush2.bf16.xpose.msra.mxu0 0
    %2940 = vmatprep.subr.bf16.mxu0 0
    %2941 = vmatpush2.bf16.xpose.msra.mxu0 0
    %2942 = vmatprep.subr.bf16.mxu0 0
    %2943 = vmatpush2.bf16.xpose.msra.mxu0 0
    %2944 = vmatprep.subr.bf16.mxu0 0
    %2945 = vmatpush2.bf16.xpose.msra.mxu0 0
    %2946 = vmatprep.subr.bf16.mxu0 0
    %2947 = vmatpush2.bf16.xpose.msra.mxu0 0
    %2948 = vmatprep.subr.bf16.mxu0 0
    %2949 = vmatpush2.bf16.xpose.msra.mxu0 0
    %2950 = vmatprep.subr.bf16.mxu0 0
    %2951 = vmatpush2.bf16.xpose.msra.mxu0 0
    %2952 = vmatprep.mubr.bf16.mxu0 0
    %2953 = vmatmul.mubr.bf16.gmra.mxu0 %v2915
    %v2954 = vpop.f32.mrf.mxu0
    %v2955 = vadd.f32 0.0, %v2954
    %v2956 = vpop.f32.mrf.mxu0
    %v2957 = vpop.f32.mrf.mxu0
    %v2958 = vpop.f32.mrf.mxu0
    %2959 = vdwg.mxu0
    %vm2960 = vcmask 52224
    %2961 = vst.msk [vmem:[#allocation9] sm:$0xf] %vm2960, %v2955
    // Predicated region
    $region98: #{_fwd.11} parent=1 // pred_check
      _
    $region99: #{_fwd.11} parent=1 // pred_check_branch
      %2963 = sbr.rel (0) target = $region101
    $region100: #{_fwd.11} parent=1 // pred_region
      %s2965 = ssub.s32 64, 64
      %2966 = vsyncadd [#allocation6], %s2965
      %s2968 = sshll.u32 [#allocation9], 4
      %s2969 = int_to_ptr.vmem [resolvable:$true] %s2968
      %2971 = dma.vmem_to_hbm [thread:$0]  %s2969, 64, %s22, [#allocation6]
    $region101: #{_fwd.11} parent=1 // pred_fallthru
      _
    // Predicated region
    $region102: #{_fwd.11} parent=1 // pred_check
      _
    $region103: #{_fwd.11} parent=1 // pred_check_branch
      %2973 = sbr.rel (0) target = $region105
    $region104: #{_fwd.11} parent=1 // pred_region
      %2974 = dma.done [#allocation6], 64
    $region105: #{_fwd.11} parent=1 // pred_fallthru
      _
    %2975 = vsyncpa [#allocation5], 1
    %2976 = vsyncpa [#allocation8], 1
    %2977 = vsyncpa [#allocation6], 1

</llo_original>
